<compile_context>
chip_gen: v6e
topology: v6e:2x2x1
jax: 0.10.0
libtpu: 0.0.40
codegen_flags: <defaults>
</compile_context>

<pallas_src>
import functools

import numpy as np
import jax
import jax.numpy as jnp
from jax.experimental import pallas as pl
from jax.experimental.pallas import tpu as pltpu

GRID_SIZE = 5
N_CTRL = GRID_SIZE * GRID_SIZE


# ---------------------------------------------------------------------------
# Shared fused epilogue: bias -> (ReLU) -> InstanceNorm -> (ReLU)
# ---------------------------------------------------------------------------
def _bias_norm_act(y, b_ref, *, add_bias, use_norm, use_act, act_before_norm, eps):
    if add_bias:
        y = y + b_ref[...]
    if use_act and act_before_norm:          # CNN first block: conv -> ReLU -> IN
        y = jnp.maximum(y, 0.0)
    if use_norm:
        # InstanceNorm2d(affine=False): per-sample / per-channel stats over H*W.
        # One-pass stats: var = E[y^2] - E[y]^2  (biased, eps=1e-5).
        mean = jnp.mean(y, axis=0, keepdims=True)
        var = jnp.mean(y * y, axis=0, keepdims=True) - mean * mean
        y = (y - mean) * jax.lax.rsqrt(var + eps)
    if use_act and not act_before_norm:      # usual conv -> IN -> ReLU
        y = jnp.maximum(y, 0.0)
    return y


# ---------------------------------------------------------------------------
# Pallas kernel 1: 3x3 stride-1 conv with in-kernel tap accumulation (+IN +ReLU)
# ---------------------------------------------------------------------------
def _conv_s1_kernel(*refs, k, oh, ow, cin, add_bias, use_norm, use_act,
                    act_before_norm, eps):
    if add_bias:
        x_ref, w_ref, b_ref, o_ref = refs
    else:
        x_ref, w_ref, o_ref = refs
        b_ref = None
    m = oh * ow
    cout = o_ref.shape[-1]
    acc = jnp.zeros((m, cout), jnp.float32)
    for i in range(k):
        for j in range(k):
            # Contiguous window of the padded activation, flattened to (H*W, Cin).
            # (ow is a multiple of 8, so the collapse is layout preserving.)
            patch = x_ref[0, i:i + oh, j:j + ow, :].reshape(m, cin)
            w_ij = w_ref[(i * k + j) * cin:(i * k + j + 1) * cin, :]
            acc = acc + jnp.dot(patch, w_ij, preferred_element_type=jnp.float32)
    y = _bias_norm_act(acc, b_ref, add_bias=add_bias, use_norm=use_norm,
                       use_act=use_act, act_before_norm=act_before_norm, eps=eps)
    o_ref[0] = y.astype(o_ref.dtype)


@functools.partial(jax.jit,
                   static_argnames=("k", "use_norm", "use_act", "act_before_norm",
                                    "add_bias"))
def conv_s1_fused(x_nhwc, w2d, bias, *, k, use_norm, use_act, act_before_norm,
                  add_bias):
    """Fused 3x3 / stride-1 / 'same' conv (+InstanceNorm)(+ReLU) for the U-Net."""
    N, H, W, Cin = x_nhwc.shape
    assert W % 8 == 0, "stride-1 conv kernel expects the width to be a multiple of 8"
    Cout = w2d.shape[1]
    pad_lo = (k - 1) // 2
    pad_hi = k - 1 - pad_lo
    xp = jnp.pad(x_nhwc, ((0, 0), (pad_lo, pad_hi), (pad_lo, pad_hi), (0, 0)))
    Hp, Wp = H + k - 1, W + k - 1
    M = H * W
    cout_blk = Cout if Cout <= 256 else 256        # VMEM-safe channel tiling (v7x 64MiB)
    n_co = Cout // cout_blk

    kernel = functools.partial(
        _conv_s1_kernel, k=k, oh=H, ow=W, cin=Cin, add_bias=add_bias,
        use_norm=use_norm, use_act=use_act, act_before_norm=act_before_norm, eps=1e-5)

    in_specs = [
        pl.BlockSpec((1, Hp, Wp, Cin), lambda n, co: (n, 0, 0, 0)),
        pl.BlockSpec((k * k * Cin, cout_blk), lambda n, co: (0, co)),
    ]
    args = [xp, w2d]
    if add_bias:
        in_specs.append(pl.BlockSpec((1, cout_blk), lambda n, co: (0, co)))
        args.append(bias.reshape(1, Cout))

    out = pl.pallas_call(
        kernel,
        out_shape=jax.ShapeDtypeStruct((N, M, Cout), jnp.float32),
        grid=(N, n_co),
        in_specs=in_specs,
        out_specs=pl.BlockSpec((1, M, cout_blk), lambda n, co: (n, 0, co)),
        compiler_params=pltpu.CompilerParams(
            dimension_semantics=("parallel", "parallel"),
            vmem_limit_bytes=100 * 1024 * 1024),   # cap only; worst-case use ~40-50 MiB
    )(*args)
    return out.reshape(N, H, W, Cout)


# ---------------------------------------------------------------------------
# Pallas kernel 2: fused (im2col-)matmul + bias + IN + ReLU (STN CNN, FC layers)
# ---------------------------------------------------------------------------
def _matmul_norm_act_kernel(*refs, add_bias, use_norm, use_act, act_before_norm, eps):
    if add_bias:
        p_ref, w_ref, b_ref, o_ref = refs
    else:
        p_ref, w_ref, o_ref = refs
        b_ref = None
    y = jnp.dot(p_ref[0], w_ref[...], preferred_element_type=jnp.float32)
    y = _bias_norm_act(y, b_ref, add_bias=add_bias, use_norm=use_norm,
                       use_act=use_act, act_before_norm=act_before_norm, eps=eps)
    o_ref[0] = y.astype(o_ref.dtype)


def _fused_matmul_call(p3, w2d, bias, *, use_norm, use_act, act_before_norm, add_bias):
    N, M, K = p3.shape
    Cout = w2d.shape[1]
    kernel = functools.partial(
        _matmul_norm_act_kernel, add_bias=add_bias, use_norm=use_norm,
        use_act=use_act, act_before_norm=act_before_norm, eps=1e-5)
    in_specs = [pl.BlockSpec((1, M, K), lambda n: (n, 0, 0)),
                pl.BlockSpec((K, Cout), lambda n: (0, 0))]
    args = [p3, w2d]
    if add_bias:
        in_specs.append(pl.BlockSpec((1, Cout), lambda n: (0, 0)))
        args.append(bias.reshape(1, Cout))
    return pl.pallas_call(
        kernel,
        out_shape=jax.ShapeDtypeStruct((N, M, Cout), jnp.float32),
        grid=(N,),
        in_specs=in_specs,
        out_specs=pl.BlockSpec((1, M, Cout), lambda n: (n, 0, 0)),
        compiler_params=pltpu.CompilerParams(dimension_semantics=("parallel",)),
    )(*args)


def _im2col(x_nhwc, k, stride, pad):
    xp = jnp.pad(x_nhwc, ((0, 0), (pad, pad), (pad, pad), (0, 0)))
    N, Hp, Wp, C = xp.shape
    OH = (Hp - k) // stride + 1
    OW = (Wp - k) // stride + 1
    cols = []
    for i in range(k):
        for j in range(k):
            cols.append(xp[:, i:i + (OH - 1) * stride + 1:stride,
                           j:j + (OW - 1) * stride + 1:stride, :])
    patches = jnp.stack(cols, axis=3).reshape(N, OH, OW, k * k * C)
    return patches.reshape(N, OH * OW, k * k * C), OH, OW


@functools.partial(jax.jit,
                   static_argnames=("k", "stride", "pad", "use_norm", "use_act",
                                    "act_before_norm", "add_bias"))
def conv_im2col_fused(x_nhwc, w2d, bias, *, k, stride, pad, use_norm, use_act,
                      act_before_norm, add_bias):
    """Fused conv (+IN)(+ReLU) for the small strided CNN layers of the STN."""
    patches, OH, OW = _im2col(x_nhwc, k, stride, pad)
    N = x_nhwc.shape[0]
    Cout = w2d.shape[1]
    out = _fused_matmul_call(patches, w2d, bias, use_norm=use_norm, use_act=use_act,
                             act_before_norm=act_before_norm, add_bias=add_bias)
    return out.reshape(N, OH, OW, Cout)


@functools.partial(jax.jit, static_argnames=("use_act",))
def linear_fused(x, w, b, *, use_act):
    out = _fused_matmul_call(x[None], w, b, use_norm=False, use_act=use_act,
                             act_before_norm=False, add_bias=True)
    return out[0]


# ---------------------------------------------------------------------------
# Plain-JAX glue: pooling, upsampling, grid_sample, TPS, control-point losses
# ---------------------------------------------------------------------------
def maxpool2x2(x):                                    # NHWC, floor like nn.MaxPool2d(2, 2)
    N, H, W, C = x.shape
    H2, W2 = H // 2, W // 2
    x = x[:, :H2 * 2, :W2 * 2, :]
    return x.reshape(N, H2, 2, W2, 2, C).max(axis=(2, 4))


def upsample2x(x):                                    # nn.UpsamplingNearest2d(scale=2)
    return jnp.repeat(jnp.repeat(x, 2, axis=1), 2, axis=2)


def _bilinear_sample(img, grid):
    """F.grid_sample(img, grid): bilinear, zeros padding, align_corners=False."""
    B, C, H, W = img.shape
    Ho, Wo = grid.shape[1], grid.shape[2]
    gx, gy = grid[..., 0], grid[..., 1]
    ix = ((gx + 1.0) * W - 1.0) * 0.5
    iy = ((gy + 1.0) * H - 1.0) * 0.5
    x0 = jnp.floor(ix)
    y0 = jnp.floor(iy)
    x1, y1 = x0 + 1.0, y0 + 1.0
    wx1, wy1 = ix - x0, iy - y0
    wx0, wy0 = 1.0 - wx1, 1.0 - wy1
    img_flat = img.reshape(B, C, H * W)

    def tap(yc, xc, wgt):
        valid = (xc >= 0) & (xc <= W - 1) & (yc >= 0) & (yc <= H - 1)
        xi = jnp.clip(xc, 0, W - 1).astype(jnp.int32)
        yi = jnp.clip(yc, 0, H - 1).astype(jnp.int32)
        idx = (yi * W + xi).reshape(B, 1, Ho * Wo)
        idx = jnp.broadcast_to(idx, (B, C, Ho * Wo))
        vals = jnp.take_along_axis(img_flat, idx, axis=2).reshape(B, C, Ho, Wo)
        w = (wgt * valid.astype(img.dtype)).reshape(B, 1, Ho, Wo)
        return vals * w

    return (tap(y0, x0, wy0 * wx0) + tap(y0, x1, wy0 * wx1)
            + tap(y1, x0, wy1 * wx0) + tap(y1, x1, wy1 * wx1))


@jax.jit
def _grid_sample_canvas0(img, grid):
    # STNNet.grid_sample(..., canvas=0): output * grid_sample(ones, grid)
    out = _bilinear_sample(img, grid)
    msk = _bilinear_sample(jnp.ones_like(img), grid)
    return out * msk


def _tps_grid(coor, inv_kernel, tc_repr, H, W):
    B = coor.shape[0]
    Yc = jnp.concatenate([coor, jnp.zeros((B, 3, 2), coor.dtype)], axis=1)   # (B, 28, 2)
    mapping = jnp.einsum("ij,bjk->bik", inv_kernel, Yc)
    src = jnp.einsum("hj,bjk->bhk", tc_repr, mapping)                        # (B, HW, 2)
    return src.reshape(B, H, W, 2)


@jax.jit
def _stn_losses(coor):
    num = GRID_SIZE

    def get_row(c):
        sec = []
        for j in range(num):
            buf = None
            for i in range(num - 1):
                d = (c[:, j * num + i + 1, :] - c[:, j * num + i, :]) ** 2
                if buf is not None:
                    sec.append(jnp.abs(d - buf))
                buf = d
        return jnp.stack(sec, axis=1)

    def get_col(c):
        sec = []
        for i in range(num):
            buf = None
            for j in range(num - 1):
                d = (c[:, (j + 1) * num + i, :] - c[:, j * num + i, :]) ** 2
                if buf is not None:
                    sec.append(jnp.abs(d - buf))
                buf = d
        return jnp.stack(sec, axis=1)

    def grad_terms(c, row_major):
        terms = []
        for a in range(num):
            for b in range(1, num - 1):
                if row_major:
                    i0, i1, i2 = a * num + b - 1, a * num + b, a * num + b + 1
                else:
                    i0, i1, i2 = (b - 1) * num + a, b * num + a, (b + 1) * num + a
                x0, y0 = c[0, i0, 0], c[0, i0, 1]
                x1, y1 = c[0, i1, 0], c[0, i1, 1]
                x2, y2 = c[0, i2, 0], c[0, i2, 1]
                terms.append(jnp.abs((y1 - y0) * (x1 - x2) - (y1 - y2) * (x1 - x0)))
        return terms

    row, col = get_row(coor), get_col(coor)
    rg = jnp.maximum(sum(grad_terms(coor, True)), 0.02)
    cg = jnp.maximum(sum(grad_terms(coor, False)), 0.02)
    rx = jnp.maximum(0.08, row[:, :, 0]).mean()
    ry = jnp.maximum(0.08, row[:, :, 1]).mean()
    cx = jnp.maximum(0.08, col[:, :, 0]).mean()
    cy = jnp.maximum(0.08, col[:, :, 1]).mean()
    return rx, ry, cx, cy, rg, cg


def _partial_repr_np(a, b):                      # TPS radial basis 0.5*r^2*log(r^2)
    diff = a[:, None, :] - b[None, :, :]
    d2 = (diff ** 2).sum(-1)
    with np.errstate(divide="ignore", invalid="ignore"):
        r = 0.5 * d2 * np.log(d2)
    r[~np.isfinite(r)] = 0.0
    return r.astype(np.float32)


# ---------------------------------------------------------------------------
# Parameters (deterministic, synthetic) and forward pass
# ---------------------------------------------------------------------------
def build_params(key, H, W, ngf=8, output_nc=3):
    keys = iter(jax.random.split(key, 64))

    def conv_p(cin, cout, k=3):
        k1, k2 = jax.random.split(next(keys))
        w = 0.1 * jax.random.normal(k1, (cout, cin, k, k), jnp.float32)     # OIHW
        w2d = jnp.transpose(w, (2, 3, 1, 0)).reshape(k * k * cin, cout)
        b = 0.01 * jax.random.normal(k2, (cout,), jnp.float32)
        return {"w2d": w2d, "b": b}

    P = {}
    # ---- STN CNN (input: cat[mask, refer, input] = 5 channels) ----
    cnn_cfg = [dict(cin=5, cout=ngf, k=4, s=2, p=1, act_first=True, bias=True)]
    nf = ngf
    for _ in range(5):                                       # n_layers = 5
        cnn_cfg.append(dict(cin=nf, cout=2 * nf, k=4, s=2, p=1, act_first=False,
                            bias=False))
        nf *= 2
    cnn_cfg += [dict(cin=256, cout=256, k=3, s=1, p=1, act_first=False, bias=False),
                dict(cin=256, cout=256, k=3, s=1, p=1, act_first=False, bias=False)]
    P["cnn_cfg"] = cnn_cfg
    P["cnn"] = [conv_p(c["cin"], c["cout"], c["k"]) for c in cnn_cfg]

    feat = 256 * ((H // 64) // 2) * ((W // 64) // 2)         # 512 at 256x192, 256 here
    P["fc1_w"] = 0.1 * jax.random.normal(next(keys), (feat, 128), jnp.float32)
    P["fc1_b"] = 0.01 * jax.random.normal(next(keys), (128,), jnp.float32)

    # fc2: weight zeroed, bias = arctanh(target control points)  (BoundedGridLocNet)
    vals = np.linspace(-0.9, 0.9, GRID_SIZE).astype(np.float64)
    gy, gx = np.meshgrid(vals, vals, indexing="ij")
    tcp = np.stack([gx.ravel(), gy.ravel()], axis=1).astype(np.float32)     # (25, 2)=(x,y)
    P["fc2_w"] = jnp.zeros((128, 2 * N_CTRL), jnp.float32)
    P["fc2_b"] = jnp.asarray(np.arctanh(tcp).reshape(-1), jnp.float32)

    # ---- TPS buffers (register_buffer equivalents, computed once on host) ----
    fk = np.zeros((N_CTRL + 3, N_CTRL + 3), np.float32)
    fk[:N_CTRL, :N_CTRL] = _partial_repr_np(tcp, tcp)
    fk[:N_CTRL, N_CTRL] = 1.0
    fk[N_CTRL, :N_CTRL] = 1.0
    fk[:N_CTRL, N_CTRL + 1:] = tcp
    fk[N_CTRL + 1:, :N_CTRL] = tcp.T
    P["tps_inv_kernel"] = jnp.asarray(np.linalg.inv(fk), jnp.float32)
    ys, xs = np.meshgrid(np.arange(H), np.arange(W), indexing="ij")
    Yn = ys.reshape(-1, 1).astype(np.float32) * 2.0 / (H - 1) - 1.0
    Xn = xs.reshape(-1, 1).astype(np.float32) * 2.0 / (W - 1) - 1.0
    tc = np.concatenate([Xn, Yn], axis=1).astype(np.float32)
    P["tps_repr"] = jnp.asarray(np.concatenate(
        [_partial_repr_np(tc, tcp), np.ones((H * W, 1), np.float32), tc], axis=1))

    # ---- U-Net ----
    P["unet"] = {
        "conv1": [conv_p(4, 64), conv_p(64, 64)],
        "conv2": [conv_p(64, 128), conv_p(128, 128)],
        "conv3": [conv_p(128, 256), conv_p(256, 256)],
        "conv4": [conv_p(256, 512), conv_p(512, 512)],
        "conv5": [conv_p(512, 1024), conv_p(1024, 1024)],
        "up6":   [conv_p(1024, 512)],
        "conv6": [conv_p(1024, 512), conv_p(512, 512)],
        "up7":   [conv_p(512, 256)],
        "conv7": [conv_p(512, 256), conv_p(256, 256)],
        "up8":   [conv_p(256, 128)],
        "conv8": [conv_p(256, 128), conv_p(128, 128)],
        "up9":   [conv_p(128, 64)],
        "conv9": [conv_p(128, 64), conv_p(64, 64), conv_p(64, output_nc)],
    }
    return P


def unet_mask_forward(P, x_in, refer, mask):
    """UnetMask.forward(input, refer, mask, grid=None)  (NCHW at the boundary)."""
    B, _, H, W = x_in.shape

    # -------------------- STN: loc-net (CNN) --------------------
    reference = jnp.concatenate([mask, refer, x_in], axis=1)          # (B, 5, H, W)
    feat = jnp.transpose(reference, (0, 2, 3, 1))                     # NHWC
    for prm, cfg in zip(P["cnn"], P["cnn_cfg"]):
        feat = conv_im2col_fused(
            feat, prm["w2d"], prm["b"] if cfg["bias"] else None,
            k=cfg["k"], stride=cfg["s"], pad=cfg["p"],
            use_norm=True, use_act=True,
            act_before_norm=cfg["act_first"], add_bias=cfg["bias"])
    feat = maxpool2x2(feat)
    feat = jnp.transpose(feat, (0, 3, 1, 2)).reshape(B, -1)           # NCHW flatten order
    feat = linear_fused(feat, P["fc1_w"], P["fc1_b"], use_act=True)
    # TODO(synk): F.dropout treated as inference-mode identity here.
    pts = linear_fused(feat, P["fc2_w"], P["fc2_b"], use_act=False)
    coor = jnp.tanh(pts).reshape(B, -1, 2)
    rx, ry, cx, cy, rg, cg = _stn_losses(coor)

    # -------------------- STN: TPS grid + warping --------------------
    grid = _tps_grid(coor, P["tps_inv_kernel"], P["tps_repr"], H, W)
    transformed_x = _grid_sample_canvas0(x_in, grid)
    warped_mask = _grid_sample_canvas0(mask, grid)

    # -------------------- U-Net --------------------
    u_in = jnp.transpose(jnp.concatenate([refer, transformed_x], axis=1), (0, 2, 3, 1))

    def conv_block(x, layers, *, final_layer=False):
        n = len(layers)
        for idx, prm in enumerate(layers):
            last = final_layer and idx == n - 1
            x = conv_s1_fused(
                x, prm["w2d"], prm["b"] if last else None,
                k=3, use_norm=not last, use_act=not last,
                act_before_norm=False, add_bias=last)
        return x

    U = P["unet"]
    conv1 = conv_block(u_in, U["conv1"])
    pool1 = maxpool2x2(conv1)
    conv2 = conv_block(pool1, U["conv2"])
    pool2 = maxpool2x2(conv2)
    conv3 = conv_block(pool2, U["conv3"])
    pool3 = maxpool2x2(conv3)
    conv4 = conv_block(pool3, U["conv4"])
    drop4 = conv4                         # TODO(synk): Dropout(0.5) as inference identity
    pool4 = maxpool2x2(drop4)
    conv5 = conv_block(pool4, U["conv5"])
    drop5 = conv5
    up6 = conv_block(upsample2x(drop5), U["up6"])
    conv6 = conv_block(jnp.concatenate([drop4, up6], axis=-1), U["conv6"])
    up7 = conv_block(upsample2x(conv6), U["up7"])
    conv7 = conv_block(jnp.concatenate([conv3, up7], axis=-1), U["conv7"])
    up8 = conv_block(upsample2x(conv7), U["up8"])
    conv8 = conv_block(jnp.concatenate([conv2, up8], axis=-1), U["conv8"])
    up9 = conv_block(upsample2x(conv8), U["up9"])
    conv9 = conv_block(jnp.concatenate([conv1, up9], axis=-1), U["conv9"],
                       final_layer=True)

    out = jnp.transpose(conv9, (0, 3, 1, 2))                          # back to NCHW
    return (out, transformed_x, warped_mask, rx, ry, cx, cy, rg, cg)


if __name__ == "__main__":
    key = jax.random.PRNGKey(0)
    kp, kx, kr, km = jax.random.split(key, 4)

    # Smallest resolution at which the STN CNN / TPS graph stays well formed (the
    # original hardcodes 256x192; derived dims are used instead at 128x128).
    B, H, W = 2, 128, 128
    x_in = jax.random.normal(kx, (B, 1, H, W), jnp.float32)     # garment / input image
    refer = jax.random.normal(kr, (B, 3, H, W), jnp.float32)    # reference image
    mask = (jax.random.uniform(km, (B, 1, H, W)) > 0.5).astype(jnp.float32)

    params = build_params(kp, H, W)
    outs = unet_mask_forward(params, x_in, refer, mask)
    outs = jax.block_until_ready(outs)

    conv9, transformed_x, warped_mask = outs[0], outs[1], outs[2]
    assert conv9.shape == (B, 3, H, W), conv9.shape
    assert transformed_x.shape == (B, 1, H, W)
    assert warped_mask.shape == (B, 1, H, W)
    for leaf in jax.tree_util.tree_leaves(outs):
        assert bool(jnp.all(jnp.isfinite(leaf)))
    print("KERNEL_OK")
</pallas_src>

<mosaic_0001>
module attributes {stable_mosaic.version = 11 : i64} {
  func.func @_matmul_norm_act_kernel(%arg0: i32, %arg1: memref<1x4096x80xf32, #tpu.memory_space<vmem>>, %arg2: memref<80x8xf32, #tpu.memory_space<vmem>>, %arg3: memref<1x8xf32, #tpu.memory_space<vmem>>, %arg4: memref<1x4096x8xf32, #tpu.memory_space<vmem>>) attributes {dimension_semantics = [#tpu.dimension_semantics<parallel>], iteration_bounds = array<i64: 2>, scalar_prefetch = 0 : i64, scratch_operands = 0 : i64, tpu.core_type = #tpu.core_type<tc>, window_params = [{transform_indices = @transform_0, window_bounds = array<i64: 1, 4096, 80>}, {pipeline_mode = #tpu.pipeline_mode<synchronous>, transform_indices = @transform_1, window_bounds = array<i64: 80, 8>}, {pipeline_mode = #tpu.pipeline_mode<synchronous>, transform_indices = @transform_2, window_bounds = array<i64: 1, 8>}, {transform_indices = @transform_3, window_bounds = array<i64: 1, 4096, 8>}]} {
    %c0 = arith.constant 0 : index
    %c0_0 = arith.constant 0 : index
    %c0_1 = arith.constant 0 : index
    %0 = vector.load %arg1[%c0, %c0_0, %c0_1] : memref<1x4096x80xf32, #tpu.memory_space<vmem>>, vector<1x4096x80xf32>
    %1 = vector.shape_cast %0 : vector<1x4096x80xf32> to vector<4096x80xf32>
    %c0_2 = arith.constant 0 : index
    %c0_3 = arith.constant 0 : index
    %2 = vector.load %arg2[%c0_2, %c0_3] : memref<80x8xf32, #tpu.memory_space<vmem>>, vector<80x8xf32>
    %cst = arith.constant dense<0.000000e+00> : vector<4096x8xf32>
    %3 = tpu.matmul %1, %2, %cst {dimension_numbers = #tpu.dot_dimension_numbers<[1], [0], [0], [1], [0, 0, 1, 1], [], []>} : vector<4096x80xf32>, vector<80x8xf32>, vector<4096x8xf32> -> vector<4096x8xf32>
    %c0_4 = arith.constant 0 : index
    %c0_5 = arith.constant 0 : index
    %4 = vector.load %arg3[%c0_4, %c0_5] : memref<1x8xf32, #tpu.memory_space<vmem>>, vector<1x8xf32>
    %5 = vector.broadcast %4 : vector<1x8xf32> to vector<4096x8xf32>
    %6 = arith.addf %3, %5 : vector<4096x8xf32>
    %cst_6 = arith.constant 0.000000e+00 : f32
    %7 = vector.broadcast %cst_6 : f32 to vector<4096x8xf32>
    %8 = arith.maximumf %6, %7 : vector<4096x8xf32>
    %cst_7 = arith.constant dense<0.000000e+00> : vector<8xf32>
    %9 = vector.multi_reduction <add>, %8, %cst_7 [0] : vector<4096x8xf32> to vector<8xf32>
    %10 = vector.shape_cast %9 : vector<8xf32> to vector<1x8xf32>
    %cst_8 = arith.constant 4.096000e+03 : f32
    %11 = vector.broadcast %cst_8 : f32 to vector<1x8xf32>
    %12 = arith.divf %10, %11 : vector<1x8xf32>
    %13 = arith.mulf %8, %8 : vector<4096x8xf32>
    %cst_9 = arith.constant dense<0.000000e+00> : vector<8xf32>
    %14 = vector.multi_reduction <add>, %13, %cst_9 [0] : vector<4096x8xf32> to vector<8xf32>
    %15 = vector.shape_cast %14 : vector<8xf32> to vector<1x8xf32>
    %cst_10 = arith.constant 4.096000e+03 : f32
    %16 = vector.broadcast %cst_10 : f32 to vector<1x8xf32>
    %17 = arith.divf %15, %16 : vector<1x8xf32>
    %18 = arith.mulf %12, %12 : vector<1x8xf32>
    %19 = arith.subf %17, %18 : vector<1x8xf32>
    %20 = vector.broadcast %12 : vector<1x8xf32> to vector<4096x8xf32>
    %21 = arith.subf %8, %20 : vector<4096x8xf32>
    %cst_11 = arith.constant 9.99999974E-6 : f32
    %22 = vector.broadcast %cst_11 : f32 to vector<1x8xf32>
    %23 = arith.addf %19, %22 : vector<1x8xf32>
    %24 = math.rsqrt %23 : vector<1x8xf32>
    %25 = vector.broadcast %24 : vector<1x8xf32> to vector<4096x8xf32>
    %26 = arith.mulf %21, %25 : vector<4096x8xf32>
    %c0_12 = arith.constant 0 : index
    %c0_13 = arith.constant 0 : index
    %c0_14 = arith.constant 0 : index
    %27 = vector.load %arg4[%c0_12, %c0_13, %c0_14] : memref<1x4096x8xf32, #tpu.memory_space<vmem>>, vector<1x4096x8xf32>
    %28 = vector.shape_cast %27 : vector<1x4096x8xf32> to vector<4096x8xf32>
    %29 = vector.shape_cast %26 : vector<4096x8xf32> to vector<1x4096x8xf32>
    tpu.vector_store %arg4[%c0_12, %c0_13, %c0_14], %29 {strides = array<i32>} : memref<1x4096x8xf32, #tpu.memory_space<vmem>>, vector<1x4096x8xf32>,
    return
  }
  func.func @transform_0(%arg0: i32) -> (i32, i32, i32) {
    %c0_i32 = arith.constant 0 : i32
    %c0_i32_0 = arith.constant 0 : i32
    %c0_i32_1 = arith.constant 0 : i32
    return %arg0, %c0_i32, %c0_i32_0 : i32, i32, i32
  }
  func.func @transform_1(%arg0: i32) -> (i32, i32) {
    %c0_i32 = arith.constant 0 : i32
    %c0_i32_0 = arith.constant 0 : i32
    %c0_i32_1 = arith.constant 0 : i32
    return %c0_i32, %c0_i32_0 : i32, i32
  }
  func.func @transform_2(%arg0: i32) -> (i32, i32) {
    %c0_i32 = arith.constant 0 : i32
    %c0_i32_0 = arith.constant 0 : i32
    %c0_i32_1 = arith.constant 0 : i32
    return %c0_i32, %c0_i32_0 : i32, i32
  }
  func.func @transform_3(%arg0: i32) -> (i32, i32, i32) {
    %c0_i32 = arith.constant 0 : i32
    %c0_i32_0 = arith.constant 0 : i32
    %c0_i32_1 = arith.constant 0 : i32
    return %arg0, %c0_i32, %c0_i32_0 : i32, i32, i32
  }
}

</mosaic_0001>

<llo_original>
// kernel: conv_im2col_fused.1
$region0: #{conv_im2col_fused.1}
  #allocation0 [shape = 'u32[]', space=smem, size = 0x4, offset = 0x4, fixed_abs, tag = 'smem constant byte address 0x4 - core index']
  #allocation1 [shape = 'u32[144,128]{1,0:T(1,128)}', space=vmem, size = 0x12000, scoped, tag = 'internal scratch']
  %s0 = inlined_call_operand.vmem [shape: f32[2,4096,80], index: 0, kind: input, shape index: {}]
  %s1 = inlined_call_operand.vmem [shape: f32[80,8], index: 1, kind: input, shape index: {}]
  %s2 = inlined_call_operand.vmem [shape: f32[1,8], index: 2, kind: input, shape index: {}]
  %s3 = inlined_call_operand.vmem [shape: f32[2,4096,8], index: 3, kind: output, shape index: {}]
  %s4 = sld [smem:[#allocation0]]
  $region45: #{conv_im2col_fused.1} parent=0
    _
  %s6 = ssub.s32 1, %s4
  %s7 = scalar_select 0, %s6, %s4
  loop: start=0, step=1, limit=4
  $region2: #{conv_im2col_fused.1} parent=0 // loop_pre_header
    _
  $region3: #{conv_im2col_fused.1} parent=0 // loop_header
    %s9 = sphi 0, %s13
    %p10 = scmp.ge.s32.totalorder %s9, 4
    %s19 = sphi 0, %s21
    %s22 = sphi 0, %s19
    %s23 = sphi 0, %s22
    %s39 = sphi 0, %s23
    %s43 = sphi 0, %s43
    %s45 = sphi 0, %s43
    %s46 = sphi 0, %s45
    %s60 = sphi 0, %s46
    %s64 = sphi 0, %s64
    %s66 = sphi 0, %s64
    %s67 = sphi 0, %s66
    %s81 = sphi 0, %s67
    %s87 = sphi 0, %s89
    %s90 = sphi 0, %s87
    %s91 = sphi 0, %s90
    %s107 = sphi 0, %s91
  $region4: #{conv_im2col_fused.1} parent=0 // loop_header_branch
    %12 = sbr.rel (%p10) target = $region8
  $region5: #{conv_im2col_fused.1} parent=0 // loop_body
    %s14 = ssub.s32 %s9, 1
    %s15 = ssub.s32 %s9, 2
    %s16 = sadd.s32 %s9, 1
    %s17 = ssub.s32 %s9, %s16
    %p18 = scmp.eq.s32.totalorder %s17, 0
    %s20 = sadd.s32 %s19, 1
    %s21 = scalar_select %p18, %s19, %s20
    %p24 = pneg %p18
    %p25 = scmp.eq.s32.totalorder %s9, 1
    %p26 = por %p24, %p25
    %p27 = scmp.ne.s32.totalorder %s19, %s22
    %p28 = scmp.eq.s32.totalorder %s9, 0
    %p29 = por %p27, %p28
    %p30 = scmp.ne.s32.totalorder %s19, %s22
    %p31 = scmp.eq.s32.totalorder %s14, 1
    %p32 = por %p30, %p31
    %p33 = scmp.ne.s32.totalorder %s22, %s23
    %p34 = scmp.eq.s32.totalorder %s14, 0
    %p35 = por %p33, %p34
    %p36 = scmp.ne.s32.totalorder %s22, %s23
    %p37 = scmp.eq.s32.totalorder %s15, 1
    %p38 = por %p36, %p37
    %p40 = scmp.ne.s32.totalorder %s23, %s39
    %p41 = scmp.eq.s32.totalorder %s15, 0
    %p42 = por %p40, %p41
    %s44 = sadd.s32 %s43, 1
    %p47 = scmp.eq.s32.totalorder %s9, 1
    %p48 = scmp.ne.s32.totalorder %s43, %s45
    %p49 = scmp.eq.s32.totalorder %s9, 0
    %p50 = por %p48, %p49
    %p51 = scmp.ne.s32.totalorder %s43, %s45
    %p52 = scmp.eq.s32.totalorder %s14, 1
    %p53 = por %p51, %p52
    %p54 = scmp.ne.s32.totalorder %s45, %s46
    %p55 = scmp.eq.s32.totalorder %s14, 0
    %p56 = por %p54, %p55
    %p57 = scmp.ne.s32.totalorder %s45, %s46
    %p58 = scmp.eq.s32.totalorder %s15, 1
    %p59 = por %p57, %p58
    %p61 = scmp.ne.s32.totalorder %s46, %s60
    %p62 = scmp.eq.s32.totalorder %s15, 0
    %p63 = por %p61, %p62
    %s65 = sadd.s32 %s64, 1
    %p68 = scmp.eq.s32.totalorder %s9, 1
    %p69 = scmp.ne.s32.totalorder %s64, %s66
    %p70 = scmp.eq.s32.totalorder %s9, 0
    %p71 = por %p69, %p70
    %p72 = scmp.ne.s32.totalorder %s64, %s66
    %p73 = scmp.eq.s32.totalorder %s14, 1
    %p74 = por %p72, %p73
    %p75 = scmp.ne.s32.totalorder %s66, %s67
    %p76 = scmp.eq.s32.totalorder %s14, 0
    %p77 = por %p75, %p76
    %p78 = scmp.ne.s32.totalorder %s66, %s67
    %p79 = scmp.eq.s32.totalorder %s15, 1
    %p80 = por %p78, %p79
    %p82 = scmp.ne.s32.totalorder %s67, %s81
    %p83 = scmp.eq.s32.totalorder %s15, 0
    %p84 = por %p82, %p83
    %s85 = ssub.s32 %s9, %s16
    %p86 = scmp.eq.s32.totalorder %s85, 0
    %s88 = sadd.s32 %s87, 1
    %s89 = scalar_select %p86, %s87, %s88
    %p92 = pneg %p86
    %p93 = scmp.eq.s32.totalorder %s9, 1
    %p94 = por %p92, %p93
    %p95 = scmp.ne.s32.totalorder %s87, %s90
    %p96 = scmp.eq.s32.totalorder %s9, 0
    %p97 = por %p95, %p96
    %p98 = scmp.ne.s32.totalorder %s87, %s90
    %p99 = scmp.eq.s32.totalorder %s14, 1
    %p100 = por %p98, %p99
    %p101 = scmp.ne.s32.totalorder %s90, %s91
    %p102 = scmp.eq.s32.totalorder %s14, 0
    %p103 = por %p101, %p102
    %p104 = scmp.ne.s32.totalorder %s90, %s91
    %p105 = scmp.eq.s32.totalorder %s15, 1
    %p106 = por %p104, %p105
    %p108 = scmp.ne.s32.totalorder %s91, %s107
    %p109 = scmp.eq.s32.totalorder %s15, 0
    %p110 = por %p108, %p109
    %p111 = scmp.le.s32.totalorder 1, %s9
    %p112 = scmp.lt.s32.totalorder %s9, 3
    %p113 = pnand %p111, %p112
    %p114 = pneg %p113
    // Predicated region
    $region9: #{conv_im2col_fused.1} parent=5 // pred_check
      _
    $region10: #{conv_im2col_fused.1} parent=5 // pred_check_branch
      %116 = sbr.rel (%p113) target = $region12
    $region11: #{conv_im2col_fused.1} parent=5 // pred_region
      %s117 = ssub.s32 %s9, 1
      // Predicated region
      $region13: #{conv_im2col_fused.1} parent=11 // pred_check
        %p118 = pneg %p56
      $region14: #{conv_im2col_fused.1} parent=11 // pred_check_branch
        %120 = sbr.rel (%p118) target = $region16
      $region15: #{conv_im2col_fused.1} parent=11 // pred_region
        _
      $region16: #{conv_im2col_fused.1} parent=11 // pred_fallthru
        _
      // Predicated region
      $region17: #{conv_im2col_fused.1} parent=11 // pred_check
        %p121 = pneg %p77
      $region18: #{conv_im2col_fused.1} parent=11 // pred_check_branch
        %123 = sbr.rel (%p121) target = $region20
      $region19: #{conv_im2col_fused.1} parent=11 // pred_region
        _
      $region20: #{conv_im2col_fused.1} parent=11 // pred_fallthru
        _
    $region12: #{conv_im2col_fused.1} parent=5 // pred_fallthru
      _
    %p124 = scmp.lt.s32.totalorder %s9, 2
    // Predicated region
    $region21: #{conv_im2col_fused.1} parent=5 // pred_check
      %p125 = pneg %p124
    $region22: #{conv_im2col_fused.1} parent=5 // pred_check_branch
      %127 = sbr.rel (%p125) target = $region24
    $region23: #{conv_im2col_fused.1} parent=5 // pred_region
      // Predicated region
      $region25: #{conv_im2col_fused.1} parent=23 // pred_check
        %p128 = pneg %p29
      $region26: #{conv_im2col_fused.1} parent=23 // pred_check_branch
        %130 = sbr.rel (%p128) target = $region28
      $region27: #{conv_im2col_fused.1} parent=23 // pred_region
        %p131 = scmp.lt.s32.totalorder %s9, 1
        %s132 = scalar_select %p131, %s9, 1
        %s133 = smul.addr %s132, 512
        %s134 = smul.addr %s133, 8
        %s135 = scalar_lea.vmem %s0, %s134
      $region28: #{conv_im2col_fused.1} parent=23 // pred_fallthru
        _
    $region24: #{conv_im2col_fused.1} parent=5 // pred_fallthru
      _
    %p136 = scmp.le.s32.totalorder 1, %s9
    %p137 = scmp.lt.s32.totalorder %s9, 3
    %p138 = pnand %p136, %p137
    %p139 = pneg %p138
    // Predicated region
    $region29: #{conv_im2col_fused.1} parent=5 // pred_check
      _
    $region30: #{conv_im2col_fused.1} parent=5 // pred_check_branch
      %141 = sbr.rel (%p138) target = $region32
    $region31: #{conv_im2col_fused.1} parent=5 // pred_region
      %s142 = ssub.s32 %s9, 1
      %p143 = scmp.lt.s32.totalorder %s14, 1
      %s144 = scalar_select %p143, %s14, 1
      %s145 = smul.addr %s144, 512
      %s146 = smul.addr %s145, 8
      %s147 = scalar_lea.vmem %s0, %s146
      %p148 = pneg %p35
      %p149 = pneg %p32
      %p150 = pneg %p56
      %p151 = pneg %p53
      %p152 = pneg %p77
      %p153 = pneg %p74
      %p154 = pneg %p103
      %p155 = pneg %p100
      %p156 = scmp.lt.s32.totalorder %s14, 1
      %s157 = scalar_select %p156, %s14, 1
      %s158 = smul.addr %s157, 512
      %s159 = smul.addr %s158, 8
      %s160 = scalar_lea.vmem %s3, %s159
      %p161 = scmp.lt.s32.totalorder %s14, 1
      %s162 = scalar_select %p161, %s14, 1
      %s163 = smul.addr %s162, 512
      %s164 = smul.addr %s163, 8
      %s165 = scalar_lea.vmem %s0, %s164
      %p166 = scmp.lt.s32.totalorder %s14, 1
      %s167 = scalar_select %p166, %s14, 1
      %s168 = smul.addr %s167, 512
      %s169 = smul.addr %s168, 8
      %s170 = scalar_lea.vmem %s3, %s169
      %v171 = vld [vmem:[%s165] sm:$0xff]
      %v172 = vld [vmem:[%s165 + $0x8] sm:$0xff]
      %v173 = vld [vmem:[%s165 + $0x10] sm:$0xff]
      %v174 = vld [vmem:[%s165 + $0x18] sm:$0xff]
      %v175 = vld [vmem:[%s165 + $0x20] sm:$0xff]
      %v176 = vld [vmem:[%s165 + $0x28] sm:$0xff]
      %v177 = vld [vmem:[%s165 + $0x30] sm:$0xff]
      %v178 = vld [vmem:[%s165 + $0x38] sm:$0xff]
      %v179 = vld [vmem:[%s165 + $0x40] sm:$0xff]
      %v180 = vld [vmem:[%s165 + $0x48] sm:$0xff]
      %v181 = vld [vmem:[%s165 + $0x50] sm:$0xff]
      %v182 = vld [vmem:[%s165 + $0x58] sm:$0xff]
      %v183 = vld [vmem:[%s165 + $0x60] sm:$0xff]
      %v184 = vld [vmem:[%s165 + $0x68] sm:$0xff]
      %v185 = vld [vmem:[%s165 + $0x70] sm:$0xff]
      %v186 = vld [vmem:[%s165 + $0x78] sm:$0xff]
      %v187 = vld [vmem:[%s165 + $0x80] sm:$0xff]
      %v188 = vld [vmem:[%s165 + $0x88] sm:$0xff]
      %v189 = vld [vmem:[%s165 + $0x90] sm:$0xff]
      %v190 = vld [vmem:[%s165 + $0x98] sm:$0xff]
      %v191 = vld [vmem:[%s165 + $0xa0] sm:$0xff]
      %v192 = vld [vmem:[%s165 + $0xa8] sm:$0xff]
      %v193 = vld [vmem:[%s165 + $0xb0] sm:$0xff]
      %v194 = vld [vmem:[%s165 + $0xb8] sm:$0xff]
      %v195 = vld [vmem:[%s165 + $0xc0] sm:$0xff]
      %v196 = vld [vmem:[%s165 + $0xc8] sm:$0xff]
      %v197 = vld [vmem:[%s165 + $0xd0] sm:$0xff]
      %v198 = vld [vmem:[%s165 + $0xd8] sm:$0xff]
      %v199 = vld [vmem:[%s165 + $0xe0] sm:$0xff]
      %v200 = vld [vmem:[%s165 + $0xe8] sm:$0xff]
      %v201 = vld [vmem:[%s165 + $0xf0] sm:$0xff]
      %v202 = vld [vmem:[%s165 + $0xf8] sm:$0xff]
      %v203 = vld [vmem:[%s165 + $0x100] sm:$0xff]
      %v204 = vld [vmem:[%s165 + $0x108] sm:$0xff]
      %v205 = vld [vmem:[%s165 + $0x110] sm:$0xff]
      %v206 = vld [vmem:[%s165 + $0x118] sm:$0xff]
      %v207 = vld [vmem:[%s165 + $0x120] sm:$0xff]
      %v208 = vld [vmem:[%s165 + $0x128] sm:$0xff]
      %v209 = vld [vmem:[%s165 + $0x130] sm:$0xff]
      %v210 = vld [vmem:[%s165 + $0x138] sm:$0xff]
      %v211 = vld [vmem:[%s165 + $0x140] sm:$0xff]
      %v212 = vld [vmem:[%s165 + $0x148] sm:$0xff]
      %v213 = vld [vmem:[%s165 + $0x150] sm:$0xff]
      %v214 = vld [vmem:[%s165 + $0x158] sm:$0xff]
      %v215 = vld [vmem:[%s165 + $0x160] sm:$0xff]
      %v216 = vld [vmem:[%s165 + $0x168] sm:$0xff]
      %v217 = vld [vmem:[%s165 + $0x170] sm:$0xff]
      %v218 = vld [vmem:[%s165 + $0x178] sm:$0xff]
      %v219 = vld [vmem:[%s165 + $0x180] sm:$0xff]
      %v220 = vld [vmem:[%s165 + $0x188] sm:$0xff]
      %v221 = vld [vmem:[%s165 + $0x190] sm:$0xff]
      %v222 = vld [vmem:[%s165 + $0x198] sm:$0xff]
      %v223 = vld [vmem:[%s165 + $0x1a0] sm:$0xff]
      %v224 = vld [vmem:[%s165 + $0x1a8] sm:$0xff]
      %v225 = vld [vmem:[%s165 + $0x1b0] sm:$0xff]
      %v226 = vld [vmem:[%s165 + $0x1b8] sm:$0xff]
      %v227 = vld [vmem:[%s165 + $0x1c0] sm:$0xff]
      %v228 = vld [vmem:[%s165 + $0x1c8] sm:$0xff]
      %v229 = vld [vmem:[%s165 + $0x1d0] sm:$0xff]
      %v230 = vld [vmem:[%s165 + $0x1d8] sm:$0xff]
      %v231 = vld [vmem:[%s165 + $0x1e0] sm:$0xff]
      %v232 = vld [vmem:[%s165 + $0x1e8] sm:$0xff]
      %v233 = vld [vmem:[%s165 + $0x1f0] sm:$0xff]
      %v234 = vld [vmem:[%s165 + $0x1f8] sm:$0xff]
      %v235 = vld [vmem:[%s165 + $0x200] sm:$0xff]
      %v236 = vld [vmem:[%s165 + $0x208] sm:$0xff]
      %v237 = vld [vmem:[%s165 + $0x210] sm:$0xff]
      %v238 = vld [vmem:[%s165 + $0x218] sm:$0xff]
      %v239 = vld [vmem:[%s165 + $0x220] sm:$0xff]
      %v240 = vld [vmem:[%s165 + $0x228] sm:$0xff]
      %v241 = vld [vmem:[%s165 + $0x230] sm:$0xff]
      %v242 = vld [vmem:[%s165 + $0x238] sm:$0xff]
      %v243 = vld [vmem:[%s165 + $0x240] sm:$0xff]
      %v244 = vld [vmem:[%s165 + $0x248] sm:$0xff]
      %v245 = vld [vmem:[%s165 + $0x250] sm:$0xff]
      %v246 = vld [vmem:[%s165 + $0x258] sm:$0xff]
      %v247 = vld [vmem:[%s165 + $0x260] sm:$0xff]
      %v248 = vld [vmem:[%s165 + $0x268] sm:$0xff]
      %v249 = vld [vmem:[%s165 + $0x270] sm:$0xff]
      %v250 = vld [vmem:[%s165 + $0x278] sm:$0xff]
      %v251 = vld [vmem:[%s165 + $0x280] sm:$0xff]
      %v252 = vld [vmem:[%s165 + $0x288] sm:$0xff]
      %v253 = vld [vmem:[%s165 + $0x290] sm:$0xff]
      %v254 = vld [vmem:[%s165 + $0x298] sm:$0xff]
      %v255 = vld [vmem:[%s165 + $0x2a0] sm:$0xff]
      %v256 = vld [vmem:[%s165 + $0x2a8] sm:$0xff]
      %v257 = vld [vmem:[%s165 + $0x2b0] sm:$0xff]
      %v258 = vld [vmem:[%s165 + $0x2b8] sm:$0xff]
      %v259 = vld [vmem:[%s165 + $0x2c0] sm:$0xff]
      %v260 = vld [vmem:[%s165 + $0x2c8] sm:$0xff]
      %v261 = vld [vmem:[%s165 + $0x2d0] sm:$0xff]
      %v262 = vld [vmem:[%s165 + $0x2d8] sm:$0xff]
      %v263 = vld [vmem:[%s165 + $0x2e0] sm:$0xff]
      %v264 = vld [vmem:[%s165 + $0x2e8] sm:$0xff]
      %v265 = vld [vmem:[%s165 + $0x2f0] sm:$0xff]
      %v266 = vld [vmem:[%s165 + $0x2f8] sm:$0xff]
      %v267 = vld [vmem:[%s165 + $0x300] sm:$0xff]
      %v268 = vld [vmem:[%s165 + $0x308] sm:$0xff]
      %v269 = vld [vmem:[%s165 + $0x310] sm:$0xff]
      %v270 = vld [vmem:[%s165 + $0x318] sm:$0xff]
      %v271 = vld [vmem:[%s165 + $0x320] sm:$0xff]
      %v272 = vld [vmem:[%s165 + $0x328] sm:$0xff]
      %v273 = vld [vmem:[%s165 + $0x330] sm:$0xff]
      %v274 = vld [vmem:[%s165 + $0x338] sm:$0xff]
      %v275 = vld [vmem:[%s165 + $0x340] sm:$0xff]
      %v276 = vld [vmem:[%s165 + $0x348] sm:$0xff]
      %v277 = vld [vmem:[%s165 + $0x350] sm:$0xff]
      %v278 = vld [vmem:[%s165 + $0x358] sm:$0xff]
      %v279 = vld [vmem:[%s165 + $0x360] sm:$0xff]
      %v280 = vld [vmem:[%s165 + $0x368] sm:$0xff]
      %v281 = vld [vmem:[%s165 + $0x370] sm:$0xff]
      %v282 = vld [vmem:[%s165 + $0x378] sm:$0xff]
      %v283 = vld [vmem:[%s165 + $0x380] sm:$0xff]
      %v284 = vld [vmem:[%s165 + $0x388] sm:$0xff]
      %v285 = vld [vmem:[%s165 + $0x390] sm:$0xff]
      %v286 = vld [vmem:[%s165 + $0x398] sm:$0xff]
      %v287 = vld [vmem:[%s165 + $0x3a0] sm:$0xff]
      %v288 = vld [vmem:[%s165 + $0x3a8] sm:$0xff]
      %v289 = vld [vmem:[%s165 + $0x3b0] sm:$0xff]
      %v290 = vld [vmem:[%s165 + $0x3b8] sm:$0xff]
      %v291 = vld [vmem:[%s165 + $0x3c0] sm:$0xff]
      %v292 = vld [vmem:[%s165 + $0x3c8] sm:$0xff]
      %v293 = vld [vmem:[%s165 + $0x3d0] sm:$0xff]
      %v294 = vld [vmem:[%s165 + $0x3d8] sm:$0xff]
      %v295 = vld [vmem:[%s165 + $0x3e0] sm:$0xff]
      %v296 = vld [vmem:[%s165 + $0x3e8] sm:$0xff]
      %v297 = vld [vmem:[%s165 + $0x3f0] sm:$0xff]
      %v298 = vld [vmem:[%s165 + $0x3f8] sm:$0xff]
      %v299 = vld [vmem:[%s165 + $0x400] sm:$0xff]
      %v300 = vld [vmem:[%s165 + $0x408] sm:$0xff]
      %v301 = vld [vmem:[%s165 + $0x410] sm:$0xff]
      %v302 = vld [vmem:[%s165 + $0x418] sm:$0xff]
      %v303 = vld [vmem:[%s165 + $0x420] sm:$0xff]
      %v304 = vld [vmem:[%s165 + $0x428] sm:$0xff]
      %v305 = vld [vmem:[%s165 + $0x430] sm:$0xff]
      %v306 = vld [vmem:[%s165 + $0x438] sm:$0xff]
      %v307 = vld [vmem:[%s165 + $0x440] sm:$0xff]
      %v308 = vld [vmem:[%s165 + $0x448] sm:$0xff]
      %v309 = vld [vmem:[%s165 + $0x450] sm:$0xff]
      %v310 = vld [vmem:[%s165 + $0x458] sm:$0xff]
      %v311 = vld [vmem:[%s165 + $0x460] sm:$0xff]
      %v312 = vld [vmem:[%s165 + $0x468] sm:$0xff]
      %v313 = vld [vmem:[%s165 + $0x470] sm:$0xff]
      %v314 = vld [vmem:[%s165 + $0x478] sm:$0xff]
      %v315 = vld [vmem:[%s165 + $0x480] sm:$0xff]
      %v316 = vld [vmem:[%s165 + $0x488] sm:$0xff]
      %v317 = vld [vmem:[%s165 + $0x490] sm:$0xff]
      %v318 = vld [vmem:[%s165 + $0x498] sm:$0xff]
      %v319 = vld [vmem:[%s165 + $0x4a0] sm:$0xff]
      %v320 = vld [vmem:[%s165 + $0x4a8] sm:$0xff]
      %v321 = vld [vmem:[%s165 + $0x4b0] sm:$0xff]
      %v322 = vld [vmem:[%s165 + $0x4b8] sm:$0xff]
      %v323 = vld [vmem:[%s165 + $0x4c0] sm:$0xff]
      %v324 = vld [vmem:[%s165 + $0x4c8] sm:$0xff]
      %v325 = vld [vmem:[%s165 + $0x4d0] sm:$0xff]
      %v326 = vld [vmem:[%s165 + $0x4d8] sm:$0xff]
      %v327 = vld [vmem:[%s165 + $0x4e0] sm:$0xff]
      %v328 = vld [vmem:[%s165 + $0x4e8] sm:$0xff]
      %v329 = vld [vmem:[%s165 + $0x4f0] sm:$0xff]
      %v330 = vld [vmem:[%s165 + $0x4f8] sm:$0xff]
      %v331 = vld [vmem:[%s165 + $0x500] sm:$0xff]
      %v332 = vld [vmem:[%s165 + $0x508] sm:$0xff]
      %v333 = vld [vmem:[%s165 + $0x510] sm:$0xff]
      %v334 = vld [vmem:[%s165 + $0x518] sm:$0xff]
      %v335 = vld [vmem:[%s165 + $0x520] sm:$0xff]
      %v336 = vld [vmem:[%s165 + $0x528] sm:$0xff]
      %v337 = vld [vmem:[%s165 + $0x530] sm:$0xff]
      %v338 = vld [vmem:[%s165 + $0x538] sm:$0xff]
      %v339 = vld [vmem:[%s165 + $0x540] sm:$0xff]
      %v340 = vld [vmem:[%s165 + $0x548] sm:$0xff]
      %v341 = vld [vmem:[%s165 + $0x550] sm:$0xff]
      %v342 = vld [vmem:[%s165 + $0x558] sm:$0xff]
      %v343 = vld [vmem:[%s165 + $0x560] sm:$0xff]
      %v344 = vld [vmem:[%s165 + $0x568] sm:$0xff]
      %v345 = vld [vmem:[%s165 + $0x570] sm:$0xff]
      %v346 = vld [vmem:[%s165 + $0x578] sm:$0xff]
      %v347 = vld [vmem:[%s165 + $0x580] sm:$0xff]
      %v348 = vld [vmem:[%s165 + $0x588] sm:$0xff]
      %v349 = vld [vmem:[%s165 + $0x590] sm:$0xff]
      %v350 = vld [vmem:[%s165 + $0x598] sm:$0xff]
      %v351 = vld [vmem:[%s165 + $0x5a0] sm:$0xff]
      %v352 = vld [vmem:[%s165 + $0x5a8] sm:$0xff]
      %v353 = vld [vmem:[%s165 + $0x5b0] sm:$0xff]
      %v354 = vld [vmem:[%s165 + $0x5b8] sm:$0xff]
      %v355 = vld [vmem:[%s165 + $0x5c0] sm:$0xff]
      %v356 = vld [vmem:[%s165 + $0x5c8] sm:$0xff]
      %v357 = vld [vmem:[%s165 + $0x5d0] sm:$0xff]
      %v358 = vld [vmem:[%s165 + $0x5d8] sm:$0xff]
      %v359 = vld [vmem:[%s165 + $0x5e0] sm:$0xff]
      %v360 = vld [vmem:[%s165 + $0x5e8] sm:$0xff]
      %v361 = vld [vmem:[%s165 + $0x5f0] sm:$0xff]
      %v362 = vld [vmem:[%s165 + $0x5f8] sm:$0xff]
      %v363 = vld [vmem:[%s165 + $0x600] sm:$0xff]
      %v364 = vld [vmem:[%s165 + $0x608] sm:$0xff]
      %v365 = vld [vmem:[%s165 + $0x610] sm:$0xff]
      %v366 = vld [vmem:[%s165 + $0x618] sm:$0xff]
      %v367 = vld [vmem:[%s165 + $0x620] sm:$0xff]
      %v368 = vld [vmem:[%s165 + $0x628] sm:$0xff]
      %v369 = vld [vmem:[%s165 + $0x630] sm:$0xff]
      %v370 = vld [vmem:[%s165 + $0x638] sm:$0xff]
      %v371 = vld [vmem:[%s165 + $0x640] sm:$0xff]
      %v372 = vld [vmem:[%s165 + $0x648] sm:$0xff]
      %v373 = vld [vmem:[%s165 + $0x650] sm:$0xff]
      %v374 = vld [vmem:[%s165 + $0x658] sm:$0xff]
      %v375 = vld [vmem:[%s165 + $0x660] sm:$0xff]
      %v376 = vld [vmem:[%s165 + $0x668] sm:$0xff]
      %v377 = vld [vmem:[%s165 + $0x670] sm:$0xff]
      %v378 = vld [vmem:[%s165 + $0x678] sm:$0xff]
      %v379 = vld [vmem:[%s165 + $0x680] sm:$0xff]
      %v380 = vld [vmem:[%s165 + $0x688] sm:$0xff]
      %v381 = vld [vmem:[%s165 + $0x690] sm:$0xff]
      %v382 = vld [vmem:[%s165 + $0x698] sm:$0xff]
      %v383 = vld [vmem:[%s165 + $0x6a0] sm:$0xff]
      %v384 = vld [vmem:[%s165 + $0x6a8] sm:$0xff]
      %v385 = vld [vmem:[%s165 + $0x6b0] sm:$0xff]
      %v386 = vld [vmem:[%s165 + $0x6b8] sm:$0xff]
      %v387 = vld [vmem:[%s165 + $0x6c0] sm:$0xff]
      %v388 = vld [vmem:[%s165 + $0x6c8] sm:$0xff]
      %v389 = vld [vmem:[%s165 + $0x6d0] sm:$0xff]
      %v390 = vld [vmem:[%s165 + $0x6d8] sm:$0xff]
      %v391 = vld [vmem:[%s165 + $0x6e0] sm:$0xff]
      %v392 = vld [vmem:[%s165 + $0x6e8] sm:$0xff]
      %v393 = vld [vmem:[%s165 + $0x6f0] sm:$0xff]
      %v394 = vld [vmem:[%s165 + $0x6f8] sm:$0xff]
      %v395 = vld [vmem:[%s165 + $0x700] sm:$0xff]
      %v396 = vld [vmem:[%s165 + $0x708] sm:$0xff]
      %v397 = vld [vmem:[%s165 + $0x710] sm:$0xff]
      %v398 = vld [vmem:[%s165 + $0x718] sm:$0xff]
      %v399 = vld [vmem:[%s165 + $0x720] sm:$0xff]
      %v400 = vld [vmem:[%s165 + $0x728] sm:$0xff]
      %v401 = vld [vmem:[%s165 + $0x730] sm:$0xff]
      %v402 = vld [vmem:[%s165 + $0x738] sm:$0xff]
      %v403 = vld [vmem:[%s165 + $0x740] sm:$0xff]
      %v404 = vld [vmem:[%s165 + $0x748] sm:$0xff]
      %v405 = vld [vmem:[%s165 + $0x750] sm:$0xff]
      %v406 = vld [vmem:[%s165 + $0x758] sm:$0xff]
      %v407 = vld [vmem:[%s165 + $0x760] sm:$0xff]
      %v408 = vld [vmem:[%s165 + $0x768] sm:$0xff]
      %v409 = vld [vmem:[%s165 + $0x770] sm:$0xff]
      %v410 = vld [vmem:[%s165 + $0x778] sm:$0xff]
      %v411 = vld [vmem:[%s165 + $0x780] sm:$0xff]
      %v412 = vld [vmem:[%s165 + $0x788] sm:$0xff]
      %v413 = vld [vmem:[%s165 + $0x790] sm:$0xff]
      %v414 = vld [vmem:[%s165 + $0x798] sm:$0xff]
      %v415 = vld [vmem:[%s165 + $0x7a0] sm:$0xff]
      %v416 = vld [vmem:[%s165 + $0x7a8] sm:$0xff]
      %v417 = vld [vmem:[%s165 + $0x7b0] sm:$0xff]
      %v418 = vld [vmem:[%s165 + $0x7b8] sm:$0xff]
      %v419 = vld [vmem:[%s165 + $0x7c0] sm:$0xff]
      %v420 = vld [vmem:[%s165 + $0x7c8] sm:$0xff]
      %v421 = vld [vmem:[%s165 + $0x7d0] sm:$0xff]
      %v422 = vld [vmem:[%s165 + $0x7d8] sm:$0xff]
      %v423 = vld [vmem:[%s165 + $0x7e0] sm:$0xff]
      %v424 = vld [vmem:[%s165 + $0x7e8] sm:$0xff]
      %v425 = vld [vmem:[%s165 + $0x7f0] sm:$0xff]
      %v426 = vld [vmem:[%s165 + $0x7f8] sm:$0xff]
      %v427 = vld [vmem:[%s165 + $0x800] sm:$0xff]
      %v428 = vld [vmem:[%s165 + $0x808] sm:$0xff]
      %v429 = vld [vmem:[%s165 + $0x810] sm:$0xff]
      %v430 = vld [vmem:[%s165 + $0x818] sm:$0xff]
      %v431 = vld [vmem:[%s165 + $0x820] sm:$0xff]
      %v432 = vld [vmem:[%s165 + $0x828] sm:$0xff]
      %v433 = vld [vmem:[%s165 + $0x830] sm:$0xff]
      %v434 = vld [vmem:[%s165 + $0x838] sm:$0xff]
      %v435 = vld [vmem:[%s165 + $0x840] sm:$0xff]
      %v436 = vld [vmem:[%s165 + $0x848] sm:$0xff]
      %v437 = vld [vmem:[%s165 + $0x850] sm:$0xff]
      %v438 = vld [vmem:[%s165 + $0x858] sm:$0xff]
      %v439 = vld [vmem:[%s165 + $0x860] sm:$0xff]
      %v440 = vld [vmem:[%s165 + $0x868] sm:$0xff]
      %v441 = vld [vmem:[%s165 + $0x870] sm:$0xff]
      %v442 = vld [vmem:[%s165 + $0x878] sm:$0xff]
      %v443 = vld [vmem:[%s165 + $0x880] sm:$0xff]
      %v444 = vld [vmem:[%s165 + $0x888] sm:$0xff]
      %v445 = vld [vmem:[%s165 + $0x890] sm:$0xff]
      %v446 = vld [vmem:[%s165 + $0x898] sm:$0xff]
      %v447 = vld [vmem:[%s165 + $0x8a0] sm:$0xff]
      %v448 = vld [vmem:[%s165 + $0x8a8] sm:$0xff]
      %v449 = vld [vmem:[%s165 + $0x8b0] sm:$0xff]
      %v450 = vld [vmem:[%s165 + $0x8b8] sm:$0xff]
      %v451 = vld [vmem:[%s165 + $0x8c0] sm:$0xff]
      %v452 = vld [vmem:[%s165 + $0x8c8] sm:$0xff]
      %v453 = vld [vmem:[%s165 + $0x8d0] sm:$0xff]
      %v454 = vld [vmem:[%s165 + $0x8d8] sm:$0xff]
      %v455 = vld [vmem:[%s165 + $0x8e0] sm:$0xff]
      %v456 = vld [vmem:[%s165 + $0x8e8] sm:$0xff]
      %v457 = vld [vmem:[%s165 + $0x8f0] sm:$0xff]
      %v458 = vld [vmem:[%s165 + $0x8f8] sm:$0xff]
      %v459 = vld [vmem:[%s165 + $0x900] sm:$0xff]
      %v460 = vld [vmem:[%s165 + $0x908] sm:$0xff]
      %v461 = vld [vmem:[%s165 + $0x910] sm:$0xff]
      %v462 = vld [vmem:[%s165 + $0x918] sm:$0xff]
      %v463 = vld [vmem:[%s165 + $0x920] sm:$0xff]
      %v464 = vld [vmem:[%s165 + $0x928] sm:$0xff]
      %v465 = vld [vmem:[%s165 + $0x930] sm:$0xff]
      %v466 = vld [vmem:[%s165 + $0x938] sm:$0xff]
      %v467 = vld [vmem:[%s165 + $0x940] sm:$0xff]
      %v468 = vld [vmem:[%s165 + $0x948] sm:$0xff]
      %v469 = vld [vmem:[%s165 + $0x950] sm:$0xff]
      %v470 = vld [vmem:[%s165 + $0x958] sm:$0xff]
      %v471 = vld [vmem:[%s165 + $0x960] sm:$0xff]
      %v472 = vld [vmem:[%s165 + $0x968] sm:$0xff]
      %v473 = vld [vmem:[%s165 + $0x970] sm:$0xff]
      %v474 = vld [vmem:[%s165 + $0x978] sm:$0xff]
      %v475 = vld [vmem:[%s165 + $0x980] sm:$0xff]
      %v476 = vld [vmem:[%s165 + $0x988] sm:$0xff]
      %v477 = vld [vmem:[%s165 + $0x990] sm:$0xff]
      %v478 = vld [vmem:[%s165 + $0x998] sm:$0xff]
      %v479 = vld [vmem:[%s165 + $0x9a0] sm:$0xff]
      %v480 = vld [vmem:[%s165 + $0x9a8] sm:$0xff]
      %v481 = vld [vmem:[%s165 + $0x9b0] sm:$0xff]
      %v482 = vld [vmem:[%s165 + $0x9b8] sm:$0xff]
      %v483 = vld [vmem:[%s165 + $0x9c0] sm:$0xff]
      %v484 = vld [vmem:[%s165 + $0x9c8] sm:$0xff]
      %v485 = vld [vmem:[%s165 + $0x9d0] sm:$0xff]
      %v486 = vld [vmem:[%s165 + $0x9d8] sm:$0xff]
      %v487 = vld [vmem:[%s165 + $0x9e0] sm:$0xff]
      %v488 = vld [vmem:[%s165 + $0x9e8] sm:$0xff]
      %v489 = vld [vmem:[%s165 + $0x9f0] sm:$0xff]
      %v490 = vld [vmem:[%s165 + $0x9f8] sm:$0xff]
      %v491 = vld [vmem:[%s165 + $0xa00] sm:$0xff]
      %v492 = vld [vmem:[%s165 + $0xa08] sm:$0xff]
      %v493 = vld [vmem:[%s165 + $0xa10] sm:$0xff]
      %v494 = vld [vmem:[%s165 + $0xa18] sm:$0xff]
      %v495 = vld [vmem:[%s165 + $0xa20] sm:$0xff]
      %v496 = vld [vmem:[%s165 + $0xa28] sm:$0xff]
      %v497 = vld [vmem:[%s165 + $0xa30] sm:$0xff]
      %v498 = vld [vmem:[%s165 + $0xa38] sm:$0xff]
      %v499 = vld [vmem:[%s165 + $0xa40] sm:$0xff]
      %v500 = vld [vmem:[%s165 + $0xa48] sm:$0xff]
      %v501 = vld [vmem:[%s165 + $0xa50] sm:$0xff]
      %v502 = vld [vmem:[%s165 + $0xa58] sm:$0xff]
      %v503 = vld [vmem:[%s165 + $0xa60] sm:$0xff]
      %v504 = vld [vmem:[%s165 + $0xa68] sm:$0xff]
      %v505 = vld [vmem:[%s165 + $0xa70] sm:$0xff]
      %v506 = vld [vmem:[%s165 + $0xa78] sm:$0xff]
      %v507 = vld [vmem:[%s165 + $0xa80] sm:$0xff]
      %v508 = vld [vmem:[%s165 + $0xa88] sm:$0xff]
      %v509 = vld [vmem:[%s165 + $0xa90] sm:$0xff]
      %v510 = vld [vmem:[%s165 + $0xa98] sm:$0xff]
      %v511 = vld [vmem:[%s165 + $0xaa0] sm:$0xff]
      %v512 = vld [vmem:[%s165 + $0xaa8] sm:$0xff]
      %v513 = vld [vmem:[%s165 + $0xab0] sm:$0xff]
      %v514 = vld [vmem:[%s165 + $0xab8] sm:$0xff]
      %v515 = vld [vmem:[%s165 + $0xac0] sm:$0xff]
      %v516 = vld [vmem:[%s165 + $0xac8] sm:$0xff]
      %v517 = vld [vmem:[%s165 + $0xad0] sm:$0xff]
      %v518 = vld [vmem:[%s165 + $0xad8] sm:$0xff]
      %v519 = vld [vmem:[%s165 + $0xae0] sm:$0xff]
      %v520 = vld [vmem:[%s165 + $0xae8] sm:$0xff]
      %v521 = vld [vmem:[%s165 + $0xaf0] sm:$0xff]
      %v522 = vld [vmem:[%s165 + $0xaf8] sm:$0xff]
      %v523 = vld [vmem:[%s165 + $0xb00] sm:$0xff]
      %v524 = vld [vmem:[%s165 + $0xb08] sm:$0xff]
      %v525 = vld [vmem:[%s165 + $0xb10] sm:$0xff]
      %v526 = vld [vmem:[%s165 + $0xb18] sm:$0xff]
      %v527 = vld [vmem:[%s165 + $0xb20] sm:$0xff]
      %v528 = vld [vmem:[%s165 + $0xb28] sm:$0xff]
      %v529 = vld [vmem:[%s165 + $0xb30] sm:$0xff]
      %v530 = vld [vmem:[%s165 + $0xb38] sm:$0xff]
      %v531 = vld [vmem:[%s165 + $0xb40] sm:$0xff]
      %v532 = vld [vmem:[%s165 + $0xb48] sm:$0xff]
      %v533 = vld [vmem:[%s165 + $0xb50] sm:$0xff]
      %v534 = vld [vmem:[%s165 + $0xb58] sm:$0xff]
      %v535 = vld [vmem:[%s165 + $0xb60] sm:$0xff]
      %v536 = vld [vmem:[%s165 + $0xb68] sm:$0xff]
      %v537 = vld [vmem:[%s165 + $0xb70] sm:$0xff]
      %v538 = vld [vmem:[%s165 + $0xb78] sm:$0xff]
      %v539 = vld [vmem:[%s165 + $0xb80] sm:$0xff]
      %v540 = vld [vmem:[%s165 + $0xb88] sm:$0xff]
      %v541 = vld [vmem:[%s165 + $0xb90] sm:$0xff]
      %v542 = vld [vmem:[%s165 + $0xb98] sm:$0xff]
      %v543 = vld [vmem:[%s165 + $0xba0] sm:$0xff]
      %v544 = vld [vmem:[%s165 + $0xba8] sm:$0xff]
      %v545 = vld [vmem:[%s165 + $0xbb0] sm:$0xff]
      %v546 = vld [vmem:[%s165 + $0xbb8] sm:$0xff]
      %v547 = vld [vmem:[%s165 + $0xbc0] sm:$0xff]
      %v548 = vld [vmem:[%s165 + $0xbc8] sm:$0xff]
      %v549 = vld [vmem:[%s165 + $0xbd0] sm:$0xff]
      %v550 = vld [vmem:[%s165 + $0xbd8] sm:$0xff]
      %v551 = vld [vmem:[%s165 + $0xbe0] sm:$0xff]
      %v552 = vld [vmem:[%s165 + $0xbe8] sm:$0xff]
      %v553 = vld [vmem:[%s165 + $0xbf0] sm:$0xff]
      %v554 = vld [vmem:[%s165 + $0xbf8] sm:$0xff]
      %v555 = vld [vmem:[%s165 + $0xc00] sm:$0xff]
      %v556 = vld [vmem:[%s165 + $0xc08] sm:$0xff]
      %v557 = vld [vmem:[%s165 + $0xc10] sm:$0xff]
      %v558 = vld [vmem:[%s165 + $0xc18] sm:$0xff]
      %v559 = vld [vmem:[%s165 + $0xc20] sm:$0xff]
      %v560 = vld [vmem:[%s165 + $0xc28] sm:$0xff]
      %v561 = vld [vmem:[%s165 + $0xc30] sm:$0xff]
      %v562 = vld [vmem:[%s165 + $0xc38] sm:$0xff]
      %v563 = vld [vmem:[%s165 + $0xc40] sm:$0xff]
      %v564 = vld [vmem:[%s165 + $0xc48] sm:$0xff]
      %v565 = vld [vmem:[%s165 + $0xc50] sm:$0xff]
      %v566 = vld [vmem:[%s165 + $0xc58] sm:$0xff]
      %v567 = vld [vmem:[%s165 + $0xc60] sm:$0xff]
      %v568 = vld [vmem:[%s165 + $0xc68] sm:$0xff]
      %v569 = vld [vmem:[%s165 + $0xc70] sm:$0xff]
      %v570 = vld [vmem:[%s165 + $0xc78] sm:$0xff]
      %v571 = vld [vmem:[%s165 + $0xc80] sm:$0xff]
      %v572 = vld [vmem:[%s165 + $0xc88] sm:$0xff]
      %v573 = vld [vmem:[%s165 + $0xc90] sm:$0xff]
      %v574 = vld [vmem:[%s165 + $0xc98] sm:$0xff]
      %v575 = vld [vmem:[%s165 + $0xca0] sm:$0xff]
      %v576 = vld [vmem:[%s165 + $0xca8] sm:$0xff]
      %v577 = vld [vmem:[%s165 + $0xcb0] sm:$0xff]
      %v578 = vld [vmem:[%s165 + $0xcb8] sm:$0xff]
      %v579 = vld [vmem:[%s165 + $0xcc0] sm:$0xff]
      %v580 = vld [vmem:[%s165 + $0xcc8] sm:$0xff]
      %v581 = vld [vmem:[%s165 + $0xcd0] sm:$0xff]
      %v582 = vld [vmem:[%s165 + $0xcd8] sm:$0xff]
      %v583 = vld [vmem:[%s165 + $0xce0] sm:$0xff]
      %v584 = vld [vmem:[%s165 + $0xce8] sm:$0xff]
      %v585 = vld [vmem:[%s165 + $0xcf0] sm:$0xff]
      %v586 = vld [vmem:[%s165 + $0xcf8] sm:$0xff]
      %v587 = vld [vmem:[%s165 + $0xd00] sm:$0xff]
      %v588 = vld [vmem:[%s165 + $0xd08] sm:$0xff]
      %v589 = vld [vmem:[%s165 + $0xd10] sm:$0xff]
      %v590 = vld [vmem:[%s165 + $0xd18] sm:$0xff]
      %v591 = vld [vmem:[%s165 + $0xd20] sm:$0xff]
      %v592 = vld [vmem:[%s165 + $0xd28] sm:$0xff]
      %v593 = vld [vmem:[%s165 + $0xd30] sm:$0xff]
      %v594 = vld [vmem:[%s165 + $0xd38] sm:$0xff]
      %v595 = vld [vmem:[%s165 + $0xd40] sm:$0xff]
      %v596 = vld [vmem:[%s165 + $0xd48] sm:$0xff]
      %v597 = vld [vmem:[%s165 + $0xd50] sm:$0xff]
      %v598 = vld [vmem:[%s165 + $0xd58] sm:$0xff]
      %v599 = vld [vmem:[%s165 + $0xd60] sm:$0xff]
      %v600 = vld [vmem:[%s165 + $0xd68] sm:$0xff]
      %v601 = vld [vmem:[%s165 + $0xd70] sm:$0xff]
      %v602 = vld [vmem:[%s165 + $0xd78] sm:$0xff]
      %v603 = vld [vmem:[%s165 + $0xd80] sm:$0xff]
      %v604 = vld [vmem:[%s165 + $0xd88] sm:$0xff]
      %v605 = vld [vmem:[%s165 + $0xd90] sm:$0xff]
      %v606 = vld [vmem:[%s165 + $0xd98] sm:$0xff]
      %v607 = vld [vmem:[%s165 + $0xda0] sm:$0xff]
      %v608 = vld [vmem:[%s165 + $0xda8] sm:$0xff]
      %v609 = vld [vmem:[%s165 + $0xdb0] sm:$0xff]
      %v610 = vld [vmem:[%s165 + $0xdb8] sm:$0xff]
      %v611 = vld [vmem:[%s165 + $0xdc0] sm:$0xff]
      %v612 = vld [vmem:[%s165 + $0xdc8] sm:$0xff]
      %v613 = vld [vmem:[%s165 + $0xdd0] sm:$0xff]
      %v614 = vld [vmem:[%s165 + $0xdd8] sm:$0xff]
      %v615 = vld [vmem:[%s165 + $0xde0] sm:$0xff]
      %v616 = vld [vmem:[%s165 + $0xde8] sm:$0xff]
      %v617 = vld [vmem:[%s165 + $0xdf0] sm:$0xff]
      %v618 = vld [vmem:[%s165 + $0xdf8] sm:$0xff]
      %v619 = vld [vmem:[%s165 + $0xe00] sm:$0xff]
      %v620 = vld [vmem:[%s165 + $0xe08] sm:$0xff]
      %v621 = vld [vmem:[%s165 + $0xe10] sm:$0xff]
      %v622 = vld [vmem:[%s165 + $0xe18] sm:$0xff]
      %v623 = vld [vmem:[%s165 + $0xe20] sm:$0xff]
      %v624 = vld [vmem:[%s165 + $0xe28] sm:$0xff]
      %v625 = vld [vmem:[%s165 + $0xe30] sm:$0xff]
      %v626 = vld [vmem:[%s165 + $0xe38] sm:$0xff]
      %v627 = vld [vmem:[%s165 + $0xe40] sm:$0xff]
      %v628 = vld [vmem:[%s165 + $0xe48] sm:$0xff]
      %v629 = vld [vmem:[%s165 + $0xe50] sm:$0xff]
      %v630 = vld [vmem:[%s165 + $0xe58] sm:$0xff]
      %v631 = vld [vmem:[%s165 + $0xe60] sm:$0xff]
      %v632 = vld [vmem:[%s165 + $0xe68] sm:$0xff]
      %v633 = vld [vmem:[%s165 + $0xe70] sm:$0xff]
      %v634 = vld [vmem:[%s165 + $0xe78] sm:$0xff]
      %v635 = vld [vmem:[%s165 + $0xe80] sm:$0xff]
      %v636 = vld [vmem:[%s165 + $0xe88] sm:$0xff]
      %v637 = vld [vmem:[%s165 + $0xe90] sm:$0xff]
      %v638 = vld [vmem:[%s165 + $0xe98] sm:$0xff]
      %v639 = vld [vmem:[%s165 + $0xea0] sm:$0xff]
      %v640 = vld [vmem:[%s165 + $0xea8] sm:$0xff]
      %v641 = vld [vmem:[%s165 + $0xeb0] sm:$0xff]
      %v642 = vld [vmem:[%s165 + $0xeb8] sm:$0xff]
      %v643 = vld [vmem:[%s165 + $0xec0] sm:$0xff]
      %v644 = vld [vmem:[%s165 + $0xec8] sm:$0xff]
      %v645 = vld [vmem:[%s165 + $0xed0] sm:$0xff]
      %v646 = vld [vmem:[%s165 + $0xed8] sm:$0xff]
      %v647 = vld [vmem:[%s165 + $0xee0] sm:$0xff]
      %v648 = vld [vmem:[%s165 + $0xee8] sm:$0xff]
      %v649 = vld [vmem:[%s165 + $0xef0] sm:$0xff]
      %v650 = vld [vmem:[%s165 + $0xef8] sm:$0xff]
      %v651 = vld [vmem:[%s165 + $0xf00] sm:$0xff]
      %v652 = vld [vmem:[%s165 + $0xf08] sm:$0xff]
      %v653 = vld [vmem:[%s165 + $0xf10] sm:$0xff]
      %v654 = vld [vmem:[%s165 + $0xf18] sm:$0xff]
      %v655 = vld [vmem:[%s165 + $0xf20] sm:$0xff]
      %v656 = vld [vmem:[%s165 + $0xf28] sm:$0xff]
      %v657 = vld [vmem:[%s165 + $0xf30] sm:$0xff]
      %v658 = vld [vmem:[%s165 + $0xf38] sm:$0xff]
      %v659 = vld [vmem:[%s165 + $0xf40] sm:$0xff]
      %v660 = vld [vmem:[%s165 + $0xf48] sm:$0xff]
      %v661 = vld [vmem:[%s165 + $0xf50] sm:$0xff]
      %v662 = vld [vmem:[%s165 + $0xf58] sm:$0xff]
      %v663 = vld [vmem:[%s165 + $0xf60] sm:$0xff]
      %v664 = vld [vmem:[%s165 + $0xf68] sm:$0xff]
      %v665 = vld [vmem:[%s165 + $0xf70] sm:$0xff]
      %v666 = vld [vmem:[%s165 + $0xf78] sm:$0xff]
      %v667 = vld [vmem:[%s165 + $0xf80] sm:$0xff]
      %v668 = vld [vmem:[%s165 + $0xf88] sm:$0xff]
      %v669 = vld [vmem:[%s165 + $0xf90] sm:$0xff]
      %v670 = vld [vmem:[%s165 + $0xf98] sm:$0xff]
      %v671 = vld [vmem:[%s165 + $0xfa0] sm:$0xff]
      %v672 = vld [vmem:[%s165 + $0xfa8] sm:$0xff]
      %v673 = vld [vmem:[%s165 + $0xfb0] sm:$0xff]
      %v674 = vld [vmem:[%s165 + $0xfb8] sm:$0xff]
      %v675 = vld [vmem:[%s165 + $0xfc0] sm:$0xff]
      %v676 = vld [vmem:[%s165 + $0xfc8] sm:$0xff]
      %v677 = vld [vmem:[%s165 + $0xfd0] sm:$0xff]
      %v678 = vld [vmem:[%s165 + $0xfd8] sm:$0xff]
      %v679 = vld [vmem:[%s165 + $0xfe0] sm:$0xff]
      %v680 = vld [vmem:[%s165 + $0xfe8] sm:$0xff]
      %v681 = vld [vmem:[%s165 + $0xff0] sm:$0xff]
      %v682 = vld [vmem:[%s165 + $0xff8] sm:$0xff]
      %v683 = vld [vmem:[%s1] sm:$0xff]
      %v684 = vld [vmem:[%s1 + $0x8] sm:$0xff]
      %v685 = vld [vmem:[%s1 + $0x10] sm:$0xff]
      %v686 = vld [vmem:[%s1 + $0x18] sm:$0xff]
      %v687 = vld [vmem:[%s1 + $0x20] sm:$0xff]
      %v688 = vld [vmem:[%s1 + $0x28] sm:$0xff]
      %v689 = vld [vmem:[%s1 + $0x30] sm:$0xff]
      %v690 = vld [vmem:[%s1 + $0x38] sm:$0xff]
      %v691 = vld [vmem:[%s1 + $0x40] sm:$0xff]
      %v692 = vld [vmem:[%s1 + $0x48] sm:$0xff]
      %v693 = vld [vmem:[%s2] sm:$0x1]
      %v695 = vlaneseq
      %v696 = vshrl.u32 %v695, 7
      %v697 = vsub.s32 0, %v696
      %v698 = vrot.slane %v693, %v697
      %vm700 = vcmask 654336
      %v702 = vsel %vm700, %v171, 0
      %v705 = vsel %vm700, %v172, 0
      %v708 = vsel %vm700, %v173, 0
      %v711 = vsel %vm700, %v174, 0
      %v714 = vsel %vm700, %v175, 0
      %v717 = vsel %vm700, %v176, 0
      %v720 = vsel %vm700, %v177, 0
      %v723 = vsel %vm700, %v178, 0
      %v726 = vsel %vm700, %v179, 0
      %v729 = vsel %vm700, %v180, 0
      %v732 = vsel %vm700, %v181, 0
      %v735 = vsel %vm700, %v182, 0
      %v738 = vsel %vm700, %v183, 0
      %v741 = vsel %vm700, %v184, 0
      %v744 = vsel %vm700, %v185, 0
      %v747 = vsel %vm700, %v186, 0
      %v750 = vsel %vm700, %v187, 0
      %v753 = vsel %vm700, %v188, 0
      %v756 = vsel %vm700, %v189, 0
      %v759 = vsel %vm700, %v190, 0
      %v762 = vsel %vm700, %v191, 0
      %v765 = vsel %vm700, %v192, 0
      %v768 = vsel %vm700, %v193, 0
      %v771 = vsel %vm700, %v194, 0
      %v774 = vsel %vm700, %v195, 0
      %v777 = vsel %vm700, %v196, 0
      %v780 = vsel %vm700, %v197, 0
      %v783 = vsel %vm700, %v198, 0
      %v786 = vsel %vm700, %v199, 0
      %v789 = vsel %vm700, %v200, 0
      %v792 = vsel %vm700, %v201, 0
      %v795 = vsel %vm700, %v202, 0
      %v798 = vsel %vm700, %v203, 0
      %v801 = vsel %vm700, %v204, 0
      %v804 = vsel %vm700, %v205, 0
      %v807 = vsel %vm700, %v206, 0
      %v810 = vsel %vm700, %v207, 0
      %v813 = vsel %vm700, %v208, 0
      %v816 = vsel %vm700, %v209, 0
      %v819 = vsel %vm700, %v210, 0
      %v822 = vsel %vm700, %v211, 0
      %v825 = vsel %vm700, %v212, 0
      %v828 = vsel %vm700, %v213, 0
      %v831 = vsel %vm700, %v214, 0
      %v834 = vsel %vm700, %v215, 0
      %v837 = vsel %vm700, %v216, 0
      %v840 = vsel %vm700, %v217, 0
      %v843 = vsel %vm700, %v218, 0
      %v846 = vsel %vm700, %v219, 0
      %v849 = vsel %vm700, %v220, 0
      %v852 = vsel %vm700, %v221, 0
      %v855 = vsel %vm700, %v222, 0
      %v858 = vsel %vm700, %v223, 0
      %v861 = vsel %vm700, %v224, 0
      %v864 = vsel %vm700, %v225, 0
      %v867 = vsel %vm700, %v226, 0
      %v870 = vsel %vm700, %v227, 0
      %v873 = vsel %vm700, %v228, 0
      %v876 = vsel %vm700, %v229, 0
      %v879 = vsel %vm700, %v230, 0
      %v882 = vsel %vm700, %v231, 0
      %v885 = vsel %vm700, %v232, 0
      %v888 = vsel %vm700, %v233, 0
      %v891 = vsel %vm700, %v234, 0
      %v894 = vsel %vm700, %v235, 0
      %v897 = vsel %vm700, %v236, 0
      %v900 = vsel %vm700, %v237, 0
      %v903 = vsel %vm700, %v238, 0
      %v906 = vsel %vm700, %v239, 0
      %v909 = vsel %vm700, %v240, 0
      %v912 = vsel %vm700, %v241, 0
      %v915 = vsel %vm700, %v242, 0
      %v918 = vsel %vm700, %v243, 0
      %v921 = vsel %vm700, %v244, 0
      %v924 = vsel %vm700, %v245, 0
      %v927 = vsel %vm700, %v246, 0
      %v930 = vsel %vm700, %v247, 0
      %v933 = vsel %vm700, %v248, 0
      %v936 = vsel %vm700, %v249, 0
      %v939 = vsel %vm700, %v250, 0
      %v942 = vsel %vm700, %v251, 0
      %v945 = vsel %vm700, %v252, 0
      %v948 = vsel %vm700, %v253, 0
      %v951 = vsel %vm700, %v254, 0
      %v954 = vsel %vm700, %v255, 0
      %v957 = vsel %vm700, %v256, 0
      %v960 = vsel %vm700, %v257, 0
      %v963 = vsel %vm700, %v258, 0
      %v966 = vsel %vm700, %v259, 0
      %v969 = vsel %vm700, %v260, 0
      %v972 = vsel %vm700, %v261, 0
      %v975 = vsel %vm700, %v262, 0
      %v978 = vsel %vm700, %v263, 0
      %v981 = vsel %vm700, %v264, 0
      %v984 = vsel %vm700, %v265, 0
      %v987 = vsel %vm700, %v266, 0
      %v990 = vsel %vm700, %v267, 0
      %v993 = vsel %vm700, %v268, 0
      %v996 = vsel %vm700, %v269, 0
      %v999 = vsel %vm700, %v270, 0
      %v1002 = vsel %vm700, %v271, 0
      %v1005 = vsel %vm700, %v272, 0
      %v1008 = vsel %vm700, %v273, 0
      %v1011 = vsel %vm700, %v274, 0
      %v1014 = vsel %vm700, %v275, 0
      %v1017 = vsel %vm700, %v276, 0
      %v1020 = vsel %vm700, %v277, 0
      %v1023 = vsel %vm700, %v278, 0
      %v1026 = vsel %vm700, %v279, 0
      %v1029 = vsel %vm700, %v280, 0
      %v1032 = vsel %vm700, %v281, 0
      %v1035 = vsel %vm700, %v282, 0
      %v1038 = vsel %vm700, %v283, 0
      %v1041 = vsel %vm700, %v284, 0
      %v1044 = vsel %vm700, %v285, 0
      %v1047 = vsel %vm700, %v286, 0
      %v1050 = vsel %vm700, %v287, 0
      %v1053 = vsel %vm700, %v288, 0
      %v1056 = vsel %vm700, %v289, 0
      %v1059 = vsel %vm700, %v290, 0
      %v1062 = vsel %vm700, %v291, 0
      %v1065 = vsel %vm700, %v292, 0
      %v1068 = vsel %vm700, %v293, 0
      %v1071 = vsel %vm700, %v294, 0
      %v1074 = vsel %vm700, %v295, 0
      %v1077 = vsel %vm700, %v296, 0
      %v1080 = vsel %vm700, %v297, 0
      %v1083 = vsel %vm700, %v298, 0
      %v1086 = vsel %vm700, %v299, 0
      %v1089 = vsel %vm700, %v300, 0
      %v1092 = vsel %vm700, %v301, 0
      %v1095 = vsel %vm700, %v302, 0
      %v1098 = vsel %vm700, %v303, 0
      %v1101 = vsel %vm700, %v304, 0
      %v1104 = vsel %vm700, %v305, 0
      %v1107 = vsel %vm700, %v306, 0
      %v1110 = vsel %vm700, %v307, 0
      %v1113 = vsel %vm700, %v308, 0
      %v1116 = vsel %vm700, %v309, 0
      %v1119 = vsel %vm700, %v310, 0
      %v1122 = vsel %vm700, %v311, 0
      %v1125 = vsel %vm700, %v312, 0
      %v1128 = vsel %vm700, %v313, 0
      %v1131 = vsel %vm700, %v314, 0
      %v1134 = vsel %vm700, %v315, 0
      %v1137 = vsel %vm700, %v316, 0
      %v1140 = vsel %vm700, %v317, 0
      %v1143 = vsel %vm700, %v318, 0
      %v1146 = vsel %vm700, %v319, 0
      %v1149 = vsel %vm700, %v320, 0
      %v1152 = vsel %vm700, %v321, 0
      %v1155 = vsel %vm700, %v322, 0
      %v1158 = vsel %vm700, %v323, 0
      %v1161 = vsel %vm700, %v324, 0
      %v1164 = vsel %vm700, %v325, 0
      %v1167 = vsel %vm700, %v326, 0
      %v1170 = vsel %vm700, %v327, 0
      %v1173 = vsel %vm700, %v328, 0
      %v1176 = vsel %vm700, %v329, 0
      %v1179 = vsel %vm700, %v330, 0
      %v1182 = vsel %vm700, %v331, 0
      %v1185 = vsel %vm700, %v332, 0
      %v1188 = vsel %vm700, %v333, 0
      %v1191 = vsel %vm700, %v334, 0
      %v1194 = vsel %vm700, %v335, 0
      %v1197 = vsel %vm700, %v336, 0
      %v1200 = vsel %vm700, %v337, 0
      %v1203 = vsel %vm700, %v338, 0
      %v1206 = vsel %vm700, %v339, 0
      %v1209 = vsel %vm700, %v340, 0
      %v1212 = vsel %vm700, %v341, 0
      %v1215 = vsel %vm700, %v342, 0
      %v1218 = vsel %vm700, %v343, 0
      %v1221 = vsel %vm700, %v344, 0
      %v1224 = vsel %vm700, %v345, 0
      %v1227 = vsel %vm700, %v346, 0
      %v1230 = vsel %vm700, %v347, 0
      %v1233 = vsel %vm700, %v348, 0
      %v1236 = vsel %vm700, %v349, 0
      %v1239 = vsel %vm700, %v350, 0
      %v1242 = vsel %vm700, %v351, 0
      %v1245 = vsel %vm700, %v352, 0
      %v1248 = vsel %vm700, %v353, 0
      %v1251 = vsel %vm700, %v354, 0
      %v1254 = vsel %vm700, %v355, 0
      %v1257 = vsel %vm700, %v356, 0
      %v1260 = vsel %vm700, %v357, 0
      %v1263 = vsel %vm700, %v358, 0
      %v1266 = vsel %vm700, %v359, 0
      %v1269 = vsel %vm700, %v360, 0
      %v1272 = vsel %vm700, %v361, 0
      %v1275 = vsel %vm700, %v362, 0
      %v1278 = vsel %vm700, %v363, 0
      %v1281 = vsel %vm700, %v364, 0
      %v1284 = vsel %vm700, %v365, 0
      %v1287 = vsel %vm700, %v366, 0
      %v1290 = vsel %vm700, %v367, 0
      %v1293 = vsel %vm700, %v368, 0
      %v1296 = vsel %vm700, %v369, 0
      %v1299 = vsel %vm700, %v370, 0
      %v1302 = vsel %vm700, %v371, 0
      %v1305 = vsel %vm700, %v372, 0
      %v1308 = vsel %vm700, %v373, 0
      %v1311 = vsel %vm700, %v374, 0
      %v1314 = vsel %vm700, %v375, 0
      %v1317 = vsel %vm700, %v376, 0
      %v1320 = vsel %vm700, %v377, 0
      %v1323 = vsel %vm700, %v378, 0
      %v1326 = vsel %vm700, %v379, 0
      %v1329 = vsel %vm700, %v380, 0
      %v1332 = vsel %vm700, %v381, 0
      %v1335 = vsel %vm700, %v382, 0
      %v1338 = vsel %vm700, %v383, 0
      %v1341 = vsel %vm700, %v384, 0
      %v1344 = vsel %vm700, %v385, 0
      %v1347 = vsel %vm700, %v386, 0
      %v1350 = vsel %vm700, %v387, 0
      %v1353 = vsel %vm700, %v388, 0
      %v1356 = vsel %vm700, %v389, 0
      %v1359 = vsel %vm700, %v390, 0
      %v1362 = vsel %vm700, %v391, 0
      %v1365 = vsel %vm700, %v392, 0
      %v1368 = vsel %vm700, %v393, 0
      %v1371 = vsel %vm700, %v394, 0
      %v1374 = vsel %vm700, %v395, 0
      %v1377 = vsel %vm700, %v396, 0
      %v1380 = vsel %vm700, %v397, 0
      %v1383 = vsel %vm700, %v398, 0
      %v1386 = vsel %vm700, %v399, 0
      %v1389 = vsel %vm700, %v400, 0
      %v1392 = vsel %vm700, %v401, 0
      %v1395 = vsel %vm700, %v402, 0
      %v1398 = vsel %vm700, %v403, 0
      %v1401 = vsel %vm700, %v404, 0
      %v1404 = vsel %vm700, %v405, 0
      %v1407 = vsel %vm700, %v406, 0
      %v1410 = vsel %vm700, %v407, 0
      %v1413 = vsel %vm700, %v408, 0
      %v1416 = vsel %vm700, %v409, 0
      %v1419 = vsel %vm700, %v410, 0
      %v1422 = vsel %vm700, %v411, 0
      %v1425 = vsel %vm700, %v412, 0
      %v1428 = vsel %vm700, %v413, 0
      %v1431 = vsel %vm700, %v414, 0
      %v1434 = vsel %vm700, %v415, 0
      %v1437 = vsel %vm700, %v416, 0
      %v1440 = vsel %vm700, %v417, 0
      %v1443 = vsel %vm700, %v418, 0
      %v1446 = vsel %vm700, %v419, 0
      %v1449 = vsel %vm700, %v420, 0
      %v1452 = vsel %vm700, %v421, 0
      %v1455 = vsel %vm700, %v422, 0
      %v1458 = vsel %vm700, %v423, 0
      %v1461 = vsel %vm700, %v424, 0
      %v1464 = vsel %vm700, %v425, 0
      %v1467 = vsel %vm700, %v426, 0
      %v1470 = vsel %vm700, %v427, 0
      %v1473 = vsel %vm700, %v428, 0
      %v1476 = vsel %vm700, %v429, 0
      %v1479 = vsel %vm700, %v430, 0
      %v1482 = vsel %vm700, %v431, 0
      %v1485 = vsel %vm700, %v432, 0
      %v1488 = vsel %vm700, %v433, 0
      %v1491 = vsel %vm700, %v434, 0
      %v1494 = vsel %vm700, %v435, 0
      %v1497 = vsel %vm700, %v436, 0
      %v1500 = vsel %vm700, %v437, 0
      %v1503 = vsel %vm700, %v438, 0
      %v1506 = vsel %vm700, %v439, 0
      %v1509 = vsel %vm700, %v440, 0
      %v1512 = vsel %vm700, %v441, 0
      %v1515 = vsel %vm700, %v442, 0
      %v1518 = vsel %vm700, %v443, 0
      %v1521 = vsel %vm700, %v444, 0
      %v1524 = vsel %vm700, %v445, 0
      %v1527 = vsel %vm700, %v446, 0
      %v1530 = vsel %vm700, %v447, 0
      %v1533 = vsel %vm700, %v448, 0
      %v1536 = vsel %vm700, %v449, 0
      %v1539 = vsel %vm700, %v450, 0
      %v1542 = vsel %vm700, %v451, 0
      %v1545 = vsel %vm700, %v452, 0
      %v1548 = vsel %vm700, %v453, 0
      %v1551 = vsel %vm700, %v454, 0
      %v1554 = vsel %vm700, %v455, 0
      %v1557 = vsel %vm700, %v456, 0
      %v1560 = vsel %vm700, %v457, 0
      %v1563 = vsel %vm700, %v458, 0
      %v1566 = vsel %vm700, %v459, 0
      %v1569 = vsel %vm700, %v460, 0
      %v1572 = vsel %vm700, %v461, 0
      %v1575 = vsel %vm700, %v462, 0
      %v1578 = vsel %vm700, %v463, 0
      %v1581 = vsel %vm700, %v464, 0
      %v1584 = vsel %vm700, %v465, 0
      %v1587 = vsel %vm700, %v466, 0
      %v1590 = vsel %vm700, %v467, 0
      %v1593 = vsel %vm700, %v468, 0
      %v1596 = vsel %vm700, %v469, 0
      %v1599 = vsel %vm700, %v470, 0
      %v1602 = vsel %vm700, %v471, 0
      %v1605 = vsel %vm700, %v472, 0
      %v1608 = vsel %vm700, %v473, 0
      %v1611 = vsel %vm700, %v474, 0
      %v1614 = vsel %vm700, %v475, 0
      %v1617 = vsel %vm700, %v476, 0
      %v1620 = vsel %vm700, %v477, 0
      %v1623 = vsel %vm700, %v478, 0
      %v1626 = vsel %vm700, %v479, 0
      %v1629 = vsel %vm700, %v480, 0
      %v1632 = vsel %vm700, %v481, 0
      %v1635 = vsel %vm700, %v482, 0
      %v1638 = vsel %vm700, %v483, 0
      %v1641 = vsel %vm700, %v484, 0
      %v1644 = vsel %vm700, %v485, 0
      %v1647 = vsel %vm700, %v486, 0
      %v1650 = vsel %vm700, %v487, 0
      %v1653 = vsel %vm700, %v488, 0
      %v1656 = vsel %vm700, %v489, 0
      %v1659 = vsel %vm700, %v490, 0
      %v1662 = vsel %vm700, %v491, 0
      %v1665 = vsel %vm700, %v492, 0
      %v1668 = vsel %vm700, %v493, 0
      %v1671 = vsel %vm700, %v494, 0
      %v1674 = vsel %vm700, %v495, 0
      %v1677 = vsel %vm700, %v496, 0
      %v1680 = vsel %vm700, %v497, 0
      %v1683 = vsel %vm700, %v498, 0
      %v1686 = vsel %vm700, %v499, 0
      %v1689 = vsel %vm700, %v500, 0
      %v1692 = vsel %vm700, %v501, 0
      %v1695 = vsel %vm700, %v502, 0
      %v1698 = vsel %vm700, %v503, 0
      %v1701 = vsel %vm700, %v504, 0
      %v1704 = vsel %vm700, %v505, 0
      %v1707 = vsel %vm700, %v506, 0
      %v1710 = vsel %vm700, %v507, 0
      %v1713 = vsel %vm700, %v508, 0
      %v1716 = vsel %vm700, %v509, 0
      %v1719 = vsel %vm700, %v510, 0
      %v1722 = vsel %vm700, %v511, 0
      %v1725 = vsel %vm700, %v512, 0
      %v1728 = vsel %vm700, %v513, 0
      %v1731 = vsel %vm700, %v514, 0
      %v1734 = vsel %vm700, %v515, 0
      %v1737 = vsel %vm700, %v516, 0
      %v1740 = vsel %vm700, %v517, 0
      %v1743 = vsel %vm700, %v518, 0
      %v1746 = vsel %vm700, %v519, 0
      %v1749 = vsel %vm700, %v520, 0
      %v1752 = vsel %vm700, %v521, 0
      %v1755 = vsel %vm700, %v522, 0
      %v1758 = vsel %vm700, %v523, 0
      %v1761 = vsel %vm700, %v524, 0
      %v1764 = vsel %vm700, %v525, 0
      %v1767 = vsel %vm700, %v526, 0
      %v1770 = vsel %vm700, %v527, 0
      %v1773 = vsel %vm700, %v528, 0
      %v1776 = vsel %vm700, %v529, 0
      %v1779 = vsel %vm700, %v530, 0
      %v1782 = vsel %vm700, %v531, 0
      %v1785 = vsel %vm700, %v532, 0
      %v1788 = vsel %vm700, %v533, 0
      %v1791 = vsel %vm700, %v534, 0
      %v1794 = vsel %vm700, %v535, 0
      %v1797 = vsel %vm700, %v536, 0
      %v1800 = vsel %vm700, %v537, 0
      %v1803 = vsel %vm700, %v538, 0
      %v1806 = vsel %vm700, %v539, 0
      %v1809 = vsel %vm700, %v540, 0
      %v1812 = vsel %vm700, %v541, 0
      %v1815 = vsel %vm700, %v542, 0
      %v1818 = vsel %vm700, %v543, 0
      %v1821 = vsel %vm700, %v544, 0
      %v1824 = vsel %vm700, %v545, 0
      %v1827 = vsel %vm700, %v546, 0
      %v1830 = vsel %vm700, %v547, 0
      %v1833 = vsel %vm700, %v548, 0
      %v1836 = vsel %vm700, %v549, 0
      %v1839 = vsel %vm700, %v550, 0
      %v1842 = vsel %vm700, %v551, 0
      %v1845 = vsel %vm700, %v552, 0
      %v1848 = vsel %vm700, %v553, 0
      %v1851 = vsel %vm700, %v554, 0
      %v1854 = vsel %vm700, %v555, 0
      %v1857 = vsel %vm700, %v556, 0
      %v1860 = vsel %vm700, %v557, 0
      %v1863 = vsel %vm700, %v558, 0
      %v1866 = vsel %vm700, %v559, 0
      %v1869 = vsel %vm700, %v560, 0
      %v1872 = vsel %vm700, %v561, 0
      %v1875 = vsel %vm700, %v562, 0
      %v1878 = vsel %vm700, %v563, 0
      %v1881 = vsel %vm700, %v564, 0
      %v1884 = vsel %vm700, %v565, 0
      %v1887 = vsel %vm700, %v566, 0
      %v1890 = vsel %vm700, %v567, 0
      %v1893 = vsel %vm700, %v568, 0
      %v1896 = vsel %vm700, %v569, 0
      %v1899 = vsel %vm700, %v570, 0
      %v1902 = vsel %vm700, %v571, 0
      %v1905 = vsel %vm700, %v572, 0
      %v1908 = vsel %vm700, %v573, 0
      %v1911 = vsel %vm700, %v574, 0
      %v1914 = vsel %vm700, %v575, 0
      %v1917 = vsel %vm700, %v576, 0
      %v1920 = vsel %vm700, %v577, 0
      %v1923 = vsel %vm700, %v578, 0
      %v1926 = vsel %vm700, %v579, 0
      %v1929 = vsel %vm700, %v580, 0
      %v1932 = vsel %vm700, %v581, 0
      %v1935 = vsel %vm700, %v582, 0
      %v1938 = vsel %vm700, %v583, 0
      %v1941 = vsel %vm700, %v584, 0
      %v1944 = vsel %vm700, %v585, 0
      %v1947 = vsel %vm700, %v586, 0
      %v1950 = vsel %vm700, %v587, 0
      %v1953 = vsel %vm700, %v588, 0
      %v1956 = vsel %vm700, %v589, 0
      %v1959 = vsel %vm700, %v590, 0
      %v1962 = vsel %vm700, %v591, 0
      %v1965 = vsel %vm700, %v592, 0
      %v1968 = vsel %vm700, %v593, 0
      %v1971 = vsel %vm700, %v594, 0
      %v1974 = vsel %vm700, %v595, 0
      %v1977 = vsel %vm700, %v596, 0
      %v1980 = vsel %vm700, %v597, 0
      %v1983 = vsel %vm700, %v598, 0
      %v1986 = vsel %vm700, %v599, 0
      %v1989 = vsel %vm700, %v600, 0
      %v1992 = vsel %vm700, %v601, 0
      %v1995 = vsel %vm700, %v602, 0
      %v1998 = vsel %vm700, %v603, 0
      %v2001 = vsel %vm700, %v604, 0
      %v2004 = vsel %vm700, %v605, 0
      %v2007 = vsel %vm700, %v606, 0
      %v2010 = vsel %vm700, %v607, 0
      %v2013 = vsel %vm700, %v608, 0
      %v2016 = vsel %vm700, %v609, 0
      %v2019 = vsel %vm700, %v610, 0
      %v2022 = vsel %vm700, %v611, 0
      %v2025 = vsel %vm700, %v612, 0
      %v2028 = vsel %vm700, %v613, 0
      %v2031 = vsel %vm700, %v614, 0
      %v2034 = vsel %vm700, %v615, 0
      %v2037 = vsel %vm700, %v616, 0
      %v2040 = vsel %vm700, %v617, 0
      %v2043 = vsel %vm700, %v618, 0
      %v2046 = vsel %vm700, %v619, 0
      %v2049 = vsel %vm700, %v620, 0
      %v2052 = vsel %vm700, %v621, 0
      %v2055 = vsel %vm700, %v622, 0
      %v2058 = vsel %vm700, %v623, 0
      %v2061 = vsel %vm700, %v624, 0
      %v2064 = vsel %vm700, %v625, 0
      %v2067 = vsel %vm700, %v626, 0
      %v2070 = vsel %vm700, %v627, 0
      %v2073 = vsel %vm700, %v628, 0
      %v2076 = vsel %vm700, %v629, 0
      %v2079 = vsel %vm700, %v630, 0
      %v2082 = vsel %vm700, %v631, 0
      %v2085 = vsel %vm700, %v632, 0
      %v2088 = vsel %vm700, %v633, 0
      %v2091 = vsel %vm700, %v634, 0
      %v2094 = vsel %vm700, %v635, 0
      %v2097 = vsel %vm700, %v636, 0
      %v2100 = vsel %vm700, %v637, 0
      %v2103 = vsel %vm700, %v638, 0
      %v2106 = vsel %vm700, %v639, 0
      %v2109 = vsel %vm700, %v640, 0
      %v2112 = vsel %vm700, %v641, 0
      %v2115 = vsel %vm700, %v642, 0
      %v2118 = vsel %vm700, %v643, 0
      %v2121 = vsel %vm700, %v644, 0
      %v2124 = vsel %vm700, %v645, 0
      %v2127 = vsel %vm700, %v646, 0
      %v2130 = vsel %vm700, %v647, 0
      %v2133 = vsel %vm700, %v648, 0
      %v2136 = vsel %vm700, %v649, 0
      %v2139 = vsel %vm700, %v650, 0
      %v2142 = vsel %vm700, %v651, 0
      %v2145 = vsel %vm700, %v652, 0
      %v2148 = vsel %vm700, %v653, 0
      %v2151 = vsel %vm700, %v654, 0
      %v2154 = vsel %vm700, %v655, 0
      %v2157 = vsel %vm700, %v656, 0
      %v2160 = vsel %vm700, %v657, 0
      %v2163 = vsel %vm700, %v658, 0
      %v2166 = vsel %vm700, %v659, 0
      %v2169 = vsel %vm700, %v660, 0
      %v2172 = vsel %vm700, %v661, 0
      %v2175 = vsel %vm700, %v662, 0
      %v2178 = vsel %vm700, %v663, 0
      %v2181 = vsel %vm700, %v664, 0
      %v2184 = vsel %vm700, %v665, 0
      %v2187 = vsel %vm700, %v666, 0
      %v2190 = vsel %vm700, %v667, 0
      %v2193 = vsel %vm700, %v668, 0
      %v2196 = vsel %vm700, %v669, 0
      %v2199 = vsel %vm700, %v670, 0
      %v2202 = vsel %vm700, %v671, 0
      %v2205 = vsel %vm700, %v672, 0
      %v2208 = vsel %vm700, %v673, 0
      %v2211 = vsel %vm700, %v674, 0
      %v2214 = vsel %vm700, %v675, 0
      %v2217 = vsel %vm700, %v676, 0
      %v2220 = vsel %vm700, %v677, 0
      %v2223 = vsel %vm700, %v678, 0
      %v2226 = vsel %vm700, %v679, 0
      %v2229 = vsel %vm700, %v680, 0
      %v2232 = vsel %vm700, %v681, 0
      %v2235 = vsel %vm700, %v682, 0
      %2237 = vmatprep.subr.mxu0 0.0
      %2238 = vmatpush1.msra.mxu0 0.0
      %2239 = vmatprep.subr.mxu0 0.0
      %2240 = vmatpush1.msra.mxu0 0.0
      %2241 = vmatprep.subr.mxu0 0.0
      %2242 = vmatpush1.msra.mxu0 0.0
      %2243 = vmatprep.subr.mxu0 0.0
      %2244 = vmatpush1.msra.mxu0 0.0
      %2245 = vmatprep.subr.mxu0 0.0
      %2246 = vmatpush1.msra.mxu0 0.0
      %2247 = vmatprep.subr.mxu0 0.0
      %2248 = vmatpush1.msra.mxu0 0.0
      %2249 = vmatprep.subr.mxu0 0.0
      %2250 = vmatpush1.msra.mxu0 %v692
      %2251 = vmatprep.subr.mxu0 0.0
      %2252 = vmatpush1.msra.mxu0 %v691
      %2253 = vmatprep.subr.mxu0 0.0
      %2254 = vmatpush1.msra.mxu0 %v690
      %2255 = vmatprep.subr.mxu0 0.0
      %2256 = vmatpush1.msra.mxu0 %v689
      %2257 = vmatprep.subr.mxu0 0.0
      %2258 = vmatpush1.msra.mxu0 %v688
      %2259 = vmatprep.subr.mxu0 0.0
      %2260 = vmatpush1.msra.mxu0 %v687
      %2261 = vmatprep.subr.mxu0 0.0
      %2262 = vmatpush1.msra.mxu0 %v686
      %2263 = vmatprep.subr.mxu0 0.0
      %2264 = vmatpush1.msra.mxu0 %v685
      %2265 = vmatprep.subr.mxu0 0.0
      %2266 = vmatpush1.msra.mxu0 %v684
      %2267 = vmatprep.subr.mxu0 0.0
      %2268 = vmatpush1.msra.mxu0 %v683
      %2269 = vmatprep.subr.mxu0 0.0
      %2270 = vmatpush2.msra.mxu0 0.0
      %2271 = vmatprep.subr.mxu0 0.0
      %2272 = vmatpush2.msra.mxu0 0.0
      %2273 = vmatprep.subr.mxu0 0.0
      %2274 = vmatpush2.msra.mxu0 0.0
      %2275 = vmatprep.subr.mxu0 0.0
      %2276 = vmatpush2.msra.mxu0 0.0
      %2277 = vmatprep.subr.mxu0 0.0
      %2278 = vmatpush2.msra.mxu0 0.0
      %2279 = vmatprep.subr.mxu0 0.0
      %2280 = vmatpush2.msra.mxu0 0.0
      %2281 = vmatprep.subr.mxu0 0.0
      %2282 = vmatpush2.msra.mxu0 0.0
      %2283 = vmatprep.subr.mxu0 0.0
      %2284 = vmatpush2.msra.mxu0 0.0
      %2285 = vmatprep.subr.mxu0 0.0
      %2286 = vmatpush2.msra.mxu0 0.0
      %2287 = vmatprep.subr.mxu0 0.0
      %2288 = vmatpush2.msra.mxu0 0.0
      %2289 = vmatprep.subr.mxu0 0.0
      %2290 = vmatpush2.msra.mxu0 0.0
      %2291 = vmatprep.subr.mxu0 0.0
      %2292 = vmatpush2.msra.mxu0 0.0
      %2293 = vmatprep.subr.mxu0 0.0
      %2294 = vmatpush2.msra.mxu0 0.0
      %2295 = vmatprep.subr.mxu0 0.0
      %2296 = vmatpush2.msra.mxu0 0.0
      %2297 = vmatprep.subr.mxu0 0.0
      %2298 = vmatpush2.msra.mxu0 0.0
      %2299 = vmatprep.subr.mxu0 0.0
      %2300 = vmatpush2.msra.mxu0 0.0
      %2301 = vmatprep.mubr.f32.mxu0 0.0
      %2302 = vmatmul.mubr.f32.gmra.mxu0 %v702
      %v2303 = vpop.f32.mrf.mxu0
      %v2304 = vadd.f32 %v698, %v2303
      %v2305 = vpop.f32.mrf.mxu0
      %2306 = vmatprep.mubr.f32.mxu0 0.0
      %2307 = vmatmul.mubr.f32.gmra.mxu0 %v705
      %v2308 = vpop.f32.mrf.mxu0
      %v2309 = vadd.f32 %v698, %v2308
      %v2310 = vpop.f32.mrf.mxu0
      %2311 = vmatprep.mubr.f32.mxu0 0.0
      %2312 = vmatmul.mubr.f32.gmra.mxu0 %v708
      %v2313 = vpop.f32.mrf.mxu0
      %v2314 = vadd.f32 %v698, %v2313
      %v2315 = vpop.f32.mrf.mxu0
      %2316 = vmatprep.mubr.f32.mxu0 0.0
      %2317 = vmatmul.mubr.f32.gmra.mxu0 %v711
      %v2318 = vpop.f32.mrf.mxu0
      %v2319 = vadd.f32 %v698, %v2318
      %v2320 = vpop.f32.mrf.mxu0
      %2321 = vmatprep.mubr.f32.mxu0 0.0
      %2322 = vmatmul.mubr.f32.gmra.mxu0 %v714
      %v2323 = vpop.f32.mrf.mxu0
      %v2324 = vadd.f32 %v698, %v2323
      %v2325 = vpop.f32.mrf.mxu0
      %2326 = vmatprep.mubr.f32.mxu0 0.0
      %2327 = vmatmul.mubr.f32.gmra.mxu0 %v717
      %v2328 = vpop.f32.mrf.mxu0
      %v2329 = vadd.f32 %v698, %v2328
      %v2330 = vpop.f32.mrf.mxu0
      %2331 = vmatprep.mubr.f32.mxu0 0.0
      %2332 = vmatmul.mubr.f32.gmra.mxu0 %v720
      %v2333 = vpop.f32.mrf.mxu0
      %v2334 = vadd.f32 %v698, %v2333
      %v2335 = vpop.f32.mrf.mxu0
      %2336 = vmatprep.mubr.f32.mxu0 0.0
      %2337 = vmatmul.mubr.f32.gmra.mxu0 %v723
      %v2338 = vpop.f32.mrf.mxu0
      %v2339 = vadd.f32 %v698, %v2338
      %v2340 = vpop.f32.mrf.mxu0
      %2341 = vmatprep.mubr.f32.mxu0 0.0
      %2342 = vmatmul.mubr.f32.gmra.mxu0 %v726
      %v2343 = vpop.f32.mrf.mxu0
      %v2344 = vadd.f32 %v698, %v2343
      %v2345 = vpop.f32.mrf.mxu0
      %2346 = vmatprep.mubr.f32.mxu0 0.0
      %2347 = vmatmul.mubr.f32.gmra.mxu0 %v729
      %v2348 = vpop.f32.mrf.mxu0
      %v2349 = vadd.f32 %v698, %v2348
      %v2350 = vpop.f32.mrf.mxu0
      %2351 = vmatprep.mubr.f32.mxu0 0.0
      %2352 = vmatmul.mubr.f32.gmra.mxu0 %v732
      %v2353 = vpop.f32.mrf.mxu0
      %v2354 = vadd.f32 %v698, %v2353
      %v2355 = vpop.f32.mrf.mxu0
      %2356 = vmatprep.mubr.f32.mxu0 0.0
      %2357 = vmatmul.mubr.f32.gmra.mxu0 %v735
      %v2358 = vpop.f32.mrf.mxu0
      %v2359 = vadd.f32 %v698, %v2358
      %v2360 = vpop.f32.mrf.mxu0
      %2361 = vmatprep.mubr.f32.mxu0 0.0
      %2362 = vmatmul.mubr.f32.gmra.mxu0 %v738
      %v2363 = vpop.f32.mrf.mxu0
      %v2364 = vadd.f32 %v698, %v2363
      %v2365 = vpop.f32.mrf.mxu0
      %2366 = vmatprep.mubr.f32.mxu0 0.0
      %2367 = vmatmul.mubr.f32.gmra.mxu0 %v741
      %v2368 = vpop.f32.mrf.mxu0
      %v2369 = vadd.f32 %v698, %v2368
      %v2370 = vpop.f32.mrf.mxu0
      %2371 = vmatprep.mubr.f32.mxu0 0.0
      %2372 = vmatmul.mubr.f32.gmra.mxu0 %v744
      %v2373 = vpop.f32.mrf.mxu0
      %v2374 = vadd.f32 %v698, %v2373
      %v2375 = vpop.f32.mrf.mxu0
      %2376 = vmatprep.mubr.f32.mxu0 0.0
      %2377 = vmatmul.mubr.f32.gmra.mxu0 %v747
      %v2378 = vpop.f32.mrf.mxu0
      %v2379 = vadd.f32 %v698, %v2378
      %v2380 = vpop.f32.mrf.mxu0
      %2381 = vmatprep.mubr.f32.mxu0 0.0
      %2382 = vmatmul.mubr.f32.gmra.mxu0 %v750
      %v2383 = vpop.f32.mrf.mxu0
      %v2384 = vadd.f32 %v698, %v2383
      %v2385 = vpop.f32.mrf.mxu0
      %2386 = vmatprep.mubr.f32.mxu0 0.0
      %2387 = vmatmul.mubr.f32.gmra.mxu0 %v753
      %v2388 = vpop.f32.mrf.mxu0
      %v2389 = vadd.f32 %v698, %v2388
      %v2390 = vpop.f32.mrf.mxu0
      %2391 = vmatprep.mubr.f32.mxu0 0.0
      %2392 = vmatmul.mubr.f32.gmra.mxu0 %v756
      %v2393 = vpop.f32.mrf.mxu0
      %v2394 = vadd.f32 %v698, %v2393
      %v2395 = vpop.f32.mrf.mxu0
      %2396 = vmatprep.mubr.f32.mxu0 0.0
      %2397 = vmatmul.mubr.f32.gmra.mxu0 %v759
      %v2398 = vpop.f32.mrf.mxu0
      %v2399 = vadd.f32 %v698, %v2398
      %v2400 = vpop.f32.mrf.mxu0
      %2401 = vmatprep.mubr.f32.mxu0 0.0
      %2402 = vmatmul.mubr.f32.gmra.mxu0 %v762
      %v2403 = vpop.f32.mrf.mxu0
      %v2404 = vadd.f32 %v698, %v2403
      %v2405 = vpop.f32.mrf.mxu0
      %2406 = vmatprep.mubr.f32.mxu0 0.0
      %2407 = vmatmul.mubr.f32.gmra.mxu0 %v765
      %v2408 = vpop.f32.mrf.mxu0
      %v2409 = vadd.f32 %v698, %v2408
      %v2410 = vpop.f32.mrf.mxu0
      %2411 = vmatprep.mubr.f32.mxu0 0.0
      %2412 = vmatmul.mubr.f32.gmra.mxu0 %v768
      %v2413 = vpop.f32.mrf.mxu0
      %v2414 = vadd.f32 %v698, %v2413
      %v2415 = vpop.f32.mrf.mxu0
      %2416 = vmatprep.mubr.f32.mxu0 0.0
      %2417 = vmatmul.mubr.f32.gmra.mxu0 %v771
      %v2418 = vpop.f32.mrf.mxu0
      %v2419 = vadd.f32 %v698, %v2418
      %v2420 = vpop.f32.mrf.mxu0
      %2421 = vmatprep.mubr.f32.mxu0 0.0
      %2422 = vmatmul.mubr.f32.gmra.mxu0 %v774
      %v2423 = vpop.f32.mrf.mxu0
      %v2424 = vadd.f32 %v698, %v2423
      %v2425 = vpop.f32.mrf.mxu0
      %2426 = vmatprep.mubr.f32.mxu0 0.0
      %2427 = vmatmul.mubr.f32.gmra.mxu0 %v777
      %v2428 = vpop.f32.mrf.mxu0
      %v2429 = vadd.f32 %v698, %v2428
      %v2430 = vpop.f32.mrf.mxu0
      %2431 = vmatprep.mubr.f32.mxu0 0.0
      %2432 = vmatmul.mubr.f32.gmra.mxu0 %v780
      %v2433 = vpop.f32.mrf.mxu0
      %v2434 = vadd.f32 %v698, %v2433
      %v2435 = vpop.f32.mrf.mxu0
      %2436 = vmatprep.mubr.f32.mxu0 0.0
      %2437 = vmatmul.mubr.f32.gmra.mxu0 %v783
      %v2438 = vpop.f32.mrf.mxu0
      %v2439 = vadd.f32 %v698, %v2438
      %v2440 = vpop.f32.mrf.mxu0
      %2441 = vmatprep.mubr.f32.mxu0 0.0
      %2442 = vmatmul.mubr.f32.gmra.mxu0 %v786
      %v2443 = vpop.f32.mrf.mxu0
      %v2444 = vadd.f32 %v698, %v2443
      %v2445 = vpop.f32.mrf.mxu0
      %2446 = vmatprep.mubr.f32.mxu0 0.0
      %2447 = vmatmul.mubr.f32.gmra.mxu0 %v789
      %v2448 = vpop.f32.mrf.mxu0
      %v2449 = vadd.f32 %v698, %v2448
      %v2450 = vpop.f32.mrf.mxu0
      %2451 = vmatprep.mubr.f32.mxu0 0.0
      %2452 = vmatmul.mubr.f32.gmra.mxu0 %v792
      %v2453 = vpop.f32.mrf.mxu0
      %v2454 = vadd.f32 %v698, %v2453
      %v2455 = vpop.f32.mrf.mxu0
      %2456 = vmatprep.mubr.f32.mxu0 0.0
      %2457 = vmatmul.mubr.f32.gmra.mxu0 %v795
      %v2458 = vpop.f32.mrf.mxu0
      %v2459 = vadd.f32 %v698, %v2458
      %v2460 = vpop.f32.mrf.mxu0
      %2461 = vmatprep.mubr.f32.mxu0 0.0
      %2462 = vmatmul.mubr.f32.gmra.mxu0 %v798
      %v2463 = vpop.f32.mrf.mxu0
      %v2464 = vadd.f32 %v698, %v2463
      %v2465 = vpop.f32.mrf.mxu0
      %2466 = vmatprep.mubr.f32.mxu0 0.0
      %2467 = vmatmul.mubr.f32.gmra.mxu0 %v801
      %v2468 = vpop.f32.mrf.mxu0
      %v2469 = vadd.f32 %v698, %v2468
      %v2470 = vpop.f32.mrf.mxu0
      %2471 = vmatprep.mubr.f32.mxu0 0.0
      %2472 = vmatmul.mubr.f32.gmra.mxu0 %v804
      %v2473 = vpop.f32.mrf.mxu0
      %v2474 = vadd.f32 %v698, %v2473
      %v2475 = vpop.f32.mrf.mxu0
      %2476 = vmatprep.mubr.f32.mxu0 0.0
      %2477 = vmatmul.mubr.f32.gmra.mxu0 %v807
      %v2478 = vpop.f32.mrf.mxu0
      %v2479 = vadd.f32 %v698, %v2478
      %v2480 = vpop.f32.mrf.mxu0
      %2481 = vmatprep.mubr.f32.mxu0 0.0
      %2482 = vmatmul.mubr.f32.gmra.mxu0 %v810
      %v2483 = vpop.f32.mrf.mxu0
      %v2484 = vadd.f32 %v698, %v2483
      %v2485 = vpop.f32.mrf.mxu0
      %2486 = vmatprep.mubr.f32.mxu0 0.0
      %2487 = vmatmul.mubr.f32.gmra.mxu0 %v813
      %v2488 = vpop.f32.mrf.mxu0
      %v2489 = vadd.f32 %v698, %v2488
      %v2490 = vpop.f32.mrf.mxu0
      %2491 = vmatprep.mubr.f32.mxu0 0.0
      %2492 = vmatmul.mubr.f32.gmra.mxu0 %v816
      %v2493 = vpop.f32.mrf.mxu0
      %v2494 = vadd.f32 %v698, %v2493
      %v2495 = vpop.f32.mrf.mxu0
      %2496 = vmatprep.mubr.f32.mxu0 0.0
      %2497 = vmatmul.mubr.f32.gmra.mxu0 %v819
      %v2498 = vpop.f32.mrf.mxu0
      %v2499 = vadd.f32 %v698, %v2498
      %v2500 = vpop.f32.mrf.mxu0
      %2501 = vmatprep.mubr.f32.mxu0 0.0
      %2502 = vmatmul.mubr.f32.gmra.mxu0 %v822
      %v2503 = vpop.f32.mrf.mxu0
      %v2504 = vadd.f32 %v698, %v2503
      %v2505 = vpop.f32.mrf.mxu0
      %2506 = vmatprep.mubr.f32.mxu0 0.0
      %2507 = vmatmul.mubr.f32.gmra.mxu0 %v825
      %v2508 = vpop.f32.mrf.mxu0
      %v2509 = vadd.f32 %v698, %v2508
      %v2510 = vpop.f32.mrf.mxu0
      %2511 = vmatprep.mubr.f32.mxu0 0.0
      %2512 = vmatmul.mubr.f32.gmra.mxu0 %v828
      %v2513 = vpop.f32.mrf.mxu0
      %v2514 = vadd.f32 %v698, %v2513
      %v2515 = vpop.f32.mrf.mxu0
      %2516 = vmatprep.mubr.f32.mxu0 0.0
      %2517 = vmatmul.mubr.f32.gmra.mxu0 %v831
      %v2518 = vpop.f32.mrf.mxu0
      %v2519 = vadd.f32 %v698, %v2518
      %v2520 = vpop.f32.mrf.mxu0
      %2521 = vmatprep.mubr.f32.mxu0 0.0
      %2522 = vmatmul.mubr.f32.gmra.mxu0 %v834
      %v2523 = vpop.f32.mrf.mxu0
      %v2524 = vadd.f32 %v698, %v2523
      %v2525 = vpop.f32.mrf.mxu0
      %2526 = vmatprep.mubr.f32.mxu0 0.0
      %2527 = vmatmul.mubr.f32.gmra.mxu0 %v837
      %v2528 = vpop.f32.mrf.mxu0
      %v2529 = vadd.f32 %v698, %v2528
      %v2530 = vpop.f32.mrf.mxu0
      %2531 = vmatprep.mubr.f32.mxu0 0.0
      %2532 = vmatmul.mubr.f32.gmra.mxu0 %v840
      %v2533 = vpop.f32.mrf.mxu0
      %v2534 = vadd.f32 %v698, %v2533
      %v2535 = vpop.f32.mrf.mxu0
      %2536 = vmatprep.mubr.f32.mxu0 0.0
      %2537 = vmatmul.mubr.f32.gmra.mxu0 %v843
      %v2538 = vpop.f32.mrf.mxu0
      %v2539 = vadd.f32 %v698, %v2538
      %v2540 = vpop.f32.mrf.mxu0
      %2541 = vmatprep.mubr.f32.mxu0 0.0
      %2542 = vmatmul.mubr.f32.gmra.mxu0 %v846
      %v2543 = vpop.f32.mrf.mxu0
      %v2544 = vadd.f32 %v698, %v2543
      %v2545 = vpop.f32.mrf.mxu0
      %2546 = vmatprep.mubr.f32.mxu0 0.0
      %2547 = vmatmul.mubr.f32.gmra.mxu0 %v849
      %v2548 = vpop.f32.mrf.mxu0
      %v2549 = vadd.f32 %v698, %v2548
      %v2550 = vpop.f32.mrf.mxu0
      %2551 = vmatprep.mubr.f32.mxu0 0.0
      %2552 = vmatmul.mubr.f32.gmra.mxu0 %v852
      %v2553 = vpop.f32.mrf.mxu0
      %v2554 = vadd.f32 %v698, %v2553
      %v2555 = vpop.f32.mrf.mxu0
      %2556 = vmatprep.mubr.f32.mxu0 0.0
      %2557 = vmatmul.mubr.f32.gmra.mxu0 %v855
      %v2558 = vpop.f32.mrf.mxu0
      %v2559 = vadd.f32 %v698, %v2558
      %v2560 = vpop.f32.mrf.mxu0
      %2561 = vmatprep.mubr.f32.mxu0 0.0
      %2562 = vmatmul.mubr.f32.gmra.mxu0 %v858
      %v2563 = vpop.f32.mrf.mxu0
      %v2564 = vadd.f32 %v698, %v2563
      %v2565 = vpop.f32.mrf.mxu0
      %2566 = vmatprep.mubr.f32.mxu0 0.0
      %2567 = vmatmul.mubr.f32.gmra.mxu0 %v861
      %v2568 = vpop.f32.mrf.mxu0
      %v2569 = vadd.f32 %v698, %v2568
      %v2570 = vpop.f32.mrf.mxu0
      %2571 = vmatprep.mubr.f32.mxu0 0.0
      %2572 = vmatmul.mubr.f32.gmra.mxu0 %v864
      %v2573 = vpop.f32.mrf.mxu0
      %v2574 = vadd.f32 %v698, %v2573
      %v2575 = vpop.f32.mrf.mxu0
      %2576 = vmatprep.mubr.f32.mxu0 0.0
      %2577 = vmatmul.mubr.f32.gmra.mxu0 %v867
      %v2578 = vpop.f32.mrf.mxu0
      %v2579 = vadd.f32 %v698, %v2578
      %v2580 = vpop.f32.mrf.mxu0
      %2581 = vmatprep.mubr.f32.mxu0 0.0
      %2582 = vmatmul.mubr.f32.gmra.mxu0 %v870
      %v2583 = vpop.f32.mrf.mxu0
      %v2584 = vadd.f32 %v698, %v2583
      %v2585 = vpop.f32.mrf.mxu0
      %2586 = vmatprep.mubr.f32.mxu0 0.0
      %2587 = vmatmul.mubr.f32.gmra.mxu0 %v873
      %v2588 = vpop.f32.mrf.mxu0
      %v2589 = vadd.f32 %v698, %v2588
      %v2590 = vpop.f32.mrf.mxu0
      %2591 = vmatprep.mubr.f32.mxu0 0.0
      %2592 = vmatmul.mubr.f32.gmra.mxu0 %v876
      %v2593 = vpop.f32.mrf.mxu0
      %v2594 = vadd.f32 %v698, %v2593
      %v2595 = vpop.f32.mrf.mxu0
      %2596 = vmatprep.mubr.f32.mxu0 0.0
      %2597 = vmatmul.mubr.f32.gmra.mxu0 %v879
      %v2598 = vpop.f32.mrf.mxu0
      %v2599 = vadd.f32 %v698, %v2598
      %v2600 = vpop.f32.mrf.mxu0
      %2601 = vmatprep.mubr.f32.mxu0 0.0
      %2602 = vmatmul.mubr.f32.gmra.mxu0 %v882
      %v2603 = vpop.f32.mrf.mxu0
      %v2604 = vadd.f32 %v698, %v2603
      %v2605 = vpop.f32.mrf.mxu0
      %2606 = vmatprep.mubr.f32.mxu0 0.0
      %2607 = vmatmul.mubr.f32.gmra.mxu0 %v885
      %v2608 = vpop.f32.mrf.mxu0
      %v2609 = vadd.f32 %v698, %v2608
      %v2610 = vpop.f32.mrf.mxu0
      %2611 = vmatprep.mubr.f32.mxu0 0.0
      %2612 = vmatmul.mubr.f32.gmra.mxu0 %v888
      %v2613 = vpop.f32.mrf.mxu0
      %v2614 = vadd.f32 %v698, %v2613
      %v2615 = vpop.f32.mrf.mxu0
      %2616 = vmatprep.mubr.f32.mxu0 0.0
      %2617 = vmatmul.mubr.f32.gmra.mxu0 %v891
      %v2618 = vpop.f32.mrf.mxu0
      %v2619 = vadd.f32 %v698, %v2618
      %v2620 = vpop.f32.mrf.mxu0
      %2621 = vmatprep.mubr.f32.mxu0 0.0
      %2622 = vmatmul.mubr.f32.gmra.mxu0 %v894
      %v2623 = vpop.f32.mrf.mxu0
      %v2624 = vadd.f32 %v698, %v2623
      %v2625 = vpop.f32.mrf.mxu0
      %2626 = vmatprep.mubr.f32.mxu0 0.0
      %2627 = vmatmul.mubr.f32.gmra.mxu0 %v897
      %v2628 = vpop.f32.mrf.mxu0
      %v2629 = vadd.f32 %v698, %v2628
      %v2630 = vpop.f32.mrf.mxu0
      %2631 = vmatprep.mubr.f32.mxu0 0.0
      %2632 = vmatmul.mubr.f32.gmra.mxu0 %v900
      %v2633 = vpop.f32.mrf.mxu0
      %v2634 = vadd.f32 %v698, %v2633
      %v2635 = vpop.f32.mrf.mxu0
      %2636 = vmatprep.mubr.f32.mxu0 0.0
      %2637 = vmatmul.mubr.f32.gmra.mxu0 %v903
      %v2638 = vpop.f32.mrf.mxu0
      %v2639 = vadd.f32 %v698, %v2638
      %v2640 = vpop.f32.mrf.mxu0
      %2641 = vmatprep.mubr.f32.mxu0 0.0
      %2642 = vmatmul.mubr.f32.gmra.mxu0 %v906
      %v2643 = vpop.f32.mrf.mxu0
      %v2644 = vadd.f32 %v698, %v2643
      %v2645 = vpop.f32.mrf.mxu0
      %2646 = vmatprep.mubr.f32.mxu0 0.0
      %2647 = vmatmul.mubr.f32.gmra.mxu0 %v909
      %v2648 = vpop.f32.mrf.mxu0
      %v2649 = vadd.f32 %v698, %v2648
      %v2650 = vpop.f32.mrf.mxu0
      %2651 = vmatprep.mubr.f32.mxu0 0.0
      %2652 = vmatmul.mubr.f32.gmra.mxu0 %v912
      %v2653 = vpop.f32.mrf.mxu0
      %v2654 = vadd.f32 %v698, %v2653
      %v2655 = vpop.f32.mrf.mxu0
      %2656 = vmatprep.mubr.f32.mxu0 0.0
      %2657 = vmatmul.mubr.f32.gmra.mxu0 %v915
      %v2658 = vpop.f32.mrf.mxu0
      %v2659 = vadd.f32 %v698, %v2658
      %v2660 = vpop.f32.mrf.mxu0
      %2661 = vmatprep.mubr.f32.mxu0 0.0
      %2662 = vmatmul.mubr.f32.gmra.mxu0 %v918
      %v2663 = vpop.f32.mrf.mxu0
      %v2664 = vadd.f32 %v698, %v2663
      %v2665 = vpop.f32.mrf.mxu0
      %2666 = vmatprep.mubr.f32.mxu0 0.0
      %2667 = vmatmul.mubr.f32.gmra.mxu0 %v921
      %v2668 = vpop.f32.mrf.mxu0
      %v2669 = vadd.f32 %v698, %v2668
      %v2670 = vpop.f32.mrf.mxu0
      %2671 = vmatprep.mubr.f32.mxu0 0.0
      %2672 = vmatmul.mubr.f32.gmra.mxu0 %v924
      %v2673 = vpop.f32.mrf.mxu0
      %v2674 = vadd.f32 %v698, %v2673
      %v2675 = vpop.f32.mrf.mxu0
      %2676 = vmatprep.mubr.f32.mxu0 0.0
      %2677 = vmatmul.mubr.f32.gmra.mxu0 %v927
      %v2678 = vpop.f32.mrf.mxu0
      %v2679 = vadd.f32 %v698, %v2678
      %v2680 = vpop.f32.mrf.mxu0
      %2681 = vmatprep.mubr.f32.mxu0 0.0
      %2682 = vmatmul.mubr.f32.gmra.mxu0 %v930
      %v2683 = vpop.f32.mrf.mxu0
      %v2684 = vadd.f32 %v698, %v2683
      %v2685 = vpop.f32.mrf.mxu0
      %2686 = vmatprep.mubr.f32.mxu0 0.0
      %2687 = vmatmul.mubr.f32.gmra.mxu0 %v933
      %v2688 = vpop.f32.mrf.mxu0
      %v2689 = vadd.f32 %v698, %v2688
      %v2690 = vpop.f32.mrf.mxu0
      %2691 = vmatprep.mubr.f32.mxu0 0.0
      %2692 = vmatmul.mubr.f32.gmra.mxu0 %v936
      %v2693 = vpop.f32.mrf.mxu0
      %v2694 = vadd.f32 %v698, %v2693
      %v2695 = vpop.f32.mrf.mxu0
      %2696 = vmatprep.mubr.f32.mxu0 0.0
      %2697 = vmatmul.mubr.f32.gmra.mxu0 %v939
      %v2698 = vpop.f32.mrf.mxu0
      %v2699 = vadd.f32 %v698, %v2698
      %v2700 = vpop.f32.mrf.mxu0
      %2701 = vmatprep.mubr.f32.mxu0 0.0
      %2702 = vmatmul.mubr.f32.gmra.mxu0 %v942
      %v2703 = vpop.f32.mrf.mxu0
      %v2704 = vadd.f32 %v698, %v2703
      %v2705 = vpop.f32.mrf.mxu0
      %2706 = vmatprep.mubr.f32.mxu0 0.0
      %2707 = vmatmul.mubr.f32.gmra.mxu0 %v945
      %v2708 = vpop.f32.mrf.mxu0
      %v2709 = vadd.f32 %v698, %v2708
      %v2710 = vpop.f32.mrf.mxu0
      %2711 = vmatprep.mubr.f32.mxu0 0.0
      %2712 = vmatmul.mubr.f32.gmra.mxu0 %v948
      %v2713 = vpop.f32.mrf.mxu0
      %v2714 = vadd.f32 %v698, %v2713
      %v2715 = vpop.f32.mrf.mxu0
      %2716 = vmatprep.mubr.f32.mxu0 0.0
      %2717 = vmatmul.mubr.f32.gmra.mxu0 %v951
      %v2718 = vpop.f32.mrf.mxu0
      %v2719 = vadd.f32 %v698, %v2718
      %v2720 = vpop.f32.mrf.mxu0
      %2721 = vmatprep.mubr.f32.mxu0 0.0
      %2722 = vmatmul.mubr.f32.gmra.mxu0 %v954
      %v2723 = vpop.f32.mrf.mxu0
      %v2724 = vadd.f32 %v698, %v2723
      %v2725 = vpop.f32.mrf.mxu0
      %2726 = vmatprep.mubr.f32.mxu0 0.0
      %2727 = vmatmul.mubr.f32.gmra.mxu0 %v957
      %v2728 = vpop.f32.mrf.mxu0
      %v2729 = vadd.f32 %v698, %v2728
      %v2730 = vpop.f32.mrf.mxu0
      %2731 = vmatprep.mubr.f32.mxu0 0.0
      %2732 = vmatmul.mubr.f32.gmra.mxu0 %v960
      %v2733 = vpop.f32.mrf.mxu0
      %v2734 = vadd.f32 %v698, %v2733
      %v2735 = vpop.f32.mrf.mxu0
      %2736 = vmatprep.mubr.f32.mxu0 0.0
      %2737 = vmatmul.mubr.f32.gmra.mxu0 %v963
      %v2738 = vpop.f32.mrf.mxu0
      %v2739 = vadd.f32 %v698, %v2738
      %v2740 = vpop.f32.mrf.mxu0
      %2741 = vmatprep.mubr.f32.mxu0 0.0
      %2742 = vmatmul.mubr.f32.gmra.mxu0 %v966
      %v2743 = vpop.f32.mrf.mxu0
      %v2744 = vadd.f32 %v698, %v2743
      %v2745 = vpop.f32.mrf.mxu0
      %2746 = vmatprep.mubr.f32.mxu0 0.0
      %2747 = vmatmul.mubr.f32.gmra.mxu0 %v969
      %v2748 = vpop.f32.mrf.mxu0
      %v2749 = vadd.f32 %v698, %v2748
      %v2750 = vpop.f32.mrf.mxu0
      %2751 = vmatprep.mubr.f32.mxu0 0.0
      %2752 = vmatmul.mubr.f32.gmra.mxu0 %v972
      %v2753 = vpop.f32.mrf.mxu0
      %v2754 = vadd.f32 %v698, %v2753
      %v2755 = vpop.f32.mrf.mxu0
      %2756 = vmatprep.mubr.f32.mxu0 0.0
      %2757 = vmatmul.mubr.f32.gmra.mxu0 %v975
      %v2758 = vpop.f32.mrf.mxu0
      %v2759 = vadd.f32 %v698, %v2758
      %v2760 = vpop.f32.mrf.mxu0
      %2761 = vmatprep.mubr.f32.mxu0 0.0
      %2762 = vmatmul.mubr.f32.gmra.mxu0 %v978
      %v2763 = vpop.f32.mrf.mxu0
      %v2764 = vadd.f32 %v698, %v2763
      %v2765 = vpop.f32.mrf.mxu0
      %2766 = vmatprep.mubr.f32.mxu0 0.0
      %2767 = vmatmul.mubr.f32.gmra.mxu0 %v981
      %v2768 = vpop.f32.mrf.mxu0
      %v2769 = vadd.f32 %v698, %v2768
      %v2770 = vpop.f32.mrf.mxu0
      %2771 = vmatprep.mubr.f32.mxu0 0.0
      %2772 = vmatmul.mubr.f32.gmra.mxu0 %v984
      %v2773 = vpop.f32.mrf.mxu0
      %v2774 = vadd.f32 %v698, %v2773
      %v2775 = vpop.f32.mrf.mxu0
      %2776 = vmatprep.mubr.f32.mxu0 0.0
      %2777 = vmatmul.mubr.f32.gmra.mxu0 %v987
      %v2778 = vpop.f32.mrf.mxu0
      %v2779 = vadd.f32 %v698, %v2778
      %v2780 = vpop.f32.mrf.mxu0
      %2781 = vmatprep.mubr.f32.mxu0 0.0
      %2782 = vmatmul.mubr.f32.gmra.mxu0 %v990
      %v2783 = vpop.f32.mrf.mxu0
      %v2784 = vadd.f32 %v698, %v2783
      %v2785 = vpop.f32.mrf.mxu0
      %2786 = vmatprep.mubr.f32.mxu0 0.0
      %2787 = vmatmul.mubr.f32.gmra.mxu0 %v993
      %v2788 = vpop.f32.mrf.mxu0
      %v2789 = vadd.f32 %v698, %v2788
      %v2790 = vpop.f32.mrf.mxu0
      %2791 = vmatprep.mubr.f32.mxu0 0.0
      %2792 = vmatmul.mubr.f32.gmra.mxu0 %v996
      %v2793 = vpop.f32.mrf.mxu0
      %v2794 = vadd.f32 %v698, %v2793
      %v2795 = vpop.f32.mrf.mxu0
      %2796 = vmatprep.mubr.f32.mxu0 0.0
      %2797 = vmatmul.mubr.f32.gmra.mxu0 %v999
      %v2798 = vpop.f32.mrf.mxu0
      %v2799 = vadd.f32 %v698, %v2798
      %v2800 = vpop.f32.mrf.mxu0
      %2801 = vmatprep.mubr.f32.mxu0 0.0
      %2802 = vmatmul.mubr.f32.gmra.mxu0 %v1002
      %v2803 = vpop.f32.mrf.mxu0
      %v2804 = vadd.f32 %v698, %v2803
      %v2805 = vpop.f32.mrf.mxu0
      %2806 = vmatprep.mubr.f32.mxu0 0.0
      %2807 = vmatmul.mubr.f32.gmra.mxu0 %v1005
      %v2808 = vpop.f32.mrf.mxu0
      %v2809 = vadd.f32 %v698, %v2808
      %v2810 = vpop.f32.mrf.mxu0
      %2811 = vmatprep.mubr.f32.mxu0 0.0
      %2812 = vmatmul.mubr.f32.gmra.mxu0 %v1008
      %v2813 = vpop.f32.mrf.mxu0
      %v2814 = vadd.f32 %v698, %v2813
      %v2815 = vpop.f32.mrf.mxu0
      %2816 = vmatprep.mubr.f32.mxu0 0.0
      %2817 = vmatmul.mubr.f32.gmra.mxu0 %v1011
      %v2818 = vpop.f32.mrf.mxu0
      %v2819 = vadd.f32 %v698, %v2818
      %v2820 = vpop.f32.mrf.mxu0
      %2821 = vmatprep.mubr.f32.mxu0 0.0
      %2822 = vmatmul.mubr.f32.gmra.mxu0 %v1014
      %v2823 = vpop.f32.mrf.mxu0
      %v2824 = vadd.f32 %v698, %v2823
      %v2825 = vpop.f32.mrf.mxu0
      %2826 = vmatprep.mubr.f32.mxu0 0.0
      %2827 = vmatmul.mubr.f32.gmra.mxu0 %v1017
      %v2828 = vpop.f32.mrf.mxu0
      %v2829 = vadd.f32 %v698, %v2828
      %v2830 = vpop.f32.mrf.mxu0
      %2831 = vmatprep.mubr.f32.mxu0 0.0
      %2832 = vmatmul.mubr.f32.gmra.mxu0 %v1020
      %v2833 = vpop.f32.mrf.mxu0
      %v2834 = vadd.f32 %v698, %v2833
      %v2835 = vpop.f32.mrf.mxu0
      %2836 = vmatprep.mubr.f32.mxu0 0.0
      %2837 = vmatmul.mubr.f32.gmra.mxu0 %v1023
      %v2838 = vpop.f32.mrf.mxu0
      %v2839 = vadd.f32 %v698, %v2838
      %v2840 = vpop.f32.mrf.mxu0
      %2841 = vmatprep.mubr.f32.mxu0 0.0
      %2842 = vmatmul.mubr.f32.gmra.mxu0 %v1026
      %v2843 = vpop.f32.mrf.mxu0
      %v2844 = vadd.f32 %v698, %v2843
      %v2845 = vpop.f32.mrf.mxu0
      %2846 = vmatprep.mubr.f32.mxu0 0.0
      %2847 = vmatmul.mubr.f32.gmra.mxu0 %v1029
      %v2848 = vpop.f32.mrf.mxu0
      %v2849 = vadd.f32 %v698, %v2848
      %v2850 = vpop.f32.mrf.mxu0
      %2851 = vmatprep.mubr.f32.mxu0 0.0
      %2852 = vmatmul.mubr.f32.gmra.mxu0 %v1032
      %v2853 = vpop.f32.mrf.mxu0
      %v2854 = vadd.f32 %v698, %v2853
      %v2855 = vpop.f32.mrf.mxu0
      %2856 = vmatprep.mubr.f32.mxu0 0.0
      %2857 = vmatmul.mubr.f32.gmra.mxu0 %v1035
      %v2858 = vpop.f32.mrf.mxu0
      %v2859 = vadd.f32 %v698, %v2858
      %v2860 = vpop.f32.mrf.mxu0
      %2861 = vmatprep.mubr.f32.mxu0 0.0
      %2862 = vmatmul.mubr.f32.gmra.mxu0 %v1038
      %v2863 = vpop.f32.mrf.mxu0
      %v2864 = vadd.f32 %v698, %v2863
      %v2865 = vpop.f32.mrf.mxu0
      %2866 = vmatprep.mubr.f32.mxu0 0.0
      %2867 = vmatmul.mubr.f32.gmra.mxu0 %v1041
      %v2868 = vpop.f32.mrf.mxu0
      %v2869 = vadd.f32 %v698, %v2868
      %v2870 = vpop.f32.mrf.mxu0
      %2871 = vmatprep.mubr.f32.mxu0 0.0
      %2872 = vmatmul.mubr.f32.gmra.mxu0 %v1044
      %v2873 = vpop.f32.mrf.mxu0
      %v2874 = vadd.f32 %v698, %v2873
      %v2875 = vpop.f32.mrf.mxu0
      %2876 = vmatprep.mubr.f32.mxu0 0.0
      %2877 = vmatmul.mubr.f32.gmra.mxu0 %v1047
      %v2878 = vpop.f32.mrf.mxu0
      %v2879 = vadd.f32 %v698, %v2878
      %v2880 = vpop.f32.mrf.mxu0
      %2881 = vmatprep.mubr.f32.mxu0 0.0
      %2882 = vmatmul.mubr.f32.gmra.mxu0 %v1050
      %v2883 = vpop.f32.mrf.mxu0
      %v2884 = vadd.f32 %v698, %v2883
      %v2885 = vpop.f32.mrf.mxu0
      %2886 = vmatprep.mubr.f32.mxu0 0.0
      %2887 = vmatmul.mubr.f32.gmra.mxu0 %v1053
      %v2888 = vpop.f32.mrf.mxu0
      %v2889 = vadd.f32 %v698, %v2888
      %v2890 = vpop.f32.mrf.mxu0
      %2891 = vmatprep.mubr.f32.mxu0 0.0
      %2892 = vmatmul.mubr.f32.gmra.mxu0 %v1056
      %v2893 = vpop.f32.mrf.mxu0
      %v2894 = vadd.f32 %v698, %v2893
      %v2895 = vpop.f32.mrf.mxu0
      %2896 = vmatprep.mubr.f32.mxu0 0.0
      %2897 = vmatmul.mubr.f32.gmra.mxu0 %v1059
      %v2898 = vpop.f32.mrf.mxu0
      %v2899 = vadd.f32 %v698, %v2898
      %v2900 = vpop.f32.mrf.mxu0
      %2901 = vmatprep.mubr.f32.mxu0 0.0
      %2902 = vmatmul.mubr.f32.gmra.mxu0 %v1062
      %v2903 = vpop.f32.mrf.mxu0
      %v2904 = vadd.f32 %v698, %v2903
      %v2905 = vpop.f32.mrf.mxu0
      %2906 = vmatprep.mubr.f32.mxu0 0.0
      %2907 = vmatmul.mubr.f32.gmra.mxu0 %v1065
      %v2908 = vpop.f32.mrf.mxu0
      %v2909 = vadd.f32 %v698, %v2908
      %v2910 = vpop.f32.mrf.mxu0
      %2911 = vmatprep.mubr.f32.mxu0 0.0
      %2912 = vmatmul.mubr.f32.gmra.mxu0 %v1068
      %v2913 = vpop.f32.mrf.mxu0
      %v2914 = vadd.f32 %v698, %v2913
      %v2915 = vpop.f32.mrf.mxu0
      %2916 = vmatprep.mubr.f32.mxu0 0.0
      %2917 = vmatmul.mubr.f32.gmra.mxu0 %v1071
      %v2918 = vpop.f32.mrf.mxu0
      %v2919 = vadd.f32 %v698, %v2918
      %v2920 = vpop.f32.mrf.mxu0
      %2921 = vmatprep.mubr.f32.mxu0 0.0
      %2922 = vmatmul.mubr.f32.gmra.mxu0 %v1074
      %v2923 = vpop.f32.mrf.mxu0
      %v2924 = vadd.f32 %v698, %v2923
      %v2925 = vpop.f32.mrf.mxu0
      %2926 = vmatprep.mubr.f32.mxu0 0.0
      %2927 = vmatmul.mubr.f32.gmra.mxu0 %v1077
      %v2928 = vpop.f32.mrf.mxu0
      %v2929 = vadd.f32 %v698, %v2928
      %v2930 = vpop.f32.mrf.mxu0
      %2931 = vmatprep.mubr.f32.mxu0 0.0
      %2932 = vmatmul.mubr.f32.gmra.mxu0 %v1080
      %v2933 = vpop.f32.mrf.mxu0
      %v2934 = vadd.f32 %v698, %v2933
      %v2935 = vpop.f32.mrf.mxu0
      %2936 = vmatprep.mubr.f32.mxu0 0.0
      %2937 = vmatmul.mubr.f32.gmra.mxu0 %v1083
      %v2938 = vpop.f32.mrf.mxu0
      %v2939 = vadd.f32 %v698, %v2938
      %v2940 = vpop.f32.mrf.mxu0
      %2941 = vmatprep.mubr.f32.mxu0 0.0
      %2942 = vmatmul.mubr.f32.gmra.mxu0 %v1086
      %v2943 = vpop.f32.mrf.mxu0
      %v2944 = vadd.f32 %v698, %v2943
      %v2945 = vpop.f32.mrf.mxu0
      %2946 = vmatprep.mubr.f32.mxu0 0.0
      %2947 = vmatmul.mubr.f32.gmra.mxu0 %v1089
      %v2948 = vpop.f32.mrf.mxu0
      %v2949 = vadd.f32 %v698, %v2948
      %v2950 = vpop.f32.mrf.mxu0
      %2951 = vmatprep.mubr.f32.mxu0 0.0
      %2952 = vmatmul.mubr.f32.gmra.mxu0 %v1092
      %v2953 = vpop.f32.mrf.mxu0
      %v2954 = vadd.f32 %v698, %v2953
      %v2955 = vpop.f32.mrf.mxu0
      %2956 = vmatprep.mubr.f32.mxu0 0.0
      %2957 = vmatmul.mubr.f32.gmra.mxu0 %v1095
      %v2958 = vpop.f32.mrf.mxu0
      %v2959 = vadd.f32 %v698, %v2958
      %v2960 = vpop.f32.mrf.mxu0
      %2961 = vmatprep.mubr.f32.mxu0 0.0
      %2962 = vmatmul.mubr.f32.gmra.mxu0 %v1098
      %v2963 = vpop.f32.mrf.mxu0
      %v2964 = vadd.f32 %v698, %v2963
      %v2965 = vpop.f32.mrf.mxu0
      %2966 = vmatprep.mubr.f32.mxu0 0.0
      %2967 = vmatmul.mubr.f32.gmra.mxu0 %v1101
      %v2968 = vpop.f32.mrf.mxu0
      %v2969 = vadd.f32 %v698, %v2968
      %v2970 = vpop.f32.mrf.mxu0
      %2971 = vmatprep.mubr.f32.mxu0 0.0
      %2972 = vmatmul.mubr.f32.gmra.mxu0 %v1104
      %v2973 = vpop.f32.mrf.mxu0
      %v2974 = vadd.f32 %v698, %v2973
      %v2975 = vpop.f32.mrf.mxu0
      %2976 = vmatprep.mubr.f32.mxu0 0.0
      %2977 = vmatmul.mubr.f32.gmra.mxu0 %v1107
      %v2978 = vpop.f32.mrf.mxu0
      %v2979 = vadd.f32 %v698, %v2978
      %v2980 = vpop.f32.mrf.mxu0
      %2981 = vmatprep.mubr.f32.mxu0 0.0
      %2982 = vmatmul.mubr.f32.gmra.mxu0 %v1110
      %v2983 = vpop.f32.mrf.mxu0
      %v2984 = vadd.f32 %v698, %v2983
      %v2985 = vpop.f32.mrf.mxu0
      %2986 = vmatprep.mubr.f32.mxu0 0.0
      %2987 = vmatmul.mubr.f32.gmra.mxu0 %v1113
      %v2988 = vpop.f32.mrf.mxu0
      %v2989 = vadd.f32 %v698, %v2988
      %v2990 = vpop.f32.mrf.mxu0
      %2991 = vmatprep.mubr.f32.mxu0 0.0
      %2992 = vmatmul.mubr.f32.gmra.mxu0 %v1116
      %v2993 = vpop.f32.mrf.mxu0
      %v2994 = vadd.f32 %v698, %v2993
      %v2995 = vpop.f32.mrf.mxu0
      %2996 = vmatprep.mubr.f32.mxu0 0.0
      %2997 = vmatmul.mubr.f32.gmra.mxu0 %v1119
      %v2998 = vpop.f32.mrf.mxu0
      %v2999 = vadd.f32 %v698, %v2998
      %v3000 = vpop.f32.mrf.mxu0
      %3001 = vmatprep.mubr.f32.mxu0 0.0
      %3002 = vmatmul.mubr.f32.gmra.mxu0 %v1122
      %v3003 = vpop.f32.mrf.mxu0
      %v3004 = vadd.f32 %v698, %v3003
      %v3005 = vpop.f32.mrf.mxu0
      %3006 = vmatprep.mubr.f32.mxu0 0.0
      %3007 = vmatmul.mubr.f32.gmra.mxu0 %v1125
      %v3008 = vpop.f32.mrf.mxu0
      %v3009 = vadd.f32 %v698, %v3008
      %v3010 = vpop.f32.mrf.mxu0
      %3011 = vmatprep.mubr.f32.mxu0 0.0
      %3012 = vmatmul.mubr.f32.gmra.mxu0 %v1128
      %v3013 = vpop.f32.mrf.mxu0
      %v3014 = vadd.f32 %v698, %v3013
      %v3015 = vpop.f32.mrf.mxu0
      %3016 = vmatprep.mubr.f32.mxu0 0.0
      %3017 = vmatmul.mubr.f32.gmra.mxu0 %v1131
      %v3018 = vpop.f32.mrf.mxu0
      %v3019 = vadd.f32 %v698, %v3018
      %v3020 = vpop.f32.mrf.mxu0
      %3021 = vmatprep.mubr.f32.mxu0 0.0
      %3022 = vmatmul.mubr.f32.gmra.mxu0 %v1134
      %v3023 = vpop.f32.mrf.mxu0
      %v3024 = vadd.f32 %v698, %v3023
      %v3025 = vpop.f32.mrf.mxu0
      %3026 = vmatprep.mubr.f32.mxu0 0.0
      %3027 = vmatmul.mubr.f32.gmra.mxu0 %v1137
      %v3028 = vpop.f32.mrf.mxu0
      %v3029 = vadd.f32 %v698, %v3028
      %v3030 = vpop.f32.mrf.mxu0
      %3031 = vmatprep.mubr.f32.mxu0 0.0
      %3032 = vmatmul.mubr.f32.gmra.mxu0 %v1140
      %v3033 = vpop.f32.mrf.mxu0
      %v3034 = vadd.f32 %v698, %v3033
      %v3035 = vpop.f32.mrf.mxu0
      %3036 = vmatprep.mubr.f32.mxu0 0.0
      %3037 = vmatmul.mubr.f32.gmra.mxu0 %v1143
      %v3038 = vpop.f32.mrf.mxu0
      %v3039 = vadd.f32 %v698, %v3038
      %v3040 = vpop.f32.mrf.mxu0
      %3041 = vmatprep.mubr.f32.mxu0 0.0
      %3042 = vmatmul.mubr.f32.gmra.mxu0 %v1146
      %v3043 = vpop.f32.mrf.mxu0
      %v3044 = vadd.f32 %v698, %v3043
      %v3045 = vpop.f32.mrf.mxu0
      %3046 = vmatprep.mubr.f32.mxu0 0.0
      %3047 = vmatmul.mubr.f32.gmra.mxu0 %v1149
      %v3048 = vpop.f32.mrf.mxu0
      %v3049 = vadd.f32 %v698, %v3048
      %v3050 = vpop.f32.mrf.mxu0
      %3051 = vmatprep.mubr.f32.mxu0 0.0
      %3052 = vmatmul.mubr.f32.gmra.mxu0 %v1152
      %v3053 = vpop.f32.mrf.mxu0
      %v3054 = vadd.f32 %v698, %v3053
      %v3055 = vpop.f32.mrf.mxu0
      %3056 = vmatprep.mubr.f32.mxu0 0.0
      %3057 = vmatmul.mubr.f32.gmra.mxu0 %v1155
      %v3058 = vpop.f32.mrf.mxu0
      %v3059 = vadd.f32 %v698, %v3058
      %v3060 = vpop.f32.mrf.mxu0
      %3061 = vmatprep.mubr.f32.mxu0 0.0
      %3062 = vmatmul.mubr.f32.gmra.mxu0 %v1158
      %v3063 = vpop.f32.mrf.mxu0
      %v3064 = vadd.f32 %v698, %v3063
      %v3065 = vpop.f32.mrf.mxu0
      %3066 = vmatprep.mubr.f32.mxu0 0.0
      %3067 = vmatmul.mubr.f32.gmra.mxu0 %v1161
      %v3068 = vpop.f32.mrf.mxu0
      %v3069 = vadd.f32 %v698, %v3068
      %v3070 = vpop.f32.mrf.mxu0
      %3071 = vmatprep.mubr.f32.mxu0 0.0
      %3072 = vmatmul.mubr.f32.gmra.mxu0 %v1164
      %v3073 = vpop.f32.mrf.mxu0
      %v3074 = vadd.f32 %v698, %v3073
      %v3075 = vpop.f32.mrf.mxu0
      %3076 = vmatprep.mubr.f32.mxu0 0.0
      %3077 = vmatmul.mubr.f32.gmra.mxu0 %v1167
      %v3078 = vpop.f32.mrf.mxu0
      %v3079 = vadd.f32 %v698, %v3078
      %v3080 = vpop.f32.mrf.mxu0
      %3081 = vmatprep.mubr.f32.mxu0 0.0
      %3082 = vmatmul.mubr.f32.gmra.mxu0 %v1170
      %v3083 = vpop.f32.mrf.mxu0
      %v3084 = vadd.f32 %v698, %v3083
      %v3085 = vpop.f32.mrf.mxu0
      %3086 = vmatprep.mubr.f32.mxu0 0.0
      %3087 = vmatmul.mubr.f32.gmra.mxu0 %v1173
      %v3088 = vpop.f32.mrf.mxu0
      %v3089 = vadd.f32 %v698, %v3088
      %v3090 = vpop.f32.mrf.mxu0
      %3091 = vmatprep.mubr.f32.mxu0 0.0
      %3092 = vmatmul.mubr.f32.gmra.mxu0 %v1176
      %v3093 = vpop.f32.mrf.mxu0
      %v3094 = vadd.f32 %v698, %v3093
      %v3095 = vpop.f32.mrf.mxu0
      %3096 = vmatprep.mubr.f32.mxu0 0.0
      %3097 = vmatmul.mubr.f32.gmra.mxu0 %v1179
      %v3098 = vpop.f32.mrf.mxu0
      %v3099 = vadd.f32 %v698, %v3098
      %v3100 = vpop.f32.mrf.mxu0
      %3101 = vmatprep.mubr.f32.mxu0 0.0
      %3102 = vmatmul.mubr.f32.gmra.mxu0 %v1182
      %v3103 = vpop.f32.mrf.mxu0
      %v3104 = vadd.f32 %v698, %v3103
      %v3105 = vpop.f32.mrf.mxu0
      %3106 = vmatprep.mubr.f32.mxu0 0.0
      %3107 = vmatmul.mubr.f32.gmra.mxu0 %v1185
      %v3108 = vpop.f32.mrf.mxu0
      %v3109 = vadd.f32 %v698, %v3108
      %v3110 = vpop.f32.mrf.mxu0
      %3111 = vmatprep.mubr.f32.mxu0 0.0
      %3112 = vmatmul.mubr.f32.gmra.mxu0 %v1188
      %v3113 = vpop.f32.mrf.mxu0
      %v3114 = vadd.f32 %v698, %v3113
      %v3115 = vpop.f32.mrf.mxu0
      %3116 = vmatprep.mubr.f32.mxu0 0.0
      %3117 = vmatmul.mubr.f32.gmra.mxu0 %v1191
      %v3118 = vpop.f32.mrf.mxu0
      %v3119 = vadd.f32 %v698, %v3118
      %v3120 = vpop.f32.mrf.mxu0
      %3121 = vmatprep.mubr.f32.mxu0 0.0
      %3122 = vmatmul.mubr.f32.gmra.mxu0 %v1194
      %v3123 = vpop.f32.mrf.mxu0
      %v3124 = vadd.f32 %v698, %v3123
      %v3125 = vpop.f32.mrf.mxu0
      %3126 = vmatprep.mubr.f32.mxu0 0.0
      %3127 = vmatmul.mubr.f32.gmra.mxu0 %v1197
      %v3128 = vpop.f32.mrf.mxu0
      %v3129 = vadd.f32 %v698, %v3128
      %v3130 = vpop.f32.mrf.mxu0
      %3131 = vmatprep.mubr.f32.mxu0 0.0
      %3132 = vmatmul.mubr.f32.gmra.mxu0 %v1200
      %v3133 = vpop.f32.mrf.mxu0
      %v3134 = vadd.f32 %v698, %v3133
      %v3135 = vpop.f32.mrf.mxu0
      %3136 = vmatprep.mubr.f32.mxu0 0.0
      %3137 = vmatmul.mubr.f32.gmra.mxu0 %v1203
      %v3138 = vpop.f32.mrf.mxu0
      %v3139 = vadd.f32 %v698, %v3138
      %v3140 = vpop.f32.mrf.mxu0
      %3141 = vmatprep.mubr.f32.mxu0 0.0
      %3142 = vmatmul.mubr.f32.gmra.mxu0 %v1206
      %v3143 = vpop.f32.mrf.mxu0
      %v3144 = vadd.f32 %v698, %v3143
      %v3145 = vpop.f32.mrf.mxu0
      %3146 = vmatprep.mubr.f32.mxu0 0.0
      %3147 = vmatmul.mubr.f32.gmra.mxu0 %v1209
      %v3148 = vpop.f32.mrf.mxu0
      %v3149 = vadd.f32 %v698, %v3148
      %v3150 = vpop.f32.mrf.mxu0
      %3151 = vmatprep.mubr.f32.mxu0 0.0
      %3152 = vmatmul.mubr.f32.gmra.mxu0 %v1212
      %v3153 = vpop.f32.mrf.mxu0
      %v3154 = vadd.f32 %v698, %v3153
      %v3155 = vpop.f32.mrf.mxu0
      %3156 = vmatprep.mubr.f32.mxu0 0.0
      %3157 = vmatmul.mubr.f32.gmra.mxu0 %v1215
      %v3158 = vpop.f32.mrf.mxu0
      %v3159 = vadd.f32 %v698, %v3158
      %v3160 = vpop.f32.mrf.mxu0
      %3161 = vmatprep.mubr.f32.mxu0 0.0
      %3162 = vmatmul.mubr.f32.gmra.mxu0 %v1218
      %v3163 = vpop.f32.mrf.mxu0
      %v3164 = vadd.f32 %v698, %v3163
      %v3165 = vpop.f32.mrf.mxu0
      %3166 = vmatprep.mubr.f32.mxu0 0.0
      %3167 = vmatmul.mubr.f32.gmra.mxu0 %v1221
      %v3168 = vpop.f32.mrf.mxu0
      %v3169 = vadd.f32 %v698, %v3168
      %v3170 = vpop.f32.mrf.mxu0
      %3171 = vmatprep.mubr.f32.mxu0 0.0
      %3172 = vmatmul.mubr.f32.gmra.mxu0 %v1224
      %v3173 = vpop.f32.mrf.mxu0
      %v3174 = vadd.f32 %v698, %v3173
      %v3175 = vpop.f32.mrf.mxu0
      %3176 = vmatprep.mubr.f32.mxu0 0.0
      %3177 = vmatmul.mubr.f32.gmra.mxu0 %v1227
      %v3178 = vpop.f32.mrf.mxu0
      %v3179 = vadd.f32 %v698, %v3178
      %v3180 = vpop.f32.mrf.mxu0
      %3181 = vmatprep.mubr.f32.mxu0 0.0
      %3182 = vmatmul.mubr.f32.gmra.mxu0 %v1230
      %v3183 = vpop.f32.mrf.mxu0
      %v3184 = vadd.f32 %v698, %v3183
      %v3185 = vpop.f32.mrf.mxu0
      %3186 = vmatprep.mubr.f32.mxu0 0.0
      %3187 = vmatmul.mubr.f32.gmra.mxu0 %v1233
      %v3188 = vpop.f32.mrf.mxu0
      %v3189 = vadd.f32 %v698, %v3188
      %v3190 = vpop.f32.mrf.mxu0
      %3191 = vmatprep.mubr.f32.mxu0 0.0
      %3192 = vmatmul.mubr.f32.gmra.mxu0 %v1236
      %v3193 = vpop.f32.mrf.mxu0
      %v3194 = vadd.f32 %v698, %v3193
      %v3195 = vpop.f32.mrf.mxu0
      %3196 = vmatprep.mubr.f32.mxu0 0.0
      %3197 = vmatmul.mubr.f32.gmra.mxu0 %v1239
      %v3198 = vpop.f32.mrf.mxu0
      %v3199 = vadd.f32 %v698, %v3198
      %v3200 = vpop.f32.mrf.mxu0
      %3201 = vmatprep.mubr.f32.mxu0 0.0
      %3202 = vmatmul.mubr.f32.gmra.mxu0 %v1242
      %v3203 = vpop.f32.mrf.mxu0
      %v3204 = vadd.f32 %v698, %v3203
      %v3205 = vpop.f32.mrf.mxu0
      %3206 = vmatprep.mubr.f32.mxu0 0.0
      %3207 = vmatmul.mubr.f32.gmra.mxu0 %v1245
      %v3208 = vpop.f32.mrf.mxu0
      %v3209 = vadd.f32 %v698, %v3208
      %v3210 = vpop.f32.mrf.mxu0
      %3211 = vmatprep.mubr.f32.mxu0 0.0
      %3212 = vmatmul.mubr.f32.gmra.mxu0 %v1248
      %v3213 = vpop.f32.mrf.mxu0
      %v3214 = vadd.f32 %v698, %v3213
      %v3215 = vpop.f32.mrf.mxu0
      %3216 = vmatprep.mubr.f32.mxu0 0.0
      %3217 = vmatmul.mubr.f32.gmra.mxu0 %v1251
      %v3218 = vpop.f32.mrf.mxu0
      %v3219 = vadd.f32 %v698, %v3218
      %v3220 = vpop.f32.mrf.mxu0
      %3221 = vmatprep.mubr.f32.mxu0 0.0
      %3222 = vmatmul.mubr.f32.gmra.mxu0 %v1254
      %v3223 = vpop.f32.mrf.mxu0
      %v3224 = vadd.f32 %v698, %v3223
      %v3225 = vpop.f32.mrf.mxu0
      %3226 = vmatprep.mubr.f32.mxu0 0.0
      %3227 = vmatmul.mubr.f32.gmra.mxu0 %v1257
      %v3228 = vpop.f32.mrf.mxu0
      %v3229 = vadd.f32 %v698, %v3228
      %v3230 = vpop.f32.mrf.mxu0
      %3231 = vmatprep.mubr.f32.mxu0 0.0
      %3232 = vmatmul.mubr.f32.gmra.mxu0 %v1260
      %v3233 = vpop.f32.mrf.mxu0
      %v3234 = vadd.f32 %v698, %v3233
      %v3235 = vpop.f32.mrf.mxu0
      %3236 = vmatprep.mubr.f32.mxu0 0.0
      %3237 = vmatmul.mubr.f32.gmra.mxu0 %v1263
      %v3238 = vpop.f32.mrf.mxu0
      %v3239 = vadd.f32 %v698, %v3238
      %v3240 = vpop.f32.mrf.mxu0
      %3241 = vmatprep.mubr.f32.mxu0 0.0
      %3242 = vmatmul.mubr.f32.gmra.mxu0 %v1266
      %v3243 = vpop.f32.mrf.mxu0
      %v3244 = vadd.f32 %v698, %v3243
      %v3245 = vpop.f32.mrf.mxu0
      %3246 = vmatprep.mubr.f32.mxu0 0.0
      %3247 = vmatmul.mubr.f32.gmra.mxu0 %v1269
      %v3248 = vpop.f32.mrf.mxu0
      %v3249 = vadd.f32 %v698, %v3248
      %v3250 = vpop.f32.mrf.mxu0
      %3251 = vmatprep.mubr.f32.mxu0 0.0
      %3252 = vmatmul.mubr.f32.gmra.mxu0 %v1272
      %v3253 = vpop.f32.mrf.mxu0
      %v3254 = vadd.f32 %v698, %v3253
      %v3255 = vpop.f32.mrf.mxu0
      %3256 = vmatprep.mubr.f32.mxu0 0.0
      %3257 = vmatmul.mubr.f32.gmra.mxu0 %v1275
      %v3258 = vpop.f32.mrf.mxu0
      %v3259 = vadd.f32 %v698, %v3258
      %v3260 = vpop.f32.mrf.mxu0
      %3261 = vmatprep.mubr.f32.mxu0 0.0
      %3262 = vmatmul.mubr.f32.gmra.mxu0 %v1278
      %v3263 = vpop.f32.mrf.mxu0
      %v3264 = vadd.f32 %v698, %v3263
      %v3265 = vpop.f32.mrf.mxu0
      %3266 = vmatprep.mubr.f32.mxu0 0.0
      %3267 = vmatmul.mubr.f32.gmra.mxu0 %v1281
      %v3268 = vpop.f32.mrf.mxu0
      %v3269 = vadd.f32 %v698, %v3268
      %v3270 = vpop.f32.mrf.mxu0
      %3271 = vmatprep.mubr.f32.mxu0 0.0
      %3272 = vmatmul.mubr.f32.gmra.mxu0 %v1284
      %v3273 = vpop.f32.mrf.mxu0
      %v3274 = vadd.f32 %v698, %v3273
      %v3275 = vpop.f32.mrf.mxu0
      %3276 = vmatprep.mubr.f32.mxu0 0.0
      %3277 = vmatmul.mubr.f32.gmra.mxu0 %v1287
      %v3278 = vpop.f32.mrf.mxu0
      %v3279 = vadd.f32 %v698, %v3278
      %v3280 = vpop.f32.mrf.mxu0
      %3281 = vmatprep.mubr.f32.mxu0 0.0
      %3282 = vmatmul.mubr.f32.gmra.mxu0 %v1290
      %v3283 = vpop.f32.mrf.mxu0
      %v3284 = vadd.f32 %v698, %v3283
      %v3285 = vpop.f32.mrf.mxu0
      %3286 = vmatprep.mubr.f32.mxu0 0.0
      %3287 = vmatmul.mubr.f32.gmra.mxu0 %v1293
      %v3288 = vpop.f32.mrf.mxu0
      %v3289 = vadd.f32 %v698, %v3288
      %v3290 = vpop.f32.mrf.mxu0
      %3291 = vmatprep.mubr.f32.mxu0 0.0
      %3292 = vmatmul.mubr.f32.gmra.mxu0 %v1296
      %v3293 = vpop.f32.mrf.mxu0
      %v3294 = vadd.f32 %v698, %v3293
      %v3295 = vpop.f32.mrf.mxu0
      %3296 = vmatprep.mubr.f32.mxu0 0.0
      %3297 = vmatmul.mubr.f32.gmra.mxu0 %v1299
      %v3298 = vpop.f32.mrf.mxu0
      %v3299 = vadd.f32 %v698, %v3298
      %v3300 = vpop.f32.mrf.mxu0
      %3301 = vmatprep.mubr.f32.mxu0 0.0
      %3302 = vmatmul.mubr.f32.gmra.mxu0 %v1302
      %v3303 = vpop.f32.mrf.mxu0
      %v3304 = vadd.f32 %v698, %v3303
      %v3305 = vpop.f32.mrf.mxu0
      %3306 = vmatprep.mubr.f32.mxu0 0.0
      %3307 = vmatmul.mubr.f32.gmra.mxu0 %v1305
      %v3308 = vpop.f32.mrf.mxu0
      %v3309 = vadd.f32 %v698, %v3308
      %v3310 = vpop.f32.mrf.mxu0
      %3311 = vmatprep.mubr.f32.mxu0 0.0
      %3312 = vmatmul.mubr.f32.gmra.mxu0 %v1308
      %v3313 = vpop.f32.mrf.mxu0
      %v3314 = vadd.f32 %v698, %v3313
      %v3315 = vpop.f32.mrf.mxu0
      %3316 = vmatprep.mubr.f32.mxu0 0.0
      %3317 = vmatmul.mubr.f32.gmra.mxu0 %v1311
      %v3318 = vpop.f32.mrf.mxu0
      %v3319 = vadd.f32 %v698, %v3318
      %v3320 = vpop.f32.mrf.mxu0
      %3321 = vmatprep.mubr.f32.mxu0 0.0
      %3322 = vmatmul.mubr.f32.gmra.mxu0 %v1314
      %v3323 = vpop.f32.mrf.mxu0
      %v3324 = vadd.f32 %v698, %v3323
      %v3325 = vpop.f32.mrf.mxu0
      %3326 = vmatprep.mubr.f32.mxu0 0.0
      %3327 = vmatmul.mubr.f32.gmra.mxu0 %v1317
      %v3328 = vpop.f32.mrf.mxu0
      %v3329 = vadd.f32 %v698, %v3328
      %v3330 = vpop.f32.mrf.mxu0
      %3331 = vmatprep.mubr.f32.mxu0 0.0
      %3332 = vmatmul.mubr.f32.gmra.mxu0 %v1320
      %v3333 = vpop.f32.mrf.mxu0
      %v3334 = vadd.f32 %v698, %v3333
      %v3335 = vpop.f32.mrf.mxu0
      %3336 = vmatprep.mubr.f32.mxu0 0.0
      %3337 = vmatmul.mubr.f32.gmra.mxu0 %v1323
      %v3338 = vpop.f32.mrf.mxu0
      %v3339 = vadd.f32 %v698, %v3338
      %v3340 = vpop.f32.mrf.mxu0
      %3341 = vmatprep.mubr.f32.mxu0 0.0
      %3342 = vmatmul.mubr.f32.gmra.mxu0 %v1326
      %v3343 = vpop.f32.mrf.mxu0
      %v3344 = vadd.f32 %v698, %v3343
      %v3345 = vpop.f32.mrf.mxu0
      %3346 = vmatprep.mubr.f32.mxu0 0.0
      %3347 = vmatmul.mubr.f32.gmra.mxu0 %v1329
      %v3348 = vpop.f32.mrf.mxu0
      %v3349 = vadd.f32 %v698, %v3348
      %v3350 = vpop.f32.mrf.mxu0
      %3351 = vmatprep.mubr.f32.mxu0 0.0
      %3352 = vmatmul.mubr.f32.gmra.mxu0 %v1332
      %v3353 = vpop.f32.mrf.mxu0
      %v3354 = vadd.f32 %v698, %v3353
      %v3355 = vpop.f32.mrf.mxu0
      %3356 = vmatprep.mubr.f32.mxu0 0.0
      %3357 = vmatmul.mubr.f32.gmra.mxu0 %v1335
      %v3358 = vpop.f32.mrf.mxu0
      %v3359 = vadd.f32 %v698, %v3358
      %v3360 = vpop.f32.mrf.mxu0
      %3361 = vmatprep.mubr.f32.mxu0 0.0
      %3362 = vmatmul.mubr.f32.gmra.mxu0 %v1338
      %v3363 = vpop.f32.mrf.mxu0
      %v3364 = vadd.f32 %v698, %v3363
      %v3365 = vpop.f32.mrf.mxu0
      %3366 = vmatprep.mubr.f32.mxu0 0.0
      %3367 = vmatmul.mubr.f32.gmra.mxu0 %v1341
      %v3368 = vpop.f32.mrf.mxu0
      %v3369 = vadd.f32 %v698, %v3368
      %v3370 = vpop.f32.mrf.mxu0
      %3371 = vmatprep.mubr.f32.mxu0 0.0
      %3372 = vmatmul.mubr.f32.gmra.mxu0 %v1344
      %v3373 = vpop.f32.mrf.mxu0
      %v3374 = vadd.f32 %v698, %v3373
      %v3375 = vpop.f32.mrf.mxu0
      %3376 = vmatprep.mubr.f32.mxu0 0.0
      %3377 = vmatmul.mubr.f32.gmra.mxu0 %v1347
      %v3378 = vpop.f32.mrf.mxu0
      %v3379 = vadd.f32 %v698, %v3378
      %v3380 = vpop.f32.mrf.mxu0
      %3381 = vmatprep.mubr.f32.mxu0 0.0
      %3382 = vmatmul.mubr.f32.gmra.mxu0 %v1350
      %v3383 = vpop.f32.mrf.mxu0
      %v3384 = vadd.f32 %v698, %v3383
      %v3385 = vpop.f32.mrf.mxu0
      %3386 = vmatprep.mubr.f32.mxu0 0.0
      %3387 = vmatmul.mubr.f32.gmra.mxu0 %v1353
      %v3388 = vpop.f32.mrf.mxu0
      %v3389 = vadd.f32 %v698, %v3388
      %v3390 = vpop.f32.mrf.mxu0
      %3391 = vmatprep.mubr.f32.mxu0 0.0
      %3392 = vmatmul.mubr.f32.gmra.mxu0 %v1356
      %v3393 = vpop.f32.mrf.mxu0
      %v3394 = vadd.f32 %v698, %v3393
      %v3395 = vpop.f32.mrf.mxu0
      %3396 = vmatprep.mubr.f32.mxu0 0.0
      %3397 = vmatmul.mubr.f32.gmra.mxu0 %v1359
      %v3398 = vpop.f32.mrf.mxu0
      %v3399 = vadd.f32 %v698, %v3398
      %v3400 = vpop.f32.mrf.mxu0
      %3401 = vmatprep.mubr.f32.mxu0 0.0
      %3402 = vmatmul.mubr.f32.gmra.mxu0 %v1362
      %v3403 = vpop.f32.mrf.mxu0
      %v3404 = vadd.f32 %v698, %v3403
      %v3405 = vpop.f32.mrf.mxu0
      %3406 = vmatprep.mubr.f32.mxu0 0.0
      %3407 = vmatmul.mubr.f32.gmra.mxu0 %v1365
      %v3408 = vpop.f32.mrf.mxu0
      %v3409 = vadd.f32 %v698, %v3408
      %v3410 = vpop.f32.mrf.mxu0
      %3411 = vmatprep.mubr.f32.mxu0 0.0
      %3412 = vmatmul.mubr.f32.gmra.mxu0 %v1368
      %v3413 = vpop.f32.mrf.mxu0
      %v3414 = vadd.f32 %v698, %v3413
      %v3415 = vpop.f32.mrf.mxu0
      %3416 = vmatprep.mubr.f32.mxu0 0.0
      %3417 = vmatmul.mubr.f32.gmra.mxu0 %v1371
      %v3418 = vpop.f32.mrf.mxu0
      %v3419 = vadd.f32 %v698, %v3418
      %v3420 = vpop.f32.mrf.mxu0
      %3421 = vmatprep.mubr.f32.mxu0 0.0
      %3422 = vmatmul.mubr.f32.gmra.mxu0 %v1374
      %v3423 = vpop.f32.mrf.mxu0
      %v3424 = vadd.f32 %v698, %v3423
      %v3425 = vpop.f32.mrf.mxu0
      %3426 = vmatprep.mubr.f32.mxu0 0.0
      %3427 = vmatmul.mubr.f32.gmra.mxu0 %v1377
      %v3428 = vpop.f32.mrf.mxu0
      %v3429 = vadd.f32 %v698, %v3428
      %v3430 = vpop.f32.mrf.mxu0
      %3431 = vmatprep.mubr.f32.mxu0 0.0
      %3432 = vmatmul.mubr.f32.gmra.mxu0 %v1380
      %v3433 = vpop.f32.mrf.mxu0
      %v3434 = vadd.f32 %v698, %v3433
      %v3435 = vpop.f32.mrf.mxu0
      %3436 = vmatprep.mubr.f32.mxu0 0.0
      %3437 = vmatmul.mubr.f32.gmra.mxu0 %v1383
      %v3438 = vpop.f32.mrf.mxu0
      %v3439 = vadd.f32 %v698, %v3438
      %v3440 = vpop.f32.mrf.mxu0
      %3441 = vmatprep.mubr.f32.mxu0 0.0
      %3442 = vmatmul.mubr.f32.gmra.mxu0 %v1386
      %v3443 = vpop.f32.mrf.mxu0
      %v3444 = vadd.f32 %v698, %v3443
      %v3445 = vpop.f32.mrf.mxu0
      %3446 = vmatprep.mubr.f32.mxu0 0.0
      %3447 = vmatmul.mubr.f32.gmra.mxu0 %v1389
      %v3448 = vpop.f32.mrf.mxu0
      %v3449 = vadd.f32 %v698, %v3448
      %v3450 = vpop.f32.mrf.mxu0
      %3451 = vmatprep.mubr.f32.mxu0 0.0
      %3452 = vmatmul.mubr.f32.gmra.mxu0 %v1392
      %v3453 = vpop.f32.mrf.mxu0
      %v3454 = vadd.f32 %v698, %v3453
      %v3455 = vpop.f32.mrf.mxu0
      %3456 = vmatprep.mubr.f32.mxu0 0.0
      %3457 = vmatmul.mubr.f32.gmra.mxu0 %v1395
      %v3458 = vpop.f32.mrf.mxu0
      %v3459 = vadd.f32 %v698, %v3458
      %v3460 = vpop.f32.mrf.mxu0
      %3461 = vmatprep.mubr.f32.mxu0 0.0
      %3462 = vmatmul.mubr.f32.gmra.mxu0 %v1398
      %v3463 = vpop.f32.mrf.mxu0
      %v3464 = vadd.f32 %v698, %v3463
      %v3465 = vpop.f32.mrf.mxu0
      %3466 = vmatprep.mubr.f32.mxu0 0.0
      %3467 = vmatmul.mubr.f32.gmra.mxu0 %v1401
      %v3468 = vpop.f32.mrf.mxu0
      %v3469 = vadd.f32 %v698, %v3468
      %v3470 = vpop.f32.mrf.mxu0
      %3471 = vmatprep.mubr.f32.mxu0 0.0
      %3472 = vmatmul.mubr.f32.gmra.mxu0 %v1404
      %v3473 = vpop.f32.mrf.mxu0
      %v3474 = vadd.f32 %v698, %v3473
      %v3475 = vpop.f32.mrf.mxu0
      %3476 = vmatprep.mubr.f32.mxu0 0.0
      %3477 = vmatmul.mubr.f32.gmra.mxu0 %v1407
      %v3478 = vpop.f32.mrf.mxu0
      %v3479 = vadd.f32 %v698, %v3478
      %v3480 = vpop.f32.mrf.mxu0
      %3481 = vmatprep.mubr.f32.mxu0 0.0
      %3482 = vmatmul.mubr.f32.gmra.mxu0 %v1410
      %v3483 = vpop.f32.mrf.mxu0
      %v3484 = vadd.f32 %v698, %v3483
      %v3485 = vpop.f32.mrf.mxu0
      %3486 = vmatprep.mubr.f32.mxu0 0.0
      %3487 = vmatmul.mubr.f32.gmra.mxu0 %v1413
      %v3488 = vpop.f32.mrf.mxu0
      %v3489 = vadd.f32 %v698, %v3488
      %v3490 = vpop.f32.mrf.mxu0
      %3491 = vmatprep.mubr.f32.mxu0 0.0
      %3492 = vmatmul.mubr.f32.gmra.mxu0 %v1416
      %v3493 = vpop.f32.mrf.mxu0
      %v3494 = vadd.f32 %v698, %v3493
      %v3495 = vpop.f32.mrf.mxu0
      %3496 = vmatprep.mubr.f32.mxu0 0.0
      %3497 = vmatmul.mubr.f32.gmra.mxu0 %v1419
      %v3498 = vpop.f32.mrf.mxu0
      %v3499 = vadd.f32 %v698, %v3498
      %v3500 = vpop.f32.mrf.mxu0
      %3501 = vmatprep.mubr.f32.mxu0 0.0
      %3502 = vmatmul.mubr.f32.gmra.mxu0 %v1422
      %v3503 = vpop.f32.mrf.mxu0
      %v3504 = vadd.f32 %v698, %v3503
      %v3505 = vpop.f32.mrf.mxu0
      %3506 = vmatprep.mubr.f32.mxu0 0.0
      %3507 = vmatmul.mubr.f32.gmra.mxu0 %v1425
      %v3508 = vpop.f32.mrf.mxu0
      %v3509 = vadd.f32 %v698, %v3508
      %v3510 = vpop.f32.mrf.mxu0
      %3511 = vmatprep.mubr.f32.mxu0 0.0
      %3512 = vmatmul.mubr.f32.gmra.mxu0 %v1428
      %v3513 = vpop.f32.mrf.mxu0
      %v3514 = vadd.f32 %v698, %v3513
      %v3515 = vpop.f32.mrf.mxu0
      %3516 = vmatprep.mubr.f32.mxu0 0.0
      %3517 = vmatmul.mubr.f32.gmra.mxu0 %v1431
      %v3518 = vpop.f32.mrf.mxu0
      %v3519 = vadd.f32 %v698, %v3518
      %v3520 = vpop.f32.mrf.mxu0
      %3521 = vmatprep.mubr.f32.mxu0 0.0
      %3522 = vmatmul.mubr.f32.gmra.mxu0 %v1434
      %v3523 = vpop.f32.mrf.mxu0
      %v3524 = vadd.f32 %v698, %v3523
      %v3525 = vpop.f32.mrf.mxu0
      %3526 = vmatprep.mubr.f32.mxu0 0.0
      %3527 = vmatmul.mubr.f32.gmra.mxu0 %v1437
      %v3528 = vpop.f32.mrf.mxu0
      %v3529 = vadd.f32 %v698, %v3528
      %v3530 = vpop.f32.mrf.mxu0
      %3531 = vmatprep.mubr.f32.mxu0 0.0
      %3532 = vmatmul.mubr.f32.gmra.mxu0 %v1440
      %v3533 = vpop.f32.mrf.mxu0
      %v3534 = vadd.f32 %v698, %v3533
      %v3535 = vpop.f32.mrf.mxu0
      %3536 = vmatprep.mubr.f32.mxu0 0.0
      %3537 = vmatmul.mubr.f32.gmra.mxu0 %v1443
      %v3538 = vpop.f32.mrf.mxu0
      %v3539 = vadd.f32 %v698, %v3538
      %v3540 = vpop.f32.mrf.mxu0
      %3541 = vmatprep.mubr.f32.mxu0 0.0
      %3542 = vmatmul.mubr.f32.gmra.mxu0 %v1446
      %v3543 = vpop.f32.mrf.mxu0
      %v3544 = vadd.f32 %v698, %v3543
      %v3545 = vpop.f32.mrf.mxu0
      %3546 = vmatprep.mubr.f32.mxu0 0.0
      %3547 = vmatmul.mubr.f32.gmra.mxu0 %v1449
      %v3548 = vpop.f32.mrf.mxu0
      %v3549 = vadd.f32 %v698, %v3548
      %v3550 = vpop.f32.mrf.mxu0
      %3551 = vmatprep.mubr.f32.mxu0 0.0
      %3552 = vmatmul.mubr.f32.gmra.mxu0 %v1452
      %v3553 = vpop.f32.mrf.mxu0
      %v3554 = vadd.f32 %v698, %v3553
      %v3555 = vpop.f32.mrf.mxu0
      %3556 = vmatprep.mubr.f32.mxu0 0.0
      %3557 = vmatmul.mubr.f32.gmra.mxu0 %v1455
      %v3558 = vpop.f32.mrf.mxu0
      %v3559 = vadd.f32 %v698, %v3558
      %v3560 = vpop.f32.mrf.mxu0
      %3561 = vmatprep.mubr.f32.mxu0 0.0
      %3562 = vmatmul.mubr.f32.gmra.mxu0 %v1458
      %v3563 = vpop.f32.mrf.mxu0
      %v3564 = vadd.f32 %v698, %v3563
      %v3565 = vpop.f32.mrf.mxu0
      %3566 = vmatprep.mubr.f32.mxu0 0.0
      %3567 = vmatmul.mubr.f32.gmra.mxu0 %v1461
      %v3568 = vpop.f32.mrf.mxu0
      %v3569 = vadd.f32 %v698, %v3568
      %v3570 = vpop.f32.mrf.mxu0
      %3571 = vmatprep.mubr.f32.mxu0 0.0
      %3572 = vmatmul.mubr.f32.gmra.mxu0 %v1464
      %v3573 = vpop.f32.mrf.mxu0
      %v3574 = vadd.f32 %v698, %v3573
      %v3575 = vpop.f32.mrf.mxu0
      %3576 = vmatprep.mubr.f32.mxu0 0.0
      %3577 = vmatmul.mubr.f32.gmra.mxu0 %v1467
      %v3578 = vpop.f32.mrf.mxu0
      %v3579 = vadd.f32 %v698, %v3578
      %v3580 = vpop.f32.mrf.mxu0
      %3581 = vmatprep.mubr.f32.mxu0 0.0
      %3582 = vmatmul.mubr.f32.gmra.mxu0 %v1470
      %v3583 = vpop.f32.mrf.mxu0
      %v3584 = vadd.f32 %v698, %v3583
      %v3585 = vpop.f32.mrf.mxu0
      %3586 = vmatprep.mubr.f32.mxu0 0.0
      %3587 = vmatmul.mubr.f32.gmra.mxu0 %v1473
      %v3588 = vpop.f32.mrf.mxu0
      %v3589 = vadd.f32 %v698, %v3588
      %v3590 = vpop.f32.mrf.mxu0
      %3591 = vmatprep.mubr.f32.mxu0 0.0
      %3592 = vmatmul.mubr.f32.gmra.mxu0 %v1476
      %v3593 = vpop.f32.mrf.mxu0
      %v3594 = vadd.f32 %v698, %v3593
      %v3595 = vpop.f32.mrf.mxu0
      %3596 = vmatprep.mubr.f32.mxu0 0.0
      %3597 = vmatmul.mubr.f32.gmra.mxu0 %v1479
      %v3598 = vpop.f32.mrf.mxu0
      %v3599 = vadd.f32 %v698, %v3598
      %v3600 = vpop.f32.mrf.mxu0
      %3601 = vmatprep.mubr.f32.mxu0 0.0
      %3602 = vmatmul.mubr.f32.gmra.mxu0 %v1482
      %v3603 = vpop.f32.mrf.mxu0
      %v3604 = vadd.f32 %v698, %v3603
      %v3605 = vpop.f32.mrf.mxu0
      %3606 = vmatprep.mubr.f32.mxu0 0.0
      %3607 = vmatmul.mubr.f32.gmra.mxu0 %v1485
      %v3608 = vpop.f32.mrf.mxu0
      %v3609 = vadd.f32 %v698, %v3608
      %v3610 = vpop.f32.mrf.mxu0
      %3611 = vmatprep.mubr.f32.mxu0 0.0
      %3612 = vmatmul.mubr.f32.gmra.mxu0 %v1488
      %v3613 = vpop.f32.mrf.mxu0
      %v3614 = vadd.f32 %v698, %v3613
      %v3615 = vpop.f32.mrf.mxu0
      %3616 = vmatprep.mubr.f32.mxu0 0.0
      %3617 = vmatmul.mubr.f32.gmra.mxu0 %v1491
      %v3618 = vpop.f32.mrf.mxu0
      %v3619 = vadd.f32 %v698, %v3618
      %v3620 = vpop.f32.mrf.mxu0
      %3621 = vmatprep.mubr.f32.mxu0 0.0
      %3622 = vmatmul.mubr.f32.gmra.mxu0 %v1494
      %v3623 = vpop.f32.mrf.mxu0
      %v3624 = vadd.f32 %v698, %v3623
      %v3625 = vpop.f32.mrf.mxu0
      %3626 = vmatprep.mubr.f32.mxu0 0.0
      %3627 = vmatmul.mubr.f32.gmra.mxu0 %v1497
      %v3628 = vpop.f32.mrf.mxu0
      %v3629 = vadd.f32 %v698, %v3628
      %v3630 = vpop.f32.mrf.mxu0
      %3631 = vmatprep.mubr.f32.mxu0 0.0
      %3632 = vmatmul.mubr.f32.gmra.mxu0 %v1500
      %v3633 = vpop.f32.mrf.mxu0
      %v3634 = vadd.f32 %v698, %v3633
      %v3635 = vpop.f32.mrf.mxu0
      %3636 = vmatprep.mubr.f32.mxu0 0.0
      %3637 = vmatmul.mubr.f32.gmra.mxu0 %v1503
      %v3638 = vpop.f32.mrf.mxu0
      %v3639 = vadd.f32 %v698, %v3638
      %v3640 = vpop.f32.mrf.mxu0
      %3641 = vmatprep.mubr.f32.mxu0 0.0
      %3642 = vmatmul.mubr.f32.gmra.mxu0 %v1506
      %v3643 = vpop.f32.mrf.mxu0
      %v3644 = vadd.f32 %v698, %v3643
      %v3645 = vpop.f32.mrf.mxu0
      %3646 = vmatprep.mubr.f32.mxu0 0.0
      %3647 = vmatmul.mubr.f32.gmra.mxu0 %v1509
      %v3648 = vpop.f32.mrf.mxu0
      %v3649 = vadd.f32 %v698, %v3648
      %v3650 = vpop.f32.mrf.mxu0
      %3651 = vmatprep.mubr.f32.mxu0 0.0
      %3652 = vmatmul.mubr.f32.gmra.mxu0 %v1512
      %v3653 = vpop.f32.mrf.mxu0
      %v3654 = vadd.f32 %v698, %v3653
      %v3655 = vpop.f32.mrf.mxu0
      %3656 = vmatprep.mubr.f32.mxu0 0.0
      %3657 = vmatmul.mubr.f32.gmra.mxu0 %v1515
      %v3658 = vpop.f32.mrf.mxu0
      %v3659 = vadd.f32 %v698, %v3658
      %v3660 = vpop.f32.mrf.mxu0
      %3661 = vmatprep.mubr.f32.mxu0 0.0
      %3662 = vmatmul.mubr.f32.gmra.mxu0 %v1518
      %v3663 = vpop.f32.mrf.mxu0
      %v3664 = vadd.f32 %v698, %v3663
      %v3665 = vpop.f32.mrf.mxu0
      %3666 = vmatprep.mubr.f32.mxu0 0.0
      %3667 = vmatmul.mubr.f32.gmra.mxu0 %v1521
      %v3668 = vpop.f32.mrf.mxu0
      %v3669 = vadd.f32 %v698, %v3668
      %v3670 = vpop.f32.mrf.mxu0
      %3671 = vmatprep.mubr.f32.mxu0 0.0
      %3672 = vmatmul.mubr.f32.gmra.mxu0 %v1524
      %v3673 = vpop.f32.mrf.mxu0
      %v3674 = vadd.f32 %v698, %v3673
      %v3675 = vpop.f32.mrf.mxu0
      %3676 = vmatprep.mubr.f32.mxu0 0.0
      %3677 = vmatmul.mubr.f32.gmra.mxu0 %v1527
      %v3678 = vpop.f32.mrf.mxu0
      %v3679 = vadd.f32 %v698, %v3678
      %v3680 = vpop.f32.mrf.mxu0
      %3681 = vmatprep.mubr.f32.mxu0 0.0
      %3682 = vmatmul.mubr.f32.gmra.mxu0 %v1530
      %v3683 = vpop.f32.mrf.mxu0
      %v3684 = vadd.f32 %v698, %v3683
      %v3685 = vpop.f32.mrf.mxu0
      %3686 = vmatprep.mubr.f32.mxu0 0.0
      %3687 = vmatmul.mubr.f32.gmra.mxu0 %v1533
      %v3688 = vpop.f32.mrf.mxu0
      %v3689 = vadd.f32 %v698, %v3688
      %v3690 = vpop.f32.mrf.mxu0
      %3691 = vmatprep.mubr.f32.mxu0 0.0
      %3692 = vmatmul.mubr.f32.gmra.mxu0 %v1536
      %v3693 = vpop.f32.mrf.mxu0
      %v3694 = vadd.f32 %v698, %v3693
      %v3695 = vpop.f32.mrf.mxu0
      %3696 = vmatprep.mubr.f32.mxu0 0.0
      %3697 = vmatmul.mubr.f32.gmra.mxu0 %v1539
      %v3698 = vpop.f32.mrf.mxu0
      %v3699 = vadd.f32 %v698, %v3698
      %v3700 = vpop.f32.mrf.mxu0
      %3701 = vmatprep.mubr.f32.mxu0 0.0
      %3702 = vmatmul.mubr.f32.gmra.mxu0 %v1542
      %v3703 = vpop.f32.mrf.mxu0
      %v3704 = vadd.f32 %v698, %v3703
      %v3705 = vpop.f32.mrf.mxu0
      %3706 = vmatprep.mubr.f32.mxu0 0.0
      %3707 = vmatmul.mubr.f32.gmra.mxu0 %v1545
      %v3708 = vpop.f32.mrf.mxu0
      %v3709 = vadd.f32 %v698, %v3708
      %v3710 = vpop.f32.mrf.mxu0
      %3711 = vmatprep.mubr.f32.mxu0 0.0
      %3712 = vmatmul.mubr.f32.gmra.mxu0 %v1548
      %v3713 = vpop.f32.mrf.mxu0
      %v3714 = vadd.f32 %v698, %v3713
      %v3715 = vpop.f32.mrf.mxu0
      %3716 = vmatprep.mubr.f32.mxu0 0.0
      %3717 = vmatmul.mubr.f32.gmra.mxu0 %v1551
      %v3718 = vpop.f32.mrf.mxu0
      %v3719 = vadd.f32 %v698, %v3718
      %v3720 = vpop.f32.mrf.mxu0
      %3721 = vmatprep.mubr.f32.mxu0 0.0
      %3722 = vmatmul.mubr.f32.gmra.mxu0 %v1554
      %v3723 = vpop.f32.mrf.mxu0
      %v3724 = vadd.f32 %v698, %v3723
      %v3725 = vpop.f32.mrf.mxu0
      %3726 = vmatprep.mubr.f32.mxu0 0.0
      %3727 = vmatmul.mubr.f32.gmra.mxu0 %v1557
      %v3728 = vpop.f32.mrf.mxu0
      %v3729 = vadd.f32 %v698, %v3728
      %v3730 = vpop.f32.mrf.mxu0
      %3731 = vmatprep.mubr.f32.mxu0 0.0
      %3732 = vmatmul.mubr.f32.gmra.mxu0 %v1560
      %v3733 = vpop.f32.mrf.mxu0
      %v3734 = vadd.f32 %v698, %v3733
      %v3735 = vpop.f32.mrf.mxu0
      %3736 = vmatprep.mubr.f32.mxu0 0.0
      %3737 = vmatmul.mubr.f32.gmra.mxu0 %v1563
      %v3738 = vpop.f32.mrf.mxu0
      %v3739 = vadd.f32 %v698, %v3738
      %v3740 = vpop.f32.mrf.mxu0
      %3741 = vmatprep.mubr.f32.mxu0 0.0
      %3742 = vmatmul.mubr.f32.gmra.mxu0 %v1566
      %v3743 = vpop.f32.mrf.mxu0
      %v3744 = vadd.f32 %v698, %v3743
      %v3745 = vpop.f32.mrf.mxu0
      %3746 = vmatprep.mubr.f32.mxu0 0.0
      %3747 = vmatmul.mubr.f32.gmra.mxu0 %v1569
      %v3748 = vpop.f32.mrf.mxu0
      %v3749 = vadd.f32 %v698, %v3748
      %v3750 = vpop.f32.mrf.mxu0
      %3751 = vmatprep.mubr.f32.mxu0 0.0
      %3752 = vmatmul.mubr.f32.gmra.mxu0 %v1572
      %v3753 = vpop.f32.mrf.mxu0
      %v3754 = vadd.f32 %v698, %v3753
      %v3755 = vpop.f32.mrf.mxu0
      %3756 = vmatprep.mubr.f32.mxu0 0.0
      %3757 = vmatmul.mubr.f32.gmra.mxu0 %v1575
      %v3758 = vpop.f32.mrf.mxu0
      %v3759 = vadd.f32 %v698, %v3758
      %v3760 = vpop.f32.mrf.mxu0
      %3761 = vmatprep.mubr.f32.mxu0 0.0
      %3762 = vmatmul.mubr.f32.gmra.mxu0 %v1578
      %v3763 = vpop.f32.mrf.mxu0
      %v3764 = vadd.f32 %v698, %v3763
      %v3765 = vpop.f32.mrf.mxu0
      %3766 = vmatprep.mubr.f32.mxu0 0.0
      %3767 = vmatmul.mubr.f32.gmra.mxu0 %v1581
      %v3768 = vpop.f32.mrf.mxu0
      %v3769 = vadd.f32 %v698, %v3768
      %v3770 = vpop.f32.mrf.mxu0
      %3771 = vmatprep.mubr.f32.mxu0 0.0
      %3772 = vmatmul.mubr.f32.gmra.mxu0 %v1584
      %v3773 = vpop.f32.mrf.mxu0
      %v3774 = vadd.f32 %v698, %v3773
      %v3775 = vpop.f32.mrf.mxu0
      %3776 = vmatprep.mubr.f32.mxu0 0.0
      %3777 = vmatmul.mubr.f32.gmra.mxu0 %v1587
      %v3778 = vpop.f32.mrf.mxu0
      %v3779 = vadd.f32 %v698, %v3778
      %v3780 = vpop.f32.mrf.mxu0
      %3781 = vmatprep.mubr.f32.mxu0 0.0
      %3782 = vmatmul.mubr.f32.gmra.mxu0 %v1590
      %v3783 = vpop.f32.mrf.mxu0
      %v3784 = vadd.f32 %v698, %v3783
      %v3785 = vpop.f32.mrf.mxu0
      %3786 = vmatprep.mubr.f32.mxu0 0.0
      %3787 = vmatmul.mubr.f32.gmra.mxu0 %v1593
      %v3788 = vpop.f32.mrf.mxu0
      %v3789 = vadd.f32 %v698, %v3788
      %v3790 = vpop.f32.mrf.mxu0
      %3791 = vmatprep.mubr.f32.mxu0 0.0
      %3792 = vmatmul.mubr.f32.gmra.mxu0 %v1596
      %v3793 = vpop.f32.mrf.mxu0
      %v3794 = vadd.f32 %v698, %v3793
      %v3795 = vpop.f32.mrf.mxu0
      %3796 = vmatprep.mubr.f32.mxu0 0.0
      %3797 = vmatmul.mubr.f32.gmra.mxu0 %v1599
      %v3798 = vpop.f32.mrf.mxu0
      %v3799 = vadd.f32 %v698, %v3798
      %v3800 = vpop.f32.mrf.mxu0
      %3801 = vmatprep.mubr.f32.mxu0 0.0
      %3802 = vmatmul.mubr.f32.gmra.mxu0 %v1602
      %v3803 = vpop.f32.mrf.mxu0
      %v3804 = vadd.f32 %v698, %v3803
      %v3805 = vpop.f32.mrf.mxu0
      %3806 = vmatprep.mubr.f32.mxu0 0.0
      %3807 = vmatmul.mubr.f32.gmra.mxu0 %v1605
      %v3808 = vpop.f32.mrf.mxu0
      %v3809 = vadd.f32 %v698, %v3808
      %v3810 = vpop.f32.mrf.mxu0
      %3811 = vmatprep.mubr.f32.mxu0 0.0
      %3812 = vmatmul.mubr.f32.gmra.mxu0 %v1608
      %v3813 = vpop.f32.mrf.mxu0
      %v3814 = vadd.f32 %v698, %v3813
      %v3815 = vpop.f32.mrf.mxu0
      %3816 = vmatprep.mubr.f32.mxu0 0.0
      %3817 = vmatmul.mubr.f32.gmra.mxu0 %v1611
      %v3818 = vpop.f32.mrf.mxu0
      %v3819 = vadd.f32 %v698, %v3818
      %v3820 = vpop.f32.mrf.mxu0
      %3821 = vmatprep.mubr.f32.mxu0 0.0
      %3822 = vmatmul.mubr.f32.gmra.mxu0 %v1614
      %v3823 = vpop.f32.mrf.mxu0
      %v3824 = vadd.f32 %v698, %v3823
      %v3825 = vpop.f32.mrf.mxu0
      %3826 = vmatprep.mubr.f32.mxu0 0.0
      %3827 = vmatmul.mubr.f32.gmra.mxu0 %v1617
      %v3828 = vpop.f32.mrf.mxu0
      %v3829 = vadd.f32 %v698, %v3828
      %v3830 = vpop.f32.mrf.mxu0
      %3831 = vmatprep.mubr.f32.mxu0 0.0
      %3832 = vmatmul.mubr.f32.gmra.mxu0 %v1620
      %v3833 = vpop.f32.mrf.mxu0
      %v3834 = vadd.f32 %v698, %v3833
      %v3835 = vpop.f32.mrf.mxu0
      %3836 = vmatprep.mubr.f32.mxu0 0.0
      %3837 = vmatmul.mubr.f32.gmra.mxu0 %v1623
      %v3838 = vpop.f32.mrf.mxu0
      %v3839 = vadd.f32 %v698, %v3838
      %v3840 = vpop.f32.mrf.mxu0
      %3841 = vmatprep.mubr.f32.mxu0 0.0
      %3842 = vmatmul.mubr.f32.gmra.mxu0 %v1626
      %v3843 = vpop.f32.mrf.mxu0
      %v3844 = vadd.f32 %v698, %v3843
      %v3845 = vpop.f32.mrf.mxu0
      %3846 = vmatprep.mubr.f32.mxu0 0.0
      %3847 = vmatmul.mubr.f32.gmra.mxu0 %v1629
      %v3848 = vpop.f32.mrf.mxu0
      %v3849 = vadd.f32 %v698, %v3848
      %v3850 = vpop.f32.mrf.mxu0
      %3851 = vmatprep.mubr.f32.mxu0 0.0
      %3852 = vmatmul.mubr.f32.gmra.mxu0 %v1632
      %v3853 = vpop.f32.mrf.mxu0
      %v3854 = vadd.f32 %v698, %v3853
      %v3855 = vpop.f32.mrf.mxu0
      %3856 = vmatprep.mubr.f32.mxu0 0.0
      %3857 = vmatmul.mubr.f32.gmra.mxu0 %v1635
      %v3858 = vpop.f32.mrf.mxu0
      %v3859 = vadd.f32 %v698, %v3858
      %v3860 = vpop.f32.mrf.mxu0
      %3861 = vmatprep.mubr.f32.mxu0 0.0
      %3862 = vmatmul.mubr.f32.gmra.mxu0 %v1638
      %v3863 = vpop.f32.mrf.mxu0
      %v3864 = vadd.f32 %v698, %v3863
      %v3865 = vpop.f32.mrf.mxu0
      %3866 = vmatprep.mubr.f32.mxu0 0.0
      %3867 = vmatmul.mubr.f32.gmra.mxu0 %v1641
      %v3868 = vpop.f32.mrf.mxu0
      %v3869 = vadd.f32 %v698, %v3868
      %v3870 = vpop.f32.mrf.mxu0
      %3871 = vmatprep.mubr.f32.mxu0 0.0
      %3872 = vmatmul.mubr.f32.gmra.mxu0 %v1644
      %v3873 = vpop.f32.mrf.mxu0
      %v3874 = vadd.f32 %v698, %v3873
      %v3875 = vpop.f32.mrf.mxu0
      %3876 = vmatprep.mubr.f32.mxu0 0.0
      %3877 = vmatmul.mubr.f32.gmra.mxu0 %v1647
      %v3878 = vpop.f32.mrf.mxu0
      %v3879 = vadd.f32 %v698, %v3878
      %v3880 = vpop.f32.mrf.mxu0
      %3881 = vmatprep.mubr.f32.mxu0 0.0
      %3882 = vmatmul.mubr.f32.gmra.mxu0 %v1650
      %v3883 = vpop.f32.mrf.mxu0
      %v3884 = vadd.f32 %v698, %v3883
      %v3885 = vpop.f32.mrf.mxu0
      %3886 = vmatprep.mubr.f32.mxu0 0.0
      %3887 = vmatmul.mubr.f32.gmra.mxu0 %v1653
      %v3888 = vpop.f32.mrf.mxu0
      %v3889 = vadd.f32 %v698, %v3888
      %v3890 = vpop.f32.mrf.mxu0
      %3891 = vmatprep.mubr.f32.mxu0 0.0
      %3892 = vmatmul.mubr.f32.gmra.mxu0 %v1656
      %v3893 = vpop.f32.mrf.mxu0
      %v3894 = vadd.f32 %v698, %v3893
      %v3895 = vpop.f32.mrf.mxu0
      %3896 = vmatprep.mubr.f32.mxu0 0.0
      %3897 = vmatmul.mubr.f32.gmra.mxu0 %v1659
      %v3898 = vpop.f32.mrf.mxu0
      %v3899 = vadd.f32 %v698, %v3898
      %v3900 = vpop.f32.mrf.mxu0
      %3901 = vmatprep.mubr.f32.mxu0 0.0
      %3902 = vmatmul.mubr.f32.gmra.mxu0 %v1662
      %v3903 = vpop.f32.mrf.mxu0
      %v3904 = vadd.f32 %v698, %v3903
      %v3905 = vpop.f32.mrf.mxu0
      %3906 = vmatprep.mubr.f32.mxu0 0.0
      %3907 = vmatmul.mubr.f32.gmra.mxu0 %v1665
      %v3908 = vpop.f32.mrf.mxu0
      %v3909 = vadd.f32 %v698, %v3908
      %v3910 = vpop.f32.mrf.mxu0
      %3911 = vmatprep.mubr.f32.mxu0 0.0
      %3912 = vmatmul.mubr.f32.gmra.mxu0 %v1668
      %v3913 = vpop.f32.mrf.mxu0
      %v3914 = vadd.f32 %v698, %v3913
      %v3915 = vpop.f32.mrf.mxu0
      %3916 = vmatprep.mubr.f32.mxu0 0.0
      %3917 = vmatmul.mubr.f32.gmra.mxu0 %v1671
      %v3918 = vpop.f32.mrf.mxu0
      %v3919 = vadd.f32 %v698, %v3918
      %v3920 = vpop.f32.mrf.mxu0
      %3921 = vmatprep.mubr.f32.mxu0 0.0
      %3922 = vmatmul.mubr.f32.gmra.mxu0 %v1674
      %v3923 = vpop.f32.mrf.mxu0
      %v3924 = vadd.f32 %v698, %v3923
      %v3925 = vpop.f32.mrf.mxu0
      %3926 = vmatprep.mubr.f32.mxu0 0.0
      %3927 = vmatmul.mubr.f32.gmra.mxu0 %v1677
      %v3928 = vpop.f32.mrf.mxu0
      %v3929 = vadd.f32 %v698, %v3928
      %v3930 = vpop.f32.mrf.mxu0
      %3931 = vmatprep.mubr.f32.mxu0 0.0
      %3932 = vmatmul.mubr.f32.gmra.mxu0 %v1680
      %v3933 = vpop.f32.mrf.mxu0
      %v3934 = vadd.f32 %v698, %v3933
      %v3935 = vpop.f32.mrf.mxu0
      %3936 = vmatprep.mubr.f32.mxu0 0.0
      %3937 = vmatmul.mubr.f32.gmra.mxu0 %v1683
      %v3938 = vpop.f32.mrf.mxu0
      %v3939 = vadd.f32 %v698, %v3938
      %v3940 = vpop.f32.mrf.mxu0
      %3941 = vmatprep.mubr.f32.mxu0 0.0
      %3942 = vmatmul.mubr.f32.gmra.mxu0 %v1686
      %v3943 = vpop.f32.mrf.mxu0
      %v3944 = vadd.f32 %v698, %v3943
      %v3945 = vpop.f32.mrf.mxu0
      %3946 = vmatprep.mubr.f32.mxu0 0.0
      %3947 = vmatmul.mubr.f32.gmra.mxu0 %v1689
      %v3948 = vpop.f32.mrf.mxu0
      %v3949 = vadd.f32 %v698, %v3948
      %v3950 = vpop.f32.mrf.mxu0
      %3951 = vmatprep.mubr.f32.mxu0 0.0
      %3952 = vmatmul.mubr.f32.gmra.mxu0 %v1692
      %v3953 = vpop.f32.mrf.mxu0
      %v3954 = vadd.f32 %v698, %v3953
      %v3955 = vpop.f32.mrf.mxu0
      %3956 = vmatprep.mubr.f32.mxu0 0.0
      %3957 = vmatmul.mubr.f32.gmra.mxu0 %v1695
      %v3958 = vpop.f32.mrf.mxu0
      %v3959 = vadd.f32 %v698, %v3958
      %v3960 = vpop.f32.mrf.mxu0
      %3961 = vmatprep.mubr.f32.mxu0 0.0
      %3962 = vmatmul.mubr.f32.gmra.mxu0 %v1698
      %v3963 = vpop.f32.mrf.mxu0
      %v3964 = vadd.f32 %v698, %v3963
      %v3965 = vpop.f32.mrf.mxu0
      %3966 = vmatprep.mubr.f32.mxu0 0.0
      %3967 = vmatmul.mubr.f32.gmra.mxu0 %v1701
      %v3968 = vpop.f32.mrf.mxu0
      %v3969 = vadd.f32 %v698, %v3968
      %v3970 = vpop.f32.mrf.mxu0
      %3971 = vmatprep.mubr.f32.mxu0 0.0
      %3972 = vmatmul.mubr.f32.gmra.mxu0 %v1704
      %v3973 = vpop.f32.mrf.mxu0
      %v3974 = vadd.f32 %v698, %v3973
      %v3975 = vpop.f32.mrf.mxu0
      %3976 = vmatprep.mubr.f32.mxu0 0.0
      %3977 = vmatmul.mubr.f32.gmra.mxu0 %v1707
      %v3978 = vpop.f32.mrf.mxu0
      %v3979 = vadd.f32 %v698, %v3978
      %v3980 = vpop.f32.mrf.mxu0
      %3981 = vmatprep.mubr.f32.mxu0 0.0
      %3982 = vmatmul.mubr.f32.gmra.mxu0 %v1710
      %v3983 = vpop.f32.mrf.mxu0
      %v3984 = vadd.f32 %v698, %v3983
      %v3985 = vpop.f32.mrf.mxu0
      %3986 = vmatprep.mubr.f32.mxu0 0.0
      %3987 = vmatmul.mubr.f32.gmra.mxu0 %v1713
      %v3988 = vpop.f32.mrf.mxu0
      %v3989 = vadd.f32 %v698, %v3988
      %v3990 = vpop.f32.mrf.mxu0
      %3991 = vmatprep.mubr.f32.mxu0 0.0
      %3992 = vmatmul.mubr.f32.gmra.mxu0 %v1716
      %v3993 = vpop.f32.mrf.mxu0
      %v3994 = vadd.f32 %v698, %v3993
      %v3995 = vpop.f32.mrf.mxu0
      %3996 = vmatprep.mubr.f32.mxu0 0.0
      %3997 = vmatmul.mubr.f32.gmra.mxu0 %v1719
      %v3998 = vpop.f32.mrf.mxu0
      %v3999 = vadd.f32 %v698, %v3998
      %v4000 = vpop.f32.mrf.mxu0
      %4001 = vmatprep.mubr.f32.mxu0 0.0
      %4002 = vmatmul.mubr.f32.gmra.mxu0 %v1722
      %v4003 = vpop.f32.mrf.mxu0
      %v4004 = vadd.f32 %v698, %v4003
      %v4005 = vpop.f32.mrf.mxu0
      %4006 = vmatprep.mubr.f32.mxu0 0.0
      %4007 = vmatmul.mubr.f32.gmra.mxu0 %v1725
      %v4008 = vpop.f32.mrf.mxu0
      %v4009 = vadd.f32 %v698, %v4008
      %v4010 = vpop.f32.mrf.mxu0
      %4011 = vmatprep.mubr.f32.mxu0 0.0
      %4012 = vmatmul.mubr.f32.gmra.mxu0 %v1728
      %v4013 = vpop.f32.mrf.mxu0
      %v4014 = vadd.f32 %v698, %v4013
      %v4015 = vpop.f32.mrf.mxu0
      %4016 = vmatprep.mubr.f32.mxu0 0.0
      %4017 = vmatmul.mubr.f32.gmra.mxu0 %v1731
      %v4018 = vpop.f32.mrf.mxu0
      %v4019 = vadd.f32 %v698, %v4018
      %v4020 = vpop.f32.mrf.mxu0
      %4021 = vmatprep.mubr.f32.mxu0 0.0
      %4022 = vmatmul.mubr.f32.gmra.mxu0 %v1734
      %v4023 = vpop.f32.mrf.mxu0
      %v4024 = vadd.f32 %v698, %v4023
      %v4025 = vpop.f32.mrf.mxu0
      %4026 = vmatprep.mubr.f32.mxu0 0.0
      %4027 = vmatmul.mubr.f32.gmra.mxu0 %v1737
      %v4028 = vpop.f32.mrf.mxu0
      %v4029 = vadd.f32 %v698, %v4028
      %v4030 = vpop.f32.mrf.mxu0
      %4031 = vmatprep.mubr.f32.mxu0 0.0
      %4032 = vmatmul.mubr.f32.gmra.mxu0 %v1740
      %v4033 = vpop.f32.mrf.mxu0
      %v4034 = vadd.f32 %v698, %v4033
      %v4035 = vpop.f32.mrf.mxu0
      %4036 = vmatprep.mubr.f32.mxu0 0.0
      %4037 = vmatmul.mubr.f32.gmra.mxu0 %v1743
      %v4038 = vpop.f32.mrf.mxu0
      %v4039 = vadd.f32 %v698, %v4038
      %v4040 = vpop.f32.mrf.mxu0
      %4041 = vmatprep.mubr.f32.mxu0 0.0
      %4042 = vmatmul.mubr.f32.gmra.mxu0 %v1746
      %v4043 = vpop.f32.mrf.mxu0
      %v4044 = vadd.f32 %v698, %v4043
      %v4045 = vpop.f32.mrf.mxu0
      %4046 = vmatprep.mubr.f32.mxu0 0.0
      %4047 = vmatmul.mubr.f32.gmra.mxu0 %v1749
      %v4048 = vpop.f32.mrf.mxu0
      %v4049 = vadd.f32 %v698, %v4048
      %v4050 = vpop.f32.mrf.mxu0
      %4051 = vmatprep.mubr.f32.mxu0 0.0
      %4052 = vmatmul.mubr.f32.gmra.mxu0 %v1752
      %v4053 = vpop.f32.mrf.mxu0
      %v4054 = vadd.f32 %v698, %v4053
      %v4055 = vpop.f32.mrf.mxu0
      %4056 = vmatprep.mubr.f32.mxu0 0.0
      %4057 = vmatmul.mubr.f32.gmra.mxu0 %v1755
      %v4058 = vpop.f32.mrf.mxu0
      %v4059 = vadd.f32 %v698, %v4058
      %v4060 = vpop.f32.mrf.mxu0
      %4061 = vmatprep.mubr.f32.mxu0 0.0
      %4062 = vmatmul.mubr.f32.gmra.mxu0 %v1758
      %v4063 = vpop.f32.mrf.mxu0
      %v4064 = vadd.f32 %v698, %v4063
      %v4065 = vpop.f32.mrf.mxu0
      %4066 = vmatprep.mubr.f32.mxu0 0.0
      %4067 = vmatmul.mubr.f32.gmra.mxu0 %v1761
      %v4068 = vpop.f32.mrf.mxu0
      %v4069 = vadd.f32 %v698, %v4068
      %v4070 = vpop.f32.mrf.mxu0
      %4071 = vmatprep.mubr.f32.mxu0 0.0
      %4072 = vmatmul.mubr.f32.gmra.mxu0 %v1764
      %v4073 = vpop.f32.mrf.mxu0
      %v4074 = vadd.f32 %v698, %v4073
      %v4075 = vpop.f32.mrf.mxu0
      %4076 = vmatprep.mubr.f32.mxu0 0.0
      %4077 = vmatmul.mubr.f32.gmra.mxu0 %v1767
      %v4078 = vpop.f32.mrf.mxu0
      %v4079 = vadd.f32 %v698, %v4078
      %v4080 = vpop.f32.mrf.mxu0
      %4081 = vmatprep.mubr.f32.mxu0 0.0
      %4082 = vmatmul.mubr.f32.gmra.mxu0 %v1770
      %v4083 = vpop.f32.mrf.mxu0
      %v4084 = vadd.f32 %v698, %v4083
      %v4085 = vpop.f32.mrf.mxu0
      %4086 = vmatprep.mubr.f32.mxu0 0.0
      %4087 = vmatmul.mubr.f32.gmra.mxu0 %v1773
      %v4088 = vpop.f32.mrf.mxu0
      %v4089 = vadd.f32 %v698, %v4088
      %v4090 = vpop.f32.mrf.mxu0
      %4091 = vmatprep.mubr.f32.mxu0 0.0
      %4092 = vmatmul.mubr.f32.gmra.mxu0 %v1776
      %v4093 = vpop.f32.mrf.mxu0
      %v4094 = vadd.f32 %v698, %v4093
      %v4095 = vpop.f32.mrf.mxu0
      %4096 = vmatprep.mubr.f32.mxu0 0.0
      %4097 = vmatmul.mubr.f32.gmra.mxu0 %v1779
      %v4098 = vpop.f32.mrf.mxu0
      %v4099 = vadd.f32 %v698, %v4098
      %v4100 = vpop.f32.mrf.mxu0
      %4101 = vmatprep.mubr.f32.mxu0 0.0
      %4102 = vmatmul.mubr.f32.gmra.mxu0 %v1782
      %v4103 = vpop.f32.mrf.mxu0
      %v4104 = vadd.f32 %v698, %v4103
      %v4105 = vpop.f32.mrf.mxu0
      %4106 = vmatprep.mubr.f32.mxu0 0.0
      %4107 = vmatmul.mubr.f32.gmra.mxu0 %v1785
      %v4108 = vpop.f32.mrf.mxu0
      %v4109 = vadd.f32 %v698, %v4108
      %v4110 = vpop.f32.mrf.mxu0
      %4111 = vmatprep.mubr.f32.mxu0 0.0
      %4112 = vmatmul.mubr.f32.gmra.mxu0 %v1788
      %v4113 = vpop.f32.mrf.mxu0
      %v4114 = vadd.f32 %v698, %v4113
      %v4115 = vpop.f32.mrf.mxu0
      %4116 = vmatprep.mubr.f32.mxu0 0.0
      %4117 = vmatmul.mubr.f32.gmra.mxu0 %v1791
      %v4118 = vpop.f32.mrf.mxu0
      %v4119 = vadd.f32 %v698, %v4118
      %v4120 = vpop.f32.mrf.mxu0
      %4121 = vmatprep.mubr.f32.mxu0 0.0
      %4122 = vmatmul.mubr.f32.gmra.mxu0 %v1794
      %v4123 = vpop.f32.mrf.mxu0
      %v4124 = vadd.f32 %v698, %v4123
      %v4125 = vpop.f32.mrf.mxu0
      %4126 = vmatprep.mubr.f32.mxu0 0.0
      %4127 = vmatmul.mubr.f32.gmra.mxu0 %v1797
      %v4128 = vpop.f32.mrf.mxu0
      %v4129 = vadd.f32 %v698, %v4128
      %v4130 = vpop.f32.mrf.mxu0
      %4131 = vmatprep.mubr.f32.mxu0 0.0
      %4132 = vmatmul.mubr.f32.gmra.mxu0 %v1800
      %v4133 = vpop.f32.mrf.mxu0
      %v4134 = vadd.f32 %v698, %v4133
      %v4135 = vpop.f32.mrf.mxu0
      %4136 = vmatprep.mubr.f32.mxu0 0.0
      %4137 = vmatmul.mubr.f32.gmra.mxu0 %v1803
      %v4138 = vpop.f32.mrf.mxu0
      %v4139 = vadd.f32 %v698, %v4138
      %v4140 = vpop.f32.mrf.mxu0
      %4141 = vmatprep.mubr.f32.mxu0 0.0
      %4142 = vmatmul.mubr.f32.gmra.mxu0 %v1806
      %v4143 = vpop.f32.mrf.mxu0
      %v4144 = vadd.f32 %v698, %v4143
      %v4145 = vpop.f32.mrf.mxu0
      %4146 = vmatprep.mubr.f32.mxu0 0.0
      %4147 = vmatmul.mubr.f32.gmra.mxu0 %v1809
      %v4148 = vpop.f32.mrf.mxu0
      %v4149 = vadd.f32 %v698, %v4148
      %v4150 = vpop.f32.mrf.mxu0
      %4151 = vmatprep.mubr.f32.mxu0 0.0
      %4152 = vmatmul.mubr.f32.gmra.mxu0 %v1812
      %v4153 = vpop.f32.mrf.mxu0
      %v4154 = vadd.f32 %v698, %v4153
      %v4155 = vpop.f32.mrf.mxu0
      %4156 = vmatprep.mubr.f32.mxu0 0.0
      %4157 = vmatmul.mubr.f32.gmra.mxu0 %v1815
      %v4158 = vpop.f32.mrf.mxu0
      %v4159 = vadd.f32 %v698, %v4158
      %v4160 = vpop.f32.mrf.mxu0
      %4161 = vmatprep.mubr.f32.mxu0 0.0
      %4162 = vmatmul.mubr.f32.gmra.mxu0 %v1818
      %v4163 = vpop.f32.mrf.mxu0
      %v4164 = vadd.f32 %v698, %v4163
      %v4165 = vpop.f32.mrf.mxu0
      %4166 = vmatprep.mubr.f32.mxu0 0.0
      %4167 = vmatmul.mubr.f32.gmra.mxu0 %v1821
      %v4168 = vpop.f32.mrf.mxu0
      %v4169 = vadd.f32 %v698, %v4168
      %v4170 = vpop.f32.mrf.mxu0
      %4171 = vmatprep.mubr.f32.mxu0 0.0
      %4172 = vmatmul.mubr.f32.gmra.mxu0 %v1824
      %v4173 = vpop.f32.mrf.mxu0
      %v4174 = vadd.f32 %v698, %v4173
      %v4175 = vpop.f32.mrf.mxu0
      %4176 = vmatprep.mubr.f32.mxu0 0.0
      %4177 = vmatmul.mubr.f32.gmra.mxu0 %v1827
      %v4178 = vpop.f32.mrf.mxu0
      %v4179 = vadd.f32 %v698, %v4178
      %v4180 = vpop.f32.mrf.mxu0
      %4181 = vmatprep.mubr.f32.mxu0 0.0
      %4182 = vmatmul.mubr.f32.gmra.mxu0 %v1830
      %v4183 = vpop.f32.mrf.mxu0
      %v4184 = vadd.f32 %v698, %v4183
      %v4185 = vpop.f32.mrf.mxu0
      %4186 = vmatprep.mubr.f32.mxu0 0.0
      %4187 = vmatmul.mubr.f32.gmra.mxu0 %v1833
      %v4188 = vpop.f32.mrf.mxu0
      %v4189 = vadd.f32 %v698, %v4188
      %v4190 = vpop.f32.mrf.mxu0
      %4191 = vmatprep.mubr.f32.mxu0 0.0
      %4192 = vmatmul.mubr.f32.gmra.mxu0 %v1836
      %v4193 = vpop.f32.mrf.mxu0
      %v4194 = vadd.f32 %v698, %v4193
      %v4195 = vpop.f32.mrf.mxu0
      %4196 = vmatprep.mubr.f32.mxu0 0.0
      %4197 = vmatmul.mubr.f32.gmra.mxu0 %v1839
      %v4198 = vpop.f32.mrf.mxu0
      %v4199 = vadd.f32 %v698, %v4198
      %v4200 = vpop.f32.mrf.mxu0
      %4201 = vmatprep.mubr.f32.mxu0 0.0
      %4202 = vmatmul.mubr.f32.gmra.mxu0 %v1842
      %v4203 = vpop.f32.mrf.mxu0
      %v4204 = vadd.f32 %v698, %v4203
      %v4205 = vpop.f32.mrf.mxu0
      %4206 = vmatprep.mubr.f32.mxu0 0.0
      %4207 = vmatmul.mubr.f32.gmra.mxu0 %v1845
      %v4208 = vpop.f32.mrf.mxu0
      %v4209 = vadd.f32 %v698, %v4208
      %v4210 = vpop.f32.mrf.mxu0
      %4211 = vmatprep.mubr.f32.mxu0 0.0
      %4212 = vmatmul.mubr.f32.gmra.mxu0 %v1848
      %v4213 = vpop.f32.mrf.mxu0
      %v4214 = vadd.f32 %v698, %v4213
      %v4215 = vpop.f32.mrf.mxu0
      %4216 = vmatprep.mubr.f32.mxu0 0.0
      %4217 = vmatmul.mubr.f32.gmra.mxu0 %v1851
      %v4218 = vpop.f32.mrf.mxu0
      %v4219 = vadd.f32 %v698, %v4218
      %v4220 = vpop.f32.mrf.mxu0
      %4221 = vmatprep.mubr.f32.mxu0 0.0
      %4222 = vmatmul.mubr.f32.gmra.mxu0 %v1854
      %v4223 = vpop.f32.mrf.mxu0
      %v4224 = vadd.f32 %v698, %v4223
      %v4225 = vpop.f32.mrf.mxu0
      %4226 = vmatprep.mubr.f32.mxu0 0.0
      %4227 = vmatmul.mubr.f32.gmra.mxu0 %v1857
      %v4228 = vpop.f32.mrf.mxu0
      %v4229 = vadd.f32 %v698, %v4228
      %v4230 = vpop.f32.mrf.mxu0
      %4231 = vmatprep.mubr.f32.mxu0 0.0
      %4232 = vmatmul.mubr.f32.gmra.mxu0 %v1860
      %v4233 = vpop.f32.mrf.mxu0
      %v4234 = vadd.f32 %v698, %v4233
      %v4235 = vpop.f32.mrf.mxu0
      %4236 = vmatprep.mubr.f32.mxu0 0.0
      %4237 = vmatmul.mubr.f32.gmra.mxu0 %v1863
      %v4238 = vpop.f32.mrf.mxu0
      %v4239 = vadd.f32 %v698, %v4238
      %v4240 = vpop.f32.mrf.mxu0
      %4241 = vmatprep.mubr.f32.mxu0 0.0
      %4242 = vmatmul.mubr.f32.gmra.mxu0 %v1866
      %v4243 = vpop.f32.mrf.mxu0
      %v4244 = vadd.f32 %v698, %v4243
      %v4245 = vpop.f32.mrf.mxu0
      %4246 = vmatprep.mubr.f32.mxu0 0.0
      %4247 = vmatmul.mubr.f32.gmra.mxu0 %v1869
      %v4248 = vpop.f32.mrf.mxu0
      %v4249 = vadd.f32 %v698, %v4248
      %v4250 = vpop.f32.mrf.mxu0
      %4251 = vmatprep.mubr.f32.mxu0 0.0
      %4252 = vmatmul.mubr.f32.gmra.mxu0 %v1872
      %v4253 = vpop.f32.mrf.mxu0
      %v4254 = vadd.f32 %v698, %v4253
      %v4255 = vpop.f32.mrf.mxu0
      %4256 = vmatprep.mubr.f32.mxu0 0.0
      %4257 = vmatmul.mubr.f32.gmra.mxu0 %v1875
      %v4258 = vpop.f32.mrf.mxu0
      %v4259 = vadd.f32 %v698, %v4258
      %v4260 = vpop.f32.mrf.mxu0
      %4261 = vmatprep.mubr.f32.mxu0 0.0
      %4262 = vmatmul.mubr.f32.gmra.mxu0 %v1878
      %v4263 = vpop.f32.mrf.mxu0
      %v4264 = vadd.f32 %v698, %v4263
      %v4265 = vpop.f32.mrf.mxu0
      %4266 = vmatprep.mubr.f32.mxu0 0.0
      %4267 = vmatmul.mubr.f32.gmra.mxu0 %v1881
      %v4268 = vpop.f32.mrf.mxu0
      %v4269 = vadd.f32 %v698, %v4268
      %v4270 = vpop.f32.mrf.mxu0
      %4271 = vmatprep.mubr.f32.mxu0 0.0
      %4272 = vmatmul.mubr.f32.gmra.mxu0 %v1884
      %v4273 = vpop.f32.mrf.mxu0
      %v4274 = vadd.f32 %v698, %v4273
      %v4275 = vpop.f32.mrf.mxu0
      %4276 = vmatprep.mubr.f32.mxu0 0.0
      %4277 = vmatmul.mubr.f32.gmra.mxu0 %v1887
      %v4278 = vpop.f32.mrf.mxu0
      %v4279 = vadd.f32 %v698, %v4278
      %v4280 = vpop.f32.mrf.mxu0
      %4281 = vmatprep.mubr.f32.mxu0 0.0
      %4282 = vmatmul.mubr.f32.gmra.mxu0 %v1890
      %v4283 = vpop.f32.mrf.mxu0
      %v4284 = vadd.f32 %v698, %v4283
      %v4285 = vpop.f32.mrf.mxu0
      %4286 = vmatprep.mubr.f32.mxu0 0.0
      %4287 = vmatmul.mubr.f32.gmra.mxu0 %v1893
      %v4288 = vpop.f32.mrf.mxu0
      %v4289 = vadd.f32 %v698, %v4288
      %v4290 = vpop.f32.mrf.mxu0
      %4291 = vmatprep.mubr.f32.mxu0 0.0
      %4292 = vmatmul.mubr.f32.gmra.mxu0 %v1896
      %v4293 = vpop.f32.mrf.mxu0
      %v4294 = vadd.f32 %v698, %v4293
      %v4295 = vpop.f32.mrf.mxu0
      %4296 = vmatprep.mubr.f32.mxu0 0.0
      %4297 = vmatmul.mubr.f32.gmra.mxu0 %v1899
      %v4298 = vpop.f32.mrf.mxu0
      %v4299 = vadd.f32 %v698, %v4298
      %v4300 = vpop.f32.mrf.mxu0
      %4301 = vmatprep.mubr.f32.mxu0 0.0
      %4302 = vmatmul.mubr.f32.gmra.mxu0 %v1902
      %v4303 = vpop.f32.mrf.mxu0
      %v4304 = vadd.f32 %v698, %v4303
      %v4305 = vpop.f32.mrf.mxu0
      %4306 = vmatprep.mubr.f32.mxu0 0.0
      %4307 = vmatmul.mubr.f32.gmra.mxu0 %v1905
      %v4308 = vpop.f32.mrf.mxu0
      %v4309 = vadd.f32 %v698, %v4308
      %v4310 = vpop.f32.mrf.mxu0
      %4311 = vmatprep.mubr.f32.mxu0 0.0
      %4312 = vmatmul.mubr.f32.gmra.mxu0 %v1908
      %v4313 = vpop.f32.mrf.mxu0
      %v4314 = vadd.f32 %v698, %v4313
      %v4315 = vpop.f32.mrf.mxu0
      %4316 = vmatprep.mubr.f32.mxu0 0.0
      %4317 = vmatmul.mubr.f32.gmra.mxu0 %v1911
      %v4318 = vpop.f32.mrf.mxu0
      %v4319 = vadd.f32 %v698, %v4318
      %v4320 = vpop.f32.mrf.mxu0
      %4321 = vmatprep.mubr.f32.mxu0 0.0
      %4322 = vmatmul.mubr.f32.gmra.mxu0 %v1914
      %v4323 = vpop.f32.mrf.mxu0
      %v4324 = vadd.f32 %v698, %v4323
      %v4325 = vpop.f32.mrf.mxu0
      %4326 = vmatprep.mubr.f32.mxu0 0.0
      %4327 = vmatmul.mubr.f32.gmra.mxu0 %v1917
      %v4328 = vpop.f32.mrf.mxu0
      %v4329 = vadd.f32 %v698, %v4328
      %v4330 = vpop.f32.mrf.mxu0
      %4331 = vmatprep.mubr.f32.mxu0 0.0
      %4332 = vmatmul.mubr.f32.gmra.mxu0 %v1920
      %v4333 = vpop.f32.mrf.mxu0
      %v4334 = vadd.f32 %v698, %v4333
      %v4335 = vpop.f32.mrf.mxu0
      %4336 = vmatprep.mubr.f32.mxu0 0.0
      %4337 = vmatmul.mubr.f32.gmra.mxu0 %v1923
      %v4338 = vpop.f32.mrf.mxu0
      %v4339 = vadd.f32 %v698, %v4338
      %v4340 = vpop.f32.mrf.mxu0
      %4341 = vmatprep.mubr.f32.mxu0 0.0
      %4342 = vmatmul.mubr.f32.gmra.mxu0 %v1926
      %v4343 = vpop.f32.mrf.mxu0
      %v4344 = vadd.f32 %v698, %v4343
      %v4345 = vpop.f32.mrf.mxu0
      %4346 = vmatprep.mubr.f32.mxu0 0.0
      %4347 = vmatmul.mubr.f32.gmra.mxu0 %v1929
      %v4348 = vpop.f32.mrf.mxu0
      %v4349 = vadd.f32 %v698, %v4348
      %v4350 = vpop.f32.mrf.mxu0
      %4351 = vmatprep.mubr.f32.mxu0 0.0
      %4352 = vmatmul.mubr.f32.gmra.mxu0 %v1932
      %v4353 = vpop.f32.mrf.mxu0
      %v4354 = vadd.f32 %v698, %v4353
      %v4355 = vpop.f32.mrf.mxu0
      %4356 = vmatprep.mubr.f32.mxu0 0.0
      %4357 = vmatmul.mubr.f32.gmra.mxu0 %v1935
      %v4358 = vpop.f32.mrf.mxu0
      %v4359 = vadd.f32 %v698, %v4358
      %v4360 = vpop.f32.mrf.mxu0
      %4361 = vmatprep.mubr.f32.mxu0 0.0
      %4362 = vmatmul.mubr.f32.gmra.mxu0 %v1938
      %v4363 = vpop.f32.mrf.mxu0
      %v4364 = vadd.f32 %v698, %v4363
      %v4365 = vpop.f32.mrf.mxu0
      %4366 = vmatprep.mubr.f32.mxu0 0.0
      %4367 = vmatmul.mubr.f32.gmra.mxu0 %v1941
      %v4368 = vpop.f32.mrf.mxu0
      %v4369 = vadd.f32 %v698, %v4368
      %v4370 = vpop.f32.mrf.mxu0
      %4371 = vmatprep.mubr.f32.mxu0 0.0
      %4372 = vmatmul.mubr.f32.gmra.mxu0 %v1944
      %v4373 = vpop.f32.mrf.mxu0
      %v4374 = vadd.f32 %v698, %v4373
      %v4375 = vpop.f32.mrf.mxu0
      %4376 = vmatprep.mubr.f32.mxu0 0.0
      %4377 = vmatmul.mubr.f32.gmra.mxu0 %v1947
      %v4378 = vpop.f32.mrf.mxu0
      %v4379 = vadd.f32 %v698, %v4378
      %v4380 = vpop.f32.mrf.mxu0
      %4381 = vmatprep.mubr.f32.mxu0 0.0
      %4382 = vmatmul.mubr.f32.gmra.mxu0 %v1950
      %v4383 = vpop.f32.mrf.mxu0
      %v4384 = vadd.f32 %v698, %v4383
      %v4385 = vpop.f32.mrf.mxu0
      %4386 = vmatprep.mubr.f32.mxu0 0.0
      %4387 = vmatmul.mubr.f32.gmra.mxu0 %v1953
      %v4388 = vpop.f32.mrf.mxu0
      %v4389 = vadd.f32 %v698, %v4388
      %v4390 = vpop.f32.mrf.mxu0
      %4391 = vmatprep.mubr.f32.mxu0 0.0
      %4392 = vmatmul.mubr.f32.gmra.mxu0 %v1956
      %v4393 = vpop.f32.mrf.mxu0
      %v4394 = vadd.f32 %v698, %v4393
      %v4395 = vpop.f32.mrf.mxu0
      %4396 = vmatprep.mubr.f32.mxu0 0.0
      %4397 = vmatmul.mubr.f32.gmra.mxu0 %v1959
      %v4398 = vpop.f32.mrf.mxu0
      %v4399 = vadd.f32 %v698, %v4398
      %v4400 = vpop.f32.mrf.mxu0
      %4401 = vmatprep.mubr.f32.mxu0 0.0
      %4402 = vmatmul.mubr.f32.gmra.mxu0 %v1962
      %v4403 = vpop.f32.mrf.mxu0
      %v4404 = vadd.f32 %v698, %v4403
      %v4405 = vpop.f32.mrf.mxu0
      %4406 = vmatprep.mubr.f32.mxu0 0.0
      %4407 = vmatmul.mubr.f32.gmra.mxu0 %v1965
      %v4408 = vpop.f32.mrf.mxu0
      %v4409 = vadd.f32 %v698, %v4408
      %v4410 = vpop.f32.mrf.mxu0
      %4411 = vmatprep.mubr.f32.mxu0 0.0
      %4412 = vmatmul.mubr.f32.gmra.mxu0 %v1968
      %v4413 = vpop.f32.mrf.mxu0
      %v4414 = vadd.f32 %v698, %v4413
      %v4415 = vpop.f32.mrf.mxu0
      %4416 = vmatprep.mubr.f32.mxu0 0.0
      %4417 = vmatmul.mubr.f32.gmra.mxu0 %v1971
      %v4418 = vpop.f32.mrf.mxu0
      %v4419 = vadd.f32 %v698, %v4418
      %v4420 = vpop.f32.mrf.mxu0
      %4421 = vmatprep.mubr.f32.mxu0 0.0
      %4422 = vmatmul.mubr.f32.gmra.mxu0 %v1974
      %v4423 = vpop.f32.mrf.mxu0
      %v4424 = vadd.f32 %v698, %v4423
      %v4425 = vpop.f32.mrf.mxu0
      %4426 = vmatprep.mubr.f32.mxu0 0.0
      %4427 = vmatmul.mubr.f32.gmra.mxu0 %v1977
      %v4428 = vpop.f32.mrf.mxu0
      %v4429 = vadd.f32 %v698, %v4428
      %v4430 = vpop.f32.mrf.mxu0
      %4431 = vmatprep.mubr.f32.mxu0 0.0
      %4432 = vmatmul.mubr.f32.gmra.mxu0 %v1980
      %v4433 = vpop.f32.mrf.mxu0
      %v4434 = vadd.f32 %v698, %v4433
      %v4435 = vpop.f32.mrf.mxu0
      %4436 = vmatprep.mubr.f32.mxu0 0.0
      %4437 = vmatmul.mubr.f32.gmra.mxu0 %v1983
      %v4438 = vpop.f32.mrf.mxu0
      %v4439 = vadd.f32 %v698, %v4438
      %v4440 = vpop.f32.mrf.mxu0
      %4441 = vmatprep.mubr.f32.mxu0 0.0
      %4442 = vmatmul.mubr.f32.gmra.mxu0 %v1986
      %v4443 = vpop.f32.mrf.mxu0
      %v4444 = vadd.f32 %v698, %v4443
      %v4445 = vpop.f32.mrf.mxu0
      %4446 = vmatprep.mubr.f32.mxu0 0.0
      %4447 = vmatmul.mubr.f32.gmra.mxu0 %v1989
      %v4448 = vpop.f32.mrf.mxu0
      %v4449 = vadd.f32 %v698, %v4448
      %v4450 = vpop.f32.mrf.mxu0
      %4451 = vmatprep.mubr.f32.mxu0 0.0
      %4452 = vmatmul.mubr.f32.gmra.mxu0 %v1992
      %v4453 = vpop.f32.mrf.mxu0
      %v4454 = vadd.f32 %v698, %v4453
      %v4455 = vpop.f32.mrf.mxu0
      %4456 = vmatprep.mubr.f32.mxu0 0.0
      %4457 = vmatmul.mubr.f32.gmra.mxu0 %v1995
      %v4458 = vpop.f32.mrf.mxu0
      %v4459 = vadd.f32 %v698, %v4458
      %v4460 = vpop.f32.mrf.mxu0
      %4461 = vmatprep.mubr.f32.mxu0 0.0
      %4462 = vmatmul.mubr.f32.gmra.mxu0 %v1998
      %v4463 = vpop.f32.mrf.mxu0
      %v4464 = vadd.f32 %v698, %v4463
      %v4465 = vpop.f32.mrf.mxu0
      %4466 = vmatprep.mubr.f32.mxu0 0.0
      %4467 = vmatmul.mubr.f32.gmra.mxu0 %v2001
      %v4468 = vpop.f32.mrf.mxu0
      %v4469 = vadd.f32 %v698, %v4468
      %v4470 = vpop.f32.mrf.mxu0
      %4471 = vmatprep.mubr.f32.mxu0 0.0
      %4472 = vmatmul.mubr.f32.gmra.mxu0 %v2004
      %v4473 = vpop.f32.mrf.mxu0
      %v4474 = vadd.f32 %v698, %v4473
      %v4475 = vpop.f32.mrf.mxu0
      %4476 = vmatprep.mubr.f32.mxu0 0.0
      %4477 = vmatmul.mubr.f32.gmra.mxu0 %v2007
      %v4478 = vpop.f32.mrf.mxu0
      %v4479 = vadd.f32 %v698, %v4478
      %v4480 = vpop.f32.mrf.mxu0
      %4481 = vmatprep.mubr.f32.mxu0 0.0
      %4482 = vmatmul.mubr.f32.gmra.mxu0 %v2010
      %v4483 = vpop.f32.mrf.mxu0
      %v4484 = vadd.f32 %v698, %v4483
      %v4485 = vpop.f32.mrf.mxu0
      %4486 = vmatprep.mubr.f32.mxu0 0.0
      %4487 = vmatmul.mubr.f32.gmra.mxu0 %v2013
      %v4488 = vpop.f32.mrf.mxu0
      %v4489 = vadd.f32 %v698, %v4488
      %v4490 = vpop.f32.mrf.mxu0
      %4491 = vmatprep.mubr.f32.mxu0 0.0
      %4492 = vmatmul.mubr.f32.gmra.mxu0 %v2016
      %v4493 = vpop.f32.mrf.mxu0
      %v4494 = vadd.f32 %v698, %v4493
      %v4495 = vpop.f32.mrf.mxu0
      %4496 = vmatprep.mubr.f32.mxu0 0.0
      %4497 = vmatmul.mubr.f32.gmra.mxu0 %v2019
      %v4498 = vpop.f32.mrf.mxu0
      %v4499 = vadd.f32 %v698, %v4498
      %v4500 = vpop.f32.mrf.mxu0
      %4501 = vmatprep.mubr.f32.mxu0 0.0
      %4502 = vmatmul.mubr.f32.gmra.mxu0 %v2022
      %v4503 = vpop.f32.mrf.mxu0
      %v4504 = vadd.f32 %v698, %v4503
      %v4505 = vpop.f32.mrf.mxu0
      %4506 = vmatprep.mubr.f32.mxu0 0.0
      %4507 = vmatmul.mubr.f32.gmra.mxu0 %v2025
      %v4508 = vpop.f32.mrf.mxu0
      %v4509 = vadd.f32 %v698, %v4508
      %v4510 = vpop.f32.mrf.mxu0
      %4511 = vmatprep.mubr.f32.mxu0 0.0
      %4512 = vmatmul.mubr.f32.gmra.mxu0 %v2028
      %v4513 = vpop.f32.mrf.mxu0
      %v4514 = vadd.f32 %v698, %v4513
      %v4515 = vpop.f32.mrf.mxu0
      %4516 = vmatprep.mubr.f32.mxu0 0.0
      %4517 = vmatmul.mubr.f32.gmra.mxu0 %v2031
      %v4518 = vpop.f32.mrf.mxu0
      %v4519 = vadd.f32 %v698, %v4518
      %v4520 = vpop.f32.mrf.mxu0
      %4521 = vmatprep.mubr.f32.mxu0 0.0
      %4522 = vmatmul.mubr.f32.gmra.mxu0 %v2034
      %v4523 = vpop.f32.mrf.mxu0
      %v4524 = vadd.f32 %v698, %v4523
      %v4525 = vpop.f32.mrf.mxu0
      %4526 = vmatprep.mubr.f32.mxu0 0.0
      %4527 = vmatmul.mubr.f32.gmra.mxu0 %v2037
      %v4528 = vpop.f32.mrf.mxu0
      %v4529 = vadd.f32 %v698, %v4528
      %v4530 = vpop.f32.mrf.mxu0
      %4531 = vmatprep.mubr.f32.mxu0 0.0
      %4532 = vmatmul.mubr.f32.gmra.mxu0 %v2040
      %v4533 = vpop.f32.mrf.mxu0
      %v4534 = vadd.f32 %v698, %v4533
      %v4535 = vpop.f32.mrf.mxu0
      %4536 = vmatprep.mubr.f32.mxu0 0.0
      %4537 = vmatmul.mubr.f32.gmra.mxu0 %v2043
      %v4538 = vpop.f32.mrf.mxu0
      %v4539 = vadd.f32 %v698, %v4538
      %v4540 = vpop.f32.mrf.mxu0
      %4541 = vmatprep.mubr.f32.mxu0 0.0
      %4542 = vmatmul.mubr.f32.gmra.mxu0 %v2046
      %v4543 = vpop.f32.mrf.mxu0
      %v4544 = vadd.f32 %v698, %v4543
      %v4545 = vpop.f32.mrf.mxu0
      %4546 = vmatprep.mubr.f32.mxu0 0.0
      %4547 = vmatmul.mubr.f32.gmra.mxu0 %v2049
      %v4548 = vpop.f32.mrf.mxu0
      %v4549 = vadd.f32 %v698, %v4548
      %v4550 = vpop.f32.mrf.mxu0
      %4551 = vmatprep.mubr.f32.mxu0 0.0
      %4552 = vmatmul.mubr.f32.gmra.mxu0 %v2052
      %v4553 = vpop.f32.mrf.mxu0
      %v4554 = vadd.f32 %v698, %v4553
      %v4555 = vpop.f32.mrf.mxu0
      %4556 = vmatprep.mubr.f32.mxu0 0.0
      %4557 = vmatmul.mubr.f32.gmra.mxu0 %v2055
      %v4558 = vpop.f32.mrf.mxu0
      %v4559 = vadd.f32 %v698, %v4558
      %v4560 = vpop.f32.mrf.mxu0
      %4561 = vmatprep.mubr.f32.mxu0 0.0
      %4562 = vmatmul.mubr.f32.gmra.mxu0 %v2058
      %v4563 = vpop.f32.mrf.mxu0
      %v4564 = vadd.f32 %v698, %v4563
      %v4565 = vpop.f32.mrf.mxu0
      %4566 = vmatprep.mubr.f32.mxu0 0.0
      %4567 = vmatmul.mubr.f32.gmra.mxu0 %v2061
      %v4568 = vpop.f32.mrf.mxu0
      %v4569 = vadd.f32 %v698, %v4568
      %v4570 = vpop.f32.mrf.mxu0
      %4571 = vmatprep.mubr.f32.mxu0 0.0
      %4572 = vmatmul.mubr.f32.gmra.mxu0 %v2064
      %v4573 = vpop.f32.mrf.mxu0
      %v4574 = vadd.f32 %v698, %v4573
      %v4575 = vpop.f32.mrf.mxu0
      %4576 = vmatprep.mubr.f32.mxu0 0.0
      %4577 = vmatmul.mubr.f32.gmra.mxu0 %v2067
      %v4578 = vpop.f32.mrf.mxu0
      %v4579 = vadd.f32 %v698, %v4578
      %v4580 = vpop.f32.mrf.mxu0
      %4581 = vmatprep.mubr.f32.mxu0 0.0
      %4582 = vmatmul.mubr.f32.gmra.mxu0 %v2070
      %v4583 = vpop.f32.mrf.mxu0
      %v4584 = vadd.f32 %v698, %v4583
      %v4585 = vpop.f32.mrf.mxu0
      %4586 = vmatprep.mubr.f32.mxu0 0.0
      %4587 = vmatmul.mubr.f32.gmra.mxu0 %v2073
      %v4588 = vpop.f32.mrf.mxu0
      %v4589 = vadd.f32 %v698, %v4588
      %v4590 = vpop.f32.mrf.mxu0
      %4591 = vmatprep.mubr.f32.mxu0 0.0
      %4592 = vmatmul.mubr.f32.gmra.mxu0 %v2076
      %v4593 = vpop.f32.mrf.mxu0
      %v4594 = vadd.f32 %v698, %v4593
      %v4595 = vpop.f32.mrf.mxu0
      %4596 = vmatprep.mubr.f32.mxu0 0.0
      %4597 = vmatmul.mubr.f32.gmra.mxu0 %v2079
      %v4598 = vpop.f32.mrf.mxu0
      %v4599 = vadd.f32 %v698, %v4598
      %v4600 = vpop.f32.mrf.mxu0
      %4601 = vmatprep.mubr.f32.mxu0 0.0
      %4602 = vmatmul.mubr.f32.gmra.mxu0 %v2082
      %v4603 = vpop.f32.mrf.mxu0
      %v4604 = vadd.f32 %v698, %v4603
      %v4605 = vpop.f32.mrf.mxu0
      %4606 = vmatprep.mubr.f32.mxu0 0.0
      %4607 = vmatmul.mubr.f32.gmra.mxu0 %v2085
      %v4608 = vpop.f32.mrf.mxu0
      %v4609 = vadd.f32 %v698, %v4608
      %v4610 = vpop.f32.mrf.mxu0
      %4611 = vmatprep.mubr.f32.mxu0 0.0
      %4612 = vmatmul.mubr.f32.gmra.mxu0 %v2088
      %v4613 = vpop.f32.mrf.mxu0
      %v4614 = vadd.f32 %v698, %v4613
      %v4615 = vpop.f32.mrf.mxu0
      %4616 = vmatprep.mubr.f32.mxu0 0.0
      %4617 = vmatmul.mubr.f32.gmra.mxu0 %v2091
      %v4618 = vpop.f32.mrf.mxu0
      %v4619 = vadd.f32 %v698, %v4618
      %v4620 = vpop.f32.mrf.mxu0
      %4621 = vmatprep.mubr.f32.mxu0 0.0
      %4622 = vmatmul.mubr.f32.gmra.mxu0 %v2094
      %v4623 = vpop.f32.mrf.mxu0
      %v4624 = vadd.f32 %v698, %v4623
      %v4625 = vpop.f32.mrf.mxu0
      %4626 = vmatprep.mubr.f32.mxu0 0.0
      %4627 = vmatmul.mubr.f32.gmra.mxu0 %v2097
      %v4628 = vpop.f32.mrf.mxu0
      %v4629 = vadd.f32 %v698, %v4628
      %v4630 = vpop.f32.mrf.mxu0
      %4631 = vmatprep.mubr.f32.mxu0 0.0
      %4632 = vmatmul.mubr.f32.gmra.mxu0 %v2100
      %v4633 = vpop.f32.mrf.mxu0
      %v4634 = vadd.f32 %v698, %v4633
      %v4635 = vpop.f32.mrf.mxu0
      %4636 = vmatprep.mubr.f32.mxu0 0.0
      %4637 = vmatmul.mubr.f32.gmra.mxu0 %v2103
      %v4638 = vpop.f32.mrf.mxu0
      %v4639 = vadd.f32 %v698, %v4638
      %v4640 = vpop.f32.mrf.mxu0
      %4641 = vmatprep.mubr.f32.mxu0 0.0
      %4642 = vmatmul.mubr.f32.gmra.mxu0 %v2106
      %v4643 = vpop.f32.mrf.mxu0
      %v4644 = vadd.f32 %v698, %v4643
      %v4645 = vpop.f32.mrf.mxu0
      %4646 = vmatprep.mubr.f32.mxu0 0.0
      %4647 = vmatmul.mubr.f32.gmra.mxu0 %v2109
      %v4648 = vpop.f32.mrf.mxu0
      %v4649 = vadd.f32 %v698, %v4648
      %v4650 = vpop.f32.mrf.mxu0
      %4651 = vmatprep.mubr.f32.mxu0 0.0
      %4652 = vmatmul.mubr.f32.gmra.mxu0 %v2112
      %v4653 = vpop.f32.mrf.mxu0
      %v4654 = vadd.f32 %v698, %v4653
      %v4655 = vpop.f32.mrf.mxu0
      %4656 = vmatprep.mubr.f32.mxu0 0.0
      %4657 = vmatmul.mubr.f32.gmra.mxu0 %v2115
      %v4658 = vpop.f32.mrf.mxu0
      %v4659 = vadd.f32 %v698, %v4658
      %v4660 = vpop.f32.mrf.mxu0
      %4661 = vmatprep.mubr.f32.mxu0 0.0
      %4662 = vmatmul.mubr.f32.gmra.mxu0 %v2118
      %v4663 = vpop.f32.mrf.mxu0
      %v4664 = vadd.f32 %v698, %v4663
      %v4665 = vpop.f32.mrf.mxu0
      %4666 = vmatprep.mubr.f32.mxu0 0.0
      %4667 = vmatmul.mubr.f32.gmra.mxu0 %v2121
      %v4668 = vpop.f32.mrf.mxu0
      %v4669 = vadd.f32 %v698, %v4668
      %v4670 = vpop.f32.mrf.mxu0
      %4671 = vmatprep.mubr.f32.mxu0 0.0
      %4672 = vmatmul.mubr.f32.gmra.mxu0 %v2124
      %v4673 = vpop.f32.mrf.mxu0
      %v4674 = vadd.f32 %v698, %v4673
      %v4675 = vpop.f32.mrf.mxu0
      %4676 = vmatprep.mubr.f32.mxu0 0.0
      %4677 = vmatmul.mubr.f32.gmra.mxu0 %v2127
      %v4678 = vpop.f32.mrf.mxu0
      %v4679 = vadd.f32 %v698, %v4678
      %v4680 = vpop.f32.mrf.mxu0
      %4681 = vmatprep.mubr.f32.mxu0 0.0
      %4682 = vmatmul.mubr.f32.gmra.mxu0 %v2130
      %v4683 = vpop.f32.mrf.mxu0
      %v4684 = vadd.f32 %v698, %v4683
      %v4685 = vpop.f32.mrf.mxu0
      %4686 = vmatprep.mubr.f32.mxu0 0.0
      %4687 = vmatmul.mubr.f32.gmra.mxu0 %v2133
      %v4688 = vpop.f32.mrf.mxu0
      %v4689 = vadd.f32 %v698, %v4688
      %v4690 = vpop.f32.mrf.mxu0
      %4691 = vmatprep.mubr.f32.mxu0 0.0
      %4692 = vmatmul.mubr.f32.gmra.mxu0 %v2136
      %v4693 = vpop.f32.mrf.mxu0
      %v4694 = vadd.f32 %v698, %v4693
      %v4695 = vpop.f32.mrf.mxu0
      %4696 = vmatprep.mubr.f32.mxu0 0.0
      %4697 = vmatmul.mubr.f32.gmra.mxu0 %v2139
      %v4698 = vpop.f32.mrf.mxu0
      %v4699 = vadd.f32 %v698, %v4698
      %v4700 = vpop.f32.mrf.mxu0
      %4701 = vmatprep.mubr.f32.mxu0 0.0
      %4702 = vmatmul.mubr.f32.gmra.mxu0 %v2142
      %v4703 = vpop.f32.mrf.mxu0
      %v4704 = vadd.f32 %v698, %v4703
      %v4705 = vpop.f32.mrf.mxu0
      %4706 = vmatprep.mubr.f32.mxu0 0.0
      %4707 = vmatmul.mubr.f32.gmra.mxu0 %v2145
      %v4708 = vpop.f32.mrf.mxu0
      %v4709 = vadd.f32 %v698, %v4708
      %v4710 = vpop.f32.mrf.mxu0
      %4711 = vmatprep.mubr.f32.mxu0 0.0
      %4712 = vmatmul.mubr.f32.gmra.mxu0 %v2148
      %v4713 = vpop.f32.mrf.mxu0
      %v4714 = vadd.f32 %v698, %v4713
      %v4715 = vpop.f32.mrf.mxu0
      %4716 = vmatprep.mubr.f32.mxu0 0.0
      %4717 = vmatmul.mubr.f32.gmra.mxu0 %v2151
      %v4718 = vpop.f32.mrf.mxu0
      %v4719 = vadd.f32 %v698, %v4718
      %v4720 = vpop.f32.mrf.mxu0
      %4721 = vmatprep.mubr.f32.mxu0 0.0
      %4722 = vmatmul.mubr.f32.gmra.mxu0 %v2154
      %v4723 = vpop.f32.mrf.mxu0
      %v4724 = vadd.f32 %v698, %v4723
      %v4725 = vpop.f32.mrf.mxu0
      %4726 = vmatprep.mubr.f32.mxu0 0.0
      %4727 = vmatmul.mubr.f32.gmra.mxu0 %v2157
      %v4728 = vpop.f32.mrf.mxu0
      %v4729 = vadd.f32 %v698, %v4728
      %v4730 = vpop.f32.mrf.mxu0
      %4731 = vmatprep.mubr.f32.mxu0 0.0
      %4732 = vmatmul.mubr.f32.gmra.mxu0 %v2160
      %v4733 = vpop.f32.mrf.mxu0
      %v4734 = vadd.f32 %v698, %v4733
      %v4735 = vpop.f32.mrf.mxu0
      %4736 = vmatprep.mubr.f32.mxu0 0.0
      %4737 = vmatmul.mubr.f32.gmra.mxu0 %v2163
      %v4738 = vpop.f32.mrf.mxu0
      %v4739 = vadd.f32 %v698, %v4738
      %v4740 = vpop.f32.mrf.mxu0
      %4741 = vmatprep.mubr.f32.mxu0 0.0
      %4742 = vmatmul.mubr.f32.gmra.mxu0 %v2166
      %v4743 = vpop.f32.mrf.mxu0
      %v4744 = vadd.f32 %v698, %v4743
      %v4745 = vpop.f32.mrf.mxu0
      %4746 = vmatprep.mubr.f32.mxu0 0.0
      %4747 = vmatmul.mubr.f32.gmra.mxu0 %v2169
      %v4748 = vpop.f32.mrf.mxu0
      %v4749 = vadd.f32 %v698, %v4748
      %v4750 = vpop.f32.mrf.mxu0
      %4751 = vmatprep.mubr.f32.mxu0 0.0
      %4752 = vmatmul.mubr.f32.gmra.mxu0 %v2172
      %v4753 = vpop.f32.mrf.mxu0
      %v4754 = vadd.f32 %v698, %v4753
      %v4755 = vpop.f32.mrf.mxu0
      %4756 = vmatprep.mubr.f32.mxu0 0.0
      %4757 = vmatmul.mubr.f32.gmra.mxu0 %v2175
      %v4758 = vpop.f32.mrf.mxu0
      %v4759 = vadd.f32 %v698, %v4758
      %v4760 = vpop.f32.mrf.mxu0
      %4761 = vmatprep.mubr.f32.mxu0 0.0
      %4762 = vmatmul.mubr.f32.gmra.mxu0 %v2178
      %v4763 = vpop.f32.mrf.mxu0
      %v4764 = vadd.f32 %v698, %v4763
      %v4765 = vpop.f32.mrf.mxu0
      %4766 = vmatprep.mubr.f32.mxu0 0.0
      %4767 = vmatmul.mubr.f32.gmra.mxu0 %v2181
      %v4768 = vpop.f32.mrf.mxu0
      %v4769 = vadd.f32 %v698, %v4768
      %v4770 = vpop.f32.mrf.mxu0
      %4771 = vmatprep.mubr.f32.mxu0 0.0
      %4772 = vmatmul.mubr.f32.gmra.mxu0 %v2184
      %v4773 = vpop.f32.mrf.mxu0
      %v4774 = vadd.f32 %v698, %v4773
      %v4775 = vpop.f32.mrf.mxu0
      %4776 = vmatprep.mubr.f32.mxu0 0.0
      %4777 = vmatmul.mubr.f32.gmra.mxu0 %v2187
      %v4778 = vpop.f32.mrf.mxu0
      %v4779 = vadd.f32 %v698, %v4778
      %v4780 = vpop.f32.mrf.mxu0
      %4781 = vmatprep.mubr.f32.mxu0 0.0
      %4782 = vmatmul.mubr.f32.gmra.mxu0 %v2190
      %v4783 = vpop.f32.mrf.mxu0
      %v4784 = vadd.f32 %v698, %v4783
      %v4785 = vpop.f32.mrf.mxu0
      %4786 = vmatprep.mubr.f32.mxu0 0.0
      %4787 = vmatmul.mubr.f32.gmra.mxu0 %v2193
      %v4788 = vpop.f32.mrf.mxu0
      %v4789 = vadd.f32 %v698, %v4788
      %v4790 = vpop.f32.mrf.mxu0
      %4791 = vmatprep.mubr.f32.mxu0 0.0
      %4792 = vmatmul.mubr.f32.gmra.mxu0 %v2196
      %v4793 = vpop.f32.mrf.mxu0
      %v4794 = vadd.f32 %v698, %v4793
      %v4795 = vpop.f32.mrf.mxu0
      %4796 = vmatprep.mubr.f32.mxu0 0.0
      %4797 = vmatmul.mubr.f32.gmra.mxu0 %v2199
      %v4798 = vpop.f32.mrf.mxu0
      %v4799 = vadd.f32 %v698, %v4798
      %v4800 = vpop.f32.mrf.mxu0
      %4801 = vmatprep.mubr.f32.mxu0 0.0
      %4802 = vmatmul.mubr.f32.gmra.mxu0 %v2202
      %v4803 = vpop.f32.mrf.mxu0
      %v4804 = vadd.f32 %v698, %v4803
      %v4805 = vpop.f32.mrf.mxu0
      %4806 = vmatprep.mubr.f32.mxu0 0.0
      %4807 = vmatmul.mubr.f32.gmra.mxu0 %v2205
      %v4808 = vpop.f32.mrf.mxu0
      %v4809 = vadd.f32 %v698, %v4808
      %v4810 = vpop.f32.mrf.mxu0
      %4811 = vmatprep.mubr.f32.mxu0 0.0
      %4812 = vmatmul.mubr.f32.gmra.mxu0 %v2208
      %v4813 = vpop.f32.mrf.mxu0
      %v4814 = vadd.f32 %v698, %v4813
      %v4815 = vpop.f32.mrf.mxu0
      %4816 = vmatprep.mubr.f32.mxu0 0.0
      %4817 = vmatmul.mubr.f32.gmra.mxu0 %v2211
      %v4818 = vpop.f32.mrf.mxu0
      %v4819 = vadd.f32 %v698, %v4818
      %v4820 = vpop.f32.mrf.mxu0
      %4821 = vmatprep.mubr.f32.mxu0 0.0
      %4822 = vmatmul.mubr.f32.gmra.mxu0 %v2214
      %v4823 = vpop.f32.mrf.mxu0
      %v4824 = vadd.f32 %v698, %v4823
      %v4825 = vpop.f32.mrf.mxu0
      %4826 = vmatprep.mubr.f32.mxu0 0.0
      %4827 = vmatmul.mubr.f32.gmra.mxu0 %v2217
      %v4828 = vpop.f32.mrf.mxu0
      %v4829 = vadd.f32 %v698, %v4828
      %v4830 = vpop.f32.mrf.mxu0
      %4831 = vmatprep.mubr.f32.mxu0 0.0
      %4832 = vmatmul.mubr.f32.gmra.mxu0 %v2220
      %v4833 = vpop.f32.mrf.mxu0
      %v4834 = vadd.f32 %v698, %v4833
      %v4835 = vpop.f32.mrf.mxu0
      %4836 = vmatprep.mubr.f32.mxu0 0.0
      %4837 = vmatmul.mubr.f32.gmra.mxu0 %v2223
      %v4838 = vpop.f32.mrf.mxu0
      %v4839 = vadd.f32 %v698, %v4838
      %v4840 = vpop.f32.mrf.mxu0
      %4841 = vmatprep.mubr.f32.mxu0 0.0
      %4842 = vmatmul.mubr.f32.gmra.mxu0 %v2226
      %v4843 = vpop.f32.mrf.mxu0
      %v4844 = vadd.f32 %v698, %v4843
      %v4845 = vpop.f32.mrf.mxu0
      %4846 = vmatprep.mubr.f32.mxu0 0.0
      %4847 = vmatmul.mubr.f32.gmra.mxu0 %v2229
      %v4848 = vpop.f32.mrf.mxu0
      %v4849 = vadd.f32 %v698, %v4848
      %v4850 = vpop.f32.mrf.mxu0
      %4851 = vmatprep.mubr.f32.mxu0 0.0
      %4852 = vmatmul.mubr.f32.gmra.mxu0 %v2232
      %v4853 = vpop.f32.mrf.mxu0
      %v4854 = vadd.f32 %v698, %v4853
      %v4855 = vpop.f32.mrf.mxu0
      %4856 = vmatprep.mubr.f32.mxu0 0.0
      %4857 = vmatmul.mubr.f32.gmra.mxu0 %v2235
      %v4858 = vpop.f32.mrf.mxu0
      %v4859 = vadd.f32 %v698, %v4858
      %v4860 = vpop.f32.mrf.mxu0
      %4861 = vdwg.mxu0
      %v4862 = vmax.f32 %v2304, 0.0
      %v4863 = vmax.f32 %v2309, 0.0
      %v4864 = vmax.f32 %v2314, 0.0
      %v4865 = vmax.f32 %v2319, 0.0
      %v4866 = vmax.f32 %v2324, 0.0
      %v4867 = vmax.f32 %v2329, 0.0
      %v4868 = vmax.f32 %v2334, 0.0
      %v4869 = vmax.f32 %v2339, 0.0
      %v4870 = vmax.f32 %v2344, 0.0
      %v4871 = vmax.f32 %v2349, 0.0
      %v4872 = vmax.f32 %v2354, 0.0
      %v4873 = vmax.f32 %v2359, 0.0
      %v4874 = vmax.f32 %v2364, 0.0
      %v4875 = vmax.f32 %v2369, 0.0
      %v4876 = vmax.f32 %v2374, 0.0
      %v4877 = vmax.f32 %v2379, 0.0
      %v4878 = vmax.f32 %v2384, 0.0
      %v4879 = vmax.f32 %v2389, 0.0
      %v4880 = vmax.f32 %v2394, 0.0
      %v4881 = vmax.f32 %v2399, 0.0
      %v4882 = vmax.f32 %v2404, 0.0
      %v4883 = vmax.f32 %v2409, 0.0
      %v4884 = vmax.f32 %v2414, 0.0
      %v4885 = vmax.f32 %v2419, 0.0
      %v4886 = vmax.f32 %v2424, 0.0
      %v4887 = vmax.f32 %v2429, 0.0
      %v4888 = vmax.f32 %v2434, 0.0
      %v4889 = vmax.f32 %v2439, 0.0
      %v4890 = vmax.f32 %v2444, 0.0
      %v4891 = vmax.f32 %v2449, 0.0
      %v4892 = vmax.f32 %v2454, 0.0
      %v4893 = vmax.f32 %v2459, 0.0
      %v4894 = vmax.f32 %v2464, 0.0
      %v4895 = vmax.f32 %v2469, 0.0
      %v4896 = vmax.f32 %v2474, 0.0
      %v4897 = vmax.f32 %v2479, 0.0
      %v4898 = vmax.f32 %v2484, 0.0
      %v4899 = vmax.f32 %v2489, 0.0
      %v4900 = vmax.f32 %v2494, 0.0
      %v4901 = vmax.f32 %v2499, 0.0
      %v4902 = vmax.f32 %v2504, 0.0
      %v4903 = vmax.f32 %v2509, 0.0
      %v4904 = vmax.f32 %v2514, 0.0
      %v4905 = vmax.f32 %v2519, 0.0
      %v4906 = vmax.f32 %v2524, 0.0
      %v4907 = vmax.f32 %v2529, 0.0
      %v4908 = vmax.f32 %v2534, 0.0
      %v4909 = vmax.f32 %v2539, 0.0
      %v4910 = vmax.f32 %v2544, 0.0
      %v4911 = vmax.f32 %v2549, 0.0
      %v4912 = vmax.f32 %v2554, 0.0
      %v4913 = vmax.f32 %v2559, 0.0
      %v4914 = vmax.f32 %v2564, 0.0
      %v4915 = vmax.f32 %v2569, 0.0
      %v4916 = vmax.f32 %v2574, 0.0
      %v4917 = vmax.f32 %v2579, 0.0
      %v4918 = vmax.f32 %v2584, 0.0
      %v4919 = vmax.f32 %v2589, 0.0
      %v4920 = vmax.f32 %v2594, 0.0
      %v4921 = vmax.f32 %v2599, 0.0
      %v4922 = vmax.f32 %v2604, 0.0
      %v4923 = vmax.f32 %v2609, 0.0
      %v4924 = vmax.f32 %v2614, 0.0
      %v4925 = vmax.f32 %v2619, 0.0
      %v4926 = vmax.f32 %v2624, 0.0
      %v4927 = vmax.f32 %v2629, 0.0
      %v4928 = vmax.f32 %v2634, 0.0
      %v4929 = vmax.f32 %v2639, 0.0
      %v4930 = vmax.f32 %v2644, 0.0
      %v4931 = vmax.f32 %v2649, 0.0
      %v4932 = vmax.f32 %v2654, 0.0
      %v4933 = vmax.f32 %v2659, 0.0
      %v4934 = vmax.f32 %v2664, 0.0
      %v4935 = vmax.f32 %v2669, 0.0
      %v4936 = vmax.f32 %v2674, 0.0
      %v4937 = vmax.f32 %v2679, 0.0
      %v4938 = vmax.f32 %v2684, 0.0
      %v4939 = vmax.f32 %v2689, 0.0
      %v4940 = vmax.f32 %v2694, 0.0
      %v4941 = vmax.f32 %v2699, 0.0
      %v4942 = vmax.f32 %v2704, 0.0
      %v4943 = vmax.f32 %v2709, 0.0
      %v4944 = vmax.f32 %v2714, 0.0
      %v4945 = vmax.f32 %v2719, 0.0
      %v4946 = vmax.f32 %v2724, 0.0
      %v4947 = vmax.f32 %v2729, 0.0
      %v4948 = vmax.f32 %v2734, 0.0
      %v4949 = vmax.f32 %v2739, 0.0
      %v4950 = vmax.f32 %v2744, 0.0
      %v4951 = vmax.f32 %v2749, 0.0
      %v4952 = vmax.f32 %v2754, 0.0
      %v4953 = vmax.f32 %v2759, 0.0
      %v4954 = vmax.f32 %v2764, 0.0
      %v4955 = vmax.f32 %v2769, 0.0
      %v4956 = vmax.f32 %v2774, 0.0
      %v4957 = vmax.f32 %v2779, 0.0
      %v4958 = vmax.f32 %v2784, 0.0
      %v4959 = vmax.f32 %v2789, 0.0
      %v4960 = vmax.f32 %v2794, 0.0
      %v4961 = vmax.f32 %v2799, 0.0
      %v4962 = vmax.f32 %v2804, 0.0
      %v4963 = vmax.f32 %v2809, 0.0
      %v4964 = vmax.f32 %v2814, 0.0
      %v4965 = vmax.f32 %v2819, 0.0
      %v4966 = vmax.f32 %v2824, 0.0
      %v4967 = vmax.f32 %v2829, 0.0
      %v4968 = vmax.f32 %v2834, 0.0
      %v4969 = vmax.f32 %v2839, 0.0
      %v4970 = vmax.f32 %v2844, 0.0
      %v4971 = vmax.f32 %v2849, 0.0
      %v4972 = vmax.f32 %v2854, 0.0
      %v4973 = vmax.f32 %v2859, 0.0
      %v4974 = vmax.f32 %v2864, 0.0
      %v4975 = vmax.f32 %v2869, 0.0
      %v4976 = vmax.f32 %v2874, 0.0
      %v4977 = vmax.f32 %v2879, 0.0
      %v4978 = vmax.f32 %v2884, 0.0
      %v4979 = vmax.f32 %v2889, 0.0
      %v4980 = vmax.f32 %v2894, 0.0
      %v4981 = vmax.f32 %v2899, 0.0
      %v4982 = vmax.f32 %v2904, 0.0
      %v4983 = vmax.f32 %v2909, 0.0
      %v4984 = vmax.f32 %v2914, 0.0
      %v4985 = vmax.f32 %v2919, 0.0
      %v4986 = vmax.f32 %v2924, 0.0
      %v4987 = vmax.f32 %v2929, 0.0
      %v4988 = vmax.f32 %v2934, 0.0
      %v4989 = vmax.f32 %v2939, 0.0
      %v4990 = vmax.f32 %v2944, 0.0
      %v4991 = vmax.f32 %v2949, 0.0
      %v4992 = vmax.f32 %v2954, 0.0
      %v4993 = vmax.f32 %v2959, 0.0
      %v4994 = vmax.f32 %v2964, 0.0
      %v4995 = vmax.f32 %v2969, 0.0
      %v4996 = vmax.f32 %v2974, 0.0
      %v4997 = vmax.f32 %v2979, 0.0
      %v4998 = vmax.f32 %v2984, 0.0
      %v4999 = vmax.f32 %v2989, 0.0
      %v5000 = vmax.f32 %v2994, 0.0
      %v5001 = vmax.f32 %v2999, 0.0
      %v5002 = vmax.f32 %v3004, 0.0
      %v5003 = vmax.f32 %v3009, 0.0
      %v5004 = vmax.f32 %v3014, 0.0
      %v5005 = vmax.f32 %v3019, 0.0
      %v5006 = vmax.f32 %v3024, 0.0
      %v5007 = vmax.f32 %v3029, 0.0
      %v5008 = vmax.f32 %v3034, 0.0
      %v5009 = vmax.f32 %v3039, 0.0
      %v5010 = vmax.f32 %v3044, 0.0
      %v5011 = vmax.f32 %v3049, 0.0
      %v5012 = vmax.f32 %v3054, 0.0
      %v5013 = vmax.f32 %v3059, 0.0
      %v5014 = vmax.f32 %v3064, 0.0
      %v5015 = vmax.f32 %v3069, 0.0
      %v5016 = vmax.f32 %v3074, 0.0
      %v5017 = vmax.f32 %v3079, 0.0
      %v5018 = vmax.f32 %v3084, 0.0
      %v5019 = vmax.f32 %v3089, 0.0
      %v5020 = vmax.f32 %v3094, 0.0
      %v5021 = vmax.f32 %v3099, 0.0
      %v5022 = vmax.f32 %v3104, 0.0
      %v5023 = vmax.f32 %v3109, 0.0
      %v5024 = vmax.f32 %v3114, 0.0
      %v5025 = vmax.f32 %v3119, 0.0
      %v5026 = vmax.f32 %v3124, 0.0
      %v5027 = vmax.f32 %v3129, 0.0
      %v5028 = vmax.f32 %v3134, 0.0
      %v5029 = vmax.f32 %v3139, 0.0
      %v5030 = vmax.f32 %v3144, 0.0
      %v5031 = vmax.f32 %v3149, 0.0
      %v5032 = vmax.f32 %v3154, 0.0
      %v5033 = vmax.f32 %v3159, 0.0
      %v5034 = vmax.f32 %v3164, 0.0
      %v5035 = vmax.f32 %v3169, 0.0
      %v5036 = vmax.f32 %v3174, 0.0
      %v5037 = vmax.f32 %v3179, 0.0
      %v5038 = vmax.f32 %v3184, 0.0
      %v5039 = vmax.f32 %v3189, 0.0
      %v5040 = vmax.f32 %v3194, 0.0
      %v5041 = vmax.f32 %v3199, 0.0
      %v5042 = vmax.f32 %v3204, 0.0
      %v5043 = vmax.f32 %v3209, 0.0
      %v5044 = vmax.f32 %v3214, 0.0
      %v5045 = vmax.f32 %v3219, 0.0
      %v5046 = vmax.f32 %v3224, 0.0
      %v5047 = vmax.f32 %v3229, 0.0
      %v5048 = vmax.f32 %v3234, 0.0
      %v5049 = vmax.f32 %v3239, 0.0
      %v5050 = vmax.f32 %v3244, 0.0
      %v5051 = vmax.f32 %v3249, 0.0
      %v5052 = vmax.f32 %v3254, 0.0
      %v5053 = vmax.f32 %v3259, 0.0
      %v5054 = vmax.f32 %v3264, 0.0
      %v5055 = vmax.f32 %v3269, 0.0
      %v5056 = vmax.f32 %v3274, 0.0
      %v5057 = vmax.f32 %v3279, 0.0
      %v5058 = vmax.f32 %v3284, 0.0
      %v5059 = vmax.f32 %v3289, 0.0
      %v5060 = vmax.f32 %v3294, 0.0
      %v5061 = vmax.f32 %v3299, 0.0
      %v5062 = vmax.f32 %v3304, 0.0
      %v5063 = vmax.f32 %v3309, 0.0
      %v5064 = vmax.f32 %v3314, 0.0
      %v5065 = vmax.f32 %v3319, 0.0
      %v5066 = vmax.f32 %v3324, 0.0
      %v5067 = vmax.f32 %v3329, 0.0
      %v5068 = vmax.f32 %v3334, 0.0
      %v5069 = vmax.f32 %v3339, 0.0
      %v5070 = vmax.f32 %v3344, 0.0
      %v5071 = vmax.f32 %v3349, 0.0
      %v5072 = vmax.f32 %v3354, 0.0
      %v5073 = vmax.f32 %v3359, 0.0
      %v5074 = vmax.f32 %v3364, 0.0
      %v5075 = vmax.f32 %v3369, 0.0
      %v5076 = vmax.f32 %v3374, 0.0
      %v5077 = vmax.f32 %v3379, 0.0
      %v5078 = vmax.f32 %v3384, 0.0
      %v5079 = vmax.f32 %v3389, 0.0
      %v5080 = vmax.f32 %v3394, 0.0
      %v5081 = vmax.f32 %v3399, 0.0
      %v5082 = vmax.f32 %v3404, 0.0
      %v5083 = vmax.f32 %v3409, 0.0
      %v5084 = vmax.f32 %v3414, 0.0
      %v5085 = vmax.f32 %v3419, 0.0
      %v5086 = vmax.f32 %v3424, 0.0
      %v5087 = vmax.f32 %v3429, 0.0
      %v5088 = vmax.f32 %v3434, 0.0
      %v5089 = vmax.f32 %v3439, 0.0
      %v5090 = vmax.f32 %v3444, 0.0
      %v5091 = vmax.f32 %v3449, 0.0
      %v5092 = vmax.f32 %v3454, 0.0
      %v5093 = vmax.f32 %v3459, 0.0
      %v5094 = vmax.f32 %v3464, 0.0
      %v5095 = vmax.f32 %v3469, 0.0
      %v5096 = vmax.f32 %v3474, 0.0
      %v5097 = vmax.f32 %v3479, 0.0
      %v5098 = vmax.f32 %v3484, 0.0
      %v5099 = vmax.f32 %v3489, 0.0
      %v5100 = vmax.f32 %v3494, 0.0
      %v5101 = vmax.f32 %v3499, 0.0
      %v5102 = vmax.f32 %v3504, 0.0
      %v5103 = vmax.f32 %v3509, 0.0
      %v5104 = vmax.f32 %v3514, 0.0
      %v5105 = vmax.f32 %v3519, 0.0
      %v5106 = vmax.f32 %v3524, 0.0
      %v5107 = vmax.f32 %v3529, 0.0
      %v5108 = vmax.f32 %v3534, 0.0
      %v5109 = vmax.f32 %v3539, 0.0
      %v5110 = vmax.f32 %v3544, 0.0
      %v5111 = vmax.f32 %v3549, 0.0
      %v5112 = vmax.f32 %v3554, 0.0
      %v5113 = vmax.f32 %v3559, 0.0
      %v5114 = vmax.f32 %v3564, 0.0
      %v5115 = vmax.f32 %v3569, 0.0
      %v5116 = vmax.f32 %v3574, 0.0
      %v5117 = vmax.f32 %v3579, 0.0
      %v5118 = vmax.f32 %v3584, 0.0
      %v5119 = vmax.f32 %v3589, 0.0
      %v5120 = vmax.f32 %v3594, 0.0
      %v5121 = vmax.f32 %v3599, 0.0
      %v5122 = vmax.f32 %v3604, 0.0
      %v5123 = vmax.f32 %v3609, 0.0
      %v5124 = vmax.f32 %v3614, 0.0
      %v5125 = vmax.f32 %v3619, 0.0
      %v5126 = vmax.f32 %v3624, 0.0
      %v5127 = vmax.f32 %v3629, 0.0
      %v5128 = vmax.f32 %v3634, 0.0
      %v5129 = vmax.f32 %v3639, 0.0
      %v5130 = vmax.f32 %v3644, 0.0
      %v5131 = vmax.f32 %v3649, 0.0
      %v5132 = vmax.f32 %v3654, 0.0
      %v5133 = vmax.f32 %v3659, 0.0
      %v5134 = vmax.f32 %v3664, 0.0
      %v5135 = vmax.f32 %v3669, 0.0
      %v5136 = vmax.f32 %v3674, 0.0
      %v5137 = vmax.f32 %v3679, 0.0
      %v5138 = vmax.f32 %v3684, 0.0
      %v5139 = vmax.f32 %v3689, 0.0
      %v5140 = vmax.f32 %v3694, 0.0
      %v5141 = vmax.f32 %v3699, 0.0
      %v5142 = vmax.f32 %v3704, 0.0
      %v5143 = vmax.f32 %v3709, 0.0
      %v5144 = vmax.f32 %v3714, 0.0
      %v5145 = vmax.f32 %v3719, 0.0
      %v5146 = vmax.f32 %v3724, 0.0
      %v5147 = vmax.f32 %v3729, 0.0
      %v5148 = vmax.f32 %v3734, 0.0
      %v5149 = vmax.f32 %v3739, 0.0
      %v5150 = vmax.f32 %v3744, 0.0
      %v5151 = vmax.f32 %v3749, 0.0
      %v5152 = vmax.f32 %v3754, 0.0
      %v5153 = vmax.f32 %v3759, 0.0
      %v5154 = vmax.f32 %v3764, 0.0
      %v5155 = vmax.f32 %v3769, 0.0
      %v5156 = vmax.f32 %v3774, 0.0
      %v5157 = vmax.f32 %v3779, 0.0
      %v5158 = vmax.f32 %v3784, 0.0
      %v5159 = vmax.f32 %v3789, 0.0
      %v5160 = vmax.f32 %v3794, 0.0
      %v5161 = vmax.f32 %v3799, 0.0
      %v5162 = vmax.f32 %v3804, 0.0
      %v5163 = vmax.f32 %v3809, 0.0
      %v5164 = vmax.f32 %v3814, 0.0
      %v5165 = vmax.f32 %v3819, 0.0
      %v5166 = vmax.f32 %v3824, 0.0
      %v5167 = vmax.f32 %v3829, 0.0
      %v5168 = vmax.f32 %v3834, 0.0
      %v5169 = vmax.f32 %v3839, 0.0
      %v5170 = vmax.f32 %v3844, 0.0
      %v5171 = vmax.f32 %v3849, 0.0
      %v5172 = vmax.f32 %v3854, 0.0
      %v5173 = vmax.f32 %v3859, 0.0
      %v5174 = vmax.f32 %v3864, 0.0
      %v5175 = vmax.f32 %v3869, 0.0
      %v5176 = vmax.f32 %v3874, 0.0
      %v5177 = vmax.f32 %v3879, 0.0
      %v5178 = vmax.f32 %v3884, 0.0
      %v5179 = vmax.f32 %v3889, 0.0
      %v5180 = vmax.f32 %v3894, 0.0
      %v5181 = vmax.f32 %v3899, 0.0
      %v5182 = vmax.f32 %v3904, 0.0
      %v5183 = vmax.f32 %v3909, 0.0
      %v5184 = vmax.f32 %v3914, 0.0
      %v5185 = vmax.f32 %v3919, 0.0
      %v5186 = vmax.f32 %v3924, 0.0
      %v5187 = vmax.f32 %v3929, 0.0
      %v5188 = vmax.f32 %v3934, 0.0
      %v5189 = vmax.f32 %v3939, 0.0
      %v5190 = vmax.f32 %v3944, 0.0
      %v5191 = vmax.f32 %v3949, 0.0
      %v5192 = vmax.f32 %v3954, 0.0
      %v5193 = vmax.f32 %v3959, 0.0
      %v5194 = vmax.f32 %v3964, 0.0
      %v5195 = vmax.f32 %v3969, 0.0
      %v5196 = vmax.f32 %v3974, 0.0
      %v5197 = vmax.f32 %v3979, 0.0
      %v5198 = vmax.f32 %v3984, 0.0
      %v5199 = vmax.f32 %v3989, 0.0
      %v5200 = vmax.f32 %v3994, 0.0
      %v5201 = vmax.f32 %v3999, 0.0
      %v5202 = vmax.f32 %v4004, 0.0
      %v5203 = vmax.f32 %v4009, 0.0
      %v5204 = vmax.f32 %v4014, 0.0
      %v5205 = vmax.f32 %v4019, 0.0
      %v5206 = vmax.f32 %v4024, 0.0
      %v5207 = vmax.f32 %v4029, 0.0
      %v5208 = vmax.f32 %v4034, 0.0
      %v5209 = vmax.f32 %v4039, 0.0
      %v5210 = vmax.f32 %v4044, 0.0
      %v5211 = vmax.f32 %v4049, 0.0
      %v5212 = vmax.f32 %v4054, 0.0
      %v5213 = vmax.f32 %v4059, 0.0
      %v5214 = vmax.f32 %v4064, 0.0
      %v5215 = vmax.f32 %v4069, 0.0
      %v5216 = vmax.f32 %v4074, 0.0
      %v5217 = vmax.f32 %v4079, 0.0
      %v5218 = vmax.f32 %v4084, 0.0
      %v5219 = vmax.f32 %v4089, 0.0
      %v5220 = vmax.f32 %v4094, 0.0
      %v5221 = vmax.f32 %v4099, 0.0
      %v5222 = vmax.f32 %v4104, 0.0
      %v5223 = vmax.f32 %v4109, 0.0
      %v5224 = vmax.f32 %v4114, 0.0
      %v5225 = vmax.f32 %v4119, 0.0
      %v5226 = vmax.f32 %v4124, 0.0
      %v5227 = vmax.f32 %v4129, 0.0
      %v5228 = vmax.f32 %v4134, 0.0
      %v5229 = vmax.f32 %v4139, 0.0
      %v5230 = vmax.f32 %v4144, 0.0
      %v5231 = vmax.f32 %v4149, 0.0
      %v5232 = vmax.f32 %v4154, 0.0
      %v5233 = vmax.f32 %v4159, 0.0
      %v5234 = vmax.f32 %v4164, 0.0
      %v5235 = vmax.f32 %v4169, 0.0
      %v5236 = vmax.f32 %v4174, 0.0
      %v5237 = vmax.f32 %v4179, 0.0
      %v5238 = vmax.f32 %v4184, 0.0
      %v5239 = vmax.f32 %v4189, 0.0
      %v5240 = vmax.f32 %v4194, 0.0
      %v5241 = vmax.f32 %v4199, 0.0
      %v5242 = vmax.f32 %v4204, 0.0
      %v5243 = vmax.f32 %v4209, 0.0
      %v5244 = vmax.f32 %v4214, 0.0
      %v5245 = vmax.f32 %v4219, 0.0
      %v5246 = vmax.f32 %v4224, 0.0
      %v5247 = vmax.f32 %v4229, 0.0
      %v5248 = vmax.f32 %v4234, 0.0
      %v5249 = vmax.f32 %v4239, 0.0
      %v5250 = vmax.f32 %v4244, 0.0
      %v5251 = vmax.f32 %v4249, 0.0
      %v5252 = vmax.f32 %v4254, 0.0
      %v5253 = vmax.f32 %v4259, 0.0
      %v5254 = vmax.f32 %v4264, 0.0
      %v5255 = vmax.f32 %v4269, 0.0
      %v5256 = vmax.f32 %v4274, 0.0
      %v5257 = vmax.f32 %v4279, 0.0
      %v5258 = vmax.f32 %v4284, 0.0
      %v5259 = vmax.f32 %v4289, 0.0
      %v5260 = vmax.f32 %v4294, 0.0
      %v5261 = vmax.f32 %v4299, 0.0
      %v5262 = vmax.f32 %v4304, 0.0
      %v5263 = vmax.f32 %v4309, 0.0
      %v5264 = vmax.f32 %v4314, 0.0
      %v5265 = vmax.f32 %v4319, 0.0
      %v5266 = vmax.f32 %v4324, 0.0
      %v5267 = vmax.f32 %v4329, 0.0
      %v5268 = vmax.f32 %v4334, 0.0
      %v5269 = vmax.f32 %v4339, 0.0
      %v5270 = vmax.f32 %v4344, 0.0
      %v5271 = vmax.f32 %v4349, 0.0
      %v5272 = vmax.f32 %v4354, 0.0
      %v5273 = vmax.f32 %v4359, 0.0
      %v5274 = vmax.f32 %v4364, 0.0
      %v5275 = vmax.f32 %v4369, 0.0
      %v5276 = vmax.f32 %v4374, 0.0
      %v5277 = vmax.f32 %v4379, 0.0
      %v5278 = vmax.f32 %v4384, 0.0
      %v5279 = vmax.f32 %v4389, 0.0
      %v5280 = vmax.f32 %v4394, 0.0
      %v5281 = vmax.f32 %v4399, 0.0
      %v5282 = vmax.f32 %v4404, 0.0
      %v5283 = vmax.f32 %v4409, 0.0
      %v5284 = vmax.f32 %v4414, 0.0
      %v5285 = vmax.f32 %v4419, 0.0
      %v5286 = vmax.f32 %v4424, 0.0
      %v5287 = vmax.f32 %v4429, 0.0
      %v5288 = vmax.f32 %v4434, 0.0
      %v5289 = vmax.f32 %v4439, 0.0
      %v5290 = vmax.f32 %v4444, 0.0
      %v5291 = vmax.f32 %v4449, 0.0
      %v5292 = vmax.f32 %v4454, 0.0
      %v5293 = vmax.f32 %v4459, 0.0
      %v5294 = vmax.f32 %v4464, 0.0
      %v5295 = vmax.f32 %v4469, 0.0
      %v5296 = vmax.f32 %v4474, 0.0
      %v5297 = vmax.f32 %v4479, 0.0
      %v5298 = vmax.f32 %v4484, 0.0
      %v5299 = vmax.f32 %v4489, 0.0
      %v5300 = vmax.f32 %v4494, 0.0
      %v5301 = vmax.f32 %v4499, 0.0
      %v5302 = vmax.f32 %v4504, 0.0
      %v5303 = vmax.f32 %v4509, 0.0
      %v5304 = vmax.f32 %v4514, 0.0
      %v5305 = vmax.f32 %v4519, 0.0
      %v5306 = vmax.f32 %v4524, 0.0
      %v5307 = vmax.f32 %v4529, 0.0
      %v5308 = vmax.f32 %v4534, 0.0
      %v5309 = vmax.f32 %v4539, 0.0
      %v5310 = vmax.f32 %v4544, 0.0
      %v5311 = vmax.f32 %v4549, 0.0
      %v5312 = vmax.f32 %v4554, 0.0
      %v5313 = vmax.f32 %v4559, 0.0
      %v5314 = vmax.f32 %v4564, 0.0
      %v5315 = vmax.f32 %v4569, 0.0
      %v5316 = vmax.f32 %v4574, 0.0
      %v5317 = vmax.f32 %v4579, 0.0
      %v5318 = vmax.f32 %v4584, 0.0
      %v5319 = vmax.f32 %v4589, 0.0
      %v5320 = vmax.f32 %v4594, 0.0
      %v5321 = vmax.f32 %v4599, 0.0
      %v5322 = vmax.f32 %v4604, 0.0
      %v5323 = vmax.f32 %v4609, 0.0
      %v5324 = vmax.f32 %v4614, 0.0
      %v5325 = vmax.f32 %v4619, 0.0
      %v5326 = vmax.f32 %v4624, 0.0
      %v5327 = vmax.f32 %v4629, 0.0
      %v5328 = vmax.f32 %v4634, 0.0
      %v5329 = vmax.f32 %v4639, 0.0
      %v5330 = vmax.f32 %v4644, 0.0
      %v5331 = vmax.f32 %v4649, 0.0
      %v5332 = vmax.f32 %v4654, 0.0
      %v5333 = vmax.f32 %v4659, 0.0
      %v5334 = vmax.f32 %v4664, 0.0
      %v5335 = vmax.f32 %v4669, 0.0
      %v5336 = vmax.f32 %v4674, 0.0
      %v5337 = vmax.f32 %v4679, 0.0
      %v5338 = vmax.f32 %v4684, 0.0
      %v5339 = vmax.f32 %v4689, 0.0
      %v5340 = vmax.f32 %v4694, 0.0
      %v5341 = vmax.f32 %v4699, 0.0
      %v5342 = vmax.f32 %v4704, 0.0
      %v5343 = vmax.f32 %v4709, 0.0
      %v5344 = vmax.f32 %v4714, 0.0
      %v5345 = vmax.f32 %v4719, 0.0
      %v5346 = vmax.f32 %v4724, 0.0
      %v5347 = vmax.f32 %v4729, 0.0
      %v5348 = vmax.f32 %v4734, 0.0
      %v5349 = vmax.f32 %v4739, 0.0
      %v5350 = vmax.f32 %v4744, 0.0
      %v5351 = vmax.f32 %v4749, 0.0
      %v5352 = vmax.f32 %v4754, 0.0
      %v5353 = vmax.f32 %v4759, 0.0
      %v5354 = vmax.f32 %v4764, 0.0
      %v5355 = vmax.f32 %v4769, 0.0
      %v5356 = vmax.f32 %v4774, 0.0
      %v5357 = vmax.f32 %v4779, 0.0
      %v5358 = vmax.f32 %v4784, 0.0
      %v5359 = vmax.f32 %v4789, 0.0
      %v5360 = vmax.f32 %v4794, 0.0
      %v5361 = vmax.f32 %v4799, 0.0
      %v5362 = vmax.f32 %v4804, 0.0
      %v5363 = vmax.f32 %v4809, 0.0
      %v5364 = vmax.f32 %v4814, 0.0
      %v5365 = vmax.f32 %v4819, 0.0
      %v5366 = vmax.f32 %v4824, 0.0
      %v5367 = vmax.f32 %v4829, 0.0
      %v5368 = vmax.f32 %v4834, 0.0
      %v5369 = vmax.f32 %v4839, 0.0
      %v5370 = vmax.f32 %v4844, 0.0
      %v5371 = vmax.f32 %v4849, 0.0
      %v5372 = vmax.f32 %v4854, 0.0
      %v5373 = vmax.f32 %v4859, 0.0
      %vm5374 = vcmask 64512
      %v5375 = vsel %vm5374, %v4862, 0.0
      %v5376 = vsel %vm5374, %v4863, 0.0
      %v5377 = vadd.f32 %v5375, %v5376
      %v5378 = vsel %vm5374, %v4864, 0.0
      %v5379 = vadd.f32 %v5377, %v5378
      %v5380 = vsel %vm5374, %v4865, 0.0
      %v5381 = vadd.f32 %v5379, %v5380
      %v5382 = vsel %vm5374, %v4866, 0.0
      %v5383 = vadd.f32 %v5381, %v5382
      %v5384 = vsel %vm5374, %v4867, 0.0
      %v5385 = vadd.f32 %v5383, %v5384
      %v5386 = vsel %vm5374, %v4868, 0.0
      %v5387 = vadd.f32 %v5385, %v5386
      %v5388 = vsel %vm5374, %v4869, 0.0
      %v5389 = vadd.f32 %v5387, %v5388
      %v5390 = vsel %vm5374, %v4870, 0.0
      %v5391 = vadd.f32 %v5389, %v5390
      %v5392 = vsel %vm5374, %v4871, 0.0
      %v5393 = vadd.f32 %v5391, %v5392
      %v5394 = vsel %vm5374, %v4872, 0.0
      %v5395 = vadd.f32 %v5393, %v5394
      %v5396 = vsel %vm5374, %v4873, 0.0
      %v5397 = vadd.f32 %v5395, %v5396
      %v5398 = vsel %vm5374, %v4874, 0.0
      %v5399 = vadd.f32 %v5397, %v5398
      %v5400 = vsel %vm5374, %v4875, 0.0
      %v5401 = vadd.f32 %v5399, %v5400
      %v5402 = vsel %vm5374, %v4876, 0.0
      %v5403 = vadd.f32 %v5401, %v5402
      %v5404 = vsel %vm5374, %v4877, 0.0
      %v5405 = vadd.f32 %v5403, %v5404
      %v5406 = vsel %vm5374, %v4878, 0.0
      %v5407 = vadd.f32 %v5405, %v5406
      %v5408 = vsel %vm5374, %v4879, 0.0
      %v5409 = vadd.f32 %v5407, %v5408
      %v5410 = vsel %vm5374, %v4880, 0.0
      %v5411 = vadd.f32 %v5409, %v5410
      %v5412 = vsel %vm5374, %v4881, 0.0
      %v5413 = vadd.f32 %v5411, %v5412
      %v5414 = vsel %vm5374, %v4882, 0.0
      %v5415 = vadd.f32 %v5413, %v5414
      %v5416 = vsel %vm5374, %v4883, 0.0
      %v5417 = vadd.f32 %v5415, %v5416
      %v5418 = vsel %vm5374, %v4884, 0.0
      %v5419 = vadd.f32 %v5417, %v5418
      %v5420 = vsel %vm5374, %v4885, 0.0
      %v5421 = vadd.f32 %v5419, %v5420
      %v5422 = vsel %vm5374, %v4886, 0.0
      %v5423 = vadd.f32 %v5421, %v5422
      %v5424 = vsel %vm5374, %v4887, 0.0
      %v5425 = vadd.f32 %v5423, %v5424
      %v5426 = vsel %vm5374, %v4888, 0.0
      %v5427 = vadd.f32 %v5425, %v5426
      %v5428 = vsel %vm5374, %v4889, 0.0
      %v5429 = vadd.f32 %v5427, %v5428
      %v5430 = vsel %vm5374, %v4890, 0.0
      %v5431 = vadd.f32 %v5429, %v5430
      %v5432 = vsel %vm5374, %v4891, 0.0
      %v5433 = vadd.f32 %v5431, %v5432
      %v5434 = vsel %vm5374, %v4892, 0.0
      %v5435 = vadd.f32 %v5433, %v5434
      %v5436 = vsel %vm5374, %v4893, 0.0
      %v5437 = vadd.f32 %v5435, %v5436
      %v5438 = vsel %vm5374, %v4894, 0.0
      %v5439 = vadd.f32 %v5437, %v5438
      %v5440 = vsel %vm5374, %v4895, 0.0
      %v5441 = vadd.f32 %v5439, %v5440
      %v5442 = vsel %vm5374, %v4896, 0.0
      %v5443 = vadd.f32 %v5441, %v5442
      %v5444 = vsel %vm5374, %v4897, 0.0
      %v5445 = vadd.f32 %v5443, %v5444
      %v5446 = vsel %vm5374, %v4898, 0.0
      %v5447 = vadd.f32 %v5445, %v5446
      %v5448 = vsel %vm5374, %v4899, 0.0
      %v5449 = vadd.f32 %v5447, %v5448
      %v5450 = vsel %vm5374, %v4900, 0.0
      %v5451 = vadd.f32 %v5449, %v5450
      %v5452 = vsel %vm5374, %v4901, 0.0
      %v5453 = vadd.f32 %v5451, %v5452
      %v5454 = vsel %vm5374, %v4902, 0.0
      %v5455 = vadd.f32 %v5453, %v5454
      %v5456 = vsel %vm5374, %v4903, 0.0
      %v5457 = vadd.f32 %v5455, %v5456
      %v5458 = vsel %vm5374, %v4904, 0.0
      %v5459 = vadd.f32 %v5457, %v5458
      %v5460 = vsel %vm5374, %v4905, 0.0
      %v5461 = vadd.f32 %v5459, %v5460
      %v5462 = vsel %vm5374, %v4906, 0.0
      %v5463 = vadd.f32 %v5461, %v5462
      %v5464 = vsel %vm5374, %v4907, 0.0
      %v5465 = vadd.f32 %v5463, %v5464
      %v5466 = vsel %vm5374, %v4908, 0.0
      %v5467 = vadd.f32 %v5465, %v5466
      %v5468 = vsel %vm5374, %v4909, 0.0
      %v5469 = vadd.f32 %v5467, %v5468
      %v5470 = vsel %vm5374, %v4910, 0.0
      %v5471 = vadd.f32 %v5469, %v5470
      %v5472 = vsel %vm5374, %v4911, 0.0
      %v5473 = vadd.f32 %v5471, %v5472
      %v5474 = vsel %vm5374, %v4912, 0.0
      %v5475 = vadd.f32 %v5473, %v5474
      %v5476 = vsel %vm5374, %v4913, 0.0
      %v5477 = vadd.f32 %v5475, %v5476
      %v5478 = vsel %vm5374, %v4914, 0.0
      %v5479 = vadd.f32 %v5477, %v5478
      %v5480 = vsel %vm5374, %v4915, 0.0
      %v5481 = vadd.f32 %v5479, %v5480
      %v5482 = vsel %vm5374, %v4916, 0.0
      %v5483 = vadd.f32 %v5481, %v5482
      %v5484 = vsel %vm5374, %v4917, 0.0
      %v5485 = vadd.f32 %v5483, %v5484
      %v5486 = vsel %vm5374, %v4918, 0.0
      %v5487 = vadd.f32 %v5485, %v5486
      %v5488 = vsel %vm5374, %v4919, 0.0
      %v5489 = vadd.f32 %v5487, %v5488
      %v5490 = vsel %vm5374, %v4920, 0.0
      %v5491 = vadd.f32 %v5489, %v5490
      %v5492 = vsel %vm5374, %v4921, 0.0
      %v5493 = vadd.f32 %v5491, %v5492
      %v5494 = vsel %vm5374, %v4922, 0.0
      %v5495 = vadd.f32 %v5493, %v5494
      %v5496 = vsel %vm5374, %v4923, 0.0
      %v5497 = vadd.f32 %v5495, %v5496
      %v5498 = vsel %vm5374, %v4924, 0.0
      %v5499 = vadd.f32 %v5497, %v5498
      %v5500 = vsel %vm5374, %v4925, 0.0
      %v5501 = vadd.f32 %v5499, %v5500
      %v5502 = vsel %vm5374, %v4926, 0.0
      %v5503 = vadd.f32 %v5501, %v5502
      %v5504 = vsel %vm5374, %v4927, 0.0
      %v5505 = vadd.f32 %v5503, %v5504
      %v5506 = vsel %vm5374, %v4928, 0.0
      %v5507 = vadd.f32 %v5505, %v5506
      %v5508 = vsel %vm5374, %v4929, 0.0
      %v5509 = vadd.f32 %v5507, %v5508
      %v5510 = vsel %vm5374, %v4930, 0.0
      %v5511 = vadd.f32 %v5509, %v5510
      %v5512 = vsel %vm5374, %v4931, 0.0
      %v5513 = vadd.f32 %v5511, %v5512
      %v5514 = vsel %vm5374, %v4932, 0.0
      %v5515 = vadd.f32 %v5513, %v5514
      %v5516 = vsel %vm5374, %v4933, 0.0
      %v5517 = vadd.f32 %v5515, %v5516
      %v5518 = vsel %vm5374, %v4934, 0.0
      %v5519 = vadd.f32 %v5517, %v5518
      %v5520 = vsel %vm5374, %v4935, 0.0
      %v5521 = vadd.f32 %v5519, %v5520
      %v5522 = vsel %vm5374, %v4936, 0.0
      %v5523 = vadd.f32 %v5521, %v5522
      %v5524 = vsel %vm5374, %v4937, 0.0
      %v5525 = vadd.f32 %v5523, %v5524
      %v5526 = vsel %vm5374, %v4938, 0.0
      %v5527 = vadd.f32 %v5525, %v5526
      %v5528 = vsel %vm5374, %v4939, 0.0
      %v5529 = vadd.f32 %v5527, %v5528
      %v5530 = vsel %vm5374, %v4940, 0.0
      %v5531 = vadd.f32 %v5529, %v5530
      %v5532 = vsel %vm5374, %v4941, 0.0
      %v5533 = vadd.f32 %v5531, %v5532
      %v5534 = vsel %vm5374, %v4942, 0.0
      %v5535 = vadd.f32 %v5533, %v5534
      %v5536 = vsel %vm5374, %v4943, 0.0
      %v5537 = vadd.f32 %v5535, %v5536
      %v5538 = vsel %vm5374, %v4944, 0.0
      %v5539 = vadd.f32 %v5537, %v5538
      %v5540 = vsel %vm5374, %v4945, 0.0
      %v5541 = vadd.f32 %v5539, %v5540
      %v5542 = vsel %vm5374, %v4946, 0.0
      %v5543 = vadd.f32 %v5541, %v5542
      %v5544 = vsel %vm5374, %v4947, 0.0
      %v5545 = vadd.f32 %v5543, %v5544
      %v5546 = vsel %vm5374, %v4948, 0.0
      %v5547 = vadd.f32 %v5545, %v5546
      %v5548 = vsel %vm5374, %v4949, 0.0
      %v5549 = vadd.f32 %v5547, %v5548
      %v5550 = vsel %vm5374, %v4950, 0.0
      %v5551 = vadd.f32 %v5549, %v5550
      %v5552 = vsel %vm5374, %v4951, 0.0
      %v5553 = vadd.f32 %v5551, %v5552
      %v5554 = vsel %vm5374, %v4952, 0.0
      %v5555 = vadd.f32 %v5553, %v5554
      %v5556 = vsel %vm5374, %v4953, 0.0
      %v5557 = vadd.f32 %v5555, %v5556
      %v5558 = vsel %vm5374, %v4954, 0.0
      %v5559 = vadd.f32 %v5557, %v5558
      %v5560 = vsel %vm5374, %v4955, 0.0
      %v5561 = vadd.f32 %v5559, %v5560
      %v5562 = vsel %vm5374, %v4956, 0.0
      %v5563 = vadd.f32 %v5561, %v5562
      %v5564 = vsel %vm5374, %v4957, 0.0
      %v5565 = vadd.f32 %v5563, %v5564
      %v5566 = vsel %vm5374, %v4958, 0.0
      %v5567 = vadd.f32 %v5565, %v5566
      %v5568 = vsel %vm5374, %v4959, 0.0
      %v5569 = vadd.f32 %v5567, %v5568
      %v5570 = vsel %vm5374, %v4960, 0.0
      %v5571 = vadd.f32 %v5569, %v5570
      %v5572 = vsel %vm5374, %v4961, 0.0
      %v5573 = vadd.f32 %v5571, %v5572
      %v5574 = vsel %vm5374, %v4962, 0.0
      %v5575 = vadd.f32 %v5573, %v5574
      %v5576 = vsel %vm5374, %v4963, 0.0
      %v5577 = vadd.f32 %v5575, %v5576
      %v5578 = vsel %vm5374, %v4964, 0.0
      %v5579 = vadd.f32 %v5577, %v5578
      %v5580 = vsel %vm5374, %v4965, 0.0
      %v5581 = vadd.f32 %v5579, %v5580
      %v5582 = vsel %vm5374, %v4966, 0.0
      %v5583 = vadd.f32 %v5581, %v5582
      %v5584 = vsel %vm5374, %v4967, 0.0
      %v5585 = vadd.f32 %v5583, %v5584
      %v5586 = vsel %vm5374, %v4968, 0.0
      %v5587 = vadd.f32 %v5585, %v5586
      %v5588 = vsel %vm5374, %v4969, 0.0
      %v5589 = vadd.f32 %v5587, %v5588
      %v5590 = vsel %vm5374, %v4970, 0.0
      %v5591 = vadd.f32 %v5589, %v5590
      %v5592 = vsel %vm5374, %v4971, 0.0
      %v5593 = vadd.f32 %v5591, %v5592
      %v5594 = vsel %vm5374, %v4972, 0.0
      %v5595 = vadd.f32 %v5593, %v5594
      %v5596 = vsel %vm5374, %v4973, 0.0
      %v5597 = vadd.f32 %v5595, %v5596
      %v5598 = vsel %vm5374, %v4974, 0.0
      %v5599 = vadd.f32 %v5597, %v5598
      %v5600 = vsel %vm5374, %v4975, 0.0
      %v5601 = vadd.f32 %v5599, %v5600
      %v5602 = vsel %vm5374, %v4976, 0.0
      %v5603 = vadd.f32 %v5601, %v5602
      %v5604 = vsel %vm5374, %v4977, 0.0
      %v5605 = vadd.f32 %v5603, %v5604
      %v5606 = vsel %vm5374, %v4978, 0.0
      %v5607 = vadd.f32 %v5605, %v5606
      %v5608 = vsel %vm5374, %v4979, 0.0
      %v5609 = vadd.f32 %v5607, %v5608
      %v5610 = vsel %vm5374, %v4980, 0.0
      %v5611 = vadd.f32 %v5609, %v5610
      %v5612 = vsel %vm5374, %v4981, 0.0
      %v5613 = vadd.f32 %v5611, %v5612
      %v5614 = vsel %vm5374, %v4982, 0.0
      %v5615 = vadd.f32 %v5613, %v5614
      %v5616 = vsel %vm5374, %v4983, 0.0
      %v5617 = vadd.f32 %v5615, %v5616
      %v5618 = vsel %vm5374, %v4984, 0.0
      %v5619 = vadd.f32 %v5617, %v5618
      %v5620 = vsel %vm5374, %v4985, 0.0
      %v5621 = vadd.f32 %v5619, %v5620
      %v5622 = vsel %vm5374, %v4986, 0.0
      %v5623 = vadd.f32 %v5621, %v5622
      %v5624 = vsel %vm5374, %v4987, 0.0
      %v5625 = vadd.f32 %v5623, %v5624
      %v5626 = vsel %vm5374, %v4988, 0.0
      %v5627 = vadd.f32 %v5625, %v5626
      %v5628 = vsel %vm5374, %v4989, 0.0
      %v5629 = vadd.f32 %v5627, %v5628
      %v5630 = vsel %vm5374, %v4990, 0.0
      %v5631 = vadd.f32 %v5629, %v5630
      %v5632 = vsel %vm5374, %v4991, 0.0
      %v5633 = vadd.f32 %v5631, %v5632
      %v5634 = vsel %vm5374, %v4992, 0.0
      %v5635 = vadd.f32 %v5633, %v5634
      %v5636 = vsel %vm5374, %v4993, 0.0
      %v5637 = vadd.f32 %v5635, %v5636
      %v5638 = vsel %vm5374, %v4994, 0.0
      %v5639 = vadd.f32 %v5637, %v5638
      %v5640 = vsel %vm5374, %v4995, 0.0
      %v5641 = vadd.f32 %v5639, %v5640
      %v5642 = vsel %vm5374, %v4996, 0.0
      %v5643 = vadd.f32 %v5641, %v5642
      %v5644 = vsel %vm5374, %v4997, 0.0
      %v5645 = vadd.f32 %v5643, %v5644
      %v5646 = vsel %vm5374, %v4998, 0.0
      %v5647 = vadd.f32 %v5645, %v5646
      %v5648 = vsel %vm5374, %v4999, 0.0
      %v5649 = vadd.f32 %v5647, %v5648
      %v5650 = vsel %vm5374, %v5000, 0.0
      %v5651 = vadd.f32 %v5649, %v5650
      %v5652 = vsel %vm5374, %v5001, 0.0
      %v5653 = vadd.f32 %v5651, %v5652
      %v5654 = vsel %vm5374, %v5002, 0.0
      %v5655 = vadd.f32 %v5653, %v5654
      %v5656 = vsel %vm5374, %v5003, 0.0
      %v5657 = vadd.f32 %v5655, %v5656
      %v5658 = vsel %vm5374, %v5004, 0.0
      %v5659 = vadd.f32 %v5657, %v5658
      %v5660 = vsel %vm5374, %v5005, 0.0
      %v5661 = vadd.f32 %v5659, %v5660
      %v5662 = vsel %vm5374, %v5006, 0.0
      %v5663 = vadd.f32 %v5661, %v5662
      %v5664 = vsel %vm5374, %v5007, 0.0
      %v5665 = vadd.f32 %v5663, %v5664
      %v5666 = vsel %vm5374, %v5008, 0.0
      %v5667 = vadd.f32 %v5665, %v5666
      %v5668 = vsel %vm5374, %v5009, 0.0
      %v5669 = vadd.f32 %v5667, %v5668
      %v5670 = vsel %vm5374, %v5010, 0.0
      %v5671 = vadd.f32 %v5669, %v5670
      %v5672 = vsel %vm5374, %v5011, 0.0
      %v5673 = vadd.f32 %v5671, %v5672
      %v5674 = vsel %vm5374, %v5012, 0.0
      %v5675 = vadd.f32 %v5673, %v5674
      %v5676 = vsel %vm5374, %v5013, 0.0
      %v5677 = vadd.f32 %v5675, %v5676
      %v5678 = vsel %vm5374, %v5014, 0.0
      %v5679 = vadd.f32 %v5677, %v5678
      %v5680 = vsel %vm5374, %v5015, 0.0
      %v5681 = vadd.f32 %v5679, %v5680
      %v5682 = vsel %vm5374, %v5016, 0.0
      %v5683 = vadd.f32 %v5681, %v5682
      %v5684 = vsel %vm5374, %v5017, 0.0
      %v5685 = vadd.f32 %v5683, %v5684
      %v5686 = vsel %vm5374, %v5018, 0.0
      %v5687 = vadd.f32 %v5685, %v5686
      %v5688 = vsel %vm5374, %v5019, 0.0
      %v5689 = vadd.f32 %v5687, %v5688
      %v5690 = vsel %vm5374, %v5020, 0.0
      %v5691 = vadd.f32 %v5689, %v5690
      %v5692 = vsel %vm5374, %v5021, 0.0
      %v5693 = vadd.f32 %v5691, %v5692
      %v5694 = vsel %vm5374, %v5022, 0.0
      %v5695 = vadd.f32 %v5693, %v5694
      %v5696 = vsel %vm5374, %v5023, 0.0
      %v5697 = vadd.f32 %v5695, %v5696
      %v5698 = vsel %vm5374, %v5024, 0.0
      %v5699 = vadd.f32 %v5697, %v5698
      %v5700 = vsel %vm5374, %v5025, 0.0
      %v5701 = vadd.f32 %v5699, %v5700
      %v5702 = vsel %vm5374, %v5026, 0.0
      %v5703 = vadd.f32 %v5701, %v5702
      %v5704 = vsel %vm5374, %v5027, 0.0
      %v5705 = vadd.f32 %v5703, %v5704
      %v5706 = vsel %vm5374, %v5028, 0.0
      %v5707 = vadd.f32 %v5705, %v5706
      %v5708 = vsel %vm5374, %v5029, 0.0
      %v5709 = vadd.f32 %v5707, %v5708
      %v5710 = vsel %vm5374, %v5030, 0.0
      %v5711 = vadd.f32 %v5709, %v5710
      %v5712 = vsel %vm5374, %v5031, 0.0
      %v5713 = vadd.f32 %v5711, %v5712
      %v5714 = vsel %vm5374, %v5032, 0.0
      %v5715 = vadd.f32 %v5713, %v5714
      %v5716 = vsel %vm5374, %v5033, 0.0
      %v5717 = vadd.f32 %v5715, %v5716
      %v5718 = vsel %vm5374, %v5034, 0.0
      %v5719 = vadd.f32 %v5717, %v5718
      %v5720 = vsel %vm5374, %v5035, 0.0
      %v5721 = vadd.f32 %v5719, %v5720
      %v5722 = vsel %vm5374, %v5036, 0.0
      %v5723 = vadd.f32 %v5721, %v5722
      %v5724 = vsel %vm5374, %v5037, 0.0
      %v5725 = vadd.f32 %v5723, %v5724
      %v5726 = vsel %vm5374, %v5038, 0.0
      %v5727 = vadd.f32 %v5725, %v5726
      %v5728 = vsel %vm5374, %v5039, 0.0
      %v5729 = vadd.f32 %v5727, %v5728
      %v5730 = vsel %vm5374, %v5040, 0.0
      %v5731 = vadd.f32 %v5729, %v5730
      %v5732 = vsel %vm5374, %v5041, 0.0
      %v5733 = vadd.f32 %v5731, %v5732
      %v5734 = vsel %vm5374, %v5042, 0.0
      %v5735 = vadd.f32 %v5733, %v5734
      %v5736 = vsel %vm5374, %v5043, 0.0
      %v5737 = vadd.f32 %v5735, %v5736
      %v5738 = vsel %vm5374, %v5044, 0.0
      %v5739 = vadd.f32 %v5737, %v5738
      %v5740 = vsel %vm5374, %v5045, 0.0
      %v5741 = vadd.f32 %v5739, %v5740
      %v5742 = vsel %vm5374, %v5046, 0.0
      %v5743 = vadd.f32 %v5741, %v5742
      %v5744 = vsel %vm5374, %v5047, 0.0
      %v5745 = vadd.f32 %v5743, %v5744
      %v5746 = vsel %vm5374, %v5048, 0.0
      %v5747 = vadd.f32 %v5745, %v5746
      %v5748 = vsel %vm5374, %v5049, 0.0
      %v5749 = vadd.f32 %v5747, %v5748
      %v5750 = vsel %vm5374, %v5050, 0.0
      %v5751 = vadd.f32 %v5749, %v5750
      %v5752 = vsel %vm5374, %v5051, 0.0
      %v5753 = vadd.f32 %v5751, %v5752
      %v5754 = vsel %vm5374, %v5052, 0.0
      %v5755 = vadd.f32 %v5753, %v5754
      %v5756 = vsel %vm5374, %v5053, 0.0
      %v5757 = vadd.f32 %v5755, %v5756
      %v5758 = vsel %vm5374, %v5054, 0.0
      %v5759 = vadd.f32 %v5757, %v5758
      %v5760 = vsel %vm5374, %v5055, 0.0
      %v5761 = vadd.f32 %v5759, %v5760
      %v5762 = vsel %vm5374, %v5056, 0.0
      %v5763 = vadd.f32 %v5761, %v5762
      %v5764 = vsel %vm5374, %v5057, 0.0
      %v5765 = vadd.f32 %v5763, %v5764
      %v5766 = vsel %vm5374, %v5058, 0.0
      %v5767 = vadd.f32 %v5765, %v5766
      %v5768 = vsel %vm5374, %v5059, 0.0
      %v5769 = vadd.f32 %v5767, %v5768
      %v5770 = vsel %vm5374, %v5060, 0.0
      %v5771 = vadd.f32 %v5769, %v5770
      %v5772 = vsel %vm5374, %v5061, 0.0
      %v5773 = vadd.f32 %v5771, %v5772
      %v5774 = vsel %vm5374, %v5062, 0.0
      %v5775 = vadd.f32 %v5773, %v5774
      %v5776 = vsel %vm5374, %v5063, 0.0
      %v5777 = vadd.f32 %v5775, %v5776
      %v5778 = vsel %vm5374, %v5064, 0.0
      %v5779 = vadd.f32 %v5777, %v5778
      %v5780 = vsel %vm5374, %v5065, 0.0
      %v5781 = vadd.f32 %v5779, %v5780
      %v5782 = vsel %vm5374, %v5066, 0.0
      %v5783 = vadd.f32 %v5781, %v5782
      %v5784 = vsel %vm5374, %v5067, 0.0
      %v5785 = vadd.f32 %v5783, %v5784
      %v5786 = vsel %vm5374, %v5068, 0.0
      %v5787 = vadd.f32 %v5785, %v5786
      %v5788 = vsel %vm5374, %v5069, 0.0
      %v5789 = vadd.f32 %v5787, %v5788
      %v5790 = vsel %vm5374, %v5070, 0.0
      %v5791 = vadd.f32 %v5789, %v5790
      %v5792 = vsel %vm5374, %v5071, 0.0
      %v5793 = vadd.f32 %v5791, %v5792
      %v5794 = vsel %vm5374, %v5072, 0.0
      %v5795 = vadd.f32 %v5793, %v5794
      %v5796 = vsel %vm5374, %v5073, 0.0
      %v5797 = vadd.f32 %v5795, %v5796
      %v5798 = vsel %vm5374, %v5074, 0.0
      %v5799 = vadd.f32 %v5797, %v5798
      %v5800 = vsel %vm5374, %v5075, 0.0
      %v5801 = vadd.f32 %v5799, %v5800
      %v5802 = vsel %vm5374, %v5076, 0.0
      %v5803 = vadd.f32 %v5801, %v5802
      %v5804 = vsel %vm5374, %v5077, 0.0
      %v5805 = vadd.f32 %v5803, %v5804
      %v5806 = vsel %vm5374, %v5078, 0.0
      %v5807 = vadd.f32 %v5805, %v5806
      %v5808 = vsel %vm5374, %v5079, 0.0
      %v5809 = vadd.f32 %v5807, %v5808
      %v5810 = vsel %vm5374, %v5080, 0.0
      %v5811 = vadd.f32 %v5809, %v5810
      %v5812 = vsel %vm5374, %v5081, 0.0
      %v5813 = vadd.f32 %v5811, %v5812
      %v5814 = vsel %vm5374, %v5082, 0.0
      %v5815 = vadd.f32 %v5813, %v5814
      %v5816 = vsel %vm5374, %v5083, 0.0
      %v5817 = vadd.f32 %v5815, %v5816
      %v5818 = vsel %vm5374, %v5084, 0.0
      %v5819 = vadd.f32 %v5817, %v5818
      %v5820 = vsel %vm5374, %v5085, 0.0
      %v5821 = vadd.f32 %v5819, %v5820
      %v5822 = vsel %vm5374, %v5086, 0.0
      %v5823 = vadd.f32 %v5821, %v5822
      %v5824 = vsel %vm5374, %v5087, 0.0
      %v5825 = vadd.f32 %v5823, %v5824
      %v5826 = vsel %vm5374, %v5088, 0.0
      %v5827 = vadd.f32 %v5825, %v5826
      %v5828 = vsel %vm5374, %v5089, 0.0
      %v5829 = vadd.f32 %v5827, %v5828
      %v5830 = vsel %vm5374, %v5090, 0.0
      %v5831 = vadd.f32 %v5829, %v5830
      %v5832 = vsel %vm5374, %v5091, 0.0
      %v5833 = vadd.f32 %v5831, %v5832
      %v5834 = vsel %vm5374, %v5092, 0.0
      %v5835 = vadd.f32 %v5833, %v5834
      %v5836 = vsel %vm5374, %v5093, 0.0
      %v5837 = vadd.f32 %v5835, %v5836
      %v5838 = vsel %vm5374, %v5094, 0.0
      %v5839 = vadd.f32 %v5837, %v5838
      %v5840 = vsel %vm5374, %v5095, 0.0
      %v5841 = vadd.f32 %v5839, %v5840
      %v5842 = vsel %vm5374, %v5096, 0.0
      %v5843 = vadd.f32 %v5841, %v5842
      %v5844 = vsel %vm5374, %v5097, 0.0
      %v5845 = vadd.f32 %v5843, %v5844
      %v5846 = vsel %vm5374, %v5098, 0.0
      %v5847 = vadd.f32 %v5845, %v5846
      %v5848 = vsel %vm5374, %v5099, 0.0
      %v5849 = vadd.f32 %v5847, %v5848
      %v5850 = vsel %vm5374, %v5100, 0.0
      %v5851 = vadd.f32 %v5849, %v5850
      %v5852 = vsel %vm5374, %v5101, 0.0
      %v5853 = vadd.f32 %v5851, %v5852
      %v5854 = vsel %vm5374, %v5102, 0.0
      %v5855 = vadd.f32 %v5853, %v5854
      %v5856 = vsel %vm5374, %v5103, 0.0
      %v5857 = vadd.f32 %v5855, %v5856
      %v5858 = vsel %vm5374, %v5104, 0.0
      %v5859 = vadd.f32 %v5857, %v5858
      %v5860 = vsel %vm5374, %v5105, 0.0
      %v5861 = vadd.f32 %v5859, %v5860
      %v5862 = vsel %vm5374, %v5106, 0.0
      %v5863 = vadd.f32 %v5861, %v5862
      %v5864 = vsel %vm5374, %v5107, 0.0
      %v5865 = vadd.f32 %v5863, %v5864
      %v5866 = vsel %vm5374, %v5108, 0.0
      %v5867 = vadd.f32 %v5865, %v5866
      %v5868 = vsel %vm5374, %v5109, 0.0
      %v5869 = vadd.f32 %v5867, %v5868
      %v5870 = vsel %vm5374, %v5110, 0.0
      %v5871 = vadd.f32 %v5869, %v5870
      %v5872 = vsel %vm5374, %v5111, 0.0
      %v5873 = vadd.f32 %v5871, %v5872
      %v5874 = vsel %vm5374, %v5112, 0.0
      %v5875 = vadd.f32 %v5873, %v5874
      %v5876 = vsel %vm5374, %v5113, 0.0
      %v5877 = vadd.f32 %v5875, %v5876
      %v5878 = vsel %vm5374, %v5114, 0.0
      %v5879 = vadd.f32 %v5877, %v5878
      %v5880 = vsel %vm5374, %v5115, 0.0
      %v5881 = vadd.f32 %v5879, %v5880
      %v5882 = vsel %vm5374, %v5116, 0.0
      %v5883 = vadd.f32 %v5881, %v5882
      %v5884 = vsel %vm5374, %v5117, 0.0
      %v5885 = vadd.f32 %v5883, %v5884
      %v5886 = vsel %vm5374, %v5118, 0.0
      %v5887 = vadd.f32 %v5885, %v5886
      %v5888 = vsel %vm5374, %v5119, 0.0
      %v5889 = vadd.f32 %v5887, %v5888
      %v5890 = vsel %vm5374, %v5120, 0.0
      %v5891 = vadd.f32 %v5889, %v5890
      %v5892 = vsel %vm5374, %v5121, 0.0
      %v5893 = vadd.f32 %v5891, %v5892
      %v5894 = vsel %vm5374, %v5122, 0.0
      %v5895 = vadd.f32 %v5893, %v5894
      %v5896 = vsel %vm5374, %v5123, 0.0
      %v5897 = vadd.f32 %v5895, %v5896
      %v5898 = vsel %vm5374, %v5124, 0.0
      %v5899 = vadd.f32 %v5897, %v5898
      %v5900 = vsel %vm5374, %v5125, 0.0
      %v5901 = vadd.f32 %v5899, %v5900
      %v5902 = vsel %vm5374, %v5126, 0.0
      %v5903 = vadd.f32 %v5901, %v5902
      %v5904 = vsel %vm5374, %v5127, 0.0
      %v5905 = vadd.f32 %v5903, %v5904
      %v5906 = vsel %vm5374, %v5128, 0.0
      %v5907 = vadd.f32 %v5905, %v5906
      %v5908 = vsel %vm5374, %v5129, 0.0
      %v5909 = vadd.f32 %v5907, %v5908
      %v5910 = vsel %vm5374, %v5130, 0.0
      %v5911 = vadd.f32 %v5909, %v5910
      %v5912 = vsel %vm5374, %v5131, 0.0
      %v5913 = vadd.f32 %v5911, %v5912
      %v5914 = vsel %vm5374, %v5132, 0.0
      %v5915 = vadd.f32 %v5913, %v5914
      %v5916 = vsel %vm5374, %v5133, 0.0
      %v5917 = vadd.f32 %v5915, %v5916
      %v5918 = vsel %vm5374, %v5134, 0.0
      %v5919 = vadd.f32 %v5917, %v5918
      %v5920 = vsel %vm5374, %v5135, 0.0
      %v5921 = vadd.f32 %v5919, %v5920
      %v5922 = vsel %vm5374, %v5136, 0.0
      %v5923 = vadd.f32 %v5921, %v5922
      %v5924 = vsel %vm5374, %v5137, 0.0
      %v5925 = vadd.f32 %v5923, %v5924
      %v5926 = vsel %vm5374, %v5138, 0.0
      %v5927 = vadd.f32 %v5925, %v5926
      %v5928 = vsel %vm5374, %v5139, 0.0
      %v5929 = vadd.f32 %v5927, %v5928
      %v5930 = vsel %vm5374, %v5140, 0.0
      %v5931 = vadd.f32 %v5929, %v5930
      %v5932 = vsel %vm5374, %v5141, 0.0
      %v5933 = vadd.f32 %v5931, %v5932
      %v5934 = vsel %vm5374, %v5142, 0.0
      %v5935 = vadd.f32 %v5933, %v5934
      %v5936 = vsel %vm5374, %v5143, 0.0
      %v5937 = vadd.f32 %v5935, %v5936
      %v5938 = vsel %vm5374, %v5144, 0.0
      %v5939 = vadd.f32 %v5937, %v5938
      %v5940 = vsel %vm5374, %v5145, 0.0
      %v5941 = vadd.f32 %v5939, %v5940
      %v5942 = vsel %vm5374, %v5146, 0.0
      %v5943 = vadd.f32 %v5941, %v5942
      %v5944 = vsel %vm5374, %v5147, 0.0
      %v5945 = vadd.f32 %v5943, %v5944
      %v5946 = vsel %vm5374, %v5148, 0.0
      %v5947 = vadd.f32 %v5945, %v5946
      %v5948 = vsel %vm5374, %v5149, 0.0
      %v5949 = vadd.f32 %v5947, %v5948
      %v5950 = vsel %vm5374, %v5150, 0.0
      %v5951 = vadd.f32 %v5949, %v5950
      %v5952 = vsel %vm5374, %v5151, 0.0
      %v5953 = vadd.f32 %v5951, %v5952
      %v5954 = vsel %vm5374, %v5152, 0.0
      %v5955 = vadd.f32 %v5953, %v5954
      %v5956 = vsel %vm5374, %v5153, 0.0
      %v5957 = vadd.f32 %v5955, %v5956
      %v5958 = vsel %vm5374, %v5154, 0.0
      %v5959 = vadd.f32 %v5957, %v5958
      %v5960 = vsel %vm5374, %v5155, 0.0
      %v5961 = vadd.f32 %v5959, %v5960
      %v5962 = vsel %vm5374, %v5156, 0.0
      %v5963 = vadd.f32 %v5961, %v5962
      %v5964 = vsel %vm5374, %v5157, 0.0
      %v5965 = vadd.f32 %v5963, %v5964
      %v5966 = vsel %vm5374, %v5158, 0.0
      %v5967 = vadd.f32 %v5965, %v5966
      %v5968 = vsel %vm5374, %v5159, 0.0
      %v5969 = vadd.f32 %v5967, %v5968
      %v5970 = vsel %vm5374, %v5160, 0.0
      %v5971 = vadd.f32 %v5969, %v5970
      %v5972 = vsel %vm5374, %v5161, 0.0
      %v5973 = vadd.f32 %v5971, %v5972
      %v5974 = vsel %vm5374, %v5162, 0.0
      %v5975 = vadd.f32 %v5973, %v5974
      %v5976 = vsel %vm5374, %v5163, 0.0
      %v5977 = vadd.f32 %v5975, %v5976
      %v5978 = vsel %vm5374, %v5164, 0.0
      %v5979 = vadd.f32 %v5977, %v5978
      %v5980 = vsel %vm5374, %v5165, 0.0
      %v5981 = vadd.f32 %v5979, %v5980
      %v5982 = vsel %vm5374, %v5166, 0.0
      %v5983 = vadd.f32 %v5981, %v5982
      %v5984 = vsel %vm5374, %v5167, 0.0
      %v5985 = vadd.f32 %v5983, %v5984
      %v5986 = vsel %vm5374, %v5168, 0.0
      %v5987 = vadd.f32 %v5985, %v5986
      %v5988 = vsel %vm5374, %v5169, 0.0
      %v5989 = vadd.f32 %v5987, %v5988
      %v5990 = vsel %vm5374, %v5170, 0.0
      %v5991 = vadd.f32 %v5989, %v5990
      %v5992 = vsel %vm5374, %v5171, 0.0
      %v5993 = vadd.f32 %v5991, %v5992
      %v5994 = vsel %vm5374, %v5172, 0.0
      %v5995 = vadd.f32 %v5993, %v5994
      %v5996 = vsel %vm5374, %v5173, 0.0
      %v5997 = vadd.f32 %v5995, %v5996
      %v5998 = vsel %vm5374, %v5174, 0.0
      %v5999 = vadd.f32 %v5997, %v5998
      %v6000 = vsel %vm5374, %v5175, 0.0
      %v6001 = vadd.f32 %v5999, %v6000
      %v6002 = vsel %vm5374, %v5176, 0.0
      %v6003 = vadd.f32 %v6001, %v6002
      %v6004 = vsel %vm5374, %v5177, 0.0
      %v6005 = vadd.f32 %v6003, %v6004
      %v6006 = vsel %vm5374, %v5178, 0.0
      %v6007 = vadd.f32 %v6005, %v6006
      %v6008 = vsel %vm5374, %v5179, 0.0
      %v6009 = vadd.f32 %v6007, %v6008
      %v6010 = vsel %vm5374, %v5180, 0.0
      %v6011 = vadd.f32 %v6009, %v6010
      %v6012 = vsel %vm5374, %v5181, 0.0
      %v6013 = vadd.f32 %v6011, %v6012
      %v6014 = vsel %vm5374, %v5182, 0.0
      %v6015 = vadd.f32 %v6013, %v6014
      %v6016 = vsel %vm5374, %v5183, 0.0
      %v6017 = vadd.f32 %v6015, %v6016
      %v6018 = vsel %vm5374, %v5184, 0.0
      %v6019 = vadd.f32 %v6017, %v6018
      %v6020 = vsel %vm5374, %v5185, 0.0
      %v6021 = vadd.f32 %v6019, %v6020
      %v6022 = vsel %vm5374, %v5186, 0.0
      %v6023 = vadd.f32 %v6021, %v6022
      %v6024 = vsel %vm5374, %v5187, 0.0
      %v6025 = vadd.f32 %v6023, %v6024
      %v6026 = vsel %vm5374, %v5188, 0.0
      %v6027 = vadd.f32 %v6025, %v6026
      %v6028 = vsel %vm5374, %v5189, 0.0
      %v6029 = vadd.f32 %v6027, %v6028
      %v6030 = vsel %vm5374, %v5190, 0.0
      %v6031 = vadd.f32 %v6029, %v6030
      %v6032 = vsel %vm5374, %v5191, 0.0
      %v6033 = vadd.f32 %v6031, %v6032
      %v6034 = vsel %vm5374, %v5192, 0.0
      %v6035 = vadd.f32 %v6033, %v6034
      %v6036 = vsel %vm5374, %v5193, 0.0
      %v6037 = vadd.f32 %v6035, %v6036
      %v6038 = vsel %vm5374, %v5194, 0.0
      %v6039 = vadd.f32 %v6037, %v6038
      %v6040 = vsel %vm5374, %v5195, 0.0
      %v6041 = vadd.f32 %v6039, %v6040
      %v6042 = vsel %vm5374, %v5196, 0.0
      %v6043 = vadd.f32 %v6041, %v6042
      %v6044 = vsel %vm5374, %v5197, 0.0
      %v6045 = vadd.f32 %v6043, %v6044
      %v6046 = vsel %vm5374, %v5198, 0.0
      %v6047 = vadd.f32 %v6045, %v6046
      %v6048 = vsel %vm5374, %v5199, 0.0
      %v6049 = vadd.f32 %v6047, %v6048
      %v6050 = vsel %vm5374, %v5200, 0.0
      %v6051 = vadd.f32 %v6049, %v6050
      %v6052 = vsel %vm5374, %v5201, 0.0
      %v6053 = vadd.f32 %v6051, %v6052
      %v6054 = vsel %vm5374, %v5202, 0.0
      %v6055 = vadd.f32 %v6053, %v6054
      %v6056 = vsel %vm5374, %v5203, 0.0
      %v6057 = vadd.f32 %v6055, %v6056
      %v6058 = vsel %vm5374, %v5204, 0.0
      %v6059 = vadd.f32 %v6057, %v6058
      %v6060 = vsel %vm5374, %v5205, 0.0
      %v6061 = vadd.f32 %v6059, %v6060
      %v6062 = vsel %vm5374, %v5206, 0.0
      %v6063 = vadd.f32 %v6061, %v6062
      %v6064 = vsel %vm5374, %v5207, 0.0
      %v6065 = vadd.f32 %v6063, %v6064
      %v6066 = vsel %vm5374, %v5208, 0.0
      %v6067 = vadd.f32 %v6065, %v6066
      %v6068 = vsel %vm5374, %v5209, 0.0
      %v6069 = vadd.f32 %v6067, %v6068
      %v6070 = vsel %vm5374, %v5210, 0.0
      %v6071 = vadd.f32 %v6069, %v6070
      %v6072 = vsel %vm5374, %v5211, 0.0
      %v6073 = vadd.f32 %v6071, %v6072
      %v6074 = vsel %vm5374, %v5212, 0.0
      %v6075 = vadd.f32 %v6073, %v6074
      %v6076 = vsel %vm5374, %v5213, 0.0
      %v6077 = vadd.f32 %v6075, %v6076
      %v6078 = vsel %vm5374, %v5214, 0.0
      %v6079 = vadd.f32 %v6077, %v6078
      %v6080 = vsel %vm5374, %v5215, 0.0
      %v6081 = vadd.f32 %v6079, %v6080
      %v6082 = vsel %vm5374, %v5216, 0.0
      %v6083 = vadd.f32 %v6081, %v6082
      %v6084 = vsel %vm5374, %v5217, 0.0
      %v6085 = vadd.f32 %v6083, %v6084
      %v6086 = vsel %vm5374, %v5218, 0.0
      %v6087 = vadd.f32 %v6085, %v6086
      %v6088 = vsel %vm5374, %v5219, 0.0
      %v6089 = vadd.f32 %v6087, %v6088
      %v6090 = vsel %vm5374, %v5220, 0.0
      %v6091 = vadd.f32 %v6089, %v6090
      %v6092 = vsel %vm5374, %v5221, 0.0
      %v6093 = vadd.f32 %v6091, %v6092
      %v6094 = vsel %vm5374, %v5222, 0.0
      %v6095 = vadd.f32 %v6093, %v6094
      %v6096 = vsel %vm5374, %v5223, 0.0
      %v6097 = vadd.f32 %v6095, %v6096
      %v6098 = vsel %vm5374, %v5224, 0.0
      %v6099 = vadd.f32 %v6097, %v6098
      %v6100 = vsel %vm5374, %v5225, 0.0
      %v6101 = vadd.f32 %v6099, %v6100
      %v6102 = vsel %vm5374, %v5226, 0.0
      %v6103 = vadd.f32 %v6101, %v6102
      %v6104 = vsel %vm5374, %v5227, 0.0
      %v6105 = vadd.f32 %v6103, %v6104
      %v6106 = vsel %vm5374, %v5228, 0.0
      %v6107 = vadd.f32 %v6105, %v6106
      %v6108 = vsel %vm5374, %v5229, 0.0
      %v6109 = vadd.f32 %v6107, %v6108
      %v6110 = vsel %vm5374, %v5230, 0.0
      %v6111 = vadd.f32 %v6109, %v6110
      %v6112 = vsel %vm5374, %v5231, 0.0
      %v6113 = vadd.f32 %v6111, %v6112
      %v6114 = vsel %vm5374, %v5232, 0.0
      %v6115 = vadd.f32 %v6113, %v6114
      %v6116 = vsel %vm5374, %v5233, 0.0
      %v6117 = vadd.f32 %v6115, %v6116
      %v6118 = vsel %vm5374, %v5234, 0.0
      %v6119 = vadd.f32 %v6117, %v6118
      %v6120 = vsel %vm5374, %v5235, 0.0
      %v6121 = vadd.f32 %v6119, %v6120
      %v6122 = vsel %vm5374, %v5236, 0.0
      %v6123 = vadd.f32 %v6121, %v6122
      %v6124 = vsel %vm5374, %v5237, 0.0
      %v6125 = vadd.f32 %v6123, %v6124
      %v6126 = vsel %vm5374, %v5238, 0.0
      %v6127 = vadd.f32 %v6125, %v6126
      %v6128 = vsel %vm5374, %v5239, 0.0
      %v6129 = vadd.f32 %v6127, %v6128
      %v6130 = vsel %vm5374, %v5240, 0.0
      %v6131 = vadd.f32 %v6129, %v6130
      %v6132 = vsel %vm5374, %v5241, 0.0
      %v6133 = vadd.f32 %v6131, %v6132
      %v6134 = vsel %vm5374, %v5242, 0.0
      %v6135 = vadd.f32 %v6133, %v6134
      %v6136 = vsel %vm5374, %v5243, 0.0
      %v6137 = vadd.f32 %v6135, %v6136
      %v6138 = vsel %vm5374, %v5244, 0.0
      %v6139 = vadd.f32 %v6137, %v6138
      %v6140 = vsel %vm5374, %v5245, 0.0
      %v6141 = vadd.f32 %v6139, %v6140
      %v6142 = vsel %vm5374, %v5246, 0.0
      %v6143 = vadd.f32 %v6141, %v6142
      %v6144 = vsel %vm5374, %v5247, 0.0
      %v6145 = vadd.f32 %v6143, %v6144
      %v6146 = vsel %vm5374, %v5248, 0.0
      %v6147 = vadd.f32 %v6145, %v6146
      %v6148 = vsel %vm5374, %v5249, 0.0
      %v6149 = vadd.f32 %v6147, %v6148
      %v6150 = vsel %vm5374, %v5250, 0.0
      %v6151 = vadd.f32 %v6149, %v6150
      %v6152 = vsel %vm5374, %v5251, 0.0
      %v6153 = vadd.f32 %v6151, %v6152
      %v6154 = vsel %vm5374, %v5252, 0.0
      %v6155 = vadd.f32 %v6153, %v6154
      %v6156 = vsel %vm5374, %v5253, 0.0
      %v6157 = vadd.f32 %v6155, %v6156
      %v6158 = vsel %vm5374, %v5254, 0.0
      %v6159 = vadd.f32 %v6157, %v6158
      %v6160 = vsel %vm5374, %v5255, 0.0
      %v6161 = vadd.f32 %v6159, %v6160
      %v6162 = vsel %vm5374, %v5256, 0.0
      %v6163 = vadd.f32 %v6161, %v6162
      %v6164 = vsel %vm5374, %v5257, 0.0
      %v6165 = vadd.f32 %v6163, %v6164
      %v6166 = vsel %vm5374, %v5258, 0.0
      %v6167 = vadd.f32 %v6165, %v6166
      %v6168 = vsel %vm5374, %v5259, 0.0
      %v6169 = vadd.f32 %v6167, %v6168
      %v6170 = vsel %vm5374, %v5260, 0.0
      %v6171 = vadd.f32 %v6169, %v6170
      %v6172 = vsel %vm5374, %v5261, 0.0
      %v6173 = vadd.f32 %v6171, %v6172
      %v6174 = vsel %vm5374, %v5262, 0.0
      %v6175 = vadd.f32 %v6173, %v6174
      %v6176 = vsel %vm5374, %v5263, 0.0
      %v6177 = vadd.f32 %v6175, %v6176
      %v6178 = vsel %vm5374, %v5264, 0.0
      %v6179 = vadd.f32 %v6177, %v6178
      %v6180 = vsel %vm5374, %v5265, 0.0
      %v6181 = vadd.f32 %v6179, %v6180
      %v6182 = vsel %vm5374, %v5266, 0.0
      %v6183 = vadd.f32 %v6181, %v6182
      %v6184 = vsel %vm5374, %v5267, 0.0
      %v6185 = vadd.f32 %v6183, %v6184
      %v6186 = vsel %vm5374, %v5268, 0.0
      %v6187 = vadd.f32 %v6185, %v6186
      %v6188 = vsel %vm5374, %v5269, 0.0
      %v6189 = vadd.f32 %v6187, %v6188
      %v6190 = vsel %vm5374, %v5270, 0.0
      %v6191 = vadd.f32 %v6189, %v6190
      %v6192 = vsel %vm5374, %v5271, 0.0
      %v6193 = vadd.f32 %v6191, %v6192
      %v6194 = vsel %vm5374, %v5272, 0.0
      %v6195 = vadd.f32 %v6193, %v6194
      %v6196 = vsel %vm5374, %v5273, 0.0
      %v6197 = vadd.f32 %v6195, %v6196
      %v6198 = vsel %vm5374, %v5274, 0.0
      %v6199 = vadd.f32 %v6197, %v6198
      %v6200 = vsel %vm5374, %v5275, 0.0
      %v6201 = vadd.f32 %v6199, %v6200
      %v6202 = vsel %vm5374, %v5276, 0.0
      %v6203 = vadd.f32 %v6201, %v6202
      %v6204 = vsel %vm5374, %v5277, 0.0
      %v6205 = vadd.f32 %v6203, %v6204
      %v6206 = vsel %vm5374, %v5278, 0.0
      %v6207 = vadd.f32 %v6205, %v6206
      %v6208 = vsel %vm5374, %v5279, 0.0
      %v6209 = vadd.f32 %v6207, %v6208
      %v6210 = vsel %vm5374, %v5280, 0.0
      %v6211 = vadd.f32 %v6209, %v6210
      %v6212 = vsel %vm5374, %v5281, 0.0
      %v6213 = vadd.f32 %v6211, %v6212
      %v6214 = vsel %vm5374, %v5282, 0.0
      %v6215 = vadd.f32 %v6213, %v6214
      %v6216 = vsel %vm5374, %v5283, 0.0
      %v6217 = vadd.f32 %v6215, %v6216
      %v6218 = vsel %vm5374, %v5284, 0.0
      %v6219 = vadd.f32 %v6217, %v6218
      %v6220 = vsel %vm5374, %v5285, 0.0
      %v6221 = vadd.f32 %v6219, %v6220
      %v6222 = vsel %vm5374, %v5286, 0.0
      %v6223 = vadd.f32 %v6221, %v6222
      %v6224 = vsel %vm5374, %v5287, 0.0
      %v6225 = vadd.f32 %v6223, %v6224
      %v6226 = vsel %vm5374, %v5288, 0.0
      %v6227 = vadd.f32 %v6225, %v6226
      %v6228 = vsel %vm5374, %v5289, 0.0
      %v6229 = vadd.f32 %v6227, %v6228
      %v6230 = vsel %vm5374, %v5290, 0.0
      %v6231 = vadd.f32 %v6229, %v6230
      %v6232 = vsel %vm5374, %v5291, 0.0
      %v6233 = vadd.f32 %v6231, %v6232
      %v6234 = vsel %vm5374, %v5292, 0.0
      %v6235 = vadd.f32 %v6233, %v6234
      %v6236 = vsel %vm5374, %v5293, 0.0
      %v6237 = vadd.f32 %v6235, %v6236
      %v6238 = vsel %vm5374, %v5294, 0.0
      %v6239 = vadd.f32 %v6237, %v6238
      %v6240 = vsel %vm5374, %v5295, 0.0
      %v6241 = vadd.f32 %v6239, %v6240
      %v6242 = vsel %vm5374, %v5296, 0.0
      %v6243 = vadd.f32 %v6241, %v6242
      %v6244 = vsel %vm5374, %v5297, 0.0
      %v6245 = vadd.f32 %v6243, %v6244
      %v6246 = vsel %vm5374, %v5298, 0.0
      %v6247 = vadd.f32 %v6245, %v6246
      %v6248 = vsel %vm5374, %v5299, 0.0
      %v6249 = vadd.f32 %v6247, %v6248
      %v6250 = vsel %vm5374, %v5300, 0.0
      %v6251 = vadd.f32 %v6249, %v6250
      %v6252 = vsel %vm5374, %v5301, 0.0
      %v6253 = vadd.f32 %v6251, %v6252
      %v6254 = vsel %vm5374, %v5302, 0.0
      %v6255 = vadd.f32 %v6253, %v6254
      %v6256 = vsel %vm5374, %v5303, 0.0
      %v6257 = vadd.f32 %v6255, %v6256
      %v6258 = vsel %vm5374, %v5304, 0.0
      %v6259 = vadd.f32 %v6257, %v6258
      %v6260 = vsel %vm5374, %v5305, 0.0
      %v6261 = vadd.f32 %v6259, %v6260
      %v6262 = vsel %vm5374, %v5306, 0.0
      %v6263 = vadd.f32 %v6261, %v6262
      %v6264 = vsel %vm5374, %v5307, 0.0
      %v6265 = vadd.f32 %v6263, %v6264
      %v6266 = vsel %vm5374, %v5308, 0.0
      %v6267 = vadd.f32 %v6265, %v6266
      %v6268 = vsel %vm5374, %v5309, 0.0
      %v6269 = vadd.f32 %v6267, %v6268
      %v6270 = vsel %vm5374, %v5310, 0.0
      %v6271 = vadd.f32 %v6269, %v6270
      %v6272 = vsel %vm5374, %v5311, 0.0
      %v6273 = vadd.f32 %v6271, %v6272
      %v6274 = vsel %vm5374, %v5312, 0.0
      %v6275 = vadd.f32 %v6273, %v6274
      %v6276 = vsel %vm5374, %v5313, 0.0
      %v6277 = vadd.f32 %v6275, %v6276
      %v6278 = vsel %vm5374, %v5314, 0.0
      %v6279 = vadd.f32 %v6277, %v6278
      %v6280 = vsel %vm5374, %v5315, 0.0
      %v6281 = vadd.f32 %v6279, %v6280
      %v6282 = vsel %vm5374, %v5316, 0.0
      %v6283 = vadd.f32 %v6281, %v6282
      %v6284 = vsel %vm5374, %v5317, 0.0
      %v6285 = vadd.f32 %v6283, %v6284
      %v6286 = vsel %vm5374, %v5318, 0.0
      %v6287 = vadd.f32 %v6285, %v6286
      %v6288 = vsel %vm5374, %v5319, 0.0
      %v6289 = vadd.f32 %v6287, %v6288
      %v6290 = vsel %vm5374, %v5320, 0.0
      %v6291 = vadd.f32 %v6289, %v6290
      %v6292 = vsel %vm5374, %v5321, 0.0
      %v6293 = vadd.f32 %v6291, %v6292
      %v6294 = vsel %vm5374, %v5322, 0.0
      %v6295 = vadd.f32 %v6293, %v6294
      %v6296 = vsel %vm5374, %v5323, 0.0
      %v6297 = vadd.f32 %v6295, %v6296
      %v6298 = vsel %vm5374, %v5324, 0.0
      %v6299 = vadd.f32 %v6297, %v6298
      %v6300 = vsel %vm5374, %v5325, 0.0
      %v6301 = vadd.f32 %v6299, %v6300
      %v6302 = vsel %vm5374, %v5326, 0.0
      %v6303 = vadd.f32 %v6301, %v6302
      %v6304 = vsel %vm5374, %v5327, 0.0
      %v6305 = vadd.f32 %v6303, %v6304
      %v6306 = vsel %vm5374, %v5328, 0.0
      %v6307 = vadd.f32 %v6305, %v6306
      %v6308 = vsel %vm5374, %v5329, 0.0
      %v6309 = vadd.f32 %v6307, %v6308
      %v6310 = vsel %vm5374, %v5330, 0.0
      %v6311 = vadd.f32 %v6309, %v6310
      %v6312 = vsel %vm5374, %v5331, 0.0
      %v6313 = vadd.f32 %v6311, %v6312
      %v6314 = vsel %vm5374, %v5332, 0.0
      %v6315 = vadd.f32 %v6313, %v6314
      %v6316 = vsel %vm5374, %v5333, 0.0
      %v6317 = vadd.f32 %v6315, %v6316
      %v6318 = vsel %vm5374, %v5334, 0.0
      %v6319 = vadd.f32 %v6317, %v6318
      %v6320 = vsel %vm5374, %v5335, 0.0
      %v6321 = vadd.f32 %v6319, %v6320
      %v6322 = vsel %vm5374, %v5336, 0.0
      %v6323 = vadd.f32 %v6321, %v6322
      %v6324 = vsel %vm5374, %v5337, 0.0
      %v6325 = vadd.f32 %v6323, %v6324
      %v6326 = vsel %vm5374, %v5338, 0.0
      %v6327 = vadd.f32 %v6325, %v6326
      %v6328 = vsel %vm5374, %v5339, 0.0
      %v6329 = vadd.f32 %v6327, %v6328
      %v6330 = vsel %vm5374, %v5340, 0.0
      %v6331 = vadd.f32 %v6329, %v6330
      %v6332 = vsel %vm5374, %v5341, 0.0
      %v6333 = vadd.f32 %v6331, %v6332
      %v6334 = vsel %vm5374, %v5342, 0.0
      %v6335 = vadd.f32 %v6333, %v6334
      %v6336 = vsel %vm5374, %v5343, 0.0
      %v6337 = vadd.f32 %v6335, %v6336
      %v6338 = vsel %vm5374, %v5344, 0.0
      %v6339 = vadd.f32 %v6337, %v6338
      %v6340 = vsel %vm5374, %v5345, 0.0
      %v6341 = vadd.f32 %v6339, %v6340
      %v6342 = vsel %vm5374, %v5346, 0.0
      %v6343 = vadd.f32 %v6341, %v6342
      %v6344 = vsel %vm5374, %v5347, 0.0
      %v6345 = vadd.f32 %v6343, %v6344
      %v6346 = vsel %vm5374, %v5348, 0.0
      %v6347 = vadd.f32 %v6345, %v6346
      %v6348 = vsel %vm5374, %v5349, 0.0
      %v6349 = vadd.f32 %v6347, %v6348
      %v6350 = vsel %vm5374, %v5350, 0.0
      %v6351 = vadd.f32 %v6349, %v6350
      %v6352 = vsel %vm5374, %v5351, 0.0
      %v6353 = vadd.f32 %v6351, %v6352
      %v6354 = vsel %vm5374, %v5352, 0.0
      %v6355 = vadd.f32 %v6353, %v6354
      %v6356 = vsel %vm5374, %v5353, 0.0
      %v6357 = vadd.f32 %v6355, %v6356
      %v6358 = vsel %vm5374, %v5354, 0.0
      %v6359 = vadd.f32 %v6357, %v6358
      %v6360 = vsel %vm5374, %v5355, 0.0
      %v6361 = vadd.f32 %v6359, %v6360
      %v6362 = vsel %vm5374, %v5356, 0.0
      %v6363 = vadd.f32 %v6361, %v6362
      %v6364 = vsel %vm5374, %v5357, 0.0
      %v6365 = vadd.f32 %v6363, %v6364
      %v6366 = vsel %vm5374, %v5358, 0.0
      %v6367 = vadd.f32 %v6365, %v6366
      %v6368 = vsel %vm5374, %v5359, 0.0
      %v6369 = vadd.f32 %v6367, %v6368
      %v6370 = vsel %vm5374, %v5360, 0.0
      %v6371 = vadd.f32 %v6369, %v6370
      %v6372 = vsel %vm5374, %v5361, 0.0
      %v6373 = vadd.f32 %v6371, %v6372
      %v6374 = vsel %vm5374, %v5362, 0.0
      %v6375 = vadd.f32 %v6373, %v6374
      %v6376 = vsel %vm5374, %v5363, 0.0
      %v6377 = vadd.f32 %v6375, %v6376
      %v6378 = vsel %vm5374, %v5364, 0.0
      %v6379 = vadd.f32 %v6377, %v6378
      %v6380 = vsel %vm5374, %v5365, 0.0
      %v6381 = vadd.f32 %v6379, %v6380
      %v6382 = vsel %vm5374, %v5366, 0.0
      %v6383 = vadd.f32 %v6381, %v6382
      %v6384 = vsel %vm5374, %v5367, 0.0
      %v6385 = vadd.f32 %v6383, %v6384
      %v6386 = vsel %vm5374, %v5368, 0.0
      %v6387 = vadd.f32 %v6385, %v6386
      %v6388 = vsel %vm5374, %v5369, 0.0
      %v6389 = vadd.f32 %v6387, %v6388
      %v6390 = vsel %vm5374, %v5370, 0.0
      %v6391 = vadd.f32 %v6389, %v6390
      %v6392 = vsel %vm5374, %v5371, 0.0
      %v6393 = vadd.f32 %v6391, %v6392
      %v6394 = vsel %vm5374, %v5372, 0.0
      %v6395 = vadd.f32 %v6393, %v6394
      %v6396 = vsel %vm5374, %v5373, 0.0
      %v6397 = vadd.f32 %v6395, %v6396
      %v6398 = vrot.slane %v6397, 4
      %v6399 = vadd.f32 %v6397, %v6398
      %v6400 = vrot.slane %v6399, 2
      %v6401 = vadd.f32 %v6399, %v6400
      %v6402 = vrot.slane %v6401, 1
      %v6403 = vadd.f32 %v6401, %v6402
      %v6404 = vrcp.pop 4096.0
      %v6405 = vmul.f32 %v6403, %v6404
      %v6406 = vmul.f32 %v4862, %v4862
      %v6407 = vmul.f32 %v4863, %v4863
      %v6408 = vmul.f32 %v4864, %v4864
      %v6409 = vmul.f32 %v4865, %v4865
      %v6410 = vmul.f32 %v4866, %v4866
      %v6411 = vmul.f32 %v4867, %v4867
      %v6412 = vmul.f32 %v4868, %v4868
      %v6413 = vmul.f32 %v4869, %v4869
      %v6414 = vmul.f32 %v4870, %v4870
      %v6415 = vmul.f32 %v4871, %v4871
      %v6416 = vmul.f32 %v4872, %v4872
      %v6417 = vmul.f32 %v4873, %v4873
      %v6418 = vmul.f32 %v4874, %v4874
      %v6419 = vmul.f32 %v4875, %v4875
      %v6420 = vmul.f32 %v4876, %v4876
      %v6421 = vmul.f32 %v4877, %v4877
      %v6422 = vmul.f32 %v4878, %v4878
      %v6423 = vmul.f32 %v4879, %v4879
      %v6424 = vmul.f32 %v4880, %v4880
      %v6425 = vmul.f32 %v4881, %v4881
      %v6426 = vmul.f32 %v4882, %v4882
      %v6427 = vmul.f32 %v4883, %v4883
      %v6428 = vmul.f32 %v4884, %v4884
      %v6429 = vmul.f32 %v4885, %v4885
      %v6430 = vmul.f32 %v4886, %v4886
      %v6431 = vmul.f32 %v4887, %v4887
      %v6432 = vmul.f32 %v4888, %v4888
      %v6433 = vmul.f32 %v4889, %v4889
      %v6434 = vmul.f32 %v4890, %v4890
      %v6435 = vmul.f32 %v4891, %v4891
      %v6436 = vmul.f32 %v4892, %v4892
      %v6437 = vmul.f32 %v4893, %v4893
      %v6438 = vmul.f32 %v4894, %v4894
      %v6439 = vmul.f32 %v4895, %v4895
      %v6440 = vmul.f32 %v4896, %v4896
      %v6441 = vmul.f32 %v4897, %v4897
      %v6442 = vmul.f32 %v4898, %v4898
      %v6443 = vmul.f32 %v4899, %v4899
      %v6444 = vmul.f32 %v4900, %v4900
      %v6445 = vmul.f32 %v4901, %v4901
      %v6446 = vmul.f32 %v4902, %v4902
      %v6447 = vmul.f32 %v4903, %v4903
      %v6448 = vmul.f32 %v4904, %v4904
      %v6449 = vmul.f32 %v4905, %v4905
      %v6450 = vmul.f32 %v4906, %v4906
      %v6451 = vmul.f32 %v4907, %v4907
      %v6452 = vmul.f32 %v4908, %v4908
      %v6453 = vmul.f32 %v4909, %v4909
      %v6454 = vmul.f32 %v4910, %v4910
      %v6455 = vmul.f32 %v4911, %v4911
      %v6456 = vmul.f32 %v4912, %v4912
      %v6457 = vmul.f32 %v4913, %v4913
      %v6458 = vmul.f32 %v4914, %v4914
      %v6459 = vmul.f32 %v4915, %v4915
      %v6460 = vmul.f32 %v4916, %v4916
      %v6461 = vmul.f32 %v4917, %v4917
      %v6462 = vmul.f32 %v4918, %v4918
      %v6463 = vmul.f32 %v4919, %v4919
      %v6464 = vmul.f32 %v4920, %v4920
      %v6465 = vmul.f32 %v4921, %v4921
      %v6466 = vmul.f32 %v4922, %v4922
      %v6467 = vmul.f32 %v4923, %v4923
      %v6468 = vmul.f32 %v4924, %v4924
      %v6469 = vmul.f32 %v4925, %v4925
      %v6470 = vmul.f32 %v4926, %v4926
      %v6471 = vmul.f32 %v4927, %v4927
      %v6472 = vmul.f32 %v4928, %v4928
      %v6473 = vmul.f32 %v4929, %v4929
      %v6474 = vmul.f32 %v4930, %v4930
      %v6475 = vmul.f32 %v4931, %v4931
      %v6476 = vmul.f32 %v4932, %v4932
      %v6477 = vmul.f32 %v4933, %v4933
      %v6478 = vmul.f32 %v4934, %v4934
      %v6479 = vmul.f32 %v4935, %v4935
      %v6480 = vmul.f32 %v4936, %v4936
      %v6481 = vmul.f32 %v4937, %v4937
      %v6482 = vmul.f32 %v4938, %v4938
      %v6483 = vmul.f32 %v4939, %v4939
      %v6484 = vmul.f32 %v4940, %v4940
      %v6485 = vmul.f32 %v4941, %v4941
      %v6486 = vmul.f32 %v4942, %v4942
      %v6487 = vmul.f32 %v4943, %v4943
      %v6488 = vmul.f32 %v4944, %v4944
      %v6489 = vmul.f32 %v4945, %v4945
      %v6490 = vmul.f32 %v4946, %v4946
      %v6491 = vmul.f32 %v4947, %v4947
      %v6492 = vmul.f32 %v4948, %v4948
      %v6493 = vmul.f32 %v4949, %v4949
      %v6494 = vmul.f32 %v4950, %v4950
      %v6495 = vmul.f32 %v4951, %v4951
      %v6496 = vmul.f32 %v4952, %v4952
      %v6497 = vmul.f32 %v4953, %v4953
      %v6498 = vmul.f32 %v4954, %v4954
      %v6499 = vmul.f32 %v4955, %v4955
      %v6500 = vmul.f32 %v4956, %v4956
      %v6501 = vmul.f32 %v4957, %v4957
      %v6502 = vmul.f32 %v4958, %v4958
      %v6503 = vmul.f32 %v4959, %v4959
      %v6504 = vmul.f32 %v4960, %v4960
      %v6505 = vmul.f32 %v4961, %v4961
      %v6506 = vmul.f32 %v4962, %v4962
      %v6507 = vmul.f32 %v4963, %v4963
      %v6508 = vmul.f32 %v4964, %v4964
      %v6509 = vmul.f32 %v4965, %v4965
      %v6510 = vmul.f32 %v4966, %v4966
      %v6511 = vmul.f32 %v4967, %v4967
      %v6512 = vmul.f32 %v4968, %v4968
      %v6513 = vmul.f32 %v4969, %v4969
      %v6514 = vmul.f32 %v4970, %v4970
      %v6515 = vmul.f32 %v4971, %v4971
      %v6516 = vmul.f32 %v4972, %v4972
      %v6517 = vmul.f32 %v4973, %v4973
      %v6518 = vmul.f32 %v4974, %v4974
      %v6519 = vmul.f32 %v4975, %v4975
      %v6520 = vmul.f32 %v4976, %v4976
      %v6521 = vmul.f32 %v4977, %v4977
      %v6522 = vmul.f32 %v4978, %v4978
      %v6523 = vmul.f32 %v4979, %v4979
      %v6524 = vmul.f32 %v4980, %v4980
      %v6525 = vmul.f32 %v4981, %v4981
      %v6526 = vmul.f32 %v4982, %v4982
      %v6527 = vmul.f32 %v4983, %v4983
      %v6528 = vmul.f32 %v4984, %v4984
      %v6529 = vmul.f32 %v4985, %v4985
      %v6530 = vmul.f32 %v4986, %v4986
      %v6531 = vmul.f32 %v4987, %v4987
      %v6532 = vmul.f32 %v4988, %v4988
      %v6533 = vmul.f32 %v4989, %v4989
      %v6534 = vmul.f32 %v4990, %v4990
      %v6535 = vmul.f32 %v4991, %v4991
      %v6536 = vmul.f32 %v4992, %v4992
      %v6537 = vmul.f32 %v4993, %v4993
      %v6538 = vmul.f32 %v4994, %v4994
      %v6539 = vmul.f32 %v4995, %v4995
      %v6540 = vmul.f32 %v4996, %v4996
      %v6541 = vmul.f32 %v4997, %v4997
      %v6542 = vmul.f32 %v4998, %v4998
      %v6543 = vmul.f32 %v4999, %v4999
      %v6544 = vmul.f32 %v5000, %v5000
      %v6545 = vmul.f32 %v5001, %v5001
      %v6546 = vmul.f32 %v5002, %v5002
      %v6547 = vmul.f32 %v5003, %v5003
      %v6548 = vmul.f32 %v5004, %v5004
      %v6549 = vmul.f32 %v5005, %v5005
      %v6550 = vmul.f32 %v5006, %v5006
      %v6551 = vmul.f32 %v5007, %v5007
      %v6552 = vmul.f32 %v5008, %v5008
      %v6553 = vmul.f32 %v5009, %v5009
      %v6554 = vmul.f32 %v5010, %v5010
      %v6555 = vmul.f32 %v5011, %v5011
      %v6556 = vmul.f32 %v5012, %v5012
      %v6557 = vmul.f32 %v5013, %v5013
      %v6558 = vmul.f32 %v5014, %v5014
      %v6559 = vmul.f32 %v5015, %v5015
      %v6560 = vmul.f32 %v5016, %v5016
      %v6561 = vmul.f32 %v5017, %v5017
      %v6562 = vmul.f32 %v5018, %v5018
      %v6563 = vmul.f32 %v5019, %v5019
      %v6564 = vmul.f32 %v5020, %v5020
      %v6565 = vmul.f32 %v5021, %v5021
      %v6566 = vmul.f32 %v5022, %v5022
      %v6567 = vmul.f32 %v5023, %v5023
      %v6568 = vmul.f32 %v5024, %v5024
      %v6569 = vmul.f32 %v5025, %v5025
      %v6570 = vmul.f32 %v5026, %v5026
      %v6571 = vmul.f32 %v5027, %v5027
      %v6572 = vmul.f32 %v5028, %v5028
      %v6573 = vmul.f32 %v5029, %v5029
      %v6574 = vmul.f32 %v5030, %v5030
      %v6575 = vmul.f32 %v5031, %v5031
      %v6576 = vmul.f32 %v5032, %v5032
      %v6577 = vmul.f32 %v5033, %v5033
      %v6578 = vmul.f32 %v5034, %v5034
      %v6579 = vmul.f32 %v5035, %v5035
      %v6580 = vmul.f32 %v5036, %v5036
      %v6581 = vmul.f32 %v5037, %v5037
      %v6582 = vmul.f32 %v5038, %v5038
      %v6583 = vmul.f32 %v5039, %v5039
      %v6584 = vmul.f32 %v5040, %v5040
      %v6585 = vmul.f32 %v5041, %v5041
      %v6586 = vmul.f32 %v5042, %v5042
      %v6587 = vmul.f32 %v5043, %v5043
      %v6588 = vmul.f32 %v5044, %v5044
      %v6589 = vmul.f32 %v5045, %v5045
      %v6590 = vmul.f32 %v5046, %v5046
      %v6591 = vmul.f32 %v5047, %v5047
      %v6592 = vmul.f32 %v5048, %v5048
      %v6593 = vmul.f32 %v5049, %v5049
      %v6594 = vmul.f32 %v5050, %v5050
      %v6595 = vmul.f32 %v5051, %v5051
      %v6596 = vmul.f32 %v5052, %v5052
      %v6597 = vmul.f32 %v5053, %v5053
      %v6598 = vmul.f32 %v5054, %v5054
      %v6599 = vmul.f32 %v5055, %v5055
      %v6600 = vmul.f32 %v5056, %v5056
      %v6601 = vmul.f32 %v5057, %v5057
      %v6602 = vmul.f32 %v5058, %v5058
      %v6603 = vmul.f32 %v5059, %v5059
      %v6604 = vmul.f32 %v5060, %v5060
      %v6605 = vmul.f32 %v5061, %v5061
      %v6606 = vmul.f32 %v5062, %v5062
      %v6607 = vmul.f32 %v5063, %v5063
      %v6608 = vmul.f32 %v5064, %v5064
      %v6609 = vmul.f32 %v5065, %v5065
      %v6610 = vmul.f32 %v5066, %v5066
      %v6611 = vmul.f32 %v5067, %v5067
      %v6612 = vmul.f32 %v5068, %v5068
      %v6613 = vmul.f32 %v5069, %v5069
      %v6614 = vmul.f32 %v5070, %v5070
      %v6615 = vmul.f32 %v5071, %v5071
      %v6616 = vmul.f32 %v5072, %v5072
      %v6617 = vmul.f32 %v5073, %v5073
      %v6618 = vmul.f32 %v5074, %v5074
      %v6619 = vmul.f32 %v5075, %v5075
      %v6620 = vmul.f32 %v5076, %v5076
      %v6621 = vmul.f32 %v5077, %v5077
      %v6622 = vmul.f32 %v5078, %v5078
      %v6623 = vmul.f32 %v5079, %v5079
      %v6624 = vmul.f32 %v5080, %v5080
      %v6625 = vmul.f32 %v5081, %v5081
      %v6626 = vmul.f32 %v5082, %v5082
      %v6627 = vmul.f32 %v5083, %v5083
      %v6628 = vmul.f32 %v5084, %v5084
      %v6629 = vmul.f32 %v5085, %v5085
      %v6630 = vmul.f32 %v5086, %v5086
      %v6631 = vmul.f32 %v5087, %v5087
      %v6632 = vmul.f32 %v5088, %v5088
      %v6633 = vmul.f32 %v5089, %v5089
      %v6634 = vmul.f32 %v5090, %v5090
      %v6635 = vmul.f32 %v5091, %v5091
      %v6636 = vmul.f32 %v5092, %v5092
      %v6637 = vmul.f32 %v5093, %v5093
      %v6638 = vmul.f32 %v5094, %v5094
      %v6639 = vmul.f32 %v5095, %v5095
      %v6640 = vmul.f32 %v5096, %v5096
      %v6641 = vmul.f32 %v5097, %v5097
      %v6642 = vmul.f32 %v5098, %v5098
      %v6643 = vmul.f32 %v5099, %v5099
      %v6644 = vmul.f32 %v5100, %v5100
      %v6645 = vmul.f32 %v5101, %v5101
      %v6646 = vmul.f32 %v5102, %v5102
      %v6647 = vmul.f32 %v5103, %v5103
      %v6648 = vmul.f32 %v5104, %v5104
      %v6649 = vmul.f32 %v5105, %v5105
      %v6650 = vmul.f32 %v5106, %v5106
      %v6651 = vmul.f32 %v5107, %v5107
      %v6652 = vmul.f32 %v5108, %v5108
      %v6653 = vmul.f32 %v5109, %v5109
      %v6654 = vmul.f32 %v5110, %v5110
      %v6655 = vmul.f32 %v5111, %v5111
      %v6656 = vmul.f32 %v5112, %v5112
      %v6657 = vmul.f32 %v5113, %v5113
      %v6658 = vmul.f32 %v5114, %v5114
      %v6659 = vmul.f32 %v5115, %v5115
      %v6660 = vmul.f32 %v5116, %v5116
      %v6661 = vmul.f32 %v5117, %v5117
      %v6662 = vmul.f32 %v5118, %v5118
      %v6663 = vmul.f32 %v5119, %v5119
      %v6664 = vmul.f32 %v5120, %v5120
      %v6665 = vmul.f32 %v5121, %v5121
      %v6666 = vmul.f32 %v5122, %v5122
      %v6667 = vmul.f32 %v5123, %v5123
      %v6668 = vmul.f32 %v5124, %v5124
      %v6669 = vmul.f32 %v5125, %v5125
      %v6670 = vmul.f32 %v5126, %v5126
      %v6671 = vmul.f32 %v5127, %v5127
      %v6672 = vmul.f32 %v5128, %v5128
      %v6673 = vmul.f32 %v5129, %v5129
      %v6674 = vmul.f32 %v5130, %v5130
      %v6675 = vmul.f32 %v5131, %v5131
      %v6676 = vmul.f32 %v5132, %v5132
      %v6677 = vmul.f32 %v5133, %v5133
      %v6678 = vmul.f32 %v5134, %v5134
      %v6679 = vmul.f32 %v5135, %v5135
      %v6680 = vmul.f32 %v5136, %v5136
      %v6681 = vmul.f32 %v5137, %v5137
      %v6682 = vmul.f32 %v5138, %v5138
      %v6683 = vmul.f32 %v5139, %v5139
      %v6684 = vmul.f32 %v5140, %v5140
      %v6685 = vmul.f32 %v5141, %v5141
      %v6686 = vmul.f32 %v5142, %v5142
      %v6687 = vmul.f32 %v5143, %v5143
      %v6688 = vmul.f32 %v5144, %v5144
      %v6689 = vmul.f32 %v5145, %v5145
      %v6690 = vmul.f32 %v5146, %v5146
      %v6691 = vmul.f32 %v5147, %v5147
      %v6692 = vmul.f32 %v5148, %v5148
      %v6693 = vmul.f32 %v5149, %v5149
      %v6694 = vmul.f32 %v5150, %v5150
      %v6695 = vmul.f32 %v5151, %v5151
      %v6696 = vmul.f32 %v5152, %v5152
      %v6697 = vmul.f32 %v5153, %v5153
      %v6698 = vmul.f32 %v5154, %v5154
      %v6699 = vmul.f32 %v5155, %v5155
      %v6700 = vmul.f32 %v5156, %v5156
      %v6701 = vmul.f32 %v5157, %v5157
      %v6702 = vmul.f32 %v5158, %v5158
      %v6703 = vmul.f32 %v5159, %v5159
      %v6704 = vmul.f32 %v5160, %v5160
      %v6705 = vmul.f32 %v5161, %v5161
      %v6706 = vmul.f32 %v5162, %v5162
      %v6707 = vmul.f32 %v5163, %v5163
      %v6708 = vmul.f32 %v5164, %v5164
      %v6709 = vmul.f32 %v5165, %v5165
      %v6710 = vmul.f32 %v5166, %v5166
      %v6711 = vmul.f32 %v5167, %v5167
      %v6712 = vmul.f32 %v5168, %v5168
      %v6713 = vmul.f32 %v5169, %v5169
      %v6714 = vmul.f32 %v5170, %v5170
      %v6715 = vmul.f32 %v5171, %v5171
      %v6716 = vmul.f32 %v5172, %v5172
      %v6717 = vmul.f32 %v5173, %v5173
      %v6718 = vmul.f32 %v5174, %v5174
      %v6719 = vmul.f32 %v5175, %v5175
      %v6720 = vmul.f32 %v5176, %v5176
      %v6721 = vmul.f32 %v5177, %v5177
      %v6722 = vmul.f32 %v5178, %v5178
      %v6723 = vmul.f32 %v5179, %v5179
      %v6724 = vmul.f32 %v5180, %v5180
      %v6725 = vmul.f32 %v5181, %v5181
      %v6726 = vmul.f32 %v5182, %v5182
      %v6727 = vmul.f32 %v5183, %v5183
      %v6728 = vmul.f32 %v5184, %v5184
      %v6729 = vmul.f32 %v5185, %v5185
      %v6730 = vmul.f32 %v5186, %v5186
      %v6731 = vmul.f32 %v5187, %v5187
      %v6732 = vmul.f32 %v5188, %v5188
      %v6733 = vmul.f32 %v5189, %v5189
      %v6734 = vmul.f32 %v5190, %v5190
      %v6735 = vmul.f32 %v5191, %v5191
      %v6736 = vmul.f32 %v5192, %v5192
      %v6737 = vmul.f32 %v5193, %v5193
      %v6738 = vmul.f32 %v5194, %v5194
      %v6739 = vmul.f32 %v5195, %v5195
      %v6740 = vmul.f32 %v5196, %v5196
      %v6741 = vmul.f32 %v5197, %v5197
      %v6742 = vmul.f32 %v5198, %v5198
      %v6743 = vmul.f32 %v5199, %v5199
      %v6744 = vmul.f32 %v5200, %v5200
      %v6745 = vmul.f32 %v5201, %v5201
      %v6746 = vmul.f32 %v5202, %v5202
      %v6747 = vmul.f32 %v5203, %v5203
      %v6748 = vmul.f32 %v5204, %v5204
      %v6749 = vmul.f32 %v5205, %v5205
      %v6750 = vmul.f32 %v5206, %v5206
      %v6751 = vmul.f32 %v5207, %v5207
      %v6752 = vmul.f32 %v5208, %v5208
      %v6753 = vmul.f32 %v5209, %v5209
      %v6754 = vmul.f32 %v5210, %v5210
      %v6755 = vmul.f32 %v5211, %v5211
      %v6756 = vmul.f32 %v5212, %v5212
      %v6757 = vmul.f32 %v5213, %v5213
      %v6758 = vmul.f32 %v5214, %v5214
      %v6759 = vmul.f32 %v5215, %v5215
      %v6760 = vmul.f32 %v5216, %v5216
      %v6761 = vmul.f32 %v5217, %v5217
      %v6762 = vmul.f32 %v5218, %v5218
      %v6763 = vmul.f32 %v5219, %v5219
      %v6764 = vmul.f32 %v5220, %v5220
      %v6765 = vmul.f32 %v5221, %v5221
      %v6766 = vmul.f32 %v5222, %v5222
      %v6767 = vmul.f32 %v5223, %v5223
      %v6768 = vmul.f32 %v5224, %v5224
      %v6769 = vmul.f32 %v5225, %v5225
      %v6770 = vmul.f32 %v5226, %v5226
      %v6771 = vmul.f32 %v5227, %v5227
      %v6772 = vmul.f32 %v5228, %v5228
      %v6773 = vmul.f32 %v5229, %v5229
      %v6774 = vmul.f32 %v5230, %v5230
      %v6775 = vmul.f32 %v5231, %v5231
      %v6776 = vmul.f32 %v5232, %v5232
      %v6777 = vmul.f32 %v5233, %v5233
      %v6778 = vmul.f32 %v5234, %v5234
      %v6779 = vmul.f32 %v5235, %v5235
      %v6780 = vmul.f32 %v5236, %v5236
      %v6781 = vmul.f32 %v5237, %v5237
      %v6782 = vmul.f32 %v5238, %v5238
      %v6783 = vmul.f32 %v5239, %v5239
      %v6784 = vmul.f32 %v5240, %v5240
      %v6785 = vmul.f32 %v5241, %v5241
      %v6786 = vmul.f32 %v5242, %v5242
      %v6787 = vmul.f32 %v5243, %v5243
      %v6788 = vmul.f32 %v5244, %v5244
      %v6789 = vmul.f32 %v5245, %v5245
      %v6790 = vmul.f32 %v5246, %v5246
      %v6791 = vmul.f32 %v5247, %v5247
      %v6792 = vmul.f32 %v5248, %v5248
      %v6793 = vmul.f32 %v5249, %v5249
      %v6794 = vmul.f32 %v5250, %v5250
      %v6795 = vmul.f32 %v5251, %v5251
      %v6796 = vmul.f32 %v5252, %v5252
      %v6797 = vmul.f32 %v5253, %v5253
      %v6798 = vmul.f32 %v5254, %v5254
      %v6799 = vmul.f32 %v5255, %v5255
      %v6800 = vmul.f32 %v5256, %v5256
      %v6801 = vmul.f32 %v5257, %v5257
      %v6802 = vmul.f32 %v5258, %v5258
      %v6803 = vmul.f32 %v5259, %v5259
      %v6804 = vmul.f32 %v5260, %v5260
      %v6805 = vmul.f32 %v5261, %v5261
      %v6806 = vmul.f32 %v5262, %v5262
      %v6807 = vmul.f32 %v5263, %v5263
      %v6808 = vmul.f32 %v5264, %v5264
      %v6809 = vmul.f32 %v5265, %v5265
      %v6810 = vmul.f32 %v5266, %v5266
      %v6811 = vmul.f32 %v5267, %v5267
      %v6812 = vmul.f32 %v5268, %v5268
      %v6813 = vmul.f32 %v5269, %v5269
      %v6814 = vmul.f32 %v5270, %v5270
      %v6815 = vmul.f32 %v5271, %v5271
      %v6816 = vmul.f32 %v5272, %v5272
      %v6817 = vmul.f32 %v5273, %v5273
      %v6818 = vmul.f32 %v5274, %v5274
      %v6819 = vmul.f32 %v5275, %v5275
      %v6820 = vmul.f32 %v5276, %v5276
      %v6821 = vmul.f32 %v5277, %v5277
      %v6822 = vmul.f32 %v5278, %v5278
      %v6823 = vmul.f32 %v5279, %v5279
      %v6824 = vmul.f32 %v5280, %v5280
      %v6825 = vmul.f32 %v5281, %v5281
      %v6826 = vmul.f32 %v5282, %v5282
      %v6827 = vmul.f32 %v5283, %v5283
      %v6828 = vmul.f32 %v5284, %v5284
      %v6829 = vmul.f32 %v5285, %v5285
      %v6830 = vmul.f32 %v5286, %v5286
      %v6831 = vmul.f32 %v5287, %v5287
      %v6832 = vmul.f32 %v5288, %v5288
      %v6833 = vmul.f32 %v5289, %v5289
      %v6834 = vmul.f32 %v5290, %v5290
      %v6835 = vmul.f32 %v5291, %v5291
      %v6836 = vmul.f32 %v5292, %v5292
      %v6837 = vmul.f32 %v5293, %v5293
      %v6838 = vmul.f32 %v5294, %v5294
      %v6839 = vmul.f32 %v5295, %v5295
      %v6840 = vmul.f32 %v5296, %v5296
      %v6841 = vmul.f32 %v5297, %v5297
      %v6842 = vmul.f32 %v5298, %v5298
      %v6843 = vmul.f32 %v5299, %v5299
      %v6844 = vmul.f32 %v5300, %v5300
      %v6845 = vmul.f32 %v5301, %v5301
      %v6846 = vmul.f32 %v5302, %v5302
      %v6847 = vmul.f32 %v5303, %v5303
      %v6848 = vmul.f32 %v5304, %v5304
      %v6849 = vmul.f32 %v5305, %v5305
      %v6850 = vmul.f32 %v5306, %v5306
      %v6851 = vmul.f32 %v5307, %v5307
      %v6852 = vmul.f32 %v5308, %v5308
      %v6853 = vmul.f32 %v5309, %v5309
      %v6854 = vmul.f32 %v5310, %v5310
      %v6855 = vmul.f32 %v5311, %v5311
      %v6856 = vmul.f32 %v5312, %v5312
      %v6857 = vmul.f32 %v5313, %v5313
      %v6858 = vmul.f32 %v5314, %v5314
      %v6859 = vmul.f32 %v5315, %v5315
      %v6860 = vmul.f32 %v5316, %v5316
      %v6861 = vmul.f32 %v5317, %v5317
      %v6862 = vmul.f32 %v5318, %v5318
      %v6863 = vmul.f32 %v5319, %v5319
      %v6864 = vmul.f32 %v5320, %v5320
      %v6865 = vmul.f32 %v5321, %v5321
      %v6866 = vmul.f32 %v5322, %v5322
      %v6867 = vmul.f32 %v5323, %v5323
      %v6868 = vmul.f32 %v5324, %v5324
      %v6869 = vmul.f32 %v5325, %v5325
      %v6870 = vmul.f32 %v5326, %v5326
      %v6871 = vmul.f32 %v5327, %v5327
      %v6872 = vmul.f32 %v5328, %v5328
      %v6873 = vmul.f32 %v5329, %v5329
      %v6874 = vmul.f32 %v5330, %v5330
      %v6875 = vmul.f32 %v5331, %v5331
      %v6876 = vmul.f32 %v5332, %v5332
      %v6877 = vmul.f32 %v5333, %v5333
      %v6878 = vmul.f32 %v5334, %v5334
      %v6879 = vmul.f32 %v5335, %v5335
      %v6880 = vmul.f32 %v5336, %v5336
      %v6881 = vmul.f32 %v5337, %v5337
      %v6882 = vmul.f32 %v5338, %v5338
      %v6883 = vmul.f32 %v5339, %v5339
      %v6884 = vmul.f32 %v5340, %v5340
      %v6885 = vmul.f32 %v5341, %v5341
      %v6886 = vmul.f32 %v5342, %v5342
      %v6887 = vmul.f32 %v5343, %v5343
      %v6888 = vmul.f32 %v5344, %v5344
      %v6889 = vmul.f32 %v5345, %v5345
      %v6890 = vmul.f32 %v5346, %v5346
      %v6891 = vmul.f32 %v5347, %v5347
      %v6892 = vmul.f32 %v5348, %v5348
      %v6893 = vmul.f32 %v5349, %v5349
      %v6894 = vmul.f32 %v5350, %v5350
      %v6895 = vmul.f32 %v5351, %v5351
      %v6896 = vmul.f32 %v5352, %v5352
      %v6897 = vmul.f32 %v5353, %v5353
      %v6898 = vmul.f32 %v5354, %v5354
      %v6899 = vmul.f32 %v5355, %v5355
      %v6900 = vmul.f32 %v5356, %v5356
      %v6901 = vmul.f32 %v5357, %v5357
      %v6902 = vmul.f32 %v5358, %v5358
      %v6903 = vmul.f32 %v5359, %v5359
      %v6904 = vmul.f32 %v5360, %v5360
      %v6905 = vmul.f32 %v5361, %v5361
      %v6906 = vmul.f32 %v5362, %v5362
      %v6907 = vmul.f32 %v5363, %v5363
      %v6908 = vmul.f32 %v5364, %v5364
      %v6909 = vmul.f32 %v5365, %v5365
      %v6910 = vmul.f32 %v5366, %v5366
      %v6911 = vmul.f32 %v5367, %v5367
      %v6912 = vmul.f32 %v5368, %v5368
      %v6913 = vmul.f32 %v5369, %v5369
      %v6914 = vmul.f32 %v5370, %v5370
      %v6915 = vmul.f32 %v5371, %v5371
      %v6916 = vmul.f32 %v5372, %v5372
      %v6917 = vmul.f32 %v5373, %v5373
      %v6918 = vsel %vm5374, %v6406, 0.0
      %v6919 = vsel %vm5374, %v6407, 0.0
      %v6920 = vadd.f32 %v6918, %v6919
      %v6921 = vsel %vm5374, %v6408, 0.0
      %v6922 = vadd.f32 %v6920, %v6921
      %v6923 = vsel %vm5374, %v6409, 0.0
      %v6924 = vadd.f32 %v6922, %v6923
      %v6925 = vsel %vm5374, %v6410, 0.0
      %v6926 = vadd.f32 %v6924, %v6925
      %v6927 = vsel %vm5374, %v6411, 0.0
      %v6928 = vadd.f32 %v6926, %v6927
      %v6929 = vsel %vm5374, %v6412, 0.0
      %v6930 = vadd.f32 %v6928, %v6929
      %v6931 = vsel %vm5374, %v6413, 0.0
      %v6932 = vadd.f32 %v6930, %v6931
      %v6933 = vsel %vm5374, %v6414, 0.0
      %v6934 = vadd.f32 %v6932, %v6933
      %v6935 = vsel %vm5374, %v6415, 0.0
      %v6936 = vadd.f32 %v6934, %v6935
      %v6937 = vsel %vm5374, %v6416, 0.0
      %v6938 = vadd.f32 %v6936, %v6937
      %v6939 = vsel %vm5374, %v6417, 0.0
      %v6940 = vadd.f32 %v6938, %v6939
      %v6941 = vsel %vm5374, %v6418, 0.0
      %v6942 = vadd.f32 %v6940, %v6941
      %v6943 = vsel %vm5374, %v6419, 0.0
      %v6944 = vadd.f32 %v6942, %v6943
      %v6945 = vsel %vm5374, %v6420, 0.0
      %v6946 = vadd.f32 %v6944, %v6945
      %v6947 = vsel %vm5374, %v6421, 0.0
      %v6948 = vadd.f32 %v6946, %v6947
      %v6949 = vsel %vm5374, %v6422, 0.0
      %v6950 = vadd.f32 %v6948, %v6949
      %v6951 = vsel %vm5374, %v6423, 0.0
      %v6952 = vadd.f32 %v6950, %v6951
      %v6953 = vsel %vm5374, %v6424, 0.0
      %v6954 = vadd.f32 %v6952, %v6953
      %v6955 = vsel %vm5374, %v6425, 0.0
      %v6956 = vadd.f32 %v6954, %v6955
      %v6957 = vsel %vm5374, %v6426, 0.0
      %v6958 = vadd.f32 %v6956, %v6957
      %v6959 = vsel %vm5374, %v6427, 0.0
      %v6960 = vadd.f32 %v6958, %v6959
      %v6961 = vsel %vm5374, %v6428, 0.0
      %v6962 = vadd.f32 %v6960, %v6961
      %v6963 = vsel %vm5374, %v6429, 0.0
      %v6964 = vadd.f32 %v6962, %v6963
      %v6965 = vsel %vm5374, %v6430, 0.0
      %v6966 = vadd.f32 %v6964, %v6965
      %v6967 = vsel %vm5374, %v6431, 0.0
      %v6968 = vadd.f32 %v6966, %v6967
      %v6969 = vsel %vm5374, %v6432, 0.0
      %v6970 = vadd.f32 %v6968, %v6969
      %v6971 = vsel %vm5374, %v6433, 0.0
      %v6972 = vadd.f32 %v6970, %v6971
      %v6973 = vsel %vm5374, %v6434, 0.0
      %v6974 = vadd.f32 %v6972, %v6973
      %v6975 = vsel %vm5374, %v6435, 0.0
      %v6976 = vadd.f32 %v6974, %v6975
      %v6977 = vsel %vm5374, %v6436, 0.0
      %v6978 = vadd.f32 %v6976, %v6977
      %v6979 = vsel %vm5374, %v6437, 0.0
      %v6980 = vadd.f32 %v6978, %v6979
      %v6981 = vsel %vm5374, %v6438, 0.0
      %v6982 = vadd.f32 %v6980, %v6981
      %v6983 = vsel %vm5374, %v6439, 0.0
      %v6984 = vadd.f32 %v6982, %v6983
      %v6985 = vsel %vm5374, %v6440, 0.0
      %v6986 = vadd.f32 %v6984, %v6985
      %v6987 = vsel %vm5374, %v6441, 0.0
      %v6988 = vadd.f32 %v6986, %v6987
      %v6989 = vsel %vm5374, %v6442, 0.0
      %v6990 = vadd.f32 %v6988, %v6989
      %v6991 = vsel %vm5374, %v6443, 0.0
      %v6992 = vadd.f32 %v6990, %v6991
      %v6993 = vsel %vm5374, %v6444, 0.0
      %v6994 = vadd.f32 %v6992, %v6993
      %v6995 = vsel %vm5374, %v6445, 0.0
      %v6996 = vadd.f32 %v6994, %v6995
      %v6997 = vsel %vm5374, %v6446, 0.0
      %v6998 = vadd.f32 %v6996, %v6997
      %v6999 = vsel %vm5374, %v6447, 0.0
      %v7000 = vadd.f32 %v6998, %v6999
      %v7001 = vsel %vm5374, %v6448, 0.0
      %v7002 = vadd.f32 %v7000, %v7001
      %v7003 = vsel %vm5374, %v6449, 0.0
      %v7004 = vadd.f32 %v7002, %v7003
      %v7005 = vsel %vm5374, %v6450, 0.0
      %v7006 = vadd.f32 %v7004, %v7005
      %v7007 = vsel %vm5374, %v6451, 0.0
      %v7008 = vadd.f32 %v7006, %v7007
      %v7009 = vsel %vm5374, %v6452, 0.0
      %v7010 = vadd.f32 %v7008, %v7009
      %v7011 = vsel %vm5374, %v6453, 0.0
      %v7012 = vadd.f32 %v7010, %v7011
      %v7013 = vsel %vm5374, %v6454, 0.0
      %v7014 = vadd.f32 %v7012, %v7013
      %v7015 = vsel %vm5374, %v6455, 0.0
      %v7016 = vadd.f32 %v7014, %v7015
      %v7017 = vsel %vm5374, %v6456, 0.0
      %v7018 = vadd.f32 %v7016, %v7017
      %v7019 = vsel %vm5374, %v6457, 0.0
      %v7020 = vadd.f32 %v7018, %v7019
      %v7021 = vsel %vm5374, %v6458, 0.0
      %v7022 = vadd.f32 %v7020, %v7021
      %v7023 = vsel %vm5374, %v6459, 0.0
      %v7024 = vadd.f32 %v7022, %v7023
      %v7025 = vsel %vm5374, %v6460, 0.0
      %v7026 = vadd.f32 %v7024, %v7025
      %v7027 = vsel %vm5374, %v6461, 0.0
      %v7028 = vadd.f32 %v7026, %v7027
      %v7029 = vsel %vm5374, %v6462, 0.0
      %v7030 = vadd.f32 %v7028, %v7029
      %v7031 = vsel %vm5374, %v6463, 0.0
      %v7032 = vadd.f32 %v7030, %v7031
      %v7033 = vsel %vm5374, %v6464, 0.0
      %v7034 = vadd.f32 %v7032, %v7033
      %v7035 = vsel %vm5374, %v6465, 0.0
      %v7036 = vadd.f32 %v7034, %v7035
      %v7037 = vsel %vm5374, %v6466, 0.0
      %v7038 = vadd.f32 %v7036, %v7037
      %v7039 = vsel %vm5374, %v6467, 0.0
      %v7040 = vadd.f32 %v7038, %v7039
      %v7041 = vsel %vm5374, %v6468, 0.0
      %v7042 = vadd.f32 %v7040, %v7041
      %v7043 = vsel %vm5374, %v6469, 0.0
      %v7044 = vadd.f32 %v7042, %v7043
      %v7045 = vsel %vm5374, %v6470, 0.0
      %v7046 = vadd.f32 %v7044, %v7045
      %v7047 = vsel %vm5374, %v6471, 0.0
      %v7048 = vadd.f32 %v7046, %v7047
      %v7049 = vsel %vm5374, %v6472, 0.0
      %v7050 = vadd.f32 %v7048, %v7049
      %v7051 = vsel %vm5374, %v6473, 0.0
      %v7052 = vadd.f32 %v7050, %v7051
      %v7053 = vsel %vm5374, %v6474, 0.0
      %v7054 = vadd.f32 %v7052, %v7053
      %v7055 = vsel %vm5374, %v6475, 0.0
      %v7056 = vadd.f32 %v7054, %v7055
      %v7057 = vsel %vm5374, %v6476, 0.0
      %v7058 = vadd.f32 %v7056, %v7057
      %v7059 = vsel %vm5374, %v6477, 0.0
      %v7060 = vadd.f32 %v7058, %v7059
      %v7061 = vsel %vm5374, %v6478, 0.0
      %v7062 = vadd.f32 %v7060, %v7061
      %v7063 = vsel %vm5374, %v6479, 0.0
      %v7064 = vadd.f32 %v7062, %v7063
      %v7065 = vsel %vm5374, %v6480, 0.0
      %v7066 = vadd.f32 %v7064, %v7065
      %v7067 = vsel %vm5374, %v6481, 0.0
      %v7068 = vadd.f32 %v7066, %v7067
      %v7069 = vsel %vm5374, %v6482, 0.0
      %v7070 = vadd.f32 %v7068, %v7069
      %v7071 = vsel %vm5374, %v6483, 0.0
      %v7072 = vadd.f32 %v7070, %v7071
      %v7073 = vsel %vm5374, %v6484, 0.0
      %v7074 = vadd.f32 %v7072, %v7073
      %v7075 = vsel %vm5374, %v6485, 0.0
      %v7076 = vadd.f32 %v7074, %v7075
      %v7077 = vsel %vm5374, %v6486, 0.0
      %v7078 = vadd.f32 %v7076, %v7077
      %v7079 = vsel %vm5374, %v6487, 0.0
      %v7080 = vadd.f32 %v7078, %v7079
      %v7081 = vsel %vm5374, %v6488, 0.0
      %v7082 = vadd.f32 %v7080, %v7081
      %v7083 = vsel %vm5374, %v6489, 0.0
      %v7084 = vadd.f32 %v7082, %v7083
      %v7085 = vsel %vm5374, %v6490, 0.0
      %v7086 = vadd.f32 %v7084, %v7085
      %v7087 = vsel %vm5374, %v6491, 0.0
      %v7088 = vadd.f32 %v7086, %v7087
      %v7089 = vsel %vm5374, %v6492, 0.0
      %v7090 = vadd.f32 %v7088, %v7089
      %v7091 = vsel %vm5374, %v6493, 0.0
      %v7092 = vadd.f32 %v7090, %v7091
      %v7093 = vsel %vm5374, %v6494, 0.0
      %v7094 = vadd.f32 %v7092, %v7093
      %v7095 = vsel %vm5374, %v6495, 0.0
      %v7096 = vadd.f32 %v7094, %v7095
      %v7097 = vsel %vm5374, %v6496, 0.0
      %v7098 = vadd.f32 %v7096, %v7097
      %v7099 = vsel %vm5374, %v6497, 0.0
      %v7100 = vadd.f32 %v7098, %v7099
      %v7101 = vsel %vm5374, %v6498, 0.0
      %v7102 = vadd.f32 %v7100, %v7101
      %v7103 = vsel %vm5374, %v6499, 0.0
      %v7104 = vadd.f32 %v7102, %v7103
      %v7105 = vsel %vm5374, %v6500, 0.0
      %v7106 = vadd.f32 %v7104, %v7105
      %v7107 = vsel %vm5374, %v6501, 0.0
      %v7108 = vadd.f32 %v7106, %v7107
      %v7109 = vsel %vm5374, %v6502, 0.0
      %v7110 = vadd.f32 %v7108, %v7109
      %v7111 = vsel %vm5374, %v6503, 0.0
      %v7112 = vadd.f32 %v7110, %v7111
      %v7113 = vsel %vm5374, %v6504, 0.0
      %v7114 = vadd.f32 %v7112, %v7113
      %v7115 = vsel %vm5374, %v6505, 0.0
      %v7116 = vadd.f32 %v7114, %v7115
      %v7117 = vsel %vm5374, %v6506, 0.0
      %v7118 = vadd.f32 %v7116, %v7117
      %v7119 = vsel %vm5374, %v6507, 0.0
      %v7120 = vadd.f32 %v7118, %v7119
      %v7121 = vsel %vm5374, %v6508, 0.0
      %v7122 = vadd.f32 %v7120, %v7121
      %v7123 = vsel %vm5374, %v6509, 0.0
      %v7124 = vadd.f32 %v7122, %v7123
      %v7125 = vsel %vm5374, %v6510, 0.0
      %v7126 = vadd.f32 %v7124, %v7125
      %v7127 = vsel %vm5374, %v6511, 0.0
      %v7128 = vadd.f32 %v7126, %v7127
      %v7129 = vsel %vm5374, %v6512, 0.0
      %v7130 = vadd.f32 %v7128, %v7129
      %v7131 = vsel %vm5374, %v6513, 0.0
      %v7132 = vadd.f32 %v7130, %v7131
      %v7133 = vsel %vm5374, %v6514, 0.0
      %v7134 = vadd.f32 %v7132, %v7133
      %v7135 = vsel %vm5374, %v6515, 0.0
      %v7136 = vadd.f32 %v7134, %v7135
      %v7137 = vsel %vm5374, %v6516, 0.0
      %v7138 = vadd.f32 %v7136, %v7137
      %v7139 = vsel %vm5374, %v6517, 0.0
      %v7140 = vadd.f32 %v7138, %v7139
      %v7141 = vsel %vm5374, %v6518, 0.0
      %v7142 = vadd.f32 %v7140, %v7141
      %v7143 = vsel %vm5374, %v6519, 0.0
      %v7144 = vadd.f32 %v7142, %v7143
      %v7145 = vsel %vm5374, %v6520, 0.0
      %v7146 = vadd.f32 %v7144, %v7145
      %v7147 = vsel %vm5374, %v6521, 0.0
      %v7148 = vadd.f32 %v7146, %v7147
      %v7149 = vsel %vm5374, %v6522, 0.0
      %v7150 = vadd.f32 %v7148, %v7149
      %v7151 = vsel %vm5374, %v6523, 0.0
      %v7152 = vadd.f32 %v7150, %v7151
      %v7153 = vsel %vm5374, %v6524, 0.0
      %v7154 = vadd.f32 %v7152, %v7153
      %v7155 = vsel %vm5374, %v6525, 0.0
      %v7156 = vadd.f32 %v7154, %v7155
      %v7157 = vsel %vm5374, %v6526, 0.0
      %v7158 = vadd.f32 %v7156, %v7157
      %v7159 = vsel %vm5374, %v6527, 0.0
      %v7160 = vadd.f32 %v7158, %v7159
      %v7161 = vsel %vm5374, %v6528, 0.0
      %v7162 = vadd.f32 %v7160, %v7161
      %v7163 = vsel %vm5374, %v6529, 0.0
      %v7164 = vadd.f32 %v7162, %v7163
      %v7165 = vsel %vm5374, %v6530, 0.0
      %v7166 = vadd.f32 %v7164, %v7165
      %v7167 = vsel %vm5374, %v6531, 0.0
      %v7168 = vadd.f32 %v7166, %v7167
      %v7169 = vsel %vm5374, %v6532, 0.0
      %v7170 = vadd.f32 %v7168, %v7169
      %v7171 = vsel %vm5374, %v6533, 0.0
      %v7172 = vadd.f32 %v7170, %v7171
      %v7173 = vsel %vm5374, %v6534, 0.0
      %v7174 = vadd.f32 %v7172, %v7173
      %v7175 = vsel %vm5374, %v6535, 0.0
      %v7176 = vadd.f32 %v7174, %v7175
      %v7177 = vsel %vm5374, %v6536, 0.0
      %v7178 = vadd.f32 %v7176, %v7177
      %v7179 = vsel %vm5374, %v6537, 0.0
      %v7180 = vadd.f32 %v7178, %v7179
      %v7181 = vsel %vm5374, %v6538, 0.0
      %v7182 = vadd.f32 %v7180, %v7181
      %v7183 = vsel %vm5374, %v6539, 0.0
      %v7184 = vadd.f32 %v7182, %v7183
      %v7185 = vsel %vm5374, %v6540, 0.0
      %v7186 = vadd.f32 %v7184, %v7185
      %v7187 = vsel %vm5374, %v6541, 0.0
      %v7188 = vadd.f32 %v7186, %v7187
      %v7189 = vsel %vm5374, %v6542, 0.0
      %v7190 = vadd.f32 %v7188, %v7189
      %v7191 = vsel %vm5374, %v6543, 0.0
      %v7192 = vadd.f32 %v7190, %v7191
      %v7193 = vsel %vm5374, %v6544, 0.0
      %v7194 = vadd.f32 %v7192, %v7193
      %v7195 = vsel %vm5374, %v6545, 0.0
      %v7196 = vadd.f32 %v7194, %v7195
      %v7197 = vsel %vm5374, %v6546, 0.0
      %v7198 = vadd.f32 %v7196, %v7197
      %v7199 = vsel %vm5374, %v6547, 0.0
      %v7200 = vadd.f32 %v7198, %v7199
      %v7201 = vsel %vm5374, %v6548, 0.0
      %v7202 = vadd.f32 %v7200, %v7201
      %v7203 = vsel %vm5374, %v6549, 0.0
      %v7204 = vadd.f32 %v7202, %v7203
      %v7205 = vsel %vm5374, %v6550, 0.0
      %v7206 = vadd.f32 %v7204, %v7205
      %v7207 = vsel %vm5374, %v6551, 0.0
      %v7208 = vadd.f32 %v7206, %v7207
      %v7209 = vsel %vm5374, %v6552, 0.0
      %v7210 = vadd.f32 %v7208, %v7209
      %v7211 = vsel %vm5374, %v6553, 0.0
      %v7212 = vadd.f32 %v7210, %v7211
      %v7213 = vsel %vm5374, %v6554, 0.0
      %v7214 = vadd.f32 %v7212, %v7213
      %v7215 = vsel %vm5374, %v6555, 0.0
      %v7216 = vadd.f32 %v7214, %v7215
      %v7217 = vsel %vm5374, %v6556, 0.0
      %v7218 = vadd.f32 %v7216, %v7217
      %v7219 = vsel %vm5374, %v6557, 0.0
      %v7220 = vadd.f32 %v7218, %v7219
      %v7221 = vsel %vm5374, %v6558, 0.0
      %v7222 = vadd.f32 %v7220, %v7221
      %v7223 = vsel %vm5374, %v6559, 0.0
      %v7224 = vadd.f32 %v7222, %v7223
      %v7225 = vsel %vm5374, %v6560, 0.0
      %v7226 = vadd.f32 %v7224, %v7225
      %v7227 = vsel %vm5374, %v6561, 0.0
      %v7228 = vadd.f32 %v7226, %v7227
      %v7229 = vsel %vm5374, %v6562, 0.0
      %v7230 = vadd.f32 %v7228, %v7229
      %v7231 = vsel %vm5374, %v6563, 0.0
      %v7232 = vadd.f32 %v7230, %v7231
      %v7233 = vsel %vm5374, %v6564, 0.0
      %v7234 = vadd.f32 %v7232, %v7233
      %v7235 = vsel %vm5374, %v6565, 0.0
      %v7236 = vadd.f32 %v7234, %v7235
      %v7237 = vsel %vm5374, %v6566, 0.0
      %v7238 = vadd.f32 %v7236, %v7237
      %v7239 = vsel %vm5374, %v6567, 0.0
      %v7240 = vadd.f32 %v7238, %v7239
      %v7241 = vsel %vm5374, %v6568, 0.0
      %v7242 = vadd.f32 %v7240, %v7241
      %v7243 = vsel %vm5374, %v6569, 0.0
      %v7244 = vadd.f32 %v7242, %v7243
      %v7245 = vsel %vm5374, %v6570, 0.0
      %v7246 = vadd.f32 %v7244, %v7245
      %v7247 = vsel %vm5374, %v6571, 0.0
      %v7248 = vadd.f32 %v7246, %v7247
      %v7249 = vsel %vm5374, %v6572, 0.0
      %v7250 = vadd.f32 %v7248, %v7249
      %v7251 = vsel %vm5374, %v6573, 0.0
      %v7252 = vadd.f32 %v7250, %v7251
      %v7253 = vsel %vm5374, %v6574, 0.0
      %v7254 = vadd.f32 %v7252, %v7253
      %v7255 = vsel %vm5374, %v6575, 0.0
      %v7256 = vadd.f32 %v7254, %v7255
      %v7257 = vsel %vm5374, %v6576, 0.0
      %v7258 = vadd.f32 %v7256, %v7257
      %v7259 = vsel %vm5374, %v6577, 0.0
      %v7260 = vadd.f32 %v7258, %v7259
      %v7261 = vsel %vm5374, %v6578, 0.0
      %v7262 = vadd.f32 %v7260, %v7261
      %v7263 = vsel %vm5374, %v6579, 0.0
      %v7264 = vadd.f32 %v7262, %v7263
      %v7265 = vsel %vm5374, %v6580, 0.0
      %v7266 = vadd.f32 %v7264, %v7265
      %v7267 = vsel %vm5374, %v6581, 0.0
      %v7268 = vadd.f32 %v7266, %v7267
      %v7269 = vsel %vm5374, %v6582, 0.0
      %v7270 = vadd.f32 %v7268, %v7269
      %v7271 = vsel %vm5374, %v6583, 0.0
      %v7272 = vadd.f32 %v7270, %v7271
      %v7273 = vsel %vm5374, %v6584, 0.0
      %v7274 = vadd.f32 %v7272, %v7273
      %v7275 = vsel %vm5374, %v6585, 0.0
      %v7276 = vadd.f32 %v7274, %v7275
      %v7277 = vsel %vm5374, %v6586, 0.0
      %v7278 = vadd.f32 %v7276, %v7277
      %v7279 = vsel %vm5374, %v6587, 0.0
      %v7280 = vadd.f32 %v7278, %v7279
      %v7281 = vsel %vm5374, %v6588, 0.0
      %v7282 = vadd.f32 %v7280, %v7281
      %v7283 = vsel %vm5374, %v6589, 0.0
      %v7284 = vadd.f32 %v7282, %v7283
      %v7285 = vsel %vm5374, %v6590, 0.0
      %v7286 = vadd.f32 %v7284, %v7285
      %v7287 = vsel %vm5374, %v6591, 0.0
      %v7288 = vadd.f32 %v7286, %v7287
      %v7289 = vsel %vm5374, %v6592, 0.0
      %v7290 = vadd.f32 %v7288, %v7289
      %v7291 = vsel %vm5374, %v6593, 0.0
      %v7292 = vadd.f32 %v7290, %v7291
      %v7293 = vsel %vm5374, %v6594, 0.0
      %v7294 = vadd.f32 %v7292, %v7293
      %v7295 = vsel %vm5374, %v6595, 0.0
      %v7296 = vadd.f32 %v7294, %v7295
      %v7297 = vsel %vm5374, %v6596, 0.0
      %v7298 = vadd.f32 %v7296, %v7297
      %v7299 = vsel %vm5374, %v6597, 0.0
      %v7300 = vadd.f32 %v7298, %v7299
      %v7301 = vsel %vm5374, %v6598, 0.0
      %v7302 = vadd.f32 %v7300, %v7301
      %v7303 = vsel %vm5374, %v6599, 0.0
      %v7304 = vadd.f32 %v7302, %v7303
      %v7305 = vsel %vm5374, %v6600, 0.0
      %v7306 = vadd.f32 %v7304, %v7305
      %v7307 = vsel %vm5374, %v6601, 0.0
      %v7308 = vadd.f32 %v7306, %v7307
      %v7309 = vsel %vm5374, %v6602, 0.0
      %v7310 = vadd.f32 %v7308, %v7309
      %v7311 = vsel %vm5374, %v6603, 0.0
      %v7312 = vadd.f32 %v7310, %v7311
      %v7313 = vsel %vm5374, %v6604, 0.0
      %v7314 = vadd.f32 %v7312, %v7313
      %v7315 = vsel %vm5374, %v6605, 0.0
      %v7316 = vadd.f32 %v7314, %v7315
      %v7317 = vsel %vm5374, %v6606, 0.0
      %v7318 = vadd.f32 %v7316, %v7317
      %v7319 = vsel %vm5374, %v6607, 0.0
      %v7320 = vadd.f32 %v7318, %v7319
      %v7321 = vsel %vm5374, %v6608, 0.0
      %v7322 = vadd.f32 %v7320, %v7321
      %v7323 = vsel %vm5374, %v6609, 0.0
      %v7324 = vadd.f32 %v7322, %v7323
      %v7325 = vsel %vm5374, %v6610, 0.0
      %v7326 = vadd.f32 %v7324, %v7325
      %v7327 = vsel %vm5374, %v6611, 0.0
      %v7328 = vadd.f32 %v7326, %v7327
      %v7329 = vsel %vm5374, %v6612, 0.0
      %v7330 = vadd.f32 %v7328, %v7329
      %v7331 = vsel %vm5374, %v6613, 0.0
      %v7332 = vadd.f32 %v7330, %v7331
      %v7333 = vsel %vm5374, %v6614, 0.0
      %v7334 = vadd.f32 %v7332, %v7333
      %v7335 = vsel %vm5374, %v6615, 0.0
      %v7336 = vadd.f32 %v7334, %v7335
      %v7337 = vsel %vm5374, %v6616, 0.0
      %v7338 = vadd.f32 %v7336, %v7337
      %v7339 = vsel %vm5374, %v6617, 0.0
      %v7340 = vadd.f32 %v7338, %v7339
      %v7341 = vsel %vm5374, %v6618, 0.0
      %v7342 = vadd.f32 %v7340, %v7341
      %v7343 = vsel %vm5374, %v6619, 0.0
      %v7344 = vadd.f32 %v7342, %v7343
      %v7345 = vsel %vm5374, %v6620, 0.0
      %v7346 = vadd.f32 %v7344, %v7345
      %v7347 = vsel %vm5374, %v6621, 0.0
      %v7348 = vadd.f32 %v7346, %v7347
      %v7349 = vsel %vm5374, %v6622, 0.0
      %v7350 = vadd.f32 %v7348, %v7349
      %v7351 = vsel %vm5374, %v6623, 0.0
      %v7352 = vadd.f32 %v7350, %v7351
      %v7353 = vsel %vm5374, %v6624, 0.0
      %v7354 = vadd.f32 %v7352, %v7353
      %v7355 = vsel %vm5374, %v6625, 0.0
      %v7356 = vadd.f32 %v7354, %v7355
      %v7357 = vsel %vm5374, %v6626, 0.0
      %v7358 = vadd.f32 %v7356, %v7357
      %v7359 = vsel %vm5374, %v6627, 0.0
      %v7360 = vadd.f32 %v7358, %v7359
      %v7361 = vsel %vm5374, %v6628, 0.0
      %v7362 = vadd.f32 %v7360, %v7361
      %v7363 = vsel %vm5374, %v6629, 0.0
      %v7364 = vadd.f32 %v7362, %v7363
      %v7365 = vsel %vm5374, %v6630, 0.0
      %v7366 = vadd.f32 %v7364, %v7365
      %v7367 = vsel %vm5374, %v6631, 0.0
      %v7368 = vadd.f32 %v7366, %v7367
      %v7369 = vsel %vm5374, %v6632, 0.0
      %v7370 = vadd.f32 %v7368, %v7369
      %v7371 = vsel %vm5374, %v6633, 0.0
      %v7372 = vadd.f32 %v7370, %v7371
      %v7373 = vsel %vm5374, %v6634, 0.0
      %v7374 = vadd.f32 %v7372, %v7373
      %v7375 = vsel %vm5374, %v6635, 0.0
      %v7376 = vadd.f32 %v7374, %v7375
      %v7377 = vsel %vm5374, %v6636, 0.0
      %v7378 = vadd.f32 %v7376, %v7377
      %v7379 = vsel %vm5374, %v6637, 0.0
      %v7380 = vadd.f32 %v7378, %v7379
      %v7381 = vsel %vm5374, %v6638, 0.0
      %v7382 = vadd.f32 %v7380, %v7381
      %v7383 = vsel %vm5374, %v6639, 0.0
      %v7384 = vadd.f32 %v7382, %v7383
      %v7385 = vsel %vm5374, %v6640, 0.0
      %v7386 = vadd.f32 %v7384, %v7385
      %v7387 = vsel %vm5374, %v6641, 0.0
      %v7388 = vadd.f32 %v7386, %v7387
      %v7389 = vsel %vm5374, %v6642, 0.0
      %v7390 = vadd.f32 %v7388, %v7389
      %v7391 = vsel %vm5374, %v6643, 0.0
      %v7392 = vadd.f32 %v7390, %v7391
      %v7393 = vsel %vm5374, %v6644, 0.0
      %v7394 = vadd.f32 %v7392, %v7393
      %v7395 = vsel %vm5374, %v6645, 0.0
      %v7396 = vadd.f32 %v7394, %v7395
      %v7397 = vsel %vm5374, %v6646, 0.0
      %v7398 = vadd.f32 %v7396, %v7397
      %v7399 = vsel %vm5374, %v6647, 0.0
      %v7400 = vadd.f32 %v7398, %v7399
      %v7401 = vsel %vm5374, %v6648, 0.0
      %v7402 = vadd.f32 %v7400, %v7401
      %v7403 = vsel %vm5374, %v6649, 0.0
      %v7404 = vadd.f32 %v7402, %v7403
      %v7405 = vsel %vm5374, %v6650, 0.0
      %v7406 = vadd.f32 %v7404, %v7405
      %v7407 = vsel %vm5374, %v6651, 0.0
      %v7408 = vadd.f32 %v7406, %v7407
      %v7409 = vsel %vm5374, %v6652, 0.0
      %v7410 = vadd.f32 %v7408, %v7409
      %v7411 = vsel %vm5374, %v6653, 0.0
      %v7412 = vadd.f32 %v7410, %v7411
      %v7413 = vsel %vm5374, %v6654, 0.0
      %v7414 = vadd.f32 %v7412, %v7413
      %v7415 = vsel %vm5374, %v6655, 0.0
      %v7416 = vadd.f32 %v7414, %v7415
      %v7417 = vsel %vm5374, %v6656, 0.0
      %v7418 = vadd.f32 %v7416, %v7417
      %v7419 = vsel %vm5374, %v6657, 0.0
      %v7420 = vadd.f32 %v7418, %v7419
      %v7421 = vsel %vm5374, %v6658, 0.0
      %v7422 = vadd.f32 %v7420, %v7421
      %v7423 = vsel %vm5374, %v6659, 0.0
      %v7424 = vadd.f32 %v7422, %v7423
      %v7425 = vsel %vm5374, %v6660, 0.0
      %v7426 = vadd.f32 %v7424, %v7425
      %v7427 = vsel %vm5374, %v6661, 0.0
      %v7428 = vadd.f32 %v7426, %v7427
      %v7429 = vsel %vm5374, %v6662, 0.0
      %v7430 = vadd.f32 %v7428, %v7429
      %v7431 = vsel %vm5374, %v6663, 0.0
      %v7432 = vadd.f32 %v7430, %v7431
      %v7433 = vsel %vm5374, %v6664, 0.0
      %v7434 = vadd.f32 %v7432, %v7433
      %v7435 = vsel %vm5374, %v6665, 0.0
      %v7436 = vadd.f32 %v7434, %v7435
      %v7437 = vsel %vm5374, %v6666, 0.0
      %v7438 = vadd.f32 %v7436, %v7437
      %v7439 = vsel %vm5374, %v6667, 0.0
      %v7440 = vadd.f32 %v7438, %v7439
      %v7441 = vsel %vm5374, %v6668, 0.0
      %v7442 = vadd.f32 %v7440, %v7441
      %v7443 = vsel %vm5374, %v6669, 0.0
      %v7444 = vadd.f32 %v7442, %v7443
      %v7445 = vsel %vm5374, %v6670, 0.0
      %v7446 = vadd.f32 %v7444, %v7445
      %v7447 = vsel %vm5374, %v6671, 0.0
      %v7448 = vadd.f32 %v7446, %v7447
      %v7449 = vsel %vm5374, %v6672, 0.0
      %v7450 = vadd.f32 %v7448, %v7449
      %v7451 = vsel %vm5374, %v6673, 0.0
      %v7452 = vadd.f32 %v7450, %v7451
      %v7453 = vsel %vm5374, %v6674, 0.0
      %v7454 = vadd.f32 %v7452, %v7453
      %v7455 = vsel %vm5374, %v6675, 0.0
      %v7456 = vadd.f32 %v7454, %v7455
      %v7457 = vsel %vm5374, %v6676, 0.0
      %v7458 = vadd.f32 %v7456, %v7457
      %v7459 = vsel %vm5374, %v6677, 0.0
      %v7460 = vadd.f32 %v7458, %v7459
      %v7461 = vsel %vm5374, %v6678, 0.0
      %v7462 = vadd.f32 %v7460, %v7461
      %v7463 = vsel %vm5374, %v6679, 0.0
      %v7464 = vadd.f32 %v7462, %v7463
      %v7465 = vsel %vm5374, %v6680, 0.0
      %v7466 = vadd.f32 %v7464, %v7465
      %v7467 = vsel %vm5374, %v6681, 0.0
      %v7468 = vadd.f32 %v7466, %v7467
      %v7469 = vsel %vm5374, %v6682, 0.0
      %v7470 = vadd.f32 %v7468, %v7469
      %v7471 = vsel %vm5374, %v6683, 0.0
      %v7472 = vadd.f32 %v7470, %v7471
      %v7473 = vsel %vm5374, %v6684, 0.0
      %v7474 = vadd.f32 %v7472, %v7473
      %v7475 = vsel %vm5374, %v6685, 0.0
      %v7476 = vadd.f32 %v7474, %v7475
      %v7477 = vsel %vm5374, %v6686, 0.0
      %v7478 = vadd.f32 %v7476, %v7477
      %v7479 = vsel %vm5374, %v6687, 0.0
      %v7480 = vadd.f32 %v7478, %v7479
      %v7481 = vsel %vm5374, %v6688, 0.0
      %v7482 = vadd.f32 %v7480, %v7481
      %v7483 = vsel %vm5374, %v6689, 0.0
      %v7484 = vadd.f32 %v7482, %v7483
      %v7485 = vsel %vm5374, %v6690, 0.0
      %v7486 = vadd.f32 %v7484, %v7485
      %v7487 = vsel %vm5374, %v6691, 0.0
      %v7488 = vadd.f32 %v7486, %v7487
      %v7489 = vsel %vm5374, %v6692, 0.0
      %v7490 = vadd.f32 %v7488, %v7489
      %v7491 = vsel %vm5374, %v6693, 0.0
      %v7492 = vadd.f32 %v7490, %v7491
      %v7493 = vsel %vm5374, %v6694, 0.0
      %v7494 = vadd.f32 %v7492, %v7493
      %v7495 = vsel %vm5374, %v6695, 0.0
      %v7496 = vadd.f32 %v7494, %v7495
      %v7497 = vsel %vm5374, %v6696, 0.0
      %v7498 = vadd.f32 %v7496, %v7497
      %v7499 = vsel %vm5374, %v6697, 0.0
      %v7500 = vadd.f32 %v7498, %v7499
      %v7501 = vsel %vm5374, %v6698, 0.0
      %v7502 = vadd.f32 %v7500, %v7501
      %v7503 = vsel %vm5374, %v6699, 0.0
      %v7504 = vadd.f32 %v7502, %v7503
      %v7505 = vsel %vm5374, %v6700, 0.0
      %v7506 = vadd.f32 %v7504, %v7505
      %v7507 = vsel %vm5374, %v6701, 0.0
      %v7508 = vadd.f32 %v7506, %v7507
      %v7509 = vsel %vm5374, %v6702, 0.0
      %v7510 = vadd.f32 %v7508, %v7509
      %v7511 = vsel %vm5374, %v6703, 0.0
      %v7512 = vadd.f32 %v7510, %v7511
      %v7513 = vsel %vm5374, %v6704, 0.0
      %v7514 = vadd.f32 %v7512, %v7513
      %v7515 = vsel %vm5374, %v6705, 0.0
      %v7516 = vadd.f32 %v7514, %v7515
      %v7517 = vsel %vm5374, %v6706, 0.0
      %v7518 = vadd.f32 %v7516, %v7517
      %v7519 = vsel %vm5374, %v6707, 0.0
      %v7520 = vadd.f32 %v7518, %v7519
      %v7521 = vsel %vm5374, %v6708, 0.0
      %v7522 = vadd.f32 %v7520, %v7521
      %v7523 = vsel %vm5374, %v6709, 0.0
      %v7524 = vadd.f32 %v7522, %v7523
      %v7525 = vsel %vm5374, %v6710, 0.0
      %v7526 = vadd.f32 %v7524, %v7525
      %v7527 = vsel %vm5374, %v6711, 0.0
      %v7528 = vadd.f32 %v7526, %v7527
      %v7529 = vsel %vm5374, %v6712, 0.0
      %v7530 = vadd.f32 %v7528, %v7529
      %v7531 = vsel %vm5374, %v6713, 0.0
      %v7532 = vadd.f32 %v7530, %v7531
      %v7533 = vsel %vm5374, %v6714, 0.0
      %v7534 = vadd.f32 %v7532, %v7533
      %v7535 = vsel %vm5374, %v6715, 0.0
      %v7536 = vadd.f32 %v7534, %v7535
      %v7537 = vsel %vm5374, %v6716, 0.0
      %v7538 = vadd.f32 %v7536, %v7537
      %v7539 = vsel %vm5374, %v6717, 0.0
      %v7540 = vadd.f32 %v7538, %v7539
      %v7541 = vsel %vm5374, %v6718, 0.0
      %v7542 = vadd.f32 %v7540, %v7541
      %v7543 = vsel %vm5374, %v6719, 0.0
      %v7544 = vadd.f32 %v7542, %v7543
      %v7545 = vsel %vm5374, %v6720, 0.0
      %v7546 = vadd.f32 %v7544, %v7545
      %v7547 = vsel %vm5374, %v6721, 0.0
      %v7548 = vadd.f32 %v7546, %v7547
      %v7549 = vsel %vm5374, %v6722, 0.0
      %v7550 = vadd.f32 %v7548, %v7549
      %v7551 = vsel %vm5374, %v6723, 0.0
      %v7552 = vadd.f32 %v7550, %v7551
      %v7553 = vsel %vm5374, %v6724, 0.0
      %v7554 = vadd.f32 %v7552, %v7553
      %v7555 = vsel %vm5374, %v6725, 0.0
      %v7556 = vadd.f32 %v7554, %v7555
      %v7557 = vsel %vm5374, %v6726, 0.0
      %v7558 = vadd.f32 %v7556, %v7557
      %v7559 = vsel %vm5374, %v6727, 0.0
      %v7560 = vadd.f32 %v7558, %v7559
      %v7561 = vsel %vm5374, %v6728, 0.0
      %v7562 = vadd.f32 %v7560, %v7561
      %v7563 = vsel %vm5374, %v6729, 0.0
      %v7564 = vadd.f32 %v7562, %v7563
      %v7565 = vsel %vm5374, %v6730, 0.0
      %v7566 = vadd.f32 %v7564, %v7565
      %v7567 = vsel %vm5374, %v6731, 0.0
      %v7568 = vadd.f32 %v7566, %v7567
      %v7569 = vsel %vm5374, %v6732, 0.0
      %v7570 = vadd.f32 %v7568, %v7569
      %v7571 = vsel %vm5374, %v6733, 0.0
      %v7572 = vadd.f32 %v7570, %v7571
      %v7573 = vsel %vm5374, %v6734, 0.0
      %v7574 = vadd.f32 %v7572, %v7573
      %v7575 = vsel %vm5374, %v6735, 0.0
      %v7576 = vadd.f32 %v7574, %v7575
      %v7577 = vsel %vm5374, %v6736, 0.0
      %v7578 = vadd.f32 %v7576, %v7577
      %v7579 = vsel %vm5374, %v6737, 0.0
      %v7580 = vadd.f32 %v7578, %v7579
      %v7581 = vsel %vm5374, %v6738, 0.0
      %v7582 = vadd.f32 %v7580, %v7581
      %v7583 = vsel %vm5374, %v6739, 0.0
      %v7584 = vadd.f32 %v7582, %v7583
      %v7585 = vsel %vm5374, %v6740, 0.0
      %v7586 = vadd.f32 %v7584, %v7585
      %v7587 = vsel %vm5374, %v6741, 0.0
      %v7588 = vadd.f32 %v7586, %v7587
      %v7589 = vsel %vm5374, %v6742, 0.0
      %v7590 = vadd.f32 %v7588, %v7589
      %v7591 = vsel %vm5374, %v6743, 0.0
      %v7592 = vadd.f32 %v7590, %v7591
      %v7593 = vsel %vm5374, %v6744, 0.0
      %v7594 = vadd.f32 %v7592, %v7593
      %v7595 = vsel %vm5374, %v6745, 0.0
      %v7596 = vadd.f32 %v7594, %v7595
      %v7597 = vsel %vm5374, %v6746, 0.0
      %v7598 = vadd.f32 %v7596, %v7597
      %v7599 = vsel %vm5374, %v6747, 0.0
      %v7600 = vadd.f32 %v7598, %v7599
      %v7601 = vsel %vm5374, %v6748, 0.0
      %v7602 = vadd.f32 %v7600, %v7601
      %v7603 = vsel %vm5374, %v6749, 0.0
      %v7604 = vadd.f32 %v7602, %v7603
      %v7605 = vsel %vm5374, %v6750, 0.0
      %v7606 = vadd.f32 %v7604, %v7605
      %v7607 = vsel %vm5374, %v6751, 0.0
      %v7608 = vadd.f32 %v7606, %v7607
      %v7609 = vsel %vm5374, %v6752, 0.0
      %v7610 = vadd.f32 %v7608, %v7609
      %v7611 = vsel %vm5374, %v6753, 0.0
      %v7612 = vadd.f32 %v7610, %v7611
      %v7613 = vsel %vm5374, %v6754, 0.0
      %v7614 = vadd.f32 %v7612, %v7613
      %v7615 = vsel %vm5374, %v6755, 0.0
      %v7616 = vadd.f32 %v7614, %v7615
      %v7617 = vsel %vm5374, %v6756, 0.0
      %v7618 = vadd.f32 %v7616, %v7617
      %v7619 = vsel %vm5374, %v6757, 0.0
      %v7620 = vadd.f32 %v7618, %v7619
      %v7621 = vsel %vm5374, %v6758, 0.0
      %v7622 = vadd.f32 %v7620, %v7621
      %v7623 = vsel %vm5374, %v6759, 0.0
      %v7624 = vadd.f32 %v7622, %v7623
      %v7625 = vsel %vm5374, %v6760, 0.0
      %v7626 = vadd.f32 %v7624, %v7625
      %v7627 = vsel %vm5374, %v6761, 0.0
      %v7628 = vadd.f32 %v7626, %v7627
      %v7629 = vsel %vm5374, %v6762, 0.0
      %v7630 = vadd.f32 %v7628, %v7629
      %v7631 = vsel %vm5374, %v6763, 0.0
      %v7632 = vadd.f32 %v7630, %v7631
      %v7633 = vsel %vm5374, %v6764, 0.0
      %v7634 = vadd.f32 %v7632, %v7633
      %v7635 = vsel %vm5374, %v6765, 0.0
      %v7636 = vadd.f32 %v7634, %v7635
      %v7637 = vsel %vm5374, %v6766, 0.0
      %v7638 = vadd.f32 %v7636, %v7637
      %v7639 = vsel %vm5374, %v6767, 0.0
      %v7640 = vadd.f32 %v7638, %v7639
      %v7641 = vsel %vm5374, %v6768, 0.0
      %v7642 = vadd.f32 %v7640, %v7641
      %v7643 = vsel %vm5374, %v6769, 0.0
      %v7644 = vadd.f32 %v7642, %v7643
      %v7645 = vsel %vm5374, %v6770, 0.0
      %v7646 = vadd.f32 %v7644, %v7645
      %v7647 = vsel %vm5374, %v6771, 0.0
      %v7648 = vadd.f32 %v7646, %v7647
      %v7649 = vsel %vm5374, %v6772, 0.0
      %v7650 = vadd.f32 %v7648, %v7649
      %v7651 = vsel %vm5374, %v6773, 0.0
      %v7652 = vadd.f32 %v7650, %v7651
      %v7653 = vsel %vm5374, %v6774, 0.0
      %v7654 = vadd.f32 %v7652, %v7653
      %v7655 = vsel %vm5374, %v6775, 0.0
      %v7656 = vadd.f32 %v7654, %v7655
      %v7657 = vsel %vm5374, %v6776, 0.0
      %v7658 = vadd.f32 %v7656, %v7657
      %v7659 = vsel %vm5374, %v6777, 0.0
      %v7660 = vadd.f32 %v7658, %v7659
      %v7661 = vsel %vm5374, %v6778, 0.0
      %v7662 = vadd.f32 %v7660, %v7661
      %v7663 = vsel %vm5374, %v6779, 0.0
      %v7664 = vadd.f32 %v7662, %v7663
      %v7665 = vsel %vm5374, %v6780, 0.0
      %v7666 = vadd.f32 %v7664, %v7665
      %v7667 = vsel %vm5374, %v6781, 0.0
      %v7668 = vadd.f32 %v7666, %v7667
      %v7669 = vsel %vm5374, %v6782, 0.0
      %v7670 = vadd.f32 %v7668, %v7669
      %v7671 = vsel %vm5374, %v6783, 0.0
      %v7672 = vadd.f32 %v7670, %v7671
      %v7673 = vsel %vm5374, %v6784, 0.0
      %v7674 = vadd.f32 %v7672, %v7673
      %v7675 = vsel %vm5374, %v6785, 0.0
      %v7676 = vadd.f32 %v7674, %v7675
      %v7677 = vsel %vm5374, %v6786, 0.0
      %v7678 = vadd.f32 %v7676, %v7677
      %v7679 = vsel %vm5374, %v6787, 0.0
      %v7680 = vadd.f32 %v7678, %v7679
      %v7681 = vsel %vm5374, %v6788, 0.0
      %v7682 = vadd.f32 %v7680, %v7681
      %v7683 = vsel %vm5374, %v6789, 0.0
      %v7684 = vadd.f32 %v7682, %v7683
      %v7685 = vsel %vm5374, %v6790, 0.0
      %v7686 = vadd.f32 %v7684, %v7685
      %v7687 = vsel %vm5374, %v6791, 0.0
      %v7688 = vadd.f32 %v7686, %v7687
      %v7689 = vsel %vm5374, %v6792, 0.0
      %v7690 = vadd.f32 %v7688, %v7689
      %v7691 = vsel %vm5374, %v6793, 0.0
      %v7692 = vadd.f32 %v7690, %v7691
      %v7693 = vsel %vm5374, %v6794, 0.0
      %v7694 = vadd.f32 %v7692, %v7693
      %v7695 = vsel %vm5374, %v6795, 0.0
      %v7696 = vadd.f32 %v7694, %v7695
      %v7697 = vsel %vm5374, %v6796, 0.0
      %v7698 = vadd.f32 %v7696, %v7697
      %v7699 = vsel %vm5374, %v6797, 0.0
      %v7700 = vadd.f32 %v7698, %v7699
      %v7701 = vsel %vm5374, %v6798, 0.0
      %v7702 = vadd.f32 %v7700, %v7701
      %v7703 = vsel %vm5374, %v6799, 0.0
      %v7704 = vadd.f32 %v7702, %v7703
      %v7705 = vsel %vm5374, %v6800, 0.0
      %v7706 = vadd.f32 %v7704, %v7705
      %v7707 = vsel %vm5374, %v6801, 0.0
      %v7708 = vadd.f32 %v7706, %v7707
      %v7709 = vsel %vm5374, %v6802, 0.0
      %v7710 = vadd.f32 %v7708, %v7709
      %v7711 = vsel %vm5374, %v6803, 0.0
      %v7712 = vadd.f32 %v7710, %v7711
      %v7713 = vsel %vm5374, %v6804, 0.0
      %v7714 = vadd.f32 %v7712, %v7713
      %v7715 = vsel %vm5374, %v6805, 0.0
      %v7716 = vadd.f32 %v7714, %v7715
      %v7717 = vsel %vm5374, %v6806, 0.0
      %v7718 = vadd.f32 %v7716, %v7717
      %v7719 = vsel %vm5374, %v6807, 0.0
      %v7720 = vadd.f32 %v7718, %v7719
      %v7721 = vsel %vm5374, %v6808, 0.0
      %v7722 = vadd.f32 %v7720, %v7721
      %v7723 = vsel %vm5374, %v6809, 0.0
      %v7724 = vadd.f32 %v7722, %v7723
      %v7725 = vsel %vm5374, %v6810, 0.0
      %v7726 = vadd.f32 %v7724, %v7725
      %v7727 = vsel %vm5374, %v6811, 0.0
      %v7728 = vadd.f32 %v7726, %v7727
      %v7729 = vsel %vm5374, %v6812, 0.0
      %v7730 = vadd.f32 %v7728, %v7729
      %v7731 = vsel %vm5374, %v6813, 0.0
      %v7732 = vadd.f32 %v7730, %v7731
      %v7733 = vsel %vm5374, %v6814, 0.0
      %v7734 = vadd.f32 %v7732, %v7733
      %v7735 = vsel %vm5374, %v6815, 0.0
      %v7736 = vadd.f32 %v7734, %v7735
      %v7737 = vsel %vm5374, %v6816, 0.0
      %v7738 = vadd.f32 %v7736, %v7737
      %v7739 = vsel %vm5374, %v6817, 0.0
      %v7740 = vadd.f32 %v7738, %v7739
      %v7741 = vsel %vm5374, %v6818, 0.0
      %v7742 = vadd.f32 %v7740, %v7741
      %v7743 = vsel %vm5374, %v6819, 0.0
      %v7744 = vadd.f32 %v7742, %v7743
      %v7745 = vsel %vm5374, %v6820, 0.0
      %v7746 = vadd.f32 %v7744, %v7745
      %v7747 = vsel %vm5374, %v6821, 0.0
      %v7748 = vadd.f32 %v7746, %v7747
      %v7749 = vsel %vm5374, %v6822, 0.0
      %v7750 = vadd.f32 %v7748, %v7749
      %v7751 = vsel %vm5374, %v6823, 0.0
      %v7752 = vadd.f32 %v7750, %v7751
      %v7753 = vsel %vm5374, %v6824, 0.0
      %v7754 = vadd.f32 %v7752, %v7753
      %v7755 = vsel %vm5374, %v6825, 0.0
      %v7756 = vadd.f32 %v7754, %v7755
      %v7757 = vsel %vm5374, %v6826, 0.0
      %v7758 = vadd.f32 %v7756, %v7757
      %v7759 = vsel %vm5374, %v6827, 0.0
      %v7760 = vadd.f32 %v7758, %v7759
      %v7761 = vsel %vm5374, %v6828, 0.0
      %v7762 = vadd.f32 %v7760, %v7761
      %v7763 = vsel %vm5374, %v6829, 0.0
      %v7764 = vadd.f32 %v7762, %v7763
      %v7765 = vsel %vm5374, %v6830, 0.0
      %v7766 = vadd.f32 %v7764, %v7765
      %v7767 = vsel %vm5374, %v6831, 0.0
      %v7768 = vadd.f32 %v7766, %v7767
      %v7769 = vsel %vm5374, %v6832, 0.0
      %v7770 = vadd.f32 %v7768, %v7769
      %v7771 = vsel %vm5374, %v6833, 0.0
      %v7772 = vadd.f32 %v7770, %v7771
      %v7773 = vsel %vm5374, %v6834, 0.0
      %v7774 = vadd.f32 %v7772, %v7773
      %v7775 = vsel %vm5374, %v6835, 0.0
      %v7776 = vadd.f32 %v7774, %v7775
      %v7777 = vsel %vm5374, %v6836, 0.0
      %v7778 = vadd.f32 %v7776, %v7777
      %v7779 = vsel %vm5374, %v6837, 0.0
      %v7780 = vadd.f32 %v7778, %v7779
      %v7781 = vsel %vm5374, %v6838, 0.0
      %v7782 = vadd.f32 %v7780, %v7781
      %v7783 = vsel %vm5374, %v6839, 0.0
      %v7784 = vadd.f32 %v7782, %v7783
      %v7785 = vsel %vm5374, %v6840, 0.0
      %v7786 = vadd.f32 %v7784, %v7785
      %v7787 = vsel %vm5374, %v6841, 0.0
      %v7788 = vadd.f32 %v7786, %v7787
      %v7789 = vsel %vm5374, %v6842, 0.0
      %v7790 = vadd.f32 %v7788, %v7789
      %v7791 = vsel %vm5374, %v6843, 0.0
      %v7792 = vadd.f32 %v7790, %v7791
      %v7793 = vsel %vm5374, %v6844, 0.0
      %v7794 = vadd.f32 %v7792, %v7793
      %v7795 = vsel %vm5374, %v6845, 0.0
      %v7796 = vadd.f32 %v7794, %v7795
      %v7797 = vsel %vm5374, %v6846, 0.0
      %v7798 = vadd.f32 %v7796, %v7797
      %v7799 = vsel %vm5374, %v6847, 0.0
      %v7800 = vadd.f32 %v7798, %v7799
      %v7801 = vsel %vm5374, %v6848, 0.0
      %v7802 = vadd.f32 %v7800, %v7801
      %v7803 = vsel %vm5374, %v6849, 0.0
      %v7804 = vadd.f32 %v7802, %v7803
      %v7805 = vsel %vm5374, %v6850, 0.0
      %v7806 = vadd.f32 %v7804, %v7805
      %v7807 = vsel %vm5374, %v6851, 0.0
      %v7808 = vadd.f32 %v7806, %v7807
      %v7809 = vsel %vm5374, %v6852, 0.0
      %v7810 = vadd.f32 %v7808, %v7809
      %v7811 = vsel %vm5374, %v6853, 0.0
      %v7812 = vadd.f32 %v7810, %v7811
      %v7813 = vsel %vm5374, %v6854, 0.0
      %v7814 = vadd.f32 %v7812, %v7813
      %v7815 = vsel %vm5374, %v6855, 0.0
      %v7816 = vadd.f32 %v7814, %v7815
      %v7817 = vsel %vm5374, %v6856, 0.0
      %v7818 = vadd.f32 %v7816, %v7817
      %v7819 = vsel %vm5374, %v6857, 0.0
      %v7820 = vadd.f32 %v7818, %v7819
      %v7821 = vsel %vm5374, %v6858, 0.0
      %v7822 = vadd.f32 %v7820, %v7821
      %v7823 = vsel %vm5374, %v6859, 0.0
      %v7824 = vadd.f32 %v7822, %v7823
      %v7825 = vsel %vm5374, %v6860, 0.0
      %v7826 = vadd.f32 %v7824, %v7825
      %v7827 = vsel %vm5374, %v6861, 0.0
      %v7828 = vadd.f32 %v7826, %v7827
      %v7829 = vsel %vm5374, %v6862, 0.0
      %v7830 = vadd.f32 %v7828, %v7829
      %v7831 = vsel %vm5374, %v6863, 0.0
      %v7832 = vadd.f32 %v7830, %v7831
      %v7833 = vsel %vm5374, %v6864, 0.0
      %v7834 = vadd.f32 %v7832, %v7833
      %v7835 = vsel %vm5374, %v6865, 0.0
      %v7836 = vadd.f32 %v7834, %v7835
      %v7837 = vsel %vm5374, %v6866, 0.0
      %v7838 = vadd.f32 %v7836, %v7837
      %v7839 = vsel %vm5374, %v6867, 0.0
      %v7840 = vadd.f32 %v7838, %v7839
      %v7841 = vsel %vm5374, %v6868, 0.0
      %v7842 = vadd.f32 %v7840, %v7841
      %v7843 = vsel %vm5374, %v6869, 0.0
      %v7844 = vadd.f32 %v7842, %v7843
      %v7845 = vsel %vm5374, %v6870, 0.0
      %v7846 = vadd.f32 %v7844, %v7845
      %v7847 = vsel %vm5374, %v6871, 0.0
      %v7848 = vadd.f32 %v7846, %v7847
      %v7849 = vsel %vm5374, %v6872, 0.0
      %v7850 = vadd.f32 %v7848, %v7849
      %v7851 = vsel %vm5374, %v6873, 0.0
      %v7852 = vadd.f32 %v7850, %v7851
      %v7853 = vsel %vm5374, %v6874, 0.0
      %v7854 = vadd.f32 %v7852, %v7853
      %v7855 = vsel %vm5374, %v6875, 0.0
      %v7856 = vadd.f32 %v7854, %v7855
      %v7857 = vsel %vm5374, %v6876, 0.0
      %v7858 = vadd.f32 %v7856, %v7857
      %v7859 = vsel %vm5374, %v6877, 0.0
      %v7860 = vadd.f32 %v7858, %v7859
      %v7861 = vsel %vm5374, %v6878, 0.0
      %v7862 = vadd.f32 %v7860, %v7861
      %v7863 = vsel %vm5374, %v6879, 0.0
      %v7864 = vadd.f32 %v7862, %v7863
      %v7865 = vsel %vm5374, %v6880, 0.0
      %v7866 = vadd.f32 %v7864, %v7865
      %v7867 = vsel %vm5374, %v6881, 0.0
      %v7868 = vadd.f32 %v7866, %v7867
      %v7869 = vsel %vm5374, %v6882, 0.0
      %v7870 = vadd.f32 %v7868, %v7869
      %v7871 = vsel %vm5374, %v6883, 0.0
      %v7872 = vadd.f32 %v7870, %v7871
      %v7873 = vsel %vm5374, %v6884, 0.0
      %v7874 = vadd.f32 %v7872, %v7873
      %v7875 = vsel %vm5374, %v6885, 0.0
      %v7876 = vadd.f32 %v7874, %v7875
      %v7877 = vsel %vm5374, %v6886, 0.0
      %v7878 = vadd.f32 %v7876, %v7877
      %v7879 = vsel %vm5374, %v6887, 0.0
      %v7880 = vadd.f32 %v7878, %v7879
      %v7881 = vsel %vm5374, %v6888, 0.0
      %v7882 = vadd.f32 %v7880, %v7881
      %v7883 = vsel %vm5374, %v6889, 0.0
      %v7884 = vadd.f32 %v7882, %v7883
      %v7885 = vsel %vm5374, %v6890, 0.0
      %v7886 = vadd.f32 %v7884, %v7885
      %v7887 = vsel %vm5374, %v6891, 0.0
      %v7888 = vadd.f32 %v7886, %v7887
      %v7889 = vsel %vm5374, %v6892, 0.0
      %v7890 = vadd.f32 %v7888, %v7889
      %v7891 = vsel %vm5374, %v6893, 0.0
      %v7892 = vadd.f32 %v7890, %v7891
      %v7893 = vsel %vm5374, %v6894, 0.0
      %v7894 = vadd.f32 %v7892, %v7893
      %v7895 = vsel %vm5374, %v6895, 0.0
      %v7896 = vadd.f32 %v7894, %v7895
      %v7897 = vsel %vm5374, %v6896, 0.0
      %v7898 = vadd.f32 %v7896, %v7897
      %v7899 = vsel %vm5374, %v6897, 0.0
      %v7900 = vadd.f32 %v7898, %v7899
      %v7901 = vsel %vm5374, %v6898, 0.0
      %v7902 = vadd.f32 %v7900, %v7901
      %v7903 = vsel %vm5374, %v6899, 0.0
      %v7904 = vadd.f32 %v7902, %v7903
      %v7905 = vsel %vm5374, %v6900, 0.0
      %v7906 = vadd.f32 %v7904, %v7905
      %v7907 = vsel %vm5374, %v6901, 0.0
      %v7908 = vadd.f32 %v7906, %v7907
      %v7909 = vsel %vm5374, %v6902, 0.0
      %v7910 = vadd.f32 %v7908, %v7909
      %v7911 = vsel %vm5374, %v6903, 0.0
      %v7912 = vadd.f32 %v7910, %v7911
      %v7913 = vsel %vm5374, %v6904, 0.0
      %v7914 = vadd.f32 %v7912, %v7913
      %v7915 = vsel %vm5374, %v6905, 0.0
      %v7916 = vadd.f32 %v7914, %v7915
      %v7917 = vsel %vm5374, %v6906, 0.0
      %v7918 = vadd.f32 %v7916, %v7917
      %v7919 = vsel %vm5374, %v6907, 0.0
      %v7920 = vadd.f32 %v7918, %v7919
      %v7921 = vsel %vm5374, %v6908, 0.0
      %v7922 = vadd.f32 %v7920, %v7921
      %v7923 = vsel %vm5374, %v6909, 0.0
      %v7924 = vadd.f32 %v7922, %v7923
      %v7925 = vsel %vm5374, %v6910, 0.0
      %v7926 = vadd.f32 %v7924, %v7925
      %v7927 = vsel %vm5374, %v6911, 0.0
      %v7928 = vadd.f32 %v7926, %v7927
      %v7929 = vsel %vm5374, %v6912, 0.0
      %v7930 = vadd.f32 %v7928, %v7929
      %v7931 = vsel %vm5374, %v6913, 0.0
      %v7932 = vadd.f32 %v7930, %v7931
      %v7933 = vsel %vm5374, %v6914, 0.0
      %v7934 = vadd.f32 %v7932, %v7933
      %v7935 = vsel %vm5374, %v6915, 0.0
      %v7936 = vadd.f32 %v7934, %v7935
      %v7937 = vsel %vm5374, %v6916, 0.0
      %v7938 = vadd.f32 %v7936, %v7937
      %v7939 = vsel %vm5374, %v6917, 0.0
      %v7940 = vadd.f32 %v7938, %v7939
      %v7941 = vrot.slane %v7940, 4
      %v7942 = vadd.f32 %v7940, %v7941
      %v7943 = vrot.slane %v7942, 2
      %v7944 = vadd.f32 %v7942, %v7943
      %v7945 = vrot.slane %v7944, 1
      %v7946 = vadd.f32 %v7944, %v7945
      %v7947 = vmul.f32 %v7946, %v6404
      %v7948 = vmul.f32 %v6405, %v6405
      %v7949 = vsub.f32 %v7947, %v7948
      %v7950 = vsub.f32 %v4862, %v6405
      %v7951 = vsub.f32 %v4863, %v6405
      %v7952 = vsub.f32 %v4864, %v6405
      %v7953 = vsub.f32 %v4865, %v6405
      %v7954 = vsub.f32 %v4866, %v6405
      %v7955 = vsub.f32 %v4867, %v6405
      %v7956 = vsub.f32 %v4868, %v6405
      %v7957 = vsub.f32 %v4869, %v6405
      %v7958 = vsub.f32 %v4870, %v6405
      %v7959 = vsub.f32 %v4871, %v6405
      %v7960 = vsub.f32 %v4872, %v6405
      %v7961 = vsub.f32 %v4873, %v6405
      %v7962 = vsub.f32 %v4874, %v6405
      %v7963 = vsub.f32 %v4875, %v6405
      %v7964 = vsub.f32 %v4876, %v6405
      %v7965 = vsub.f32 %v4877, %v6405
      %v7966 = vsub.f32 %v4878, %v6405
      %v7967 = vsub.f32 %v4879, %v6405
      %v7968 = vsub.f32 %v4880, %v6405
      %v7969 = vsub.f32 %v4881, %v6405
      %v7970 = vsub.f32 %v4882, %v6405
      %v7971 = vsub.f32 %v4883, %v6405
      %v7972 = vsub.f32 %v4884, %v6405
      %v7973 = vsub.f32 %v4885, %v6405
      %v7974 = vsub.f32 %v4886, %v6405
      %v7975 = vsub.f32 %v4887, %v6405
      %v7976 = vsub.f32 %v4888, %v6405
      %v7977 = vsub.f32 %v4889, %v6405
      %v7978 = vsub.f32 %v4890, %v6405
      %v7979 = vsub.f32 %v4891, %v6405
      %v7980 = vsub.f32 %v4892, %v6405
      %v7981 = vsub.f32 %v4893, %v6405
      %v7982 = vsub.f32 %v4894, %v6405
      %v7983 = vsub.f32 %v4895, %v6405
      %v7984 = vsub.f32 %v4896, %v6405
      %v7985 = vsub.f32 %v4897, %v6405
      %v7986 = vsub.f32 %v4898, %v6405
      %v7987 = vsub.f32 %v4899, %v6405
      %v7988 = vsub.f32 %v4900, %v6405
      %v7989 = vsub.f32 %v4901, %v6405
      %v7990 = vsub.f32 %v4902, %v6405
      %v7991 = vsub.f32 %v4903, %v6405
      %v7992 = vsub.f32 %v4904, %v6405
      %v7993 = vsub.f32 %v4905, %v6405
      %v7994 = vsub.f32 %v4906, %v6405
      %v7995 = vsub.f32 %v4907, %v6405
      %v7996 = vsub.f32 %v4908, %v6405
      %v7997 = vsub.f32 %v4909, %v6405
      %v7998 = vsub.f32 %v4910, %v6405
      %v7999 = vsub.f32 %v4911, %v6405
      %v8000 = vsub.f32 %v4912, %v6405
      %v8001 = vsub.f32 %v4913, %v6405
      %v8002 = vsub.f32 %v4914, %v6405
      %v8003 = vsub.f32 %v4915, %v6405
      %v8004 = vsub.f32 %v4916, %v6405
      %v8005 = vsub.f32 %v4917, %v6405
      %v8006 = vsub.f32 %v4918, %v6405
      %v8007 = vsub.f32 %v4919, %v6405
      %v8008 = vsub.f32 %v4920, %v6405
      %v8009 = vsub.f32 %v4921, %v6405
      %v8010 = vsub.f32 %v4922, %v6405
      %v8011 = vsub.f32 %v4923, %v6405
      %v8012 = vsub.f32 %v4924, %v6405
      %v8013 = vsub.f32 %v4925, %v6405
      %v8014 = vsub.f32 %v4926, %v6405
      %v8015 = vsub.f32 %v4927, %v6405
      %v8016 = vsub.f32 %v4928, %v6405
      %v8017 = vsub.f32 %v4929, %v6405
      %v8018 = vsub.f32 %v4930, %v6405
      %v8019 = vsub.f32 %v4931, %v6405
      %v8020 = vsub.f32 %v4932, %v6405
      %v8021 = vsub.f32 %v4933, %v6405
      %v8022 = vsub.f32 %v4934, %v6405
      %v8023 = vsub.f32 %v4935, %v6405
      %v8024 = vsub.f32 %v4936, %v6405
      %v8025 = vsub.f32 %v4937, %v6405
      %v8026 = vsub.f32 %v4938, %v6405
      %v8027 = vsub.f32 %v4939, %v6405
      %v8028 = vsub.f32 %v4940, %v6405
      %v8029 = vsub.f32 %v4941, %v6405
      %v8030 = vsub.f32 %v4942, %v6405
      %v8031 = vsub.f32 %v4943, %v6405
      %v8032 = vsub.f32 %v4944, %v6405
      %v8033 = vsub.f32 %v4945, %v6405
      %v8034 = vsub.f32 %v4946, %v6405
      %v8035 = vsub.f32 %v4947, %v6405
      %v8036 = vsub.f32 %v4948, %v6405
      %v8037 = vsub.f32 %v4949, %v6405
      %v8038 = vsub.f32 %v4950, %v6405
      %v8039 = vsub.f32 %v4951, %v6405
      %v8040 = vsub.f32 %v4952, %v6405
      %v8041 = vsub.f32 %v4953, %v6405
      %v8042 = vsub.f32 %v4954, %v6405
      %v8043 = vsub.f32 %v4955, %v6405
      %v8044 = vsub.f32 %v4956, %v6405
      %v8045 = vsub.f32 %v4957, %v6405
      %v8046 = vsub.f32 %v4958, %v6405
      %v8047 = vsub.f32 %v4959, %v6405
      %v8048 = vsub.f32 %v4960, %v6405
      %v8049 = vsub.f32 %v4961, %v6405
      %v8050 = vsub.f32 %v4962, %v6405
      %v8051 = vsub.f32 %v4963, %v6405
      %v8052 = vsub.f32 %v4964, %v6405
      %v8053 = vsub.f32 %v4965, %v6405
      %v8054 = vsub.f32 %v4966, %v6405
      %v8055 = vsub.f32 %v4967, %v6405
      %v8056 = vsub.f32 %v4968, %v6405
      %v8057 = vsub.f32 %v4969, %v6405
      %v8058 = vsub.f32 %v4970, %v6405
      %v8059 = vsub.f32 %v4971, %v6405
      %v8060 = vsub.f32 %v4972, %v6405
      %v8061 = vsub.f32 %v4973, %v6405
      %v8062 = vsub.f32 %v4974, %v6405
      %v8063 = vsub.f32 %v4975, %v6405
      %v8064 = vsub.f32 %v4976, %v6405
      %v8065 = vsub.f32 %v4977, %v6405
      %v8066 = vsub.f32 %v4978, %v6405
      %v8067 = vsub.f32 %v4979, %v6405
      %v8068 = vsub.f32 %v4980, %v6405
      %v8069 = vsub.f32 %v4981, %v6405
      %v8070 = vsub.f32 %v4982, %v6405
      %v8071 = vsub.f32 %v4983, %v6405
      %v8072 = vsub.f32 %v4984, %v6405
      %v8073 = vsub.f32 %v4985, %v6405
      %v8074 = vsub.f32 %v4986, %v6405
      %v8075 = vsub.f32 %v4987, %v6405
      %v8076 = vsub.f32 %v4988, %v6405
      %v8077 = vsub.f32 %v4989, %v6405
      %v8078 = vsub.f32 %v4990, %v6405
      %v8079 = vsub.f32 %v4991, %v6405
      %v8080 = vsub.f32 %v4992, %v6405
      %v8081 = vsub.f32 %v4993, %v6405
      %v8082 = vsub.f32 %v4994, %v6405
      %v8083 = vsub.f32 %v4995, %v6405
      %v8084 = vsub.f32 %v4996, %v6405
      %v8085 = vsub.f32 %v4997, %v6405
      %v8086 = vsub.f32 %v4998, %v6405
      %v8087 = vsub.f32 %v4999, %v6405
      %v8088 = vsub.f32 %v5000, %v6405
      %v8089 = vsub.f32 %v5001, %v6405
      %v8090 = vsub.f32 %v5002, %v6405
      %v8091 = vsub.f32 %v5003, %v6405
      %v8092 = vsub.f32 %v5004, %v6405
      %v8093 = vsub.f32 %v5005, %v6405
      %v8094 = vsub.f32 %v5006, %v6405
      %v8095 = vsub.f32 %v5007, %v6405
      %v8096 = vsub.f32 %v5008, %v6405
      %v8097 = vsub.f32 %v5009, %v6405
      %v8098 = vsub.f32 %v5010, %v6405
      %v8099 = vsub.f32 %v5011, %v6405
      %v8100 = vsub.f32 %v5012, %v6405
      %v8101 = vsub.f32 %v5013, %v6405
      %v8102 = vsub.f32 %v5014, %v6405
      %v8103 = vsub.f32 %v5015, %v6405
      %v8104 = vsub.f32 %v5016, %v6405
      %v8105 = vsub.f32 %v5017, %v6405
      %v8106 = vsub.f32 %v5018, %v6405
      %v8107 = vsub.f32 %v5019, %v6405
      %v8108 = vsub.f32 %v5020, %v6405
      %v8109 = vsub.f32 %v5021, %v6405
      %v8110 = vsub.f32 %v5022, %v6405
      %v8111 = vsub.f32 %v5023, %v6405
      %v8112 = vsub.f32 %v5024, %v6405
      %v8113 = vsub.f32 %v5025, %v6405
      %v8114 = vsub.f32 %v5026, %v6405
      %v8115 = vsub.f32 %v5027, %v6405
      %v8116 = vsub.f32 %v5028, %v6405
      %v8117 = vsub.f32 %v5029, %v6405
      %v8118 = vsub.f32 %v5030, %v6405
      %v8119 = vsub.f32 %v5031, %v6405
      %v8120 = vsub.f32 %v5032, %v6405
      %v8121 = vsub.f32 %v5033, %v6405
      %v8122 = vsub.f32 %v5034, %v6405
      %v8123 = vsub.f32 %v5035, %v6405
      %v8124 = vsub.f32 %v5036, %v6405
      %v8125 = vsub.f32 %v5037, %v6405
      %v8126 = vsub.f32 %v5038, %v6405
      %v8127 = vsub.f32 %v5039, %v6405
      %v8128 = vsub.f32 %v5040, %v6405
      %v8129 = vsub.f32 %v5041, %v6405
      %v8130 = vsub.f32 %v5042, %v6405
      %v8131 = vsub.f32 %v5043, %v6405
      %v8132 = vsub.f32 %v5044, %v6405
      %v8133 = vsub.f32 %v5045, %v6405
      %v8134 = vsub.f32 %v5046, %v6405
      %v8135 = vsub.f32 %v5047, %v6405
      %v8136 = vsub.f32 %v5048, %v6405
      %v8137 = vsub.f32 %v5049, %v6405
      %v8138 = vsub.f32 %v5050, %v6405
      %v8139 = vsub.f32 %v5051, %v6405
      %v8140 = vsub.f32 %v5052, %v6405
      %v8141 = vsub.f32 %v5053, %v6405
      %v8142 = vsub.f32 %v5054, %v6405
      %v8143 = vsub.f32 %v5055, %v6405
      %v8144 = vsub.f32 %v5056, %v6405
      %v8145 = vsub.f32 %v5057, %v6405
      %v8146 = vsub.f32 %v5058, %v6405
      %v8147 = vsub.f32 %v5059, %v6405
      %v8148 = vsub.f32 %v5060, %v6405
      %v8149 = vsub.f32 %v5061, %v6405
      %v8150 = vsub.f32 %v5062, %v6405
      %v8151 = vsub.f32 %v5063, %v6405
      %v8152 = vsub.f32 %v5064, %v6405
      %v8153 = vsub.f32 %v5065, %v6405
      %v8154 = vsub.f32 %v5066, %v6405
      %v8155 = vsub.f32 %v5067, %v6405
      %v8156 = vsub.f32 %v5068, %v6405
      %v8157 = vsub.f32 %v5069, %v6405
      %v8158 = vsub.f32 %v5070, %v6405
      %v8159 = vsub.f32 %v5071, %v6405
      %v8160 = vsub.f32 %v5072, %v6405
      %v8161 = vsub.f32 %v5073, %v6405
      %v8162 = vsub.f32 %v5074, %v6405
      %v8163 = vsub.f32 %v5075, %v6405
      %v8164 = vsub.f32 %v5076, %v6405
      %v8165 = vsub.f32 %v5077, %v6405
      %v8166 = vsub.f32 %v5078, %v6405
      %v8167 = vsub.f32 %v5079, %v6405
      %v8168 = vsub.f32 %v5080, %v6405
      %v8169 = vsub.f32 %v5081, %v6405
      %v8170 = vsub.f32 %v5082, %v6405
      %v8171 = vsub.f32 %v5083, %v6405
      %v8172 = vsub.f32 %v5084, %v6405
      %v8173 = vsub.f32 %v5085, %v6405
      %v8174 = vsub.f32 %v5086, %v6405
      %v8175 = vsub.f32 %v5087, %v6405
      %v8176 = vsub.f32 %v5088, %v6405
      %v8177 = vsub.f32 %v5089, %v6405
      %v8178 = vsub.f32 %v5090, %v6405
      %v8179 = vsub.f32 %v5091, %v6405
      %v8180 = vsub.f32 %v5092, %v6405
      %v8181 = vsub.f32 %v5093, %v6405
      %v8182 = vsub.f32 %v5094, %v6405
      %v8183 = vsub.f32 %v5095, %v6405
      %v8184 = vsub.f32 %v5096, %v6405
      %v8185 = vsub.f32 %v5097, %v6405
      %v8186 = vsub.f32 %v5098, %v6405
      %v8187 = vsub.f32 %v5099, %v6405
      %v8188 = vsub.f32 %v5100, %v6405
      %v8189 = vsub.f32 %v5101, %v6405
      %v8190 = vsub.f32 %v5102, %v6405
      %v8191 = vsub.f32 %v5103, %v6405
      %v8192 = vsub.f32 %v5104, %v6405
      %v8193 = vsub.f32 %v5105, %v6405
      %v8194 = vsub.f32 %v5106, %v6405
      %v8195 = vsub.f32 %v5107, %v6405
      %v8196 = vsub.f32 %v5108, %v6405
      %v8197 = vsub.f32 %v5109, %v6405
      %v8198 = vsub.f32 %v5110, %v6405
      %v8199 = vsub.f32 %v5111, %v6405
      %v8200 = vsub.f32 %v5112, %v6405
      %v8201 = vsub.f32 %v5113, %v6405
      %v8202 = vsub.f32 %v5114, %v6405
      %v8203 = vsub.f32 %v5115, %v6405
      %v8204 = vsub.f32 %v5116, %v6405
      %v8205 = vsub.f32 %v5117, %v6405
      %v8206 = vsub.f32 %v5118, %v6405
      %v8207 = vsub.f32 %v5119, %v6405
      %v8208 = vsub.f32 %v5120, %v6405
      %v8209 = vsub.f32 %v5121, %v6405
      %v8210 = vsub.f32 %v5122, %v6405
      %v8211 = vsub.f32 %v5123, %v6405
      %v8212 = vsub.f32 %v5124, %v6405
      %v8213 = vsub.f32 %v5125, %v6405
      %v8214 = vsub.f32 %v5126, %v6405
      %v8215 = vsub.f32 %v5127, %v6405
      %v8216 = vsub.f32 %v5128, %v6405
      %v8217 = vsub.f32 %v5129, %v6405
      %v8218 = vsub.f32 %v5130, %v6405
      %v8219 = vsub.f32 %v5131, %v6405
      %v8220 = vsub.f32 %v5132, %v6405
      %v8221 = vsub.f32 %v5133, %v6405
      %v8222 = vsub.f32 %v5134, %v6405
      %v8223 = vsub.f32 %v5135, %v6405
      %v8224 = vsub.f32 %v5136, %v6405
      %v8225 = vsub.f32 %v5137, %v6405
      %v8226 = vsub.f32 %v5138, %v6405
      %v8227 = vsub.f32 %v5139, %v6405
      %v8228 = vsub.f32 %v5140, %v6405
      %v8229 = vsub.f32 %v5141, %v6405
      %v8230 = vsub.f32 %v5142, %v6405
      %v8231 = vsub.f32 %v5143, %v6405
      %v8232 = vsub.f32 %v5144, %v6405
      %v8233 = vsub.f32 %v5145, %v6405
      %v8234 = vsub.f32 %v5146, %v6405
      %v8235 = vsub.f32 %v5147, %v6405
      %v8236 = vsub.f32 %v5148, %v6405
      %v8237 = vsub.f32 %v5149, %v6405
      %v8238 = vsub.f32 %v5150, %v6405
      %v8239 = vsub.f32 %v5151, %v6405
      %v8240 = vsub.f32 %v5152, %v6405
      %v8241 = vsub.f32 %v5153, %v6405
      %v8242 = vsub.f32 %v5154, %v6405
      %v8243 = vsub.f32 %v5155, %v6405
      %v8244 = vsub.f32 %v5156, %v6405
      %v8245 = vsub.f32 %v5157, %v6405
      %v8246 = vsub.f32 %v5158, %v6405
      %v8247 = vsub.f32 %v5159, %v6405
      %v8248 = vsub.f32 %v5160, %v6405
      %v8249 = vsub.f32 %v5161, %v6405
      %v8250 = vsub.f32 %v5162, %v6405
      %v8251 = vsub.f32 %v5163, %v6405
      %v8252 = vsub.f32 %v5164, %v6405
      %v8253 = vsub.f32 %v5165, %v6405
      %v8254 = vsub.f32 %v5166, %v6405
      %v8255 = vsub.f32 %v5167, %v6405
      %v8256 = vsub.f32 %v5168, %v6405
      %v8257 = vsub.f32 %v5169, %v6405
      %v8258 = vsub.f32 %v5170, %v6405
      %v8259 = vsub.f32 %v5171, %v6405
      %v8260 = vsub.f32 %v5172, %v6405
      %v8261 = vsub.f32 %v5173, %v6405
      %v8262 = vsub.f32 %v5174, %v6405
      %v8263 = vsub.f32 %v5175, %v6405
      %v8264 = vsub.f32 %v5176, %v6405
      %v8265 = vsub.f32 %v5177, %v6405
      %v8266 = vsub.f32 %v5178, %v6405
      %v8267 = vsub.f32 %v5179, %v6405
      %v8268 = vsub.f32 %v5180, %v6405
      %v8269 = vsub.f32 %v5181, %v6405
      %v8270 = vsub.f32 %v5182, %v6405
      %v8271 = vsub.f32 %v5183, %v6405
      %v8272 = vsub.f32 %v5184, %v6405
      %v8273 = vsub.f32 %v5185, %v6405
      %v8274 = vsub.f32 %v5186, %v6405
      %v8275 = vsub.f32 %v5187, %v6405
      %v8276 = vsub.f32 %v5188, %v6405
      %v8277 = vsub.f32 %v5189, %v6405
      %v8278 = vsub.f32 %v5190, %v6405
      %v8279 = vsub.f32 %v5191, %v6405
      %v8280 = vsub.f32 %v5192, %v6405
      %v8281 = vsub.f32 %v5193, %v6405
      %v8282 = vsub.f32 %v5194, %v6405
      %v8283 = vsub.f32 %v5195, %v6405
      %v8284 = vsub.f32 %v5196, %v6405
      %v8285 = vsub.f32 %v5197, %v6405
      %v8286 = vsub.f32 %v5198, %v6405
      %v8287 = vsub.f32 %v5199, %v6405
      %v8288 = vsub.f32 %v5200, %v6405
      %v8289 = vsub.f32 %v5201, %v6405
      %v8290 = vsub.f32 %v5202, %v6405
      %v8291 = vsub.f32 %v5203, %v6405
      %v8292 = vsub.f32 %v5204, %v6405
      %v8293 = vsub.f32 %v5205, %v6405
      %v8294 = vsub.f32 %v5206, %v6405
      %v8295 = vsub.f32 %v5207, %v6405
      %v8296 = vsub.f32 %v5208, %v6405
      %v8297 = vsub.f32 %v5209, %v6405
      %v8298 = vsub.f32 %v5210, %v6405
      %v8299 = vsub.f32 %v5211, %v6405
      %v8300 = vsub.f32 %v5212, %v6405
      %v8301 = vsub.f32 %v5213, %v6405
      %v8302 = vsub.f32 %v5214, %v6405
      %v8303 = vsub.f32 %v5215, %v6405
      %v8304 = vsub.f32 %v5216, %v6405
      %v8305 = vsub.f32 %v5217, %v6405
      %v8306 = vsub.f32 %v5218, %v6405
      %v8307 = vsub.f32 %v5219, %v6405
      %v8308 = vsub.f32 %v5220, %v6405
      %v8309 = vsub.f32 %v5221, %v6405
      %v8310 = vsub.f32 %v5222, %v6405
      %v8311 = vsub.f32 %v5223, %v6405
      %v8312 = vsub.f32 %v5224, %v6405
      %v8313 = vsub.f32 %v5225, %v6405
      %v8314 = vsub.f32 %v5226, %v6405
      %v8315 = vsub.f32 %v5227, %v6405
      %v8316 = vsub.f32 %v5228, %v6405
      %v8317 = vsub.f32 %v5229, %v6405
      %v8318 = vsub.f32 %v5230, %v6405
      %v8319 = vsub.f32 %v5231, %v6405
      %v8320 = vsub.f32 %v5232, %v6405
      %v8321 = vsub.f32 %v5233, %v6405
      %v8322 = vsub.f32 %v5234, %v6405
      %v8323 = vsub.f32 %v5235, %v6405
      %v8324 = vsub.f32 %v5236, %v6405
      %v8325 = vsub.f32 %v5237, %v6405
      %v8326 = vsub.f32 %v5238, %v6405
      %v8327 = vsub.f32 %v5239, %v6405
      %v8328 = vsub.f32 %v5240, %v6405
      %v8329 = vsub.f32 %v5241, %v6405
      %v8330 = vsub.f32 %v5242, %v6405
      %v8331 = vsub.f32 %v5243, %v6405
      %v8332 = vsub.f32 %v5244, %v6405
      %v8333 = vsub.f32 %v5245, %v6405
      %v8334 = vsub.f32 %v5246, %v6405
      %v8335 = vsub.f32 %v5247, %v6405
      %v8336 = vsub.f32 %v5248, %v6405
      %v8337 = vsub.f32 %v5249, %v6405
      %v8338 = vsub.f32 %v5250, %v6405
      %v8339 = vsub.f32 %v5251, %v6405
      %v8340 = vsub.f32 %v5252, %v6405
      %v8341 = vsub.f32 %v5253, %v6405
      %v8342 = vsub.f32 %v5254, %v6405
      %v8343 = vsub.f32 %v5255, %v6405
      %v8344 = vsub.f32 %v5256, %v6405
      %v8345 = vsub.f32 %v5257, %v6405
      %v8346 = vsub.f32 %v5258, %v6405
      %v8347 = vsub.f32 %v5259, %v6405
      %v8348 = vsub.f32 %v5260, %v6405
      %v8349 = vsub.f32 %v5261, %v6405
      %v8350 = vsub.f32 %v5262, %v6405
      %v8351 = vsub.f32 %v5263, %v6405
      %v8352 = vsub.f32 %v5264, %v6405
      %v8353 = vsub.f32 %v5265, %v6405
      %v8354 = vsub.f32 %v5266, %v6405
      %v8355 = vsub.f32 %v5267, %v6405
      %v8356 = vsub.f32 %v5268, %v6405
      %v8357 = vsub.f32 %v5269, %v6405
      %v8358 = vsub.f32 %v5270, %v6405
      %v8359 = vsub.f32 %v5271, %v6405
      %v8360 = vsub.f32 %v5272, %v6405
      %v8361 = vsub.f32 %v5273, %v6405
      %v8362 = vsub.f32 %v5274, %v6405
      %v8363 = vsub.f32 %v5275, %v6405
      %v8364 = vsub.f32 %v5276, %v6405
      %v8365 = vsub.f32 %v5277, %v6405
      %v8366 = vsub.f32 %v5278, %v6405
      %v8367 = vsub.f32 %v5279, %v6405
      %v8368 = vsub.f32 %v5280, %v6405
      %v8369 = vsub.f32 %v5281, %v6405
      %v8370 = vsub.f32 %v5282, %v6405
      %v8371 = vsub.f32 %v5283, %v6405
      %v8372 = vsub.f32 %v5284, %v6405
      %v8373 = vsub.f32 %v5285, %v6405
      %v8374 = vsub.f32 %v5286, %v6405
      %v8375 = vsub.f32 %v5287, %v6405
      %v8376 = vsub.f32 %v5288, %v6405
      %v8377 = vsub.f32 %v5289, %v6405
      %v8378 = vsub.f32 %v5290, %v6405
      %v8379 = vsub.f32 %v5291, %v6405
      %v8380 = vsub.f32 %v5292, %v6405
      %v8381 = vsub.f32 %v5293, %v6405
      %v8382 = vsub.f32 %v5294, %v6405
      %v8383 = vsub.f32 %v5295, %v6405
      %v8384 = vsub.f32 %v5296, %v6405
      %v8385 = vsub.f32 %v5297, %v6405
      %v8386 = vsub.f32 %v5298, %v6405
      %v8387 = vsub.f32 %v5299, %v6405
      %v8388 = vsub.f32 %v5300, %v6405
      %v8389 = vsub.f32 %v5301, %v6405
      %v8390 = vsub.f32 %v5302, %v6405
      %v8391 = vsub.f32 %v5303, %v6405
      %v8392 = vsub.f32 %v5304, %v6405
      %v8393 = vsub.f32 %v5305, %v6405
      %v8394 = vsub.f32 %v5306, %v6405
      %v8395 = vsub.f32 %v5307, %v6405
      %v8396 = vsub.f32 %v5308, %v6405
      %v8397 = vsub.f32 %v5309, %v6405
      %v8398 = vsub.f32 %v5310, %v6405
      %v8399 = vsub.f32 %v5311, %v6405
      %v8400 = vsub.f32 %v5312, %v6405
      %v8401 = vsub.f32 %v5313, %v6405
      %v8402 = vsub.f32 %v5314, %v6405
      %v8403 = vsub.f32 %v5315, %v6405
      %v8404 = vsub.f32 %v5316, %v6405
      %v8405 = vsub.f32 %v5317, %v6405
      %v8406 = vsub.f32 %v5318, %v6405
      %v8407 = vsub.f32 %v5319, %v6405
      %v8408 = vsub.f32 %v5320, %v6405
      %v8409 = vsub.f32 %v5321, %v6405
      %v8410 = vsub.f32 %v5322, %v6405
      %v8411 = vsub.f32 %v5323, %v6405
      %v8412 = vsub.f32 %v5324, %v6405
      %v8413 = vsub.f32 %v5325, %v6405
      %v8414 = vsub.f32 %v5326, %v6405
      %v8415 = vsub.f32 %v5327, %v6405
      %v8416 = vsub.f32 %v5328, %v6405
      %v8417 = vsub.f32 %v5329, %v6405
      %v8418 = vsub.f32 %v5330, %v6405
      %v8419 = vsub.f32 %v5331, %v6405
      %v8420 = vsub.f32 %v5332, %v6405
      %v8421 = vsub.f32 %v5333, %v6405
      %v8422 = vsub.f32 %v5334, %v6405
      %v8423 = vsub.f32 %v5335, %v6405
      %v8424 = vsub.f32 %v5336, %v6405
      %v8425 = vsub.f32 %v5337, %v6405
      %v8426 = vsub.f32 %v5338, %v6405
      %v8427 = vsub.f32 %v5339, %v6405
      %v8428 = vsub.f32 %v5340, %v6405
      %v8429 = vsub.f32 %v5341, %v6405
      %v8430 = vsub.f32 %v5342, %v6405
      %v8431 = vsub.f32 %v5343, %v6405
      %v8432 = vsub.f32 %v5344, %v6405
      %v8433 = vsub.f32 %v5345, %v6405
      %v8434 = vsub.f32 %v5346, %v6405
      %v8435 = vsub.f32 %v5347, %v6405
      %v8436 = vsub.f32 %v5348, %v6405
      %v8437 = vsub.f32 %v5349, %v6405
      %v8438 = vsub.f32 %v5350, %v6405
      %v8439 = vsub.f32 %v5351, %v6405
      %v8440 = vsub.f32 %v5352, %v6405
      %v8441 = vsub.f32 %v5353, %v6405
      %v8442 = vsub.f32 %v5354, %v6405
      %v8443 = vsub.f32 %v5355, %v6405
      %v8444 = vsub.f32 %v5356, %v6405
      %v8445 = vsub.f32 %v5357, %v6405
      %v8446 = vsub.f32 %v5358, %v6405
      %v8447 = vsub.f32 %v5359, %v6405
      %v8448 = vsub.f32 %v5360, %v6405
      %v8449 = vsub.f32 %v5361, %v6405
      %v8450 = vsub.f32 %v5362, %v6405
      %v8451 = vsub.f32 %v5363, %v6405
      %v8452 = vsub.f32 %v5364, %v6405
      %v8453 = vsub.f32 %v5365, %v6405
      %v8454 = vsub.f32 %v5366, %v6405
      %v8455 = vsub.f32 %v5367, %v6405
      %v8456 = vsub.f32 %v5368, %v6405
      %v8457 = vsub.f32 %v5369, %v6405
      %v8458 = vsub.f32 %v5370, %v6405
      %v8459 = vsub.f32 %v5371, %v6405
      %v8460 = vsub.f32 %v5372, %v6405
      %v8461 = vsub.f32 %v5373, %v6405
      %v8462 = vadd.f32 %v7949, 1e-05
      %v8463 = vrsqrt.pop %v8462
      %v8464 = vmul.f32 %v7950, %v8463
      %v8465 = vmul.f32 %v7951, %v8463
      %v8466 = vmul.f32 %v7952, %v8463
      %v8467 = vmul.f32 %v7953, %v8463
      %v8468 = vmul.f32 %v7954, %v8463
      %v8469 = vmul.f32 %v7955, %v8463
      %v8470 = vmul.f32 %v7956, %v8463
      %v8471 = vmul.f32 %v7957, %v8463
      %v8472 = vmul.f32 %v7958, %v8463
      %v8473 = vmul.f32 %v7959, %v8463
      %v8474 = vmul.f32 %v7960, %v8463
      %v8475 = vmul.f32 %v7961, %v8463
      %v8476 = vmul.f32 %v7962, %v8463
      %v8477 = vmul.f32 %v7963, %v8463
      %v8478 = vmul.f32 %v7964, %v8463
      %v8479 = vmul.f32 %v7965, %v8463
      %v8480 = vmul.f32 %v7966, %v8463
      %v8481 = vmul.f32 %v7967, %v8463
      %v8482 = vmul.f32 %v7968, %v8463
      %v8483 = vmul.f32 %v7969, %v8463
      %v8484 = vmul.f32 %v7970, %v8463
      %v8485 = vmul.f32 %v7971, %v8463
      %v8486 = vmul.f32 %v7972, %v8463
      %v8487 = vmul.f32 %v7973, %v8463
      %v8488 = vmul.f32 %v7974, %v8463
      %v8489 = vmul.f32 %v7975, %v8463
      %v8490 = vmul.f32 %v7976, %v8463
      %v8491 = vmul.f32 %v7977, %v8463
      %v8492 = vmul.f32 %v7978, %v8463
      %v8493 = vmul.f32 %v7979, %v8463
      %v8494 = vmul.f32 %v7980, %v8463
      %v8495 = vmul.f32 %v7981, %v8463
      %v8496 = vmul.f32 %v7982, %v8463
      %v8497 = vmul.f32 %v7983, %v8463
      %v8498 = vmul.f32 %v7984, %v8463
      %v8499 = vmul.f32 %v7985, %v8463
      %v8500 = vmul.f32 %v7986, %v8463
      %v8501 = vmul.f32 %v7987, %v8463
      %v8502 = vmul.f32 %v7988, %v8463
      %v8503 = vmul.f32 %v7989, %v8463
      %v8504 = vmul.f32 %v7990, %v8463
      %v8505 = vmul.f32 %v7991, %v8463
      %v8506 = vmul.f32 %v7992, %v8463
      %v8507 = vmul.f32 %v7993, %v8463
      %v8508 = vmul.f32 %v7994, %v8463
      %v8509 = vmul.f32 %v7995, %v8463
      %v8510 = vmul.f32 %v7996, %v8463
      %v8511 = vmul.f32 %v7997, %v8463
      %v8512 = vmul.f32 %v7998, %v8463
      %v8513 = vmul.f32 %v7999, %v8463
      %v8514 = vmul.f32 %v8000, %v8463
      %v8515 = vmul.f32 %v8001, %v8463
      %v8516 = vmul.f32 %v8002, %v8463
      %v8517 = vmul.f32 %v8003, %v8463
      %v8518 = vmul.f32 %v8004, %v8463
      %v8519 = vmul.f32 %v8005, %v8463
      %v8520 = vmul.f32 %v8006, %v8463
      %v8521 = vmul.f32 %v8007, %v8463
      %v8522 = vmul.f32 %v8008, %v8463
      %v8523 = vmul.f32 %v8009, %v8463
      %v8524 = vmul.f32 %v8010, %v8463
      %v8525 = vmul.f32 %v8011, %v8463
      %v8526 = vmul.f32 %v8012, %v8463
      %v8527 = vmul.f32 %v8013, %v8463
      %v8528 = vmul.f32 %v8014, %v8463
      %v8529 = vmul.f32 %v8015, %v8463
      %v8530 = vmul.f32 %v8016, %v8463
      %v8531 = vmul.f32 %v8017, %v8463
      %v8532 = vmul.f32 %v8018, %v8463
      %v8533 = vmul.f32 %v8019, %v8463
      %v8534 = vmul.f32 %v8020, %v8463
      %v8535 = vmul.f32 %v8021, %v8463
      %v8536 = vmul.f32 %v8022, %v8463
      %v8537 = vmul.f32 %v8023, %v8463
      %v8538 = vmul.f32 %v8024, %v8463
      %v8539 = vmul.f32 %v8025, %v8463
      %v8540 = vmul.f32 %v8026, %v8463
      %v8541 = vmul.f32 %v8027, %v8463
      %v8542 = vmul.f32 %v8028, %v8463
      %v8543 = vmul.f32 %v8029, %v8463
      %v8544 = vmul.f32 %v8030, %v8463
      %v8545 = vmul.f32 %v8031, %v8463
      %v8546 = vmul.f32 %v8032, %v8463
      %v8547 = vmul.f32 %v8033, %v8463
      %v8548 = vmul.f32 %v8034, %v8463
      %v8549 = vmul.f32 %v8035, %v8463
      %v8550 = vmul.f32 %v8036, %v8463
      %v8551 = vmul.f32 %v8037, %v8463
      %v8552 = vmul.f32 %v8038, %v8463
      %v8553 = vmul.f32 %v8039, %v8463
      %v8554 = vmul.f32 %v8040, %v8463
      %v8555 = vmul.f32 %v8041, %v8463
      %v8556 = vmul.f32 %v8042, %v8463
      %v8557 = vmul.f32 %v8043, %v8463
      %v8558 = vmul.f32 %v8044, %v8463
      %v8559 = vmul.f32 %v8045, %v8463
      %v8560 = vmul.f32 %v8046, %v8463
      %v8561 = vmul.f32 %v8047, %v8463
      %v8562 = vmul.f32 %v8048, %v8463
      %v8563 = vmul.f32 %v8049, %v8463
      %v8564 = vmul.f32 %v8050, %v8463
      %v8565 = vmul.f32 %v8051, %v8463
      %v8566 = vmul.f32 %v8052, %v8463
      %v8567 = vmul.f32 %v8053, %v8463
      %v8568 = vmul.f32 %v8054, %v8463
      %v8569 = vmul.f32 %v8055, %v8463
      %v8570 = vmul.f32 %v8056, %v8463
      %v8571 = vmul.f32 %v8057, %v8463
      %v8572 = vmul.f32 %v8058, %v8463
      %v8573 = vmul.f32 %v8059, %v8463
      %v8574 = vmul.f32 %v8060, %v8463
      %v8575 = vmul.f32 %v8061, %v8463
      %v8576 = vmul.f32 %v8062, %v8463
      %v8577 = vmul.f32 %v8063, %v8463
      %v8578 = vmul.f32 %v8064, %v8463
      %v8579 = vmul.f32 %v8065, %v8463
      %v8580 = vmul.f32 %v8066, %v8463
      %v8581 = vmul.f32 %v8067, %v8463
      %v8582 = vmul.f32 %v8068, %v8463
      %v8583 = vmul.f32 %v8069, %v8463
      %v8584 = vmul.f32 %v8070, %v8463
      %v8585 = vmul.f32 %v8071, %v8463
      %v8586 = vmul.f32 %v8072, %v8463
      %v8587 = vmul.f32 %v8073, %v8463
      %v8588 = vmul.f32 %v8074, %v8463
      %v8589 = vmul.f32 %v8075, %v8463
      %v8590 = vmul.f32 %v8076, %v8463
      %v8591 = vmul.f32 %v8077, %v8463
      %v8592 = vmul.f32 %v8078, %v8463
      %v8593 = vmul.f32 %v8079, %v8463
      %v8594 = vmul.f32 %v8080, %v8463
      %v8595 = vmul.f32 %v8081, %v8463
      %v8596 = vmul.f32 %v8082, %v8463
      %v8597 = vmul.f32 %v8083, %v8463
      %v8598 = vmul.f32 %v8084, %v8463
      %v8599 = vmul.f32 %v8085, %v8463
      %v8600 = vmul.f32 %v8086, %v8463
      %v8601 = vmul.f32 %v8087, %v8463
      %v8602 = vmul.f32 %v8088, %v8463
      %v8603 = vmul.f32 %v8089, %v8463
      %v8604 = vmul.f32 %v8090, %v8463
      %v8605 = vmul.f32 %v8091, %v8463
      %v8606 = vmul.f32 %v8092, %v8463
      %v8607 = vmul.f32 %v8093, %v8463
      %v8608 = vmul.f32 %v8094, %v8463
      %v8609 = vmul.f32 %v8095, %v8463
      %v8610 = vmul.f32 %v8096, %v8463
      %v8611 = vmul.f32 %v8097, %v8463
      %v8612 = vmul.f32 %v8098, %v8463
      %v8613 = vmul.f32 %v8099, %v8463
      %v8614 = vmul.f32 %v8100, %v8463
      %v8615 = vmul.f32 %v8101, %v8463
      %v8616 = vmul.f32 %v8102, %v8463
      %v8617 = vmul.f32 %v8103, %v8463
      %v8618 = vmul.f32 %v8104, %v8463
      %v8619 = vmul.f32 %v8105, %v8463
      %v8620 = vmul.f32 %v8106, %v8463
      %v8621 = vmul.f32 %v8107, %v8463
      %v8622 = vmul.f32 %v8108, %v8463
      %v8623 = vmul.f32 %v8109, %v8463
      %v8624 = vmul.f32 %v8110, %v8463
      %v8625 = vmul.f32 %v8111, %v8463
      %v8626 = vmul.f32 %v8112, %v8463
      %v8627 = vmul.f32 %v8113, %v8463
      %v8628 = vmul.f32 %v8114, %v8463
      %v8629 = vmul.f32 %v8115, %v8463
      %v8630 = vmul.f32 %v8116, %v8463
      %v8631 = vmul.f32 %v8117, %v8463
      %v8632 = vmul.f32 %v8118, %v8463
      %v8633 = vmul.f32 %v8119, %v8463
      %v8634 = vmul.f32 %v8120, %v8463
      %v8635 = vmul.f32 %v8121, %v8463
      %v8636 = vmul.f32 %v8122, %v8463
      %v8637 = vmul.f32 %v8123, %v8463
      %v8638 = vmul.f32 %v8124, %v8463
      %v8639 = vmul.f32 %v8125, %v8463
      %v8640 = vmul.f32 %v8126, %v8463
      %v8641 = vmul.f32 %v8127, %v8463
      %v8642 = vmul.f32 %v8128, %v8463
      %v8643 = vmul.f32 %v8129, %v8463
      %v8644 = vmul.f32 %v8130, %v8463
      %v8645 = vmul.f32 %v8131, %v8463
      %v8646 = vmul.f32 %v8132, %v8463
      %v8647 = vmul.f32 %v8133, %v8463
      %v8648 = vmul.f32 %v8134, %v8463
      %v8649 = vmul.f32 %v8135, %v8463
      %v8650 = vmul.f32 %v8136, %v8463
      %v8651 = vmul.f32 %v8137, %v8463
      %v8652 = vmul.f32 %v8138, %v8463
      %v8653 = vmul.f32 %v8139, %v8463
      %v8654 = vmul.f32 %v8140, %v8463
      %v8655 = vmul.f32 %v8141, %v8463
      %v8656 = vmul.f32 %v8142, %v8463
      %v8657 = vmul.f32 %v8143, %v8463
      %v8658 = vmul.f32 %v8144, %v8463
      %v8659 = vmul.f32 %v8145, %v8463
      %v8660 = vmul.f32 %v8146, %v8463
      %v8661 = vmul.f32 %v8147, %v8463
      %v8662 = vmul.f32 %v8148, %v8463
      %v8663 = vmul.f32 %v8149, %v8463
      %v8664 = vmul.f32 %v8150, %v8463
      %v8665 = vmul.f32 %v8151, %v8463
      %v8666 = vmul.f32 %v8152, %v8463
      %v8667 = vmul.f32 %v8153, %v8463
      %v8668 = vmul.f32 %v8154, %v8463
      %v8669 = vmul.f32 %v8155, %v8463
      %v8670 = vmul.f32 %v8156, %v8463
      %v8671 = vmul.f32 %v8157, %v8463
      %v8672 = vmul.f32 %v8158, %v8463
      %v8673 = vmul.f32 %v8159, %v8463
      %v8674 = vmul.f32 %v8160, %v8463
      %v8675 = vmul.f32 %v8161, %v8463
      %v8676 = vmul.f32 %v8162, %v8463
      %v8677 = vmul.f32 %v8163, %v8463
      %v8678 = vmul.f32 %v8164, %v8463
      %v8679 = vmul.f32 %v8165, %v8463
      %v8680 = vmul.f32 %v8166, %v8463
      %v8681 = vmul.f32 %v8167, %v8463
      %v8682 = vmul.f32 %v8168, %v8463
      %v8683 = vmul.f32 %v8169, %v8463
      %v8684 = vmul.f32 %v8170, %v8463
      %v8685 = vmul.f32 %v8171, %v8463
      %v8686 = vmul.f32 %v8172, %v8463
      %v8687 = vmul.f32 %v8173, %v8463
      %v8688 = vmul.f32 %v8174, %v8463
      %v8689 = vmul.f32 %v8175, %v8463
      %v8690 = vmul.f32 %v8176, %v8463
      %v8691 = vmul.f32 %v8177, %v8463
      %v8692 = vmul.f32 %v8178, %v8463
      %v8693 = vmul.f32 %v8179, %v8463
      %v8694 = vmul.f32 %v8180, %v8463
      %v8695 = vmul.f32 %v8181, %v8463
      %v8696 = vmul.f32 %v8182, %v8463
      %v8697 = vmul.f32 %v8183, %v8463
      %v8698 = vmul.f32 %v8184, %v8463
      %v8699 = vmul.f32 %v8185, %v8463
      %v8700 = vmul.f32 %v8186, %v8463
      %v8701 = vmul.f32 %v8187, %v8463
      %v8702 = vmul.f32 %v8188, %v8463
      %v8703 = vmul.f32 %v8189, %v8463
      %v8704 = vmul.f32 %v8190, %v8463
      %v8705 = vmul.f32 %v8191, %v8463
      %v8706 = vmul.f32 %v8192, %v8463
      %v8707 = vmul.f32 %v8193, %v8463
      %v8708 = vmul.f32 %v8194, %v8463
      %v8709 = vmul.f32 %v8195, %v8463
      %v8710 = vmul.f32 %v8196, %v8463
      %v8711 = vmul.f32 %v8197, %v8463
      %v8712 = vmul.f32 %v8198, %v8463
      %v8713 = vmul.f32 %v8199, %v8463
      %v8714 = vmul.f32 %v8200, %v8463
      %v8715 = vmul.f32 %v8201, %v8463
      %v8716 = vmul.f32 %v8202, %v8463
      %v8717 = vmul.f32 %v8203, %v8463
      %v8718 = vmul.f32 %v8204, %v8463
      %v8719 = vmul.f32 %v8205, %v8463
      %v8720 = vmul.f32 %v8206, %v8463
      %v8721 = vmul.f32 %v8207, %v8463
      %v8722 = vmul.f32 %v8208, %v8463
      %v8723 = vmul.f32 %v8209, %v8463
      %v8724 = vmul.f32 %v8210, %v8463
      %v8725 = vmul.f32 %v8211, %v8463
      %v8726 = vmul.f32 %v8212, %v8463
      %v8727 = vmul.f32 %v8213, %v8463
      %v8728 = vmul.f32 %v8214, %v8463
      %v8729 = vmul.f32 %v8215, %v8463
      %v8730 = vmul.f32 %v8216, %v8463
      %v8731 = vmul.f32 %v8217, %v8463
      %v8732 = vmul.f32 %v8218, %v8463
      %v8733 = vmul.f32 %v8219, %v8463
      %v8734 = vmul.f32 %v8220, %v8463
      %v8735 = vmul.f32 %v8221, %v8463
      %v8736 = vmul.f32 %v8222, %v8463
      %v8737 = vmul.f32 %v8223, %v8463
      %v8738 = vmul.f32 %v8224, %v8463
      %v8739 = vmul.f32 %v8225, %v8463
      %v8740 = vmul.f32 %v8226, %v8463
      %v8741 = vmul.f32 %v8227, %v8463
      %v8742 = vmul.f32 %v8228, %v8463
      %v8743 = vmul.f32 %v8229, %v8463
      %v8744 = vmul.f32 %v8230, %v8463
      %v8745 = vmul.f32 %v8231, %v8463
      %v8746 = vmul.f32 %v8232, %v8463
      %v8747 = vmul.f32 %v8233, %v8463
      %v8748 = vmul.f32 %v8234, %v8463
      %v8749 = vmul.f32 %v8235, %v8463
      %v8750 = vmul.f32 %v8236, %v8463
      %v8751 = vmul.f32 %v8237, %v8463
      %v8752 = vmul.f32 %v8238, %v8463
      %v8753 = vmul.f32 %v8239, %v8463
      %v8754 = vmul.f32 %v8240, %v8463
      %v8755 = vmul.f32 %v8241, %v8463
      %v8756 = vmul.f32 %v8242, %v8463
      %v8757 = vmul.f32 %v8243, %v8463
      %v8758 = vmul.f32 %v8244, %v8463
      %v8759 = vmul.f32 %v8245, %v8463
      %v8760 = vmul.f32 %v8246, %v8463
      %v8761 = vmul.f32 %v8247, %v8463
      %v8762 = vmul.f32 %v8248, %v8463
      %v8763 = vmul.f32 %v8249, %v8463
      %v8764 = vmul.f32 %v8250, %v8463
      %v8765 = vmul.f32 %v8251, %v8463
      %v8766 = vmul.f32 %v8252, %v8463
      %v8767 = vmul.f32 %v8253, %v8463
      %v8768 = vmul.f32 %v8254, %v8463
      %v8769 = vmul.f32 %v8255, %v8463
      %v8770 = vmul.f32 %v8256, %v8463
      %v8771 = vmul.f32 %v8257, %v8463
      %v8772 = vmul.f32 %v8258, %v8463
      %v8773 = vmul.f32 %v8259, %v8463
      %v8774 = vmul.f32 %v8260, %v8463
      %v8775 = vmul.f32 %v8261, %v8463
      %v8776 = vmul.f32 %v8262, %v8463
      %v8777 = vmul.f32 %v8263, %v8463
      %v8778 = vmul.f32 %v8264, %v8463
      %v8779 = vmul.f32 %v8265, %v8463
      %v8780 = vmul.f32 %v8266, %v8463
      %v8781 = vmul.f32 %v8267, %v8463
      %v8782 = vmul.f32 %v8268, %v8463
      %v8783 = vmul.f32 %v8269, %v8463
      %v8784 = vmul.f32 %v8270, %v8463
      %v8785 = vmul.f32 %v8271, %v8463
      %v8786 = vmul.f32 %v8272, %v8463
      %v8787 = vmul.f32 %v8273, %v8463
      %v8788 = vmul.f32 %v8274, %v8463
      %v8789 = vmul.f32 %v8275, %v8463
      %v8790 = vmul.f32 %v8276, %v8463
      %v8791 = vmul.f32 %v8277, %v8463
      %v8792 = vmul.f32 %v8278, %v8463
      %v8793 = vmul.f32 %v8279, %v8463
      %v8794 = vmul.f32 %v8280, %v8463
      %v8795 = vmul.f32 %v8281, %v8463
      %v8796 = vmul.f32 %v8282, %v8463
      %v8797 = vmul.f32 %v8283, %v8463
      %v8798 = vmul.f32 %v8284, %v8463
      %v8799 = vmul.f32 %v8285, %v8463
      %v8800 = vmul.f32 %v8286, %v8463
      %v8801 = vmul.f32 %v8287, %v8463
      %v8802 = vmul.f32 %v8288, %v8463
      %v8803 = vmul.f32 %v8289, %v8463
      %v8804 = vmul.f32 %v8290, %v8463
      %v8805 = vmul.f32 %v8291, %v8463
      %v8806 = vmul.f32 %v8292, %v8463
      %v8807 = vmul.f32 %v8293, %v8463
      %v8808 = vmul.f32 %v8294, %v8463
      %v8809 = vmul.f32 %v8295, %v8463
      %v8810 = vmul.f32 %v8296, %v8463
      %v8811 = vmul.f32 %v8297, %v8463
      %v8812 = vmul.f32 %v8298, %v8463
      %v8813 = vmul.f32 %v8299, %v8463
      %v8814 = vmul.f32 %v8300, %v8463
      %v8815 = vmul.f32 %v8301, %v8463
      %v8816 = vmul.f32 %v8302, %v8463
      %v8817 = vmul.f32 %v8303, %v8463
      %v8818 = vmul.f32 %v8304, %v8463
      %v8819 = vmul.f32 %v8305, %v8463
      %v8820 = vmul.f32 %v8306, %v8463
      %v8821 = vmul.f32 %v8307, %v8463
      %v8822 = vmul.f32 %v8308, %v8463
      %v8823 = vmul.f32 %v8309, %v8463
      %v8824 = vmul.f32 %v8310, %v8463
      %v8825 = vmul.f32 %v8311, %v8463
      %v8826 = vmul.f32 %v8312, %v8463
      %v8827 = vmul.f32 %v8313, %v8463
      %v8828 = vmul.f32 %v8314, %v8463
      %v8829 = vmul.f32 %v8315, %v8463
      %v8830 = vmul.f32 %v8316, %v8463
      %v8831 = vmul.f32 %v8317, %v8463
      %v8832 = vmul.f32 %v8318, %v8463
      %v8833 = vmul.f32 %v8319, %v8463
      %v8834 = vmul.f32 %v8320, %v8463
      %v8835 = vmul.f32 %v8321, %v8463
      %v8836 = vmul.f32 %v8322, %v8463
      %v8837 = vmul.f32 %v8323, %v8463
      %v8838 = vmul.f32 %v8324, %v8463
      %v8839 = vmul.f32 %v8325, %v8463
      %v8840 = vmul.f32 %v8326, %v8463
      %v8841 = vmul.f32 %v8327, %v8463
      %v8842 = vmul.f32 %v8328, %v8463
      %v8843 = vmul.f32 %v8329, %v8463
      %v8844 = vmul.f32 %v8330, %v8463
      %v8845 = vmul.f32 %v8331, %v8463
      %v8846 = vmul.f32 %v8332, %v8463
      %v8847 = vmul.f32 %v8333, %v8463
      %v8848 = vmul.f32 %v8334, %v8463
      %v8849 = vmul.f32 %v8335, %v8463
      %v8850 = vmul.f32 %v8336, %v8463
      %v8851 = vmul.f32 %v8337, %v8463
      %v8852 = vmul.f32 %v8338, %v8463
      %v8853 = vmul.f32 %v8339, %v8463
      %v8854 = vmul.f32 %v8340, %v8463
      %v8855 = vmul.f32 %v8341, %v8463
      %v8856 = vmul.f32 %v8342, %v8463
      %v8857 = vmul.f32 %v8343, %v8463
      %v8858 = vmul.f32 %v8344, %v8463
      %v8859 = vmul.f32 %v8345, %v8463
      %v8860 = vmul.f32 %v8346, %v8463
      %v8861 = vmul.f32 %v8347, %v8463
      %v8862 = vmul.f32 %v8348, %v8463
      %v8863 = vmul.f32 %v8349, %v8463
      %v8864 = vmul.f32 %v8350, %v8463
      %v8865 = vmul.f32 %v8351, %v8463
      %v8866 = vmul.f32 %v8352, %v8463
      %v8867 = vmul.f32 %v8353, %v8463
      %v8868 = vmul.f32 %v8354, %v8463
      %v8869 = vmul.f32 %v8355, %v8463
      %v8870 = vmul.f32 %v8356, %v8463
      %v8871 = vmul.f32 %v8357, %v8463
      %v8872 = vmul.f32 %v8358, %v8463
      %v8873 = vmul.f32 %v8359, %v8463
      %v8874 = vmul.f32 %v8360, %v8463
      %v8875 = vmul.f32 %v8361, %v8463
      %v8876 = vmul.f32 %v8362, %v8463
      %v8877 = vmul.f32 %v8363, %v8463
      %v8878 = vmul.f32 %v8364, %v8463
      %v8879 = vmul.f32 %v8365, %v8463
      %v8880 = vmul.f32 %v8366, %v8463
      %v8881 = vmul.f32 %v8367, %v8463
      %v8882 = vmul.f32 %v8368, %v8463
      %v8883 = vmul.f32 %v8369, %v8463
      %v8884 = vmul.f32 %v8370, %v8463
      %v8885 = vmul.f32 %v8371, %v8463
      %v8886 = vmul.f32 %v8372, %v8463
      %v8887 = vmul.f32 %v8373, %v8463
      %v8888 = vmul.f32 %v8374, %v8463
      %v8889 = vmul.f32 %v8375, %v8463
      %v8890 = vmul.f32 %v8376, %v8463
      %v8891 = vmul.f32 %v8377, %v8463
      %v8892 = vmul.f32 %v8378, %v8463
      %v8893 = vmul.f32 %v8379, %v8463
      %v8894 = vmul.f32 %v8380, %v8463
      %v8895 = vmul.f32 %v8381, %v8463
      %v8896 = vmul.f32 %v8382, %v8463
      %v8897 = vmul.f32 %v8383, %v8463
      %v8898 = vmul.f32 %v8384, %v8463
      %v8899 = vmul.f32 %v8385, %v8463
      %v8900 = vmul.f32 %v8386, %v8463
      %v8901 = vmul.f32 %v8387, %v8463
      %v8902 = vmul.f32 %v8388, %v8463
      %v8903 = vmul.f32 %v8389, %v8463
      %v8904 = vmul.f32 %v8390, %v8463
      %v8905 = vmul.f32 %v8391, %v8463
      %v8906 = vmul.f32 %v8392, %v8463
      %v8907 = vmul.f32 %v8393, %v8463
      %v8908 = vmul.f32 %v8394, %v8463
      %v8909 = vmul.f32 %v8395, %v8463
      %v8910 = vmul.f32 %v8396, %v8463
      %v8911 = vmul.f32 %v8397, %v8463
      %v8912 = vmul.f32 %v8398, %v8463
      %v8913 = vmul.f32 %v8399, %v8463
      %v8914 = vmul.f32 %v8400, %v8463
      %v8915 = vmul.f32 %v8401, %v8463
      %v8916 = vmul.f32 %v8402, %v8463
      %v8917 = vmul.f32 %v8403, %v8463
      %v8918 = vmul.f32 %v8404, %v8463
      %v8919 = vmul.f32 %v8405, %v8463
      %v8920 = vmul.f32 %v8406, %v8463
      %v8921 = vmul.f32 %v8407, %v8463
      %v8922 = vmul.f32 %v8408, %v8463
      %v8923 = vmul.f32 %v8409, %v8463
      %v8924 = vmul.f32 %v8410, %v8463
      %v8925 = vmul.f32 %v8411, %v8463
      %v8926 = vmul.f32 %v8412, %v8463
      %v8927 = vmul.f32 %v8413, %v8463
      %v8928 = vmul.f32 %v8414, %v8463
      %v8929 = vmul.f32 %v8415, %v8463
      %v8930 = vmul.f32 %v8416, %v8463
      %v8931 = vmul.f32 %v8417, %v8463
      %v8932 = vmul.f32 %v8418, %v8463
      %v8933 = vmul.f32 %v8419, %v8463
      %v8934 = vmul.f32 %v8420, %v8463
      %v8935 = vmul.f32 %v8421, %v8463
      %v8936 = vmul.f32 %v8422, %v8463
      %v8937 = vmul.f32 %v8423, %v8463
      %v8938 = vmul.f32 %v8424, %v8463
      %v8939 = vmul.f32 %v8425, %v8463
      %v8940 = vmul.f32 %v8426, %v8463
      %v8941 = vmul.f32 %v8427, %v8463
      %v8942 = vmul.f32 %v8428, %v8463
      %v8943 = vmul.f32 %v8429, %v8463
      %v8944 = vmul.f32 %v8430, %v8463
      %v8945 = vmul.f32 %v8431, %v8463
      %v8946 = vmul.f32 %v8432, %v8463
      %v8947 = vmul.f32 %v8433, %v8463
      %v8948 = vmul.f32 %v8434, %v8463
      %v8949 = vmul.f32 %v8435, %v8463
      %v8950 = vmul.f32 %v8436, %v8463
      %v8951 = vmul.f32 %v8437, %v8463
      %v8952 = vmul.f32 %v8438, %v8463
      %v8953 = vmul.f32 %v8439, %v8463
      %v8954 = vmul.f32 %v8440, %v8463
      %v8955 = vmul.f32 %v8441, %v8463
      %v8956 = vmul.f32 %v8442, %v8463
      %v8957 = vmul.f32 %v8443, %v8463
      %v8958 = vmul.f32 %v8444, %v8463
      %v8959 = vmul.f32 %v8445, %v8463
      %v8960 = vmul.f32 %v8446, %v8463
      %v8961 = vmul.f32 %v8447, %v8463
      %v8962 = vmul.f32 %v8448, %v8463
      %v8963 = vmul.f32 %v8449, %v8463
      %v8964 = vmul.f32 %v8450, %v8463
      %v8965 = vmul.f32 %v8451, %v8463
      %v8966 = vmul.f32 %v8452, %v8463
      %v8967 = vmul.f32 %v8453, %v8463
      %v8968 = vmul.f32 %v8454, %v8463
      %v8969 = vmul.f32 %v8455, %v8463
      %v8970 = vmul.f32 %v8456, %v8463
      %v8971 = vmul.f32 %v8457, %v8463
      %v8972 = vmul.f32 %v8458, %v8463
      %v8973 = vmul.f32 %v8459, %v8463
      %v8974 = vmul.f32 %v8460, %v8463
      %v8975 = vmul.f32 %v8461, %v8463
      %8976 = vst.msk [vmem:[%s170] sm:$0xff] %vm5374, %v8464
      %8977 = vst.msk [vmem:[%s170 + $0x8] sm:$0xff] %vm5374, %v8465
      %8978 = vst.msk [vmem:[%s170 + $0x10] sm:$0xff] %vm5374, %v8466
      %8979 = vst.msk [vmem:[%s170 + $0x18] sm:$0xff] %vm5374, %v8467
      %8980 = vst.msk [vmem:[%s170 + $0x20] sm:$0xff] %vm5374, %v8468
      %8981 = vst.msk [vmem:[%s170 + $0x28] sm:$0xff] %vm5374, %v8469
      %8982 = vst.msk [vmem:[%s170 + $0x30] sm:$0xff] %vm5374, %v8470
      %8983 = vst.msk [vmem:[%s170 + $0x38] sm:$0xff] %vm5374, %v8471
      %8984 = vst.msk [vmem:[%s170 + $0x40] sm:$0xff] %vm5374, %v8472
      %8985 = vst.msk [vmem:[%s170 + $0x48] sm:$0xff] %vm5374, %v8473
      %8986 = vst.msk [vmem:[%s170 + $0x50] sm:$0xff] %vm5374, %v8474
      %8987 = vst.msk [vmem:[%s170 + $0x58] sm:$0xff] %vm5374, %v8475
      %8988 = vst.msk [vmem:[%s170 + $0x60] sm:$0xff] %vm5374, %v8476
      %8989 = vst.msk [vmem:[%s170 + $0x68] sm:$0xff] %vm5374, %v8477
      %8990 = vst.msk [vmem:[%s170 + $0x70] sm:$0xff] %vm5374, %v8478
      %8991 = vst.msk [vmem:[%s170 + $0x78] sm:$0xff] %vm5374, %v8479
      %8992 = vst.msk [vmem:[%s170 + $0x80] sm:$0xff] %vm5374, %v8480
      %8993 = vst.msk [vmem:[%s170 + $0x88] sm:$0xff] %vm5374, %v8481
      %8994 = vst.msk [vmem:[%s170 + $0x90] sm:$0xff] %vm5374, %v8482
      %8995 = vst.msk [vmem:[%s170 + $0x98] sm:$0xff] %vm5374, %v8483
      %8996 = vst.msk [vmem:[%s170 + $0xa0] sm:$0xff] %vm5374, %v8484
      %8997 = vst.msk [vmem:[%s170 + $0xa8] sm:$0xff] %vm5374, %v8485
      %8998 = vst.msk [vmem:[%s170 + $0xb0] sm:$0xff] %vm5374, %v8486
      %8999 = vst.msk [vmem:[%s170 + $0xb8] sm:$0xff] %vm5374, %v8487
      %9000 = vst.msk [vmem:[%s170 + $0xc0] sm:$0xff] %vm5374, %v8488
      %9001 = vst.msk [vmem:[%s170 + $0xc8] sm:$0xff] %vm5374, %v8489
      %9002 = vst.msk [vmem:[%s170 + $0xd0] sm:$0xff] %vm5374, %v8490
      %9003 = vst.msk [vmem:[%s170 + $0xd8] sm:$0xff] %vm5374, %v8491
      %9004 = vst.msk [vmem:[%s170 + $0xe0] sm:$0xff] %vm5374, %v8492
      %9005 = vst.msk [vmem:[%s170 + $0xe8] sm:$0xff] %vm5374, %v8493
      %9006 = vst.msk [vmem:[%s170 + $0xf0] sm:$0xff] %vm5374, %v8494
      %9007 = vst.msk [vmem:[%s170 + $0xf8] sm:$0xff] %vm5374, %v8495
      %9008 = vst.msk [vmem:[%s170 + $0x100] sm:$0xff] %vm5374, %v8496
      %9009 = vst.msk [vmem:[%s170 + $0x108] sm:$0xff] %vm5374, %v8497
      %9010 = vst.msk [vmem:[%s170 + $0x110] sm:$0xff] %vm5374, %v8498
      %9011 = vst.msk [vmem:[%s170 + $0x118] sm:$0xff] %vm5374, %v8499
      %9012 = vst.msk [vmem:[%s170 + $0x120] sm:$0xff] %vm5374, %v8500
      %9013 = vst.msk [vmem:[%s170 + $0x128] sm:$0xff] %vm5374, %v8501
      %9014 = vst.msk [vmem:[%s170 + $0x130] sm:$0xff] %vm5374, %v8502
      %9015 = vst.msk [vmem:[%s170 + $0x138] sm:$0xff] %vm5374, %v8503
      %9016 = vst.msk [vmem:[%s170 + $0x140] sm:$0xff] %vm5374, %v8504
      %9017 = vst.msk [vmem:[%s170 + $0x148] sm:$0xff] %vm5374, %v8505
      %9018 = vst.msk [vmem:[%s170 + $0x150] sm:$0xff] %vm5374, %v8506
      %9019 = vst.msk [vmem:[%s170 + $0x158] sm:$0xff] %vm5374, %v8507
      %9020 = vst.msk [vmem:[%s170 + $0x160] sm:$0xff] %vm5374, %v8508
      %9021 = vst.msk [vmem:[%s170 + $0x168] sm:$0xff] %vm5374, %v8509
      %9022 = vst.msk [vmem:[%s170 + $0x170] sm:$0xff] %vm5374, %v8510
      %9023 = vst.msk [vmem:[%s170 + $0x178] sm:$0xff] %vm5374, %v8511
      %9024 = vst.msk [vmem:[%s170 + $0x180] sm:$0xff] %vm5374, %v8512
      %9025 = vst.msk [vmem:[%s170 + $0x188] sm:$0xff] %vm5374, %v8513
      %9026 = vst.msk [vmem:[%s170 + $0x190] sm:$0xff] %vm5374, %v8514
      %9027 = vst.msk [vmem:[%s170 + $0x198] sm:$0xff] %vm5374, %v8515
      %9028 = vst.msk [vmem:[%s170 + $0x1a0] sm:$0xff] %vm5374, %v8516
      %9029 = vst.msk [vmem:[%s170 + $0x1a8] sm:$0xff] %vm5374, %v8517
      %9030 = vst.msk [vmem:[%s170 + $0x1b0] sm:$0xff] %vm5374, %v8518
      %9031 = vst.msk [vmem:[%s170 + $0x1b8] sm:$0xff] %vm5374, %v8519
      %9032 = vst.msk [vmem:[%s170 + $0x1c0] sm:$0xff] %vm5374, %v8520
      %9033 = vst.msk [vmem:[%s170 + $0x1c8] sm:$0xff] %vm5374, %v8521
      %9034 = vst.msk [vmem:[%s170 + $0x1d0] sm:$0xff] %vm5374, %v8522
      %9035 = vst.msk [vmem:[%s170 + $0x1d8] sm:$0xff] %vm5374, %v8523
      %9036 = vst.msk [vmem:[%s170 + $0x1e0] sm:$0xff] %vm5374, %v8524
      %9037 = vst.msk [vmem:[%s170 + $0x1e8] sm:$0xff] %vm5374, %v8525
      %9038 = vst.msk [vmem:[%s170 + $0x1f0] sm:$0xff] %vm5374, %v8526
      %9039 = vst.msk [vmem:[%s170 + $0x1f8] sm:$0xff] %vm5374, %v8527
      %9040 = vst.msk [vmem:[%s170 + $0x200] sm:$0xff] %vm5374, %v8528
      %9041 = vst.msk [vmem:[%s170 + $0x208] sm:$0xff] %vm5374, %v8529
      %9042 = vst.msk [vmem:[%s170 + $0x210] sm:$0xff] %vm5374, %v8530
      %9043 = vst.msk [vmem:[%s170 + $0x218] sm:$0xff] %vm5374, %v8531
      %9044 = vst.msk [vmem:[%s170 + $0x220] sm:$0xff] %vm5374, %v8532
      %9045 = vst.msk [vmem:[%s170 + $0x228] sm:$0xff] %vm5374, %v8533
      %9046 = vst.msk [vmem:[%s170 + $0x230] sm:$0xff] %vm5374, %v8534
      %9047 = vst.msk [vmem:[%s170 + $0x238] sm:$0xff] %vm5374, %v8535
      %9048 = vst.msk [vmem:[%s170 + $0x240] sm:$0xff] %vm5374, %v8536
      %9049 = vst.msk [vmem:[%s170 + $0x248] sm:$0xff] %vm5374, %v8537
      %9050 = vst.msk [vmem:[%s170 + $0x250] sm:$0xff] %vm5374, %v8538
      %9051 = vst.msk [vmem:[%s170 + $0x258] sm:$0xff] %vm5374, %v8539
      %9052 = vst.msk [vmem:[%s170 + $0x260] sm:$0xff] %vm5374, %v8540
      %9053 = vst.msk [vmem:[%s170 + $0x268] sm:$0xff] %vm5374, %v8541
      %9054 = vst.msk [vmem:[%s170 + $0x270] sm:$0xff] %vm5374, %v8542
      %9055 = vst.msk [vmem:[%s170 + $0x278] sm:$0xff] %vm5374, %v8543
      %9056 = vst.msk [vmem:[%s170 + $0x280] sm:$0xff] %vm5374, %v8544
      %9057 = vst.msk [vmem:[%s170 + $0x288] sm:$0xff] %vm5374, %v8545
      %9058 = vst.msk [vmem:[%s170 + $0x290] sm:$0xff] %vm5374, %v8546
      %9059 = vst.msk [vmem:[%s170 + $0x298] sm:$0xff] %vm5374, %v8547
      %9060 = vst.msk [vmem:[%s170 + $0x2a0] sm:$0xff] %vm5374, %v8548
      %9061 = vst.msk [vmem:[%s170 + $0x2a8] sm:$0xff] %vm5374, %v8549
      %9062 = vst.msk [vmem:[%s170 + $0x2b0] sm:$0xff] %vm5374, %v8550
      %9063 = vst.msk [vmem:[%s170 + $0x2b8] sm:$0xff] %vm5374, %v8551
      %9064 = vst.msk [vmem:[%s170 + $0x2c0] sm:$0xff] %vm5374, %v8552
      %9065 = vst.msk [vmem:[%s170 + $0x2c8] sm:$0xff] %vm5374, %v8553
      %9066 = vst.msk [vmem:[%s170 + $0x2d0] sm:$0xff] %vm5374, %v8554
      %9067 = vst.msk [vmem:[%s170 + $0x2d8] sm:$0xff] %vm5374, %v8555
      %9068 = vst.msk [vmem:[%s170 + $0x2e0] sm:$0xff] %vm5374, %v8556
      %9069 = vst.msk [vmem:[%s170 + $0x2e8] sm:$0xff] %vm5374, %v8557
      %9070 = vst.msk [vmem:[%s170 + $0x2f0] sm:$0xff] %vm5374, %v8558
      %9071 = vst.msk [vmem:[%s170 + $0x2f8] sm:$0xff] %vm5374, %v8559
      %9072 = vst.msk [vmem:[%s170 + $0x300] sm:$0xff] %vm5374, %v8560
      %9073 = vst.msk [vmem:[%s170 + $0x308] sm:$0xff] %vm5374, %v8561
      %9074 = vst.msk [vmem:[%s170 + $0x310] sm:$0xff] %vm5374, %v8562
      %9075 = vst.msk [vmem:[%s170 + $0x318] sm:$0xff] %vm5374, %v8563
      %9076 = vst.msk [vmem:[%s170 + $0x320] sm:$0xff] %vm5374, %v8564
      %9077 = vst.msk [vmem:[%s170 + $0x328] sm:$0xff] %vm5374, %v8565
      %9078 = vst.msk [vmem:[%s170 + $0x330] sm:$0xff] %vm5374, %v8566
      %9079 = vst.msk [vmem:[%s170 + $0x338] sm:$0xff] %vm5374, %v8567
      %9080 = vst.msk [vmem:[%s170 + $0x340] sm:$0xff] %vm5374, %v8568
      %9081 = vst.msk [vmem:[%s170 + $0x348] sm:$0xff] %vm5374, %v8569
      %9082 = vst.msk [vmem:[%s170 + $0x350] sm:$0xff] %vm5374, %v8570
      %9083 = vst.msk [vmem:[%s170 + $0x358] sm:$0xff] %vm5374, %v8571
      %9084 = vst.msk [vmem:[%s170 + $0x360] sm:$0xff] %vm5374, %v8572
      %9085 = vst.msk [vmem:[%s170 + $0x368] sm:$0xff] %vm5374, %v8573
      %9086 = vst.msk [vmem:[%s170 + $0x370] sm:$0xff] %vm5374, %v8574
      %9087 = vst.msk [vmem:[%s170 + $0x378] sm:$0xff] %vm5374, %v8575
      %9088 = vst.msk [vmem:[%s170 + $0x380] sm:$0xff] %vm5374, %v8576
      %9089 = vst.msk [vmem:[%s170 + $0x388] sm:$0xff] %vm5374, %v8577
      %9090 = vst.msk [vmem:[%s170 + $0x390] sm:$0xff] %vm5374, %v8578
      %9091 = vst.msk [vmem:[%s170 + $0x398] sm:$0xff] %vm5374, %v8579
      %9092 = vst.msk [vmem:[%s170 + $0x3a0] sm:$0xff] %vm5374, %v8580
      %9093 = vst.msk [vmem:[%s170 + $0x3a8] sm:$0xff] %vm5374, %v8581
      %9094 = vst.msk [vmem:[%s170 + $0x3b0] sm:$0xff] %vm5374, %v8582
      %9095 = vst.msk [vmem:[%s170 + $0x3b8] sm:$0xff] %vm5374, %v8583
      %9096 = vst.msk [vmem:[%s170 + $0x3c0] sm:$0xff] %vm5374, %v8584
      %9097 = vst.msk [vmem:[%s170 + $0x3c8] sm:$0xff] %vm5374, %v8585
      %9098 = vst.msk [vmem:[%s170 + $0x3d0] sm:$0xff] %vm5374, %v8586
      %9099 = vst.msk [vmem:[%s170 + $0x3d8] sm:$0xff] %vm5374, %v8587
      %9100 = vst.msk [vmem:[%s170 + $0x3e0] sm:$0xff] %vm5374, %v8588
      %9101 = vst.msk [vmem:[%s170 + $0x3e8] sm:$0xff] %vm5374, %v8589
      %9102 = vst.msk [vmem:[%s170 + $0x3f0] sm:$0xff] %vm5374, %v8590
      %9103 = vst.msk [vmem:[%s170 + $0x3f8] sm:$0xff] %vm5374, %v8591
      %9104 = vst.msk [vmem:[%s170 + $0x400] sm:$0xff] %vm5374, %v8592
      %9105 = vst.msk [vmem:[%s170 + $0x408] sm:$0xff] %vm5374, %v8593
      %9106 = vst.msk [vmem:[%s170 + $0x410] sm:$0xff] %vm5374, %v8594
      %9107 = vst.msk [vmem:[%s170 + $0x418] sm:$0xff] %vm5374, %v8595
      %9108 = vst.msk [vmem:[%s170 + $0x420] sm:$0xff] %vm5374, %v8596
      %9109 = vst.msk [vmem:[%s170 + $0x428] sm:$0xff] %vm5374, %v8597
      %9110 = vst.msk [vmem:[%s170 + $0x430] sm:$0xff] %vm5374, %v8598
      %9111 = vst.msk [vmem:[%s170 + $0x438] sm:$0xff] %vm5374, %v8599
      %9112 = vst.msk [vmem:[%s170 + $0x440] sm:$0xff] %vm5374, %v8600
      %9113 = vst.msk [vmem:[%s170 + $0x448] sm:$0xff] %vm5374, %v8601
      %9114 = vst.msk [vmem:[%s170 + $0x450] sm:$0xff] %vm5374, %v8602
      %9115 = vst.msk [vmem:[%s170 + $0x458] sm:$0xff] %vm5374, %v8603
      %9116 = vst.msk [vmem:[%s170 + $0x460] sm:$0xff] %vm5374, %v8604
      %9117 = vst.msk [vmem:[%s170 + $0x468] sm:$0xff] %vm5374, %v8605
      %9118 = vst.msk [vmem:[%s170 + $0x470] sm:$0xff] %vm5374, %v8606
      %9119 = vst.msk [vmem:[%s170 + $0x478] sm:$0xff] %vm5374, %v8607
      %9120 = vst.msk [vmem:[%s170 + $0x480] sm:$0xff] %vm5374, %v8608
      %9121 = vst.msk [vmem:[%s170 + $0x488] sm:$0xff] %vm5374, %v8609
      %9122 = vst.msk [vmem:[%s170 + $0x490] sm:$0xff] %vm5374, %v8610
      %9123 = vst.msk [vmem:[%s170 + $0x498] sm:$0xff] %vm5374, %v8611
      %9124 = vst.msk [vmem:[%s170 + $0x4a0] sm:$0xff] %vm5374, %v8612
      %9125 = vst.msk [vmem:[%s170 + $0x4a8] sm:$0xff] %vm5374, %v8613
      %9126 = vst.msk [vmem:[%s170 + $0x4b0] sm:$0xff] %vm5374, %v8614
      %9127 = vst.msk [vmem:[%s170 + $0x4b8] sm:$0xff] %vm5374, %v8615
      %9128 = vst.msk [vmem:[%s170 + $0x4c0] sm:$0xff] %vm5374, %v8616
      %9129 = vst.msk [vmem:[%s170 + $0x4c8] sm:$0xff] %vm5374, %v8617
      %9130 = vst.msk [vmem:[%s170 + $0x4d0] sm:$0xff] %vm5374, %v8618
      %9131 = vst.msk [vmem:[%s170 + $0x4d8] sm:$0xff] %vm5374, %v8619
      %9132 = vst.msk [vmem:[%s170 + $0x4e0] sm:$0xff] %vm5374, %v8620
      %9133 = vst.msk [vmem:[%s170 + $0x4e8] sm:$0xff] %vm5374, %v8621
      %9134 = vst.msk [vmem:[%s170 + $0x4f0] sm:$0xff] %vm5374, %v8622
      %9135 = vst.msk [vmem:[%s170 + $0x4f8] sm:$0xff] %vm5374, %v8623
      %9136 = vst.msk [vmem:[%s170 + $0x500] sm:$0xff] %vm5374, %v8624
      %9137 = vst.msk [vmem:[%s170 + $0x508] sm:$0xff] %vm5374, %v8625
      %9138 = vst.msk [vmem:[%s170 + $0x510] sm:$0xff] %vm5374, %v8626
      %9139 = vst.msk [vmem:[%s170 + $0x518] sm:$0xff] %vm5374, %v8627
      %9140 = vst.msk [vmem:[%s170 + $0x520] sm:$0xff] %vm5374, %v8628
      %9141 = vst.msk [vmem:[%s170 + $0x528] sm:$0xff] %vm5374, %v8629
      %9142 = vst.msk [vmem:[%s170 + $0x530] sm:$0xff] %vm5374, %v8630
      %9143 = vst.msk [vmem:[%s170 + $0x538] sm:$0xff] %vm5374, %v8631
      %9144 = vst.msk [vmem:[%s170 + $0x540] sm:$0xff] %vm5374, %v8632
      %9145 = vst.msk [vmem:[%s170 + $0x548] sm:$0xff] %vm5374, %v8633
      %9146 = vst.msk [vmem:[%s170 + $0x550] sm:$0xff] %vm5374, %v8634
      %9147 = vst.msk [vmem:[%s170 + $0x558] sm:$0xff] %vm5374, %v8635
      %9148 = vst.msk [vmem:[%s170 + $0x560] sm:$0xff] %vm5374, %v8636
      %9149 = vst.msk [vmem:[%s170 + $0x568] sm:$0xff] %vm5374, %v8637
      %9150 = vst.msk [vmem:[%s170 + $0x570] sm:$0xff] %vm5374, %v8638
      %9151 = vst.msk [vmem:[%s170 + $0x578] sm:$0xff] %vm5374, %v8639
      %9152 = vst.msk [vmem:[%s170 + $0x580] sm:$0xff] %vm5374, %v8640
      %9153 = vst.msk [vmem:[%s170 + $0x588] sm:$0xff] %vm5374, %v8641
      %9154 = vst.msk [vmem:[%s170 + $0x590] sm:$0xff] %vm5374, %v8642
      %9155 = vst.msk [vmem:[%s170 + $0x598] sm:$0xff] %vm5374, %v8643
      %9156 = vst.msk [vmem:[%s170 + $0x5a0] sm:$0xff] %vm5374, %v8644
      %9157 = vst.msk [vmem:[%s170 + $0x5a8] sm:$0xff] %vm5374, %v8645
      %9158 = vst.msk [vmem:[%s170 + $0x5b0] sm:$0xff] %vm5374, %v8646
      %9159 = vst.msk [vmem:[%s170 + $0x5b8] sm:$0xff] %vm5374, %v8647
      %9160 = vst.msk [vmem:[%s170 + $0x5c0] sm:$0xff] %vm5374, %v8648
      %9161 = vst.msk [vmem:[%s170 + $0x5c8] sm:$0xff] %vm5374, %v8649
      %9162 = vst.msk [vmem:[%s170 + $0x5d0] sm:$0xff] %vm5374, %v8650
      %9163 = vst.msk [vmem:[%s170 + $0x5d8] sm:$0xff] %vm5374, %v8651
      %9164 = vst.msk [vmem:[%s170 + $0x5e0] sm:$0xff] %vm5374, %v8652
      %9165 = vst.msk [vmem:[%s170 + $0x5e8] sm:$0xff] %vm5374, %v8653
      %9166 = vst.msk [vmem:[%s170 + $0x5f0] sm:$0xff] %vm5374, %v8654
      %9167 = vst.msk [vmem:[%s170 + $0x5f8] sm:$0xff] %vm5374, %v8655
      %9168 = vst.msk [vmem:[%s170 + $0x600] sm:$0xff] %vm5374, %v8656
      %9169 = vst.msk [vmem:[%s170 + $0x608] sm:$0xff] %vm5374, %v8657
      %9170 = vst.msk [vmem:[%s170 + $0x610] sm:$0xff] %vm5374, %v8658
      %9171 = vst.msk [vmem:[%s170 + $0x618] sm:$0xff] %vm5374, %v8659
      %9172 = vst.msk [vmem:[%s170 + $0x620] sm:$0xff] %vm5374, %v8660
      %9173 = vst.msk [vmem:[%s170 + $0x628] sm:$0xff] %vm5374, %v8661
      %9174 = vst.msk [vmem:[%s170 + $0x630] sm:$0xff] %vm5374, %v8662
      %9175 = vst.msk [vmem:[%s170 + $0x638] sm:$0xff] %vm5374, %v8663
      %9176 = vst.msk [vmem:[%s170 + $0x640] sm:$0xff] %vm5374, %v8664
      %9177 = vst.msk [vmem:[%s170 + $0x648] sm:$0xff] %vm5374, %v8665
      %9178 = vst.msk [vmem:[%s170 + $0x650] sm:$0xff] %vm5374, %v8666
      %9179 = vst.msk [vmem:[%s170 + $0x658] sm:$0xff] %vm5374, %v8667
      %9180 = vst.msk [vmem:[%s170 + $0x660] sm:$0xff] %vm5374, %v8668
      %9181 = vst.msk [vmem:[%s170 + $0x668] sm:$0xff] %vm5374, %v8669
      %9182 = vst.msk [vmem:[%s170 + $0x670] sm:$0xff] %vm5374, %v8670
      %9183 = vst.msk [vmem:[%s170 + $0x678] sm:$0xff] %vm5374, %v8671
      %9184 = vst.msk [vmem:[%s170 + $0x680] sm:$0xff] %vm5374, %v8672
      %9185 = vst.msk [vmem:[%s170 + $0x688] sm:$0xff] %vm5374, %v8673
      %9186 = vst.msk [vmem:[%s170 + $0x690] sm:$0xff] %vm5374, %v8674
      %9187 = vst.msk [vmem:[%s170 + $0x698] sm:$0xff] %vm5374, %v8675
      %9188 = vst.msk [vmem:[%s170 + $0x6a0] sm:$0xff] %vm5374, %v8676
      %9189 = vst.msk [vmem:[%s170 + $0x6a8] sm:$0xff] %vm5374, %v8677
      %9190 = vst.msk [vmem:[%s170 + $0x6b0] sm:$0xff] %vm5374, %v8678
      %9191 = vst.msk [vmem:[%s170 + $0x6b8] sm:$0xff] %vm5374, %v8679
      %9192 = vst.msk [vmem:[%s170 + $0x6c0] sm:$0xff] %vm5374, %v8680
      %9193 = vst.msk [vmem:[%s170 + $0x6c8] sm:$0xff] %vm5374, %v8681
      %9194 = vst.msk [vmem:[%s170 + $0x6d0] sm:$0xff] %vm5374, %v8682
      %9195 = vst.msk [vmem:[%s170 + $0x6d8] sm:$0xff] %vm5374, %v8683
      %9196 = vst.msk [vmem:[%s170 + $0x6e0] sm:$0xff] %vm5374, %v8684
      %9197 = vst.msk [vmem:[%s170 + $0x6e8] sm:$0xff] %vm5374, %v8685
      %9198 = vst.msk [vmem:[%s170 + $0x6f0] sm:$0xff] %vm5374, %v8686
      %9199 = vst.msk [vmem:[%s170 + $0x6f8] sm:$0xff] %vm5374, %v8687
      %9200 = vst.msk [vmem:[%s170 + $0x700] sm:$0xff] %vm5374, %v8688
      %9201 = vst.msk [vmem:[%s170 + $0x708] sm:$0xff] %vm5374, %v8689
      %9202 = vst.msk [vmem:[%s170 + $0x710] sm:$0xff] %vm5374, %v8690
      %9203 = vst.msk [vmem:[%s170 + $0x718] sm:$0xff] %vm5374, %v8691
      %9204 = vst.msk [vmem:[%s170 + $0x720] sm:$0xff] %vm5374, %v8692
      %9205 = vst.msk [vmem:[%s170 + $0x728] sm:$0xff] %vm5374, %v8693
      %9206 = vst.msk [vmem:[%s170 + $0x730] sm:$0xff] %vm5374, %v8694
      %9207 = vst.msk [vmem:[%s170 + $0x738] sm:$0xff] %vm5374, %v8695
      %9208 = vst.msk [vmem:[%s170 + $0x740] sm:$0xff] %vm5374, %v8696
      %9209 = vst.msk [vmem:[%s170 + $0x748] sm:$0xff] %vm5374, %v8697
      %9210 = vst.msk [vmem:[%s170 + $0x750] sm:$0xff] %vm5374, %v8698
      %9211 = vst.msk [vmem:[%s170 + $0x758] sm:$0xff] %vm5374, %v8699
      %9212 = vst.msk [vmem:[%s170 + $0x760] sm:$0xff] %vm5374, %v8700
      %9213 = vst.msk [vmem:[%s170 + $0x768] sm:$0xff] %vm5374, %v8701
      %9214 = vst.msk [vmem:[%s170 + $0x770] sm:$0xff] %vm5374, %v8702
      %9215 = vst.msk [vmem:[%s170 + $0x778] sm:$0xff] %vm5374, %v8703
      %9216 = vst.msk [vmem:[%s170 + $0x780] sm:$0xff] %vm5374, %v8704
      %9217 = vst.msk [vmem:[%s170 + $0x788] sm:$0xff] %vm5374, %v8705
      %9218 = vst.msk [vmem:[%s170 + $0x790] sm:$0xff] %vm5374, %v8706
      %9219 = vst.msk [vmem:[%s170 + $0x798] sm:$0xff] %vm5374, %v8707
      %9220 = vst.msk [vmem:[%s170 + $0x7a0] sm:$0xff] %vm5374, %v8708
      %9221 = vst.msk [vmem:[%s170 + $0x7a8] sm:$0xff] %vm5374, %v8709
      %9222 = vst.msk [vmem:[%s170 + $0x7b0] sm:$0xff] %vm5374, %v8710
      %9223 = vst.msk [vmem:[%s170 + $0x7b8] sm:$0xff] %vm5374, %v8711
      %9224 = vst.msk [vmem:[%s170 + $0x7c0] sm:$0xff] %vm5374, %v8712
      %9225 = vst.msk [vmem:[%s170 + $0x7c8] sm:$0xff] %vm5374, %v8713
      %9226 = vst.msk [vmem:[%s170 + $0x7d0] sm:$0xff] %vm5374, %v8714
      %9227 = vst.msk [vmem:[%s170 + $0x7d8] sm:$0xff] %vm5374, %v8715
      %9228 = vst.msk [vmem:[%s170 + $0x7e0] sm:$0xff] %vm5374, %v8716
      %9229 = vst.msk [vmem:[%s170 + $0x7e8] sm:$0xff] %vm5374, %v8717
      %9230 = vst.msk [vmem:[%s170 + $0x7f0] sm:$0xff] %vm5374, %v8718
      %9231 = vst.msk [vmem:[%s170 + $0x7f8] sm:$0xff] %vm5374, %v8719
      %9232 = vst.msk [vmem:[%s170 + $0x800] sm:$0xff] %vm5374, %v8720
      %9233 = vst.msk [vmem:[%s170 + $0x808] sm:$0xff] %vm5374, %v8721
      %9234 = vst.msk [vmem:[%s170 + $0x810] sm:$0xff] %vm5374, %v8722
      %9235 = vst.msk [vmem:[%s170 + $0x818] sm:$0xff] %vm5374, %v8723
      %9236 = vst.msk [vmem:[%s170 + $0x820] sm:$0xff] %vm5374, %v8724
      %9237 = vst.msk [vmem:[%s170 + $0x828] sm:$0xff] %vm5374, %v8725
      %9238 = vst.msk [vmem:[%s170 + $0x830] sm:$0xff] %vm5374, %v8726
      %9239 = vst.msk [vmem:[%s170 + $0x838] sm:$0xff] %vm5374, %v8727
      %9240 = vst.msk [vmem:[%s170 + $0x840] sm:$0xff] %vm5374, %v8728
      %9241 = vst.msk [vmem:[%s170 + $0x848] sm:$0xff] %vm5374, %v8729
      %9242 = vst.msk [vmem:[%s170 + $0x850] sm:$0xff] %vm5374, %v8730
      %9243 = vst.msk [vmem:[%s170 + $0x858] sm:$0xff] %vm5374, %v8731
      %9244 = vst.msk [vmem:[%s170 + $0x860] sm:$0xff] %vm5374, %v8732
      %9245 = vst.msk [vmem:[%s170 + $0x868] sm:$0xff] %vm5374, %v8733
      %9246 = vst.msk [vmem:[%s170 + $0x870] sm:$0xff] %vm5374, %v8734
      %9247 = vst.msk [vmem:[%s170 + $0x878] sm:$0xff] %vm5374, %v8735
      %9248 = vst.msk [vmem:[%s170 + $0x880] sm:$0xff] %vm5374, %v8736
      %9249 = vst.msk [vmem:[%s170 + $0x888] sm:$0xff] %vm5374, %v8737
      %9250 = vst.msk [vmem:[%s170 + $0x890] sm:$0xff] %vm5374, %v8738
      %9251 = vst.msk [vmem:[%s170 + $0x898] sm:$0xff] %vm5374, %v8739
      %9252 = vst.msk [vmem:[%s170 + $0x8a0] sm:$0xff] %vm5374, %v8740
      %9253 = vst.msk [vmem:[%s170 + $0x8a8] sm:$0xff] %vm5374, %v8741
      %9254 = vst.msk [vmem:[%s170 + $0x8b0] sm:$0xff] %vm5374, %v8742
      %9255 = vst.msk [vmem:[%s170 + $0x8b8] sm:$0xff] %vm5374, %v8743
      %9256 = vst.msk [vmem:[%s170 + $0x8c0] sm:$0xff] %vm5374, %v8744
      %9257 = vst.msk [vmem:[%s170 + $0x8c8] sm:$0xff] %vm5374, %v8745
      %9258 = vst.msk [vmem:[%s170 + $0x8d0] sm:$0xff] %vm5374, %v8746
      %9259 = vst.msk [vmem:[%s170 + $0x8d8] sm:$0xff] %vm5374, %v8747
      %9260 = vst.msk [vmem:[%s170 + $0x8e0] sm:$0xff] %vm5374, %v8748
      %9261 = vst.msk [vmem:[%s170 + $0x8e8] sm:$0xff] %vm5374, %v8749
      %9262 = vst.msk [vmem:[%s170 + $0x8f0] sm:$0xff] %vm5374, %v8750
      %9263 = vst.msk [vmem:[%s170 + $0x8f8] sm:$0xff] %vm5374, %v8751
      %9264 = vst.msk [vmem:[%s170 + $0x900] sm:$0xff] %vm5374, %v8752
      %9265 = vst.msk [vmem:[%s170 + $0x908] sm:$0xff] %vm5374, %v8753
      %9266 = vst.msk [vmem:[%s170 + $0x910] sm:$0xff] %vm5374, %v8754
      %9267 = vst.msk [vmem:[%s170 + $0x918] sm:$0xff] %vm5374, %v8755
      %9268 = vst.msk [vmem:[%s170 + $0x920] sm:$0xff] %vm5374, %v8756
      %9269 = vst.msk [vmem:[%s170 + $0x928] sm:$0xff] %vm5374, %v8757
      %9270 = vst.msk [vmem:[%s170 + $0x930] sm:$0xff] %vm5374, %v8758
      %9271 = vst.msk [vmem:[%s170 + $0x938] sm:$0xff] %vm5374, %v8759
      %9272 = vst.msk [vmem:[%s170 + $0x940] sm:$0xff] %vm5374, %v8760
      %9273 = vst.msk [vmem:[%s170 + $0x948] sm:$0xff] %vm5374, %v8761
      %9274 = vst.msk [vmem:[%s170 + $0x950] sm:$0xff] %vm5374, %v8762
      %9275 = vst.msk [vmem:[%s170 + $0x958] sm:$0xff] %vm5374, %v8763
      %9276 = vst.msk [vmem:[%s170 + $0x960] sm:$0xff] %vm5374, %v8764
      %9277 = vst.msk [vmem:[%s170 + $0x968] sm:$0xff] %vm5374, %v8765
      %9278 = vst.msk [vmem:[%s170 + $0x970] sm:$0xff] %vm5374, %v8766
      %9279 = vst.msk [vmem:[%s170 + $0x978] sm:$0xff] %vm5374, %v8767
      %9280 = vst.msk [vmem:[%s170 + $0x980] sm:$0xff] %vm5374, %v8768
      %9281 = vst.msk [vmem:[%s170 + $0x988] sm:$0xff] %vm5374, %v8769
      %9282 = vst.msk [vmem:[%s170 + $0x990] sm:$0xff] %vm5374, %v8770
      %9283 = vst.msk [vmem:[%s170 + $0x998] sm:$0xff] %vm5374, %v8771
      %9284 = vst.msk [vmem:[%s170 + $0x9a0] sm:$0xff] %vm5374, %v8772
      %9285 = vst.msk [vmem:[%s170 + $0x9a8] sm:$0xff] %vm5374, %v8773
      %9286 = vst.msk [vmem:[%s170 + $0x9b0] sm:$0xff] %vm5374, %v8774
      %9287 = vst.msk [vmem:[%s170 + $0x9b8] sm:$0xff] %vm5374, %v8775
      %9288 = vst.msk [vmem:[%s170 + $0x9c0] sm:$0xff] %vm5374, %v8776
      %9289 = vst.msk [vmem:[%s170 + $0x9c8] sm:$0xff] %vm5374, %v8777
      %9290 = vst.msk [vmem:[%s170 + $0x9d0] sm:$0xff] %vm5374, %v8778
      %9291 = vst.msk [vmem:[%s170 + $0x9d8] sm:$0xff] %vm5374, %v8779
      %9292 = vst.msk [vmem:[%s170 + $0x9e0] sm:$0xff] %vm5374, %v8780
      %9293 = vst.msk [vmem:[%s170 + $0x9e8] sm:$0xff] %vm5374, %v8781
      %9294 = vst.msk [vmem:[%s170 + $0x9f0] sm:$0xff] %vm5374, %v8782
      %9295 = vst.msk [vmem:[%s170 + $0x9f8] sm:$0xff] %vm5374, %v8783
      %9296 = vst.msk [vmem:[%s170 + $0xa00] sm:$0xff] %vm5374, %v8784
      %9297 = vst.msk [vmem:[%s170 + $0xa08] sm:$0xff] %vm5374, %v8785
      %9298 = vst.msk [vmem:[%s170 + $0xa10] sm:$0xff] %vm5374, %v8786
      %9299 = vst.msk [vmem:[%s170 + $0xa18] sm:$0xff] %vm5374, %v8787
      %9300 = vst.msk [vmem:[%s170 + $0xa20] sm:$0xff] %vm5374, %v8788
      %9301 = vst.msk [vmem:[%s170 + $0xa28] sm:$0xff] %vm5374, %v8789
      %9302 = vst.msk [vmem:[%s170 + $0xa30] sm:$0xff] %vm5374, %v8790
      %9303 = vst.msk [vmem:[%s170 + $0xa38] sm:$0xff] %vm5374, %v8791
      %9304 = vst.msk [vmem:[%s170 + $0xa40] sm:$0xff] %vm5374, %v8792
      %9305 = vst.msk [vmem:[%s170 + $0xa48] sm:$0xff] %vm5374, %v8793
      %9306 = vst.msk [vmem:[%s170 + $0xa50] sm:$0xff] %vm5374, %v8794
      %9307 = vst.msk [vmem:[%s170 + $0xa58] sm:$0xff] %vm5374, %v8795
      %9308 = vst.msk [vmem:[%s170 + $0xa60] sm:$0xff] %vm5374, %v8796
      %9309 = vst.msk [vmem:[%s170 + $0xa68] sm:$0xff] %vm5374, %v8797
      %9310 = vst.msk [vmem:[%s170 + $0xa70] sm:$0xff] %vm5374, %v8798
      %9311 = vst.msk [vmem:[%s170 + $0xa78] sm:$0xff] %vm5374, %v8799
      %9312 = vst.msk [vmem:[%s170 + $0xa80] sm:$0xff] %vm5374, %v8800
      %9313 = vst.msk [vmem:[%s170 + $0xa88] sm:$0xff] %vm5374, %v8801
      %9314 = vst.msk [vmem:[%s170 + $0xa90] sm:$0xff] %vm5374, %v8802
      %9315 = vst.msk [vmem:[%s170 + $0xa98] sm:$0xff] %vm5374, %v8803
      %9316 = vst.msk [vmem:[%s170 + $0xaa0] sm:$0xff] %vm5374, %v8804
      %9317 = vst.msk [vmem:[%s170 + $0xaa8] sm:$0xff] %vm5374, %v8805
      %9318 = vst.msk [vmem:[%s170 + $0xab0] sm:$0xff] %vm5374, %v8806
      %9319 = vst.msk [vmem:[%s170 + $0xab8] sm:$0xff] %vm5374, %v8807
      %9320 = vst.msk [vmem:[%s170 + $0xac0] sm:$0xff] %vm5374, %v8808
      %9321 = vst.msk [vmem:[%s170 + $0xac8] sm:$0xff] %vm5374, %v8809
      %9322 = vst.msk [vmem:[%s170 + $0xad0] sm:$0xff] %vm5374, %v8810
      %9323 = vst.msk [vmem:[%s170 + $0xad8] sm:$0xff] %vm5374, %v8811
      %9324 = vst.msk [vmem:[%s170 + $0xae0] sm:$0xff] %vm5374, %v8812
      %9325 = vst.msk [vmem:[%s170 + $0xae8] sm:$0xff] %vm5374, %v8813
      %9326 = vst.msk [vmem:[%s170 + $0xaf0] sm:$0xff] %vm5374, %v8814
      %9327 = vst.msk [vmem:[%s170 + $0xaf8] sm:$0xff] %vm5374, %v8815
      %9328 = vst.msk [vmem:[%s170 + $0xb00] sm:$0xff] %vm5374, %v8816
      %9329 = vst.msk [vmem:[%s170 + $0xb08] sm:$0xff] %vm5374, %v8817
      %9330 = vst.msk [vmem:[%s170 + $0xb10] sm:$0xff] %vm5374, %v8818
      %9331 = vst.msk [vmem:[%s170 + $0xb18] sm:$0xff] %vm5374, %v8819
      %9332 = vst.msk [vmem:[%s170 + $0xb20] sm:$0xff] %vm5374, %v8820
      %9333 = vst.msk [vmem:[%s170 + $0xb28] sm:$0xff] %vm5374, %v8821
      %9334 = vst.msk [vmem:[%s170 + $0xb30] sm:$0xff] %vm5374, %v8822
      %9335 = vst.msk [vmem:[%s170 + $0xb38] sm:$0xff] %vm5374, %v8823
      %9336 = vst.msk [vmem:[%s170 + $0xb40] sm:$0xff] %vm5374, %v8824
      %9337 = vst.msk [vmem:[%s170 + $0xb48] sm:$0xff] %vm5374, %v8825
      %9338 = vst.msk [vmem:[%s170 + $0xb50] sm:$0xff] %vm5374, %v8826
      %9339 = vst.msk [vmem:[%s170 + $0xb58] sm:$0xff] %vm5374, %v8827
      %9340 = vst.msk [vmem:[%s170 + $0xb60] sm:$0xff] %vm5374, %v8828
      %9341 = vst.msk [vmem:[%s170 + $0xb68] sm:$0xff] %vm5374, %v8829
      %9342 = vst.msk [vmem:[%s170 + $0xb70] sm:$0xff] %vm5374, %v8830
      %9343 = vst.msk [vmem:[%s170 + $0xb78] sm:$0xff] %vm5374, %v8831
      %9344 = vst.msk [vmem:[%s170 + $0xb80] sm:$0xff] %vm5374, %v8832
      %9345 = vst.msk [vmem:[%s170 + $0xb88] sm:$0xff] %vm5374, %v8833
      %9346 = vst.msk [vmem:[%s170 + $0xb90] sm:$0xff] %vm5374, %v8834
      %9347 = vst.msk [vmem:[%s170 + $0xb98] sm:$0xff] %vm5374, %v8835
      %9348 = vst.msk [vmem:[%s170 + $0xba0] sm:$0xff] %vm5374, %v8836
      %9349 = vst.msk [vmem:[%s170 + $0xba8] sm:$0xff] %vm5374, %v8837
      %9350 = vst.msk [vmem:[%s170 + $0xbb0] sm:$0xff] %vm5374, %v8838
      %9351 = vst.msk [vmem:[%s170 + $0xbb8] sm:$0xff] %vm5374, %v8839
      %9352 = vst.msk [vmem:[%s170 + $0xbc0] sm:$0xff] %vm5374, %v8840
      %9353 = vst.msk [vmem:[%s170 + $0xbc8] sm:$0xff] %vm5374, %v8841
      %9354 = vst.msk [vmem:[%s170 + $0xbd0] sm:$0xff] %vm5374, %v8842
      %9355 = vst.msk [vmem:[%s170 + $0xbd8] sm:$0xff] %vm5374, %v8843
      %9356 = vst.msk [vmem:[%s170 + $0xbe0] sm:$0xff] %vm5374, %v8844
      %9357 = vst.msk [vmem:[%s170 + $0xbe8] sm:$0xff] %vm5374, %v8845
      %9358 = vst.msk [vmem:[%s170 + $0xbf0] sm:$0xff] %vm5374, %v8846
      %9359 = vst.msk [vmem:[%s170 + $0xbf8] sm:$0xff] %vm5374, %v8847
      %9360 = vst.msk [vmem:[%s170 + $0xc00] sm:$0xff] %vm5374, %v8848
      %9361 = vst.msk [vmem:[%s170 + $0xc08] sm:$0xff] %vm5374, %v8849
      %9362 = vst.msk [vmem:[%s170 + $0xc10] sm:$0xff] %vm5374, %v8850
      %9363 = vst.msk [vmem:[%s170 + $0xc18] sm:$0xff] %vm5374, %v8851
      %9364 = vst.msk [vmem:[%s170 + $0xc20] sm:$0xff] %vm5374, %v8852
      %9365 = vst.msk [vmem:[%s170 + $0xc28] sm:$0xff] %vm5374, %v8853
      %9366 = vst.msk [vmem:[%s170 + $0xc30] sm:$0xff] %vm5374, %v8854
      %9367 = vst.msk [vmem:[%s170 + $0xc38] sm:$0xff] %vm5374, %v8855
      %9368 = vst.msk [vmem:[%s170 + $0xc40] sm:$0xff] %vm5374, %v8856
      %9369 = vst.msk [vmem:[%s170 + $0xc48] sm:$0xff] %vm5374, %v8857
      %9370 = vst.msk [vmem:[%s170 + $0xc50] sm:$0xff] %vm5374, %v8858
      %9371 = vst.msk [vmem:[%s170 + $0xc58] sm:$0xff] %vm5374, %v8859
      %9372 = vst.msk [vmem:[%s170 + $0xc60] sm:$0xff] %vm5374, %v8860
      %9373 = vst.msk [vmem:[%s170 + $0xc68] sm:$0xff] %vm5374, %v8861
      %9374 = vst.msk [vmem:[%s170 + $0xc70] sm:$0xff] %vm5374, %v8862
      %9375 = vst.msk [vmem:[%s170 + $0xc78] sm:$0xff] %vm5374, %v8863
      %9376 = vst.msk [vmem:[%s170 + $0xc80] sm:$0xff] %vm5374, %v8864
      %9377 = vst.msk [vmem:[%s170 + $0xc88] sm:$0xff] %vm5374, %v8865
      %9378 = vst.msk [vmem:[%s170 + $0xc90] sm:$0xff] %vm5374, %v8866
      %9379 = vst.msk [vmem:[%s170 + $0xc98] sm:$0xff] %vm5374, %v8867
      %9380 = vst.msk [vmem:[%s170 + $0xca0] sm:$0xff] %vm5374, %v8868
      %9381 = vst.msk [vmem:[%s170 + $0xca8] sm:$0xff] %vm5374, %v8869
      %9382 = vst.msk [vmem:[%s170 + $0xcb0] sm:$0xff] %vm5374, %v8870
      %9383 = vst.msk [vmem:[%s170 + $0xcb8] sm:$0xff] %vm5374, %v8871
      %9384 = vst.msk [vmem:[%s170 + $0xcc0] sm:$0xff] %vm5374, %v8872
      %9385 = vst.msk [vmem:[%s170 + $0xcc8] sm:$0xff] %vm5374, %v8873
      %9386 = vst.msk [vmem:[%s170 + $0xcd0] sm:$0xff] %vm5374, %v8874
      %9387 = vst.msk [vmem:[%s170 + $0xcd8] sm:$0xff] %vm5374, %v8875
      %9388 = vst.msk [vmem:[%s170 + $0xce0] sm:$0xff] %vm5374, %v8876
      %9389 = vst.msk [vmem:[%s170 + $0xce8] sm:$0xff] %vm5374, %v8877
      %9390 = vst.msk [vmem:[%s170 + $0xcf0] sm:$0xff] %vm5374, %v8878
      %9391 = vst.msk [vmem:[%s170 + $0xcf8] sm:$0xff] %vm5374, %v8879
      %9392 = vst.msk [vmem:[%s170 + $0xd00] sm:$0xff] %vm5374, %v8880
      %9393 = vst.msk [vmem:[%s170 + $0xd08] sm:$0xff] %vm5374, %v8881
      %9394 = vst.msk [vmem:[%s170 + $0xd10] sm:$0xff] %vm5374, %v8882
      %9395 = vst.msk [vmem:[%s170 + $0xd18] sm:$0xff] %vm5374, %v8883
      %9396 = vst.msk [vmem:[%s170 + $0xd20] sm:$0xff] %vm5374, %v8884
      %9397 = vst.msk [vmem:[%s170 + $0xd28] sm:$0xff] %vm5374, %v8885
      %9398 = vst.msk [vmem:[%s170 + $0xd30] sm:$0xff] %vm5374, %v8886
      %9399 = vst.msk [vmem:[%s170 + $0xd38] sm:$0xff] %vm5374, %v8887
      %9400 = vst.msk [vmem:[%s170 + $0xd40] sm:$0xff] %vm5374, %v8888
      %9401 = vst.msk [vmem:[%s170 + $0xd48] sm:$0xff] %vm5374, %v8889
      %9402 = vst.msk [vmem:[%s170 + $0xd50] sm:$0xff] %vm5374, %v8890
      %9403 = vst.msk [vmem:[%s170 + $0xd58] sm:$0xff] %vm5374, %v8891
      %9404 = vst.msk [vmem:[%s170 + $0xd60] sm:$0xff] %vm5374, %v8892
      %9405 = vst.msk [vmem:[%s170 + $0xd68] sm:$0xff] %vm5374, %v8893
      %9406 = vst.msk [vmem:[%s170 + $0xd70] sm:$0xff] %vm5374, %v8894
      %9407 = vst.msk [vmem:[%s170 + $0xd78] sm:$0xff] %vm5374, %v8895
      %9408 = vst.msk [vmem:[%s170 + $0xd80] sm:$0xff] %vm5374, %v8896
      %9409 = vst.msk [vmem:[%s170 + $0xd88] sm:$0xff] %vm5374, %v8897
      %9410 = vst.msk [vmem:[%s170 + $0xd90] sm:$0xff] %vm5374, %v8898
      %9411 = vst.msk [vmem:[%s170 + $0xd98] sm:$0xff] %vm5374, %v8899
      %9412 = vst.msk [vmem:[%s170 + $0xda0] sm:$0xff] %vm5374, %v8900
      %9413 = vst.msk [vmem:[%s170 + $0xda8] sm:$0xff] %vm5374, %v8901
      %9414 = vst.msk [vmem:[%s170 + $0xdb0] sm:$0xff] %vm5374, %v8902
      %9415 = vst.msk [vmem:[%s170 + $0xdb8] sm:$0xff] %vm5374, %v8903
      %9416 = vst.msk [vmem:[%s170 + $0xdc0] sm:$0xff] %vm5374, %v8904
      %9417 = vst.msk [vmem:[%s170 + $0xdc8] sm:$0xff] %vm5374, %v8905
      %9418 = vst.msk [vmem:[%s170 + $0xdd0] sm:$0xff] %vm5374, %v8906
      %9419 = vst.msk [vmem:[%s170 + $0xdd8] sm:$0xff] %vm5374, %v8907
      %9420 = vst.msk [vmem:[%s170 + $0xde0] sm:$0xff] %vm5374, %v8908
      %9421 = vst.msk [vmem:[%s170 + $0xde8] sm:$0xff] %vm5374, %v8909
      %9422 = vst.msk [vmem:[%s170 + $0xdf0] sm:$0xff] %vm5374, %v8910
      %9423 = vst.msk [vmem:[%s170 + $0xdf8] sm:$0xff] %vm5374, %v8911
      %9424 = vst.msk [vmem:[%s170 + $0xe00] sm:$0xff] %vm5374, %v8912
      %9425 = vst.msk [vmem:[%s170 + $0xe08] sm:$0xff] %vm5374, %v8913
      %9426 = vst.msk [vmem:[%s170 + $0xe10] sm:$0xff] %vm5374, %v8914
      %9427 = vst.msk [vmem:[%s170 + $0xe18] sm:$0xff] %vm5374, %v8915
      %9428 = vst.msk [vmem:[%s170 + $0xe20] sm:$0xff] %vm5374, %v8916
      %9429 = vst.msk [vmem:[%s170 + $0xe28] sm:$0xff] %vm5374, %v8917
      %9430 = vst.msk [vmem:[%s170 + $0xe30] sm:$0xff] %vm5374, %v8918
      %9431 = vst.msk [vmem:[%s170 + $0xe38] sm:$0xff] %vm5374, %v8919
      %9432 = vst.msk [vmem:[%s170 + $0xe40] sm:$0xff] %vm5374, %v8920
      %9433 = vst.msk [vmem:[%s170 + $0xe48] sm:$0xff] %vm5374, %v8921
      %9434 = vst.msk [vmem:[%s170 + $0xe50] sm:$0xff] %vm5374, %v8922
      %9435 = vst.msk [vmem:[%s170 + $0xe58] sm:$0xff] %vm5374, %v8923
      %9436 = vst.msk [vmem:[%s170 + $0xe60] sm:$0xff] %vm5374, %v8924
      %9437 = vst.msk [vmem:[%s170 + $0xe68] sm:$0xff] %vm5374, %v8925
      %9438 = vst.msk [vmem:[%s170 + $0xe70] sm:$0xff] %vm5374, %v8926
      %9439 = vst.msk [vmem:[%s170 + $0xe78] sm:$0xff] %vm5374, %v8927
      %9440 = vst.msk [vmem:[%s170 + $0xe80] sm:$0xff] %vm5374, %v8928
      %9441 = vst.msk [vmem:[%s170 + $0xe88] sm:$0xff] %vm5374, %v8929
      %9442 = vst.msk [vmem:[%s170 + $0xe90] sm:$0xff] %vm5374, %v8930
      %9443 = vst.msk [vmem:[%s170 + $0xe98] sm:$0xff] %vm5374, %v8931
      %9444 = vst.msk [vmem:[%s170 + $0xea0] sm:$0xff] %vm5374, %v8932
      %9445 = vst.msk [vmem:[%s170 + $0xea8] sm:$0xff] %vm5374, %v8933
      %9446 = vst.msk [vmem:[%s170 + $0xeb0] sm:$0xff] %vm5374, %v8934
      %9447 = vst.msk [vmem:[%s170 + $0xeb8] sm:$0xff] %vm5374, %v8935
      %9448 = vst.msk [vmem:[%s170 + $0xec0] sm:$0xff] %vm5374, %v8936
      %9449 = vst.msk [vmem:[%s170 + $0xec8] sm:$0xff] %vm5374, %v8937
      %9450 = vst.msk [vmem:[%s170 + $0xed0] sm:$0xff] %vm5374, %v8938
      %9451 = vst.msk [vmem:[%s170 + $0xed8] sm:$0xff] %vm5374, %v8939
      %9452 = vst.msk [vmem:[%s170 + $0xee0] sm:$0xff] %vm5374, %v8940
      %9453 = vst.msk [vmem:[%s170 + $0xee8] sm:$0xff] %vm5374, %v8941
      %9454 = vst.msk [vmem:[%s170 + $0xef0] sm:$0xff] %vm5374, %v8942
      %9455 = vst.msk [vmem:[%s170 + $0xef8] sm:$0xff] %vm5374, %v8943
      %9456 = vst.msk [vmem:[%s170 + $0xf00] sm:$0xff] %vm5374, %v8944
      %9457 = vst.msk [vmem:[%s170 + $0xf08] sm:$0xff] %vm5374, %v8945
      %9458 = vst.msk [vmem:[%s170 + $0xf10] sm:$0xff] %vm5374, %v8946
      %9459 = vst.msk [vmem:[%s170 + $0xf18] sm:$0xff] %vm5374, %v8947
      %9460 = vst.msk [vmem:[%s170 + $0xf20] sm:$0xff] %vm5374, %v8948
      %9461 = vst.msk [vmem:[%s170 + $0xf28] sm:$0xff] %vm5374, %v8949
      %9462 = vst.msk [vmem:[%s170 + $0xf30] sm:$0xff] %vm5374, %v8950
      %9463 = vst.msk [vmem:[%s170 + $0xf38] sm:$0xff] %vm5374, %v8951
      %9464 = vst.msk [vmem:[%s170 + $0xf40] sm:$0xff] %vm5374, %v8952
      %9465 = vst.msk [vmem:[%s170 + $0xf48] sm:$0xff] %vm5374, %v8953
      %9466 = vst.msk [vmem:[%s170 + $0xf50] sm:$0xff] %vm5374, %v8954
      %9467 = vst.msk [vmem:[%s170 + $0xf58] sm:$0xff] %vm5374, %v8955
      %9468 = vst.msk [vmem:[%s170 + $0xf60] sm:$0xff] %vm5374, %v8956
      %9469 = vst.msk [vmem:[%s170 + $0xf68] sm:$0xff] %vm5374, %v8957
      %9470 = vst.msk [vmem:[%s170 + $0xf70] sm:$0xff] %vm5374, %v8958
      %9471 = vst.msk [vmem:[%s170 + $0xf78] sm:$0xff] %vm5374, %v8959
      %9472 = vst.msk [vmem:[%s170 + $0xf80] sm:$0xff] %vm5374, %v8960
      %9473 = vst.msk [vmem:[%s170 + $0xf88] sm:$0xff] %vm5374, %v8961
      %9474 = vst.msk [vmem:[%s170 + $0xf90] sm:$0xff] %vm5374, %v8962
      %9475 = vst.msk [vmem:[%s170 + $0xf98] sm:$0xff] %vm5374, %v8963
      %9476 = vst.msk [vmem:[%s170 + $0xfa0] sm:$0xff] %vm5374, %v8964
      %9477 = vst.msk [vmem:[%s170 + $0xfa8] sm:$0xff] %vm5374, %v8965
      %9478 = vst.msk [vmem:[%s170 + $0xfb0] sm:$0xff] %vm5374, %v8966
      %9479 = vst.msk [vmem:[%s170 + $0xfb8] sm:$0xff] %vm5374, %v8967
      %9480 = vst.msk [vmem:[%s170 + $0xfc0] sm:$0xff] %vm5374, %v8968
      %9481 = vst.msk [vmem:[%s170 + $0xfc8] sm:$0xff] %vm5374, %v8969
      %9482 = vst.msk [vmem:[%s170 + $0xfd0] sm:$0xff] %vm5374, %v8970
      %9483 = vst.msk [vmem:[%s170 + $0xfd8] sm:$0xff] %vm5374, %v8971
      %9484 = vst.msk [vmem:[%s170 + $0xfe0] sm:$0xff] %vm5374, %v8972
      %9485 = vst.msk [vmem:[%s170 + $0xfe8] sm:$0xff] %vm5374, %v8973
      %9486 = vst.msk [vmem:[%s170 + $0xff0] sm:$0xff] %vm5374, %v8974
      %9487 = vst.msk [vmem:[%s170 + $0xff8] sm:$0xff] %vm5374, %v8975
      %p9488 = scmp.lt.s32.totalorder %s14, 1
      %s9489 = scalar_select %p9488, %s14, 1
      %s9490 = smul.addr %s9489, 512
      %s9491 = smul.addr %s9490, 8
      %s9492 = scalar_lea.vmem %s3, %s9491
      // Predicated region
      $region33: #{conv_im2col_fused.1} parent=31 // pred_check
        %p9493 = pneg %p100
      $region34: #{conv_im2col_fused.1} parent=31 // pred_check_branch
        %9495 = sbr.rel (%p9493) target = $region36
      $region35: #{conv_im2col_fused.1} parent=31 // pred_region
        _
      $region36: #{conv_im2col_fused.1} parent=31 // pred_fallthru
        _
    $region32: #{conv_im2col_fused.1} parent=5 // pred_fallthru
      _
    %p9496 = scmp.le.s32.totalorder 2, %s9
    // Predicated region
    $region37: #{conv_im2col_fused.1} parent=5 // pred_check
      %p9497 = pneg %p9496
    $region38: #{conv_im2col_fused.1} parent=5 // pred_check_branch
      %9499 = sbr.rel (%p9497) target = $region40
    $region39: #{conv_im2col_fused.1} parent=5 // pred_region
      %s9500 = ssub.s32 %s9, 2
      // Predicated region
      $region41: #{conv_im2col_fused.1} parent=39 // pred_check
        %p9501 = pneg %p106
      $region42: #{conv_im2col_fused.1} parent=39 // pred_check_branch
        %9503 = sbr.rel (%p9501) target = $region44
      $region43: #{conv_im2col_fused.1} parent=39 // pred_region
        %p9504 = scmp.lt.s32.totalorder %s15, 1
        %s9505 = scalar_select %p9504, %s15, 1
        %s9506 = smul.addr %s9505, 512
        %s9507 = smul.addr %s9506, 8
        %s9508 = scalar_lea.vmem %s3, %s9507
      $region44: #{conv_im2col_fused.1} parent=39 // pred_fallthru
        _
    $region40: #{conv_im2col_fused.1} parent=5 // pred_fallthru
      _
  $region6: #{conv_im2col_fused.1} parent=0 // loop_footer
    %s13 = sadd.s32 1, %s9
  $region7: #{conv_im2col_fused.1} parent=0 // loop_footer_branch
    %8 = sbr.rel target = $region3
  $region8: #{conv_im2col_fused.1} parent=0 // loop_exit
    _

</llo_original>
